<compile_context>
chip_gen: v7x
topology: tpu7x:2x2x1
jax: 0.10.0
libtpu: 0.0.40
codegen_flags: <defaults>
</compile_context>

<pallas_src>
import math
import functools
import numpy as np
import jax
import jax.numpy as jnp
from jax.experimental import pallas as pl
from jax.experimental.pallas import tpu as pltpu


def _cross_modal_kernel(x_ref, wqkv_ref, wo_ref, bqkv_ref, bo_ref,
                        gamma_ref, beta_ref, bias_ref, avg_ref, o_ref,
                        *, num_heads, eps, items_per_row):
    TBM, E = x_ref.shape            # TBM = TB * M rows, E on the lane axis
    H = num_heads
    Dh = E // H
    scale = 1.0 / math.sqrt(Dh)
    ipr = items_per_row

    x = x_ref[...]                                  # (TBM, E), matmul dtype
    x_f32 = x.astype(jnp.float32)

    # --- fused QKV projection: one (TBM, E) @ (E, 3E) MXU matmul, f32 accumulate ---
    qkv = jnp.dot(x, wqkv_ref[...], preferred_element_type=jnp.float32)
    qkv = qkv + bqkv_ref[...]                       # (TBM, 3E) f32

    q = qkv[:, 0 * E:1 * E]
    k = qkv[:, 1 * E:2 * E]
    v = qkv[:, 2 * E:3 * E]

    bias = bias_ref[...]                            # (TBM, TBM) block-diag additive mask

    # --- attention, batched over all TB items at once (one 2-D matmul per head) ---
    # attn_full @ Wo == sum_h attn_h @ Wo[h*Dh:(h+1)*Dh, :], so head outputs are
    # folded straight into the output projection (no per-head concatenate/relayout).
    attn = None
    for h in range(H):
        sl = slice(h * Dh, (h + 1) * Dh)
        qh = q[:, sl]                               # (TBM, Dh)
        kh = k[:, sl]
        vh = v[:, sl]
        s = jnp.dot(qh, kh.T, preferred_element_type=jnp.float32) * scale + bias
        s = s - jnp.max(s, axis=-1, keepdims=True)
        p = jnp.exp(s)                              # masked entries underflow to 0
        # EUP reciprocal instead of a VALU divide chain.
        p = p * pl.reciprocal(jnp.sum(p, axis=-1, keepdims=True), approx=True)
        o_h = jnp.dot(p, vh, preferred_element_type=jnp.float32)          # (TBM, Dh)
        part = jnp.dot(o_h.astype(wo_ref.dtype), wo_ref[sl, :],
                       preferred_element_type=jnp.float32)                # (TBM, E)
        attn = part if attn is None else attn + part
    attn = attn + bo_ref[...]                       # (TBM, E) f32

    # --- residual + LayerNorm over E (all f32) ---
    y = attn + x_f32
    mu = jnp.mean(y, axis=-1, keepdims=True)
    var = jnp.mean((y - mu) ** 2, axis=-1, keepdims=True)
    y = (y - mu) * jax.lax.rsqrt(var + eps)
    y = y * gamma_ref[...] + beta_ref[...]          # (TBM, E)

    # --- modality mean + lane-dense output packing via small averaging matmuls ---
    # avg_ref[j] averages the M modality rows of items {g*ipr + j}; the lane concat
    # packs ipr items per 128-lane output row -> unmasked, lane-dense stores.
    packed = [jnp.dot(avg_ref[j], y, preferred_element_type=jnp.float32)
              for j in range(ipr)]
    out = packed[0] if ipr == 1 else jnp.concatenate(packed, axis=-1)
    o_ref[...] = out.astype(o_ref.dtype)


def cross_modal_attention(x, params, *, num_heads, eps=1e-5,
                          block_items=64, matmul_dtype=jnp.float32):
    """x: (B, T, M, E) float32 -> (B, T, E) float32."""
    B, T, M, E = x.shape
    N = B * T
    assert E % num_heads == 0

    # lane-dense packing: how many items share one 128-lane output row
    ipr = 128 // E if (E < 128 and 128 % E == 0) else 1

    # items per grid step: multiple of 8*ipr so all block shapes stay (8,128)-legal
    align = 8 * ipr
    TB = max(align, (block_items // align) * align)
    n_blocks = pl.cdiv(N, TB)
    Np = n_blocks * TB                  # padded item count
    TBM = TB * M
    G = TB // ipr

    # flatten (B,T,M,E) -> (N*M, E): projections / LN / attention all run on a
    # dense 2-D slab (no in-kernel reshapes needed).
    xf = x.reshape(N * M, E).astype(matmul_dtype)
    if Np != N:
        xf = jnp.pad(xf, ((0, (Np - N) * M), (0, 0)))

    # Per-block constants, built host-side (keeps iota / integer-div out of the kernel):
    #  * block-diagonal additive attention mask (rows attend only within their item)
    #  * modality-averaging matrices that also pack ipr items per output row.
    item_of_row = np.arange(TBM) // M
    same_item = item_of_row[:, None] == item_of_row[None, :]
    attn_bias = np.where(same_item, 0.0, -1e30).astype(np.float32)        # (TBM, TBM)
    avg = np.zeros((ipr, G, TBM), np.float32)
    for j in range(ipr):
        tgt = np.arange(G) * ipr + j
        avg[j] = (item_of_row[None, :] == tgt[:, None]).astype(np.float32) / M
    attn_bias = jnp.asarray(attn_bias)
    avg = jnp.asarray(avg)

    wqkv = params["w_qkv_t"].astype(matmul_dtype)   # (E, 3E) fused QKV weight
    wo = params["w_o_t"].astype(matmul_dtype)       # (E, E)
    bqkv, bo = params["b_qkv"], params["b_o"]       # f32 biases
    gamma, beta = params["gamma"], params["beta"]   # f32 LayerNorm params

    # Constant-index operands: whole array in VMEM, single-buffered, no pipelining.
    vmem_spec = pl.BlockSpec(memory_space=pltpu.MemorySpace.VMEM)

    kernel = functools.partial(_cross_modal_kernel, num_heads=num_heads,
                               eps=eps, items_per_row=ipr)

    out = pl.pallas_call(
        kernel,
        out_shape=jax.ShapeDtypeStruct((Np // ipr, ipr * E), jnp.float32),
        grid_spec=pltpu.PrefetchScalarGridSpec(
            num_scalar_prefetch=0,
            grid=(n_blocks,),
            in_specs=[
                pl.BlockSpec((TBM, E), lambda i: (i, 0)),   # x slab (pipelined)
                vmem_spec, vmem_spec,                       # w_qkv_t, w_o_t
                vmem_spec, vmem_spec,                       # b_qkv, b_o
                vmem_spec, vmem_spec,                       # gamma, beta
                vmem_spec, vmem_spec,                       # attn_bias, avg
            ],
            out_specs=pl.BlockSpec((G, ipr * E), lambda i: (i, 0)),
        ),
        compiler_params=pltpu.CompilerParams(
            dimension_semantics=("parallel",),          # shards grid across v7x's 2 TCs
            vmem_limit_bytes=48 * 1024 * 1024,          # explicit budget, fits v7x 64 MiB
        ),
    )(xf, wqkv, wo, bqkv, bo, gamma, beta, attn_bias, avg)

    out = out.reshape(Np, E)[:N]        # unpack lane-dense rows, drop padding
    return out.reshape(B, T, E)


def init_params(key, embed_dim):
    """Synthetic parameters matching nn.MultiheadAttention + LayerNorm shapes.

    w_qkv_t is in_proj_weight.T (E, 3E) so qkv = x @ w_qkv_t + b_qkv, columns
    ordered [q | k | v] like PyTorch; w_o_t is out_proj.weight.T."""
    k = jax.random.split(key, 6)
    E = embed_dim
    scale = 1.0 / math.sqrt(E)
    w_qkv_t = jax.random.uniform(k[0], (E, 3 * E), jnp.float32, -scale, scale)
    w_o_t = jax.random.uniform(k[1], (E, E), jnp.float32, -scale, scale)
    b_qkv = jax.random.normal(k[2], (1, 3 * E), jnp.float32) * 0.02
    b_o = jax.random.normal(k[3], (1, E), jnp.float32) * 0.02
    gamma = 1.0 + 0.1 * jax.random.normal(k[4], (1, E), jnp.float32)
    beta = 0.05 * jax.random.normal(k[5], (1, E), jnp.float32)
    return dict(w_qkv_t=w_qkv_t, w_o_t=w_o_t, b_qkv=b_qkv, b_o=b_o,
                gamma=gamma, beta=beta)


def reference(x, params, *, num_heads, eps=1e-5):
    """Pure-JAX reference mirroring the PyTorch forward."""
    B, T, M, E = x.shape
    H = num_heads
    Dh = E // H
    xf = x.reshape(B * T, M, E)
    qkv = xf @ params["w_qkv_t"] + params["b_qkv"]
    q, k, v = qkv[..., :E], qkv[..., E:2 * E], qkv[..., 2 * E:]

    def split(a):  # (N, M, E) -> (N, H, M, Dh)
        return a.reshape(B * T, M, H, Dh).transpose(0, 2, 1, 3)

    qh, kh, vh = split(q), split(k), split(v)
    s = jnp.einsum("nhmd,nhkd->nhmk", qh, kh) / math.sqrt(Dh)
    p = jax.nn.softmax(s, axis=-1)
    a = jnp.einsum("nhmk,nhkd->nhmd", p, vh).transpose(0, 2, 1, 3).reshape(B * T, M, E)
    a = a @ params["w_o_t"] + params["b_o"]
    y = a + xf
    mu = y.mean(-1, keepdims=True)
    var = ((y - mu) ** 2).mean(-1, keepdims=True)
    y = (y - mu) / jnp.sqrt(var + eps) * params["gamma"] + params["beta"]
    return y.mean(axis=1).reshape(B, T, E)


if __name__ == "__main__":
    B, T, M, E, H = 2, 64, 4, 32, 4   # N = B*T = 128 items -> 2 grid steps of 64 items
    key = jax.random.PRNGKey(0)
    kx, kp = jax.random.split(key)
    x = jax.random.normal(kx, (B, T, M, E), jnp.float32)
    params = init_params(kp, E)

    ref = reference(x, params, num_heads=H)

    # f32 MXU path (exact-ish check)
    out = cross_modal_attention(x, params, num_heads=H, block_items=64)
    out = jax.block_until_ready(out)
    assert out.shape == (B, T, E)
    assert jnp.allclose(out, ref, atol=2e-3, rtol=2e-3), "f32 kernel mismatch vs reference"

    # bf16-matmul path (v6e/v7x): bf16 MXU inputs, f32 accumulate + f32 elementwise
    out_bf16 = cross_modal_attention(x, params, num_heads=H, block_items=64,
                                     matmul_dtype=jnp.bfloat16)
    out_bf16 = jax.block_until_ready(out_bf16)
    assert jnp.allclose(out_bf16, ref, atol=5e-2, rtol=5e-2), "bf16 kernel mismatch vs reference"

    print("KERNEL_OK")
</pallas_src>

<mosaic_0001>
module attributes {stable_mosaic.version = 11 : i64} {
  func.func @_cross_modal_kernel(%arg0: i32, %arg1: memref<256x32xf32, #tpu.memory_space<vmem>>, %arg2: memref<32x96xf32, #tpu.memory_space<vmem>>, %arg3: memref<32x32xf32, #tpu.memory_space<vmem>>, %arg4: memref<1x96xf32, #tpu.memory_space<vmem>>, %arg5: memref<1x32xf32, #tpu.memory_space<vmem>>, %arg6: memref<1x32xf32, #tpu.memory_space<vmem>>, %arg7: memref<1x32xf32, #tpu.memory_space<vmem>>, %arg8: memref<256x256xf32, #tpu.memory_space<vmem>>, %arg9: memref<4x16x256xf32, #tpu.memory_space<vmem>>, %arg10: memref<16x128xf32, #tpu.memory_space<vmem>>) attributes {dimension_semantics = [#tpu.dimension_semantics<parallel>], iteration_bounds = array<i64: 2>, scalar_prefetch = 0 : i64, scratch_operands = 0 : i64, tpu.core_type = #tpu.core_type<tc>, window_params = [{transform_indices = @transform_0, window_bounds = array<i64: 256, 32>}, {pipeline_mode = #tpu.pipeline_mode<synchronous>, transform_indices = @transform_1, window_bounds = array<i64: 32, 96>}, {pipeline_mode = #tpu.pipeline_mode<synchronous>, transform_indices = @transform_2, window_bounds = array<i64: 32, 32>}, {pipeline_mode = #tpu.pipeline_mode<synchronous>, transform_indices = @transform_3, window_bounds = array<i64: 1, 96>}, {pipeline_mode = #tpu.pipeline_mode<synchronous>, transform_indices = @transform_4, window_bounds = array<i64: 1, 32>}, {pipeline_mode = #tpu.pipeline_mode<synchronous>, transform_indices = @transform_5, window_bounds = array<i64: 1, 32>}, {pipeline_mode = #tpu.pipeline_mode<synchronous>, transform_indices = @transform_6, window_bounds = array<i64: 1, 32>}, {pipeline_mode = #tpu.pipeline_mode<synchronous>, transform_indices = @transform_7, window_bounds = array<i64: 256, 256>}, {pipeline_mode = #tpu.pipeline_mode<synchronous>, transform_indices = @transform_8, window_bounds = array<i64: 4, 16, 256>}, {transform_indices = @transform_9, window_bounds = array<i64: 16, 128>}]} {
    %c0 = arith.constant 0 : index
    %c0_0 = arith.constant 0 : index
    %0 = vector.load %arg1[%c0, %c0_0] : memref<256x32xf32, #tpu.memory_space<vmem>>, vector<256x32xf32>
    %c0_1 = arith.constant 0 : index
    %c0_2 = arith.constant 0 : index
    %1 = vector.load %arg2[%c0_1, %c0_2] : memref<32x96xf32, #tpu.memory_space<vmem>>, vector<32x96xf32>
    %cst = arith.constant dense<0.000000e+00> : vector<256x96xf32>
    %2 = tpu.matmul %0, %1, %cst {dimension_numbers = #tpu.dot_dimension_numbers<[1], [0], [0], [1], [0, 0, 1, 1], [], []>} : vector<256x32xf32>, vector<32x96xf32>, vector<256x96xf32> -> vector<256x96xf32>
    %c0_3 = arith.constant 0 : index
    %c0_4 = arith.constant 0 : index
    %3 = vector.load %arg4[%c0_3, %c0_4] : memref<1x96xf32, #tpu.memory_space<vmem>>, vector<1x96xf32>
    %4 = vector.broadcast %3 : vector<1x96xf32> to vector<256x96xf32>
    %5 = arith.addf %2, %4 : vector<256x96xf32>
    %6 = vector.extract_strided_slice %5 {offsets = [0, 0], sizes = [256, 32], strides = [1, 1]} : vector<256x96xf32> to vector<256x32xf32>
    %7 = vector.extract_strided_slice %5 {offsets = [0, 32], sizes = [256, 32], strides = [1, 1]} : vector<256x96xf32> to vector<256x32xf32>
    %8 = vector.extract_strided_slice %5 {offsets = [0, 64], sizes = [256, 32], strides = [1, 1]} : vector<256x96xf32> to vector<256x32xf32>
    %c0_5 = arith.constant 0 : index
    %c0_6 = arith.constant 0 : index
    %9 = vector.load %arg8[%c0_5, %c0_6] : memref<256x256xf32, #tpu.memory_space<vmem>>, vector<256x256xf32>
    %10 = vector.extract_strided_slice %6 {offsets = [0, 0], sizes = [256, 8], strides = [1, 1]} : vector<256x32xf32> to vector<256x8xf32>
    %11 = vector.extract_strided_slice %7 {offsets = [0, 0], sizes = [256, 8], strides = [1, 1]} : vector<256x32xf32> to vector<256x8xf32>
    %12 = vector.extract_strided_slice %8 {offsets = [0, 0], sizes = [256, 8], strides = [1, 1]} : vector<256x32xf32> to vector<256x8xf32>
    %13 = tpu.transpose %11, [1, 0] : vector<256x8xf32> -> vector<8x256xf32>
    %cst_7 = arith.constant dense<0.000000e+00> : vector<256x256xf32>
    %14 = tpu.matmul %10, %13, %cst_7 {dimension_numbers = #tpu.dot_dimension_numbers<[1], [0], [0], [1], [0, 0, 1, 1], [], []>} : vector<256x8xf32>, vector<8x256xf32>, vector<256x256xf32> -> vector<256x256xf32>
    %cst_8 = arith.constant 0.353553385 : f32
    %15 = vector.broadcast %cst_8 : f32 to vector<256x256xf32>
    %16 = arith.mulf %14, %15 : vector<256x256xf32>
    %17 = arith.addf %16, %9 : vector<256x256xf32>
    %cst_9 = arith.constant dense<0xFF800000> : vector<256xf32>
    %18 = vector.multi_reduction <maximumf>, %17, %cst_9 [1] : vector<256x256xf32> to vector<256xf32>
    %19 = vector.shape_cast %18 : vector<256xf32> to vector<256x1xf32>
    %20 = vector.broadcast %19 : vector<256x1xf32> to vector<256x256xf32>
    %21 = arith.subf %17, %20 : vector<256x256xf32>
    %22 = math.exp %21 : vector<256x256xf32>
    %cst_10 = arith.constant dense<0.000000e+00> : vector<256xf32>
    %23 = vector.multi_reduction <add>, %22, %cst_10 [1] : vector<256x256xf32> to vector<256xf32>
    %24 = vector.shape_cast %23 : vector<256xf32> to vector<256x1xf32>
    %25 = tpu.reciprocal %24 {approx = true} : vector<256x1xf32> -> vector<256x1xf32>
    %26 = vector.broadcast %25 : vector<256x1xf32> to vector<256x256xf32>
    %27 = arith.mulf %22, %26 : vector<256x256xf32>
    %cst_11 = arith.constant dense<0.000000e+00> : vector<256x8xf32>
    %28 = tpu.matmul %27, %12, %cst_11 {dimension_numbers = #tpu.dot_dimension_numbers<[1], [0], [0], [1], [0, 0, 1, 1], [], []>} : vector<256x256xf32>, vector<256x8xf32>, vector<256x8xf32> -> vector<256x8xf32>
    %c0_12 = arith.constant 0 : index
    %c0_13 = arith.constant 0 : index
    %29 = vector.load %arg3[%c0_12, %c0_13] : memref<32x32xf32, #tpu.memory_space<vmem>>, vector<8x32xf32>
    %cst_14 = arith.constant dense<0.000000e+00> : vector<256x32xf32>
    %30 = tpu.matmul %28, %29, %cst_14 {dimension_numbers = #tpu.dot_dimension_numbers<[1], [0], [0], [1], [0, 0, 1, 1], [], []>} : vector<256x8xf32>, vector<8x32xf32>, vector<256x32xf32> -> vector<256x32xf32>
    %31 = vector.extract_strided_slice %6 {offsets = [0, 8], sizes = [256, 8], strides = [1, 1]} : vector<256x32xf32> to vector<256x8xf32>
    %32 = vector.extract_strided_slice %7 {offsets = [0, 8], sizes = [256, 8], strides = [1, 1]} : vector<256x32xf32> to vector<256x8xf32>
    %33 = vector.extract_strided_slice %8 {offsets = [0, 8], sizes = [256, 8], strides = [1, 1]} : vector<256x32xf32> to vector<256x8xf32>
    %34 = tpu.transpose %32, [1, 0] : vector<256x8xf32> -> vector<8x256xf32>
    %cst_15 = arith.constant dense<0.000000e+00> : vector<256x256xf32>
    %35 = tpu.matmul %31, %34, %cst_15 {dimension_numbers = #tpu.dot_dimension_numbers<[1], [0], [0], [1], [0, 0, 1, 1], [], []>} : vector<256x8xf32>, vector<8x256xf32>, vector<256x256xf32> -> vector<256x256xf32>
    %cst_16 = arith.constant 0.353553385 : f32
    %36 = vector.broadcast %cst_16 : f32 to vector<256x256xf32>
    %37 = arith.mulf %35, %36 : vector<256x256xf32>
    %38 = arith.addf %37, %9 : vector<256x256xf32>
    %cst_17 = arith.constant dense<0xFF800000> : vector<256xf32>
    %39 = vector.multi_reduction <maximumf>, %38, %cst_17 [1] : vector<256x256xf32> to vector<256xf32>
    %40 = vector.shape_cast %39 : vector<256xf32> to vector<256x1xf32>
    %41 = vector.broadcast %40 : vector<256x1xf32> to vector<256x256xf32>
    %42 = arith.subf %38, %41 : vector<256x256xf32>
    %43 = math.exp %42 : vector<256x256xf32>
    %cst_18 = arith.constant dense<0.000000e+00> : vector<256xf32>
    %44 = vector.multi_reduction <add>, %43, %cst_18 [1] : vector<256x256xf32> to vector<256xf32>
    %45 = vector.shape_cast %44 : vector<256xf32> to vector<256x1xf32>
    %46 = tpu.reciprocal %45 {approx = true} : vector<256x1xf32> -> vector<256x1xf32>
    %47 = vector.broadcast %46 : vector<256x1xf32> to vector<256x256xf32>
    %48 = arith.mulf %43, %47 : vector<256x256xf32>
    %cst_19 = arith.constant dense<0.000000e+00> : vector<256x8xf32>
    %49 = tpu.matmul %48, %33, %cst_19 {dimension_numbers = #tpu.dot_dimension_numbers<[1], [0], [0], [1], [0, 0, 1, 1], [], []>} : vector<256x256xf32>, vector<256x8xf32>, vector<256x8xf32> -> vector<256x8xf32>
    %c8 = arith.constant 8 : index
    %c0_20 = arith.constant 0 : index
    %50 = vector.load %arg3[%c8, %c0_20] : memref<32x32xf32, #tpu.memory_space<vmem>>, vector<8x32xf32>
    %cst_21 = arith.constant dense<0.000000e+00> : vector<256x32xf32>
    %51 = tpu.matmul %49, %50, %cst_21 {dimension_numbers = #tpu.dot_dimension_numbers<[1], [0], [0], [1], [0, 0, 1, 1], [], []>} : vector<256x8xf32>, vector<8x32xf32>, vector<256x32xf32> -> vector<256x32xf32>
    %52 = arith.addf %30, %51 : vector<256x32xf32>
    %53 = vector.extract_strided_slice %6 {offsets = [0, 16], sizes = [256, 8], strides = [1, 1]} : vector<256x32xf32> to vector<256x8xf32>
    %54 = vector.extract_strided_slice %7 {offsets = [0, 16], sizes = [256, 8], strides = [1, 1]} : vector<256x32xf32> to vector<256x8xf32>
    %55 = vector.extract_strided_slice %8 {offsets = [0, 16], sizes = [256, 8], strides = [1, 1]} : vector<256x32xf32> to vector<256x8xf32>
    %56 = tpu.transpose %54, [1, 0] : vector<256x8xf32> -> vector<8x256xf32>
    %cst_22 = arith.constant dense<0.000000e+00> : vector<256x256xf32>
    %57 = tpu.matmul %53, %56, %cst_22 {dimension_numbers = #tpu.dot_dimension_numbers<[1], [0], [0], [1], [0, 0, 1, 1], [], []>} : vector<256x8xf32>, vector<8x256xf32>, vector<256x256xf32> -> vector<256x256xf32>
    %cst_23 = arith.constant 0.353553385 : f32
    %58 = vector.broadcast %cst_23 : f32 to vector<256x256xf32>
    %59 = arith.mulf %57, %58 : vector<256x256xf32>
    %60 = arith.addf %59, %9 : vector<256x256xf32>
    %cst_24 = arith.constant dense<0xFF800000> : vector<256xf32>
    %61 = vector.multi_reduction <maximumf>, %60, %cst_24 [1] : vector<256x256xf32> to vector<256xf32>
    %62 = vector.shape_cast %61 : vector<256xf32> to vector<256x1xf32>
    %63 = vector.broadcast %62 : vector<256x1xf32> to vector<256x256xf32>
    %64 = arith.subf %60, %63 : vector<256x256xf32>
    %65 = math.exp %64 : vector<256x256xf32>
    %cst_25 = arith.constant dense<0.000000e+00> : vector<256xf32>
    %66 = vector.multi_reduction <add>, %65, %cst_25 [1] : vector<256x256xf32> to vector<256xf32>
    %67 = vector.shape_cast %66 : vector<256xf32> to vector<256x1xf32>
    %68 = tpu.reciprocal %67 {approx = true} : vector<256x1xf32> -> vector<256x1xf32>
    %69 = vector.broadcast %68 : vector<256x1xf32> to vector<256x256xf32>
    %70 = arith.mulf %65, %69 : vector<256x256xf32>
    %cst_26 = arith.constant dense<0.000000e+00> : vector<256x8xf32>
    %71 = tpu.matmul %70, %55, %cst_26 {dimension_numbers = #tpu.dot_dimension_numbers<[1], [0], [0], [1], [0, 0, 1, 1], [], []>} : vector<256x256xf32>, vector<256x8xf32>, vector<256x8xf32> -> vector<256x8xf32>
    %c16 = arith.constant 16 : index
    %c0_27 = arith.constant 0 : index
    %72 = vector.load %arg3[%c16, %c0_27] : memref<32x32xf32, #tpu.memory_space<vmem>>, vector<8x32xf32>
    %cst_28 = arith.constant dense<0.000000e+00> : vector<256x32xf32>
    %73 = tpu.matmul %71, %72, %cst_28 {dimension_numbers = #tpu.dot_dimension_numbers<[1], [0], [0], [1], [0, 0, 1, 1], [], []>} : vector<256x8xf32>, vector<8x32xf32>, vector<256x32xf32> -> vector<256x32xf32>
    %74 = arith.addf %52, %73 : vector<256x32xf32>
    %75 = vector.extract_strided_slice %6 {offsets = [0, 24], sizes = [256, 8], strides = [1, 1]} : vector<256x32xf32> to vector<256x8xf32>
    %76 = vector.extract_strided_slice %7 {offsets = [0, 24], sizes = [256, 8], strides = [1, 1]} : vector<256x32xf32> to vector<256x8xf32>
    %77 = vector.extract_strided_slice %8 {offsets = [0, 24], sizes = [256, 8], strides = [1, 1]} : vector<256x32xf32> to vector<256x8xf32>
    %78 = tpu.transpose %76, [1, 0] : vector<256x8xf32> -> vector<8x256xf32>
    %cst_29 = arith.constant dense<0.000000e+00> : vector<256x256xf32>
    %79 = tpu.matmul %75, %78, %cst_29 {dimension_numbers = #tpu.dot_dimension_numbers<[1], [0], [0], [1], [0, 0, 1, 1], [], []>} : vector<256x8xf32>, vector<8x256xf32>, vector<256x256xf32> -> vector<256x256xf32>
    %cst_30 = arith.constant 0.353553385 : f32
    %80 = vector.broadcast %cst_30 : f32 to vector<256x256xf32>
    %81 = arith.mulf %79, %80 : vector<256x256xf32>
    %82 = arith.addf %81, %9 : vector<256x256xf32>
    %cst_31 = arith.constant dense<0xFF800000> : vector<256xf32>
    %83 = vector.multi_reduction <maximumf>, %82, %cst_31 [1] : vector<256x256xf32> to vector<256xf32>
    %84 = vector.shape_cast %83 : vector<256xf32> to vector<256x1xf32>
    %85 = vector.broadcast %84 : vector<256x1xf32> to vector<256x256xf32>
    %86 = arith.subf %82, %85 : vector<256x256xf32>
    %87 = math.exp %86 : vector<256x256xf32>
    %cst_32 = arith.constant dense<0.000000e+00> : vector<256xf32>
    %88 = vector.multi_reduction <add>, %87, %cst_32 [1] : vector<256x256xf32> to vector<256xf32>
    %89 = vector.shape_cast %88 : vector<256xf32> to vector<256x1xf32>
    %90 = tpu.reciprocal %89 {approx = true} : vector<256x1xf32> -> vector<256x1xf32>
    %91 = vector.broadcast %90 : vector<256x1xf32> to vector<256x256xf32>
    %92 = arith.mulf %87, %91 : vector<256x256xf32>
    %cst_33 = arith.constant dense<0.000000e+00> : vector<256x8xf32>
    %93 = tpu.matmul %92, %77, %cst_33 {dimension_numbers = #tpu.dot_dimension_numbers<[1], [0], [0], [1], [0, 0, 1, 1], [], []>} : vector<256x256xf32>, vector<256x8xf32>, vector<256x8xf32> -> vector<256x8xf32>
    %c24 = arith.constant 24 : index
    %c0_34 = arith.constant 0 : index
    %94 = vector.load %arg3[%c24, %c0_34] : memref<32x32xf32, #tpu.memory_space<vmem>>, vector<8x32xf32>
    %cst_35 = arith.constant dense<0.000000e+00> : vector<256x32xf32>
    %95 = tpu.matmul %93, %94, %cst_35 {dimension_numbers = #tpu.dot_dimension_numbers<[1], [0], [0], [1], [0, 0, 1, 1], [], []>} : vector<256x8xf32>, vector<8x32xf32>, vector<256x32xf32> -> vector<256x32xf32>
    %96 = arith.addf %74, %95 : vector<256x32xf32>
    %c0_36 = arith.constant 0 : index
    %c0_37 = arith.constant 0 : index
    %97 = vector.load %arg5[%c0_36, %c0_37] : memref<1x32xf32, #tpu.memory_space<vmem>>, vector<1x32xf32>
    %98 = vector.broadcast %97 : vector<1x32xf32> to vector<256x32xf32>
    %99 = arith.addf %96, %98 : vector<256x32xf32>
    %100 = arith.addf %99, %0 : vector<256x32xf32>
    %cst_38 = arith.constant dense<0.000000e+00> : vector<256xf32>
    %101 = vector.multi_reduction <add>, %100, %cst_38 [1] : vector<256x32xf32> to vector<256xf32>
    %102 = vector.shape_cast %101 : vector<256xf32> to vector<256x1xf32>
    %cst_39 = arith.constant 3.200000e+01 : f32
    %103 = vector.broadcast %cst_39 : f32 to vector<256x1xf32>
    %104 = arith.divf %102, %103 : vector<256x1xf32>
    %105 = vector.broadcast %104 : vector<256x1xf32> to vector<256x32xf32>
    %106 = arith.subf %100, %105 : vector<256x32xf32>
    %107 = arith.mulf %106, %106 : vector<256x32xf32>
    %cst_40 = arith.constant dense<0.000000e+00> : vector<256xf32>
    %108 = vector.multi_reduction <add>, %107, %cst_40 [1] : vector<256x32xf32> to vector<256xf32>
    %109 = vector.shape_cast %108 : vector<256xf32> to vector<256x1xf32>
    %cst_41 = arith.constant 3.200000e+01 : f32
    %110 = vector.broadcast %cst_41 : f32 to vector<256x1xf32>
    %111 = arith.divf %109, %110 : vector<256x1xf32>
    %112 = vector.broadcast %104 : vector<256x1xf32> to vector<256x32xf32>
    %113 = arith.subf %100, %112 : vector<256x32xf32>
    %cst_42 = arith.constant 9.99999974E-6 : f32
    %114 = vector.broadcast %cst_42 : f32 to vector<256x1xf32>
    %115 = arith.addf %111, %114 : vector<256x1xf32>
    %116 = math.rsqrt %115 : vector<256x1xf32>
    %117 = vector.broadcast %116 : vector<256x1xf32> to vector<256x32xf32>
    %118 = arith.mulf %113, %117 : vector<256x32xf32>
    %c0_43 = arith.constant 0 : index
    %c0_44 = arith.constant 0 : index
    %119 = vector.load %arg6[%c0_43, %c0_44] : memref<1x32xf32, #tpu.memory_space<vmem>>, vector<1x32xf32>
    %120 = vector.broadcast %119 : vector<1x32xf32> to vector<256x32xf32>
    %121 = arith.mulf %118, %120 : vector<256x32xf32>
    %c0_45 = arith.constant 0 : index
    %c0_46 = arith.constant 0 : index
    %122 = vector.load %arg7[%c0_45, %c0_46] : memref<1x32xf32, #tpu.memory_space<vmem>>, vector<1x32xf32>
    %123 = vector.broadcast %122 : vector<1x32xf32> to vector<256x32xf32>
    %124 = arith.addf %121, %123 : vector<256x32xf32>
    %c0_47 = arith.constant 0 : index
    %c0_48 = arith.constant 0 : index
    %c0_49 = arith.constant 0 : index
    %125 = vector.load %arg9[%c0_47, %c0_48, %c0_49] : memref<4x16x256xf32, #tpu.memory_space<vmem>>, vector<1x16x256xf32>
    %126 = vector.shape_cast %125 : vector<1x16x256xf32> to vector<16x256xf32>
    %cst_50 = arith.constant dense<0.000000e+00> : vector<16x32xf32>
    %127 = tpu.matmul %126, %124, %cst_50 {dimension_numbers = #tpu.dot_dimension_numbers<[1], [0], [0], [1], [0, 0, 1, 1], [], []>} : vector<16x256xf32>, vector<256x32xf32>, vector<16x32xf32> -> vector<16x32xf32>
    %c1 = arith.constant 1 : index
    %c0_51 = arith.constant 0 : index
    %c0_52 = arith.constant 0 : index
    %128 = vector.load %arg9[%c1, %c0_51, %c0_52] : memref<4x16x256xf32, #tpu.memory_space<vmem>>, vector<1x16x256xf32>
    %129 = vector.shape_cast %128 : vector<1x16x256xf32> to vector<16x256xf32>
    %cst_53 = arith.constant dense<0.000000e+00> : vector<16x32xf32>
    %130 = tpu.matmul %129, %124, %cst_53 {dimension_numbers = #tpu.dot_dimension_numbers<[1], [0], [0], [1], [0, 0, 1, 1], [], []>} : vector<16x256xf32>, vector<256x32xf32>, vector<16x32xf32> -> vector<16x32xf32>
    %c2 = arith.constant 2 : index
    %c0_54 = arith.constant 0 : index
    %c0_55 = arith.constant 0 : index
    %131 = vector.load %arg9[%c2, %c0_54, %c0_55] : memref<4x16x256xf32, #tpu.memory_space<vmem>>, vector<1x16x256xf32>
    %132 = vector.shape_cast %131 : vector<1x16x256xf32> to vector<16x256xf32>
    %cst_56 = arith.constant dense<0.000000e+00> : vector<16x32xf32>
    %133 = tpu.matmul %132, %124, %cst_56 {dimension_numbers = #tpu.dot_dimension_numbers<[1], [0], [0], [1], [0, 0, 1, 1], [], []>} : vector<16x256xf32>, vector<256x32xf32>, vector<16x32xf32> -> vector<16x32xf32>
    %c3 = arith.constant 3 : index
    %c0_57 = arith.constant 0 : index
    %c0_58 = arith.constant 0 : index
    %134 = vector.load %arg9[%c3, %c0_57, %c0_58] : memref<4x16x256xf32, #tpu.memory_space<vmem>>, vector<1x16x256xf32>
    %135 = vector.shape_cast %134 : vector<1x16x256xf32> to vector<16x256xf32>
    %cst_59 = arith.constant dense<0.000000e+00> : vector<16x32xf32>
    %136 = tpu.matmul %135, %124, %cst_59 {dimension_numbers = #tpu.dot_dimension_numbers<[1], [0], [0], [1], [0, 0, 1, 1], [], []>} : vector<16x256xf32>, vector<256x32xf32>, vector<16x32xf32> -> vector<16x32xf32>
    %137 = tpu.concatenate %127, %130, %133, %136 in 1 : vector<16x32xf32>, vector<16x32xf32>, vector<16x32xf32>, vector<16x32xf32> -> vector<16x128xf32>
    %c0_60 = arith.constant 0 : index
    %c0_61 = arith.constant 0 : index
    %138 = vector.load %arg10[%c0_60, %c0_61] : memref<16x128xf32, #tpu.memory_space<vmem>>, vector<16x128xf32>
    tpu.vector_store %arg10[%c0_60, %c0_61], %137 {strides = array<i32>} : memref<16x128xf32, #tpu.memory_space<vmem>>, vector<16x128xf32>,
    return
  }
  func.func @transform_0(%arg0: i32) -> (i32, i32) {
    %c0_i32 = arith.constant 0 : i32
    %c0_i32_0 = arith.constant 0 : i32
    return %arg0, %c0_i32 : i32, i32
  }
  func.func @transform_1(%arg0: i32) -> (i32, i32) {
    %c0_i32 = arith.constant 0 : i32
    %c0_i32_0 = arith.constant 0 : i32
    %c0_i32_1 = arith.constant 0 : i32
    return %c0_i32, %c0_i32_0 : i32, i32
  }
  func.func @transform_2(%arg0: i32) -> (i32, i32) {
    %c0_i32 = arith.constant 0 : i32
    %c0_i32_0 = arith.constant 0 : i32
    %c0_i32_1 = arith.constant 0 : i32
    return %c0_i32, %c0_i32_0 : i32, i32
  }
  func.func @transform_3(%arg0: i32) -> (i32, i32) {
    %c0_i32 = arith.constant 0 : i32
    %c0_i32_0 = arith.constant 0 : i32
    %c0_i32_1 = arith.constant 0 : i32
    return %c0_i32, %c0_i32_0 : i32, i32
  }
  func.func @transform_4(%arg0: i32) -> (i32, i32) {
    %c0_i32 = arith.constant 0 : i32
    %c0_i32_0 = arith.constant 0 : i32
    %c0_i32_1 = arith.constant 0 : i32
    return %c0_i32, %c0_i32_0 : i32, i32
  }
  func.func @transform_5(%arg0: i32) -> (i32, i32) {
    %c0_i32 = arith.constant 0 : i32
    %c0_i32_0 = arith.constant 0 : i32
    %c0_i32_1 = arith.constant 0 : i32
    return %c0_i32, %c0_i32_0 : i32, i32
  }
  func.func @transform_6(%arg0: i32) -> (i32, i32) {
    %c0_i32 = arith.constant 0 : i32
    %c0_i32_0 = arith.constant 0 : i32
    %c0_i32_1 = arith.constant 0 : i32
    return %c0_i32, %c0_i32_0 : i32, i32
  }
  func.func @transform_7(%arg0: i32) -> (i32, i32) {
    %c0_i32 = arith.constant 0 : i32
    %c0_i32_0 = arith.constant 0 : i32
    %c0_i32_1 = arith.constant 0 : i32
    return %c0_i32, %c0_i32_0 : i32, i32
  }
  func.func @transform_8(%arg0: i32) -> (i32, i32, i32) {
    %c0_i32 = arith.constant 0 : i32
    %c0_i32_0 = arith.constant 0 : i32
    %c0_i32_1 = arith.constant 0 : i32
    %c0_i32_2 = arith.constant 0 : i32
    return %c0_i32, %c0_i32_0, %c0_i32_1 : i32, i32, i32
  }
  func.func @transform_9(%arg0: i32) -> (i32, i32) {
    %c0_i32 = arith.constant 0 : i32
    %c0_i32_0 = arith.constant 0 : i32
    return %arg0, %c0_i32 : i32, i32
  }
}

</mosaic_0001>

<llo_original>
// kernel: tpu_custom_call.1
$region0: #{tpu_custom_call.1}
  #allocation0 [shape = 'u32[]', space=smem, size = 0x4, offset = 0x4, fixed_abs, tag = 'smem constant byte address 0x4 - core index']
  #allocation1 [shape = 'u32[144,128]{1,0:T(1,128)}', space=vmem, size = 0x12000, scoped, tag = 'internal scratch']
  %s0 = inlined_call_operand.vmem [shape: f32[512,32], index: 0, kind: input, shape index: {}]
  %s1 = inlined_call_operand.hbm [shape: f32[32,96], index: 1, kind: input, shape index: {}]
  %s2 = inlined_call_operand.hbm [shape: f32[32,32], index: 2, kind: input, shape index: {}]
  %s3 = inlined_call_operand.vmem [shape: f32[1,96], index: 3, kind: input, shape index: {}]
  %s4 = inlined_call_operand.vmem [shape: f32[1,32], index: 4, kind: input, shape index: {}]
  %s5 = inlined_call_operand.vmem [shape: f32[1,32], index: 5, kind: input, shape index: {}]
  %s6 = inlined_call_operand.vmem [shape: f32[1,32], index: 6, kind: input, shape index: {}]
  %s7 = inlined_call_operand.vmem [shape: f32[256,256], index: 7, kind: input, shape index: {}]
  %s8 = inlined_call_operand.vmem [shape: f32[4,16,256], index: 8, kind: input, shape index: {}]
  %s9 = inlined_call_operand.hbm [shape: f32[32,128], index: 9, kind: output, shape index: {}]
  %s10 = sld [smem:[#allocation0]]
  $region77: #{tpu_custom_call.1} parent=0
    _
  %s12 = ssub.s32 1, %s10
  %s13 = scalar_select 0, %s12, %s10
  $region1: #{tpu_custom_call.1} parent=0
    #allocation2 [shape = 'u8[16384]{0}', space=vmem, size = 0x4000, scoped, tag = 'input window, operand 1, single buffered']
    #allocation3 [shape = 's32[2]{0}', space=sflag, size = 0x8, scoped, tag = 'scoped memory for tpu_custom_call.1']
    #allocation4 [shape = 's32[2]{0}', space=sflag, size = 0x8, scoped, tag = 'scoped memory for tpu_custom_call.1']
    #allocation5 [shape = 'u8[16384]{0}', space=vmem, size = 0x4000, scoped, tag = 'input window, operand 2, single buffered']
    #allocation6 [shape = 's32[1]{0}', space=sflag, size = 0x4, scoped, tag = 'scoped memory for tpu_custom_call.1']
    #allocation7 [shape = 'u8[16384]{0}', space=vmem, size = 0x4000, scoped, tag = 'output window, operand 0']
    %14 = vsyncpa [#allocation3], 0
    %15 = vsyncpa [#allocation6], 0
    %16 = vsyncpa [#allocation4], 0
    %s17 = scalar_lea.sflag [#allocation4], 1
    %18 = vsyncpa %s17, 0
    loop: start=0, step=1, limit=4
    $region2: #{tpu_custom_call.1} parent=1 // loop_pre_header
      _
    $region3: #{tpu_custom_call.1} parent=1 // loop_header
      %s20 = sphi 0, %s24
      %p21 = scmp.ge.s32.totalorder %s20, 4
      %s30 = sphi 0, %s32
      %s33 = sphi 0, %s30
      %s34 = sphi 0, %s33
      %s50 = sphi 0, %s34
      %s54 = sphi 0, %s54
      %s56 = sphi 0, %s54
      %s57 = sphi 0, %s56
      %s71 = sphi 0, %s57
      %s75 = sphi 0, %s75
      %s77 = sphi 0, %s75
      %s78 = sphi 0, %s77
      %s92 = sphi 0, %s78
      %s96 = sphi 0, %s96
      %s98 = sphi 0, %s96
      %s99 = sphi 0, %s98
      %s113 = sphi 0, %s99
      %s117 = sphi 0, %s117
      %s119 = sphi 0, %s117
      %s120 = sphi 0, %s119
      %s134 = sphi 0, %s120
      %s138 = sphi 0, %s138
      %s140 = sphi 0, %s138
      %s141 = sphi 0, %s140
      %s155 = sphi 0, %s141
      %s159 = sphi 0, %s159
      %s161 = sphi 0, %s159
      %s162 = sphi 0, %s161
      %s176 = sphi 0, %s162
      %s180 = sphi 0, %s180
      %s182 = sphi 0, %s180
      %s183 = sphi 0, %s182
      %s197 = sphi 0, %s183
      %s201 = sphi 0, %s201
      %s203 = sphi 0, %s201
      %s204 = sphi 0, %s203
      %s218 = sphi 0, %s204
      %s224 = sphi 0, %s226
      %s227 = sphi 0, %s224
      %s228 = sphi 0, %s227
      %s244 = sphi 0, %s228
    $region4: #{tpu_custom_call.1} parent=1 // loop_header_branch
      %23 = sbr.rel (%p21) target = $region8
    $region5: #{tpu_custom_call.1} parent=1 // loop_body
      %s25 = ssub.s32 %s20, 1
      %s26 = ssub.s32 %s20, 2
      %s27 = sadd.s32 %s20, 1
      %s28 = ssub.s32 %s20, %s27
      %p29 = scmp.eq.s32.totalorder %s28, 0
      %s31 = sadd.s32 %s30, 1
      %s32 = scalar_select %p29, %s30, %s31
      %p35 = pneg %p29
      %p36 = scmp.eq.s32.totalorder %s20, 1
      %p37 = por %p35, %p36
      %p38 = scmp.ne.s32.totalorder %s30, %s33
      %p39 = scmp.eq.s32.totalorder %s20, 0
      %p40 = por %p38, %p39
      %p41 = scmp.ne.s32.totalorder %s30, %s33
      %p42 = scmp.eq.s32.totalorder %s25, 1
      %p43 = por %p41, %p42
      %p44 = scmp.ne.s32.totalorder %s33, %s34
      %p45 = scmp.eq.s32.totalorder %s25, 0
      %p46 = por %p44, %p45
      %p47 = scmp.ne.s32.totalorder %s33, %s34
      %p48 = scmp.eq.s32.totalorder %s26, 1
      %p49 = por %p47, %p48
      %p51 = scmp.ne.s32.totalorder %s34, %s50
      %p52 = scmp.eq.s32.totalorder %s26, 0
      %p53 = por %p51, %p52
      %s55 = sadd.s32 %s54, 1
      %p58 = scmp.eq.s32.totalorder %s20, 1
      %p59 = scmp.ne.s32.totalorder %s54, %s56
      %p60 = scmp.eq.s32.totalorder %s20, 0
      %p61 = por %p59, %p60
      %p62 = scmp.ne.s32.totalorder %s54, %s56
      %p63 = scmp.eq.s32.totalorder %s25, 1
      %p64 = por %p62, %p63
      %p65 = scmp.ne.s32.totalorder %s56, %s57
      %p66 = scmp.eq.s32.totalorder %s25, 0
      %p67 = por %p65, %p66
      %p68 = scmp.ne.s32.totalorder %s56, %s57
      %p69 = scmp.eq.s32.totalorder %s26, 1
      %p70 = por %p68, %p69
      %p72 = scmp.ne.s32.totalorder %s57, %s71
      %p73 = scmp.eq.s32.totalorder %s26, 0
      %p74 = por %p72, %p73
      %s76 = sadd.s32 %s75, 1
      %p79 = scmp.eq.s32.totalorder %s20, 1
      %p80 = scmp.ne.s32.totalorder %s75, %s77
      %p81 = scmp.eq.s32.totalorder %s20, 0
      %p82 = por %p80, %p81
      %p83 = scmp.ne.s32.totalorder %s75, %s77
      %p84 = scmp.eq.s32.totalorder %s25, 1
      %p85 = por %p83, %p84
      %p86 = scmp.ne.s32.totalorder %s77, %s78
      %p87 = scmp.eq.s32.totalorder %s25, 0
      %p88 = por %p86, %p87
      %p89 = scmp.ne.s32.totalorder %s77, %s78
      %p90 = scmp.eq.s32.totalorder %s26, 1
      %p91 = por %p89, %p90
      %p93 = scmp.ne.s32.totalorder %s78, %s92
      %p94 = scmp.eq.s32.totalorder %s26, 0
      %p95 = por %p93, %p94
      %s97 = sadd.s32 %s96, 1
      %p100 = scmp.eq.s32.totalorder %s20, 1
      %p101 = scmp.ne.s32.totalorder %s96, %s98
      %p102 = scmp.eq.s32.totalorder %s20, 0
      %p103 = por %p101, %p102
      %p104 = scmp.ne.s32.totalorder %s96, %s98
      %p105 = scmp.eq.s32.totalorder %s25, 1
      %p106 = por %p104, %p105
      %p107 = scmp.ne.s32.totalorder %s98, %s99
      %p108 = scmp.eq.s32.totalorder %s25, 0
      %p109 = por %p107, %p108
      %p110 = scmp.ne.s32.totalorder %s98, %s99
      %p111 = scmp.eq.s32.totalorder %s26, 1
      %p112 = por %p110, %p111
      %p114 = scmp.ne.s32.totalorder %s99, %s113
      %p115 = scmp.eq.s32.totalorder %s26, 0
      %p116 = por %p114, %p115
      %s118 = sadd.s32 %s117, 1
      %p121 = scmp.eq.s32.totalorder %s20, 1
      %p122 = scmp.ne.s32.totalorder %s117, %s119
      %p123 = scmp.eq.s32.totalorder %s20, 0
      %p124 = por %p122, %p123
      %p125 = scmp.ne.s32.totalorder %s117, %s119
      %p126 = scmp.eq.s32.totalorder %s25, 1
      %p127 = por %p125, %p126
      %p128 = scmp.ne.s32.totalorder %s119, %s120
      %p129 = scmp.eq.s32.totalorder %s25, 0
      %p130 = por %p128, %p129
      %p131 = scmp.ne.s32.totalorder %s119, %s120
      %p132 = scmp.eq.s32.totalorder %s26, 1
      %p133 = por %p131, %p132
      %p135 = scmp.ne.s32.totalorder %s120, %s134
      %p136 = scmp.eq.s32.totalorder %s26, 0
      %p137 = por %p135, %p136
      %s139 = sadd.s32 %s138, 1
      %p142 = scmp.eq.s32.totalorder %s20, 1
      %p143 = scmp.ne.s32.totalorder %s138, %s140
      %p144 = scmp.eq.s32.totalorder %s20, 0
      %p145 = por %p143, %p144
      %p146 = scmp.ne.s32.totalorder %s138, %s140
      %p147 = scmp.eq.s32.totalorder %s25, 1
      %p148 = por %p146, %p147
      %p149 = scmp.ne.s32.totalorder %s140, %s141
      %p150 = scmp.eq.s32.totalorder %s25, 0
      %p151 = por %p149, %p150
      %p152 = scmp.ne.s32.totalorder %s140, %s141
      %p153 = scmp.eq.s32.totalorder %s26, 1
      %p154 = por %p152, %p153
      %p156 = scmp.ne.s32.totalorder %s141, %s155
      %p157 = scmp.eq.s32.totalorder %s26, 0
      %p158 = por %p156, %p157
      %s160 = sadd.s32 %s159, 1
      %p163 = scmp.eq.s32.totalorder %s20, 1
      %p164 = scmp.ne.s32.totalorder %s159, %s161
      %p165 = scmp.eq.s32.totalorder %s20, 0
      %p166 = por %p164, %p165
      %p167 = scmp.ne.s32.totalorder %s159, %s161
      %p168 = scmp.eq.s32.totalorder %s25, 1
      %p169 = por %p167, %p168
      %p170 = scmp.ne.s32.totalorder %s161, %s162
      %p171 = scmp.eq.s32.totalorder %s25, 0
      %p172 = por %p170, %p171
      %p173 = scmp.ne.s32.totalorder %s161, %s162
      %p174 = scmp.eq.s32.totalorder %s26, 1
      %p175 = por %p173, %p174
      %p177 = scmp.ne.s32.totalorder %s162, %s176
      %p178 = scmp.eq.s32.totalorder %s26, 0
      %p179 = por %p177, %p178
      %s181 = sadd.s32 %s180, 1
      %p184 = scmp.eq.s32.totalorder %s20, 1
      %p185 = scmp.ne.s32.totalorder %s180, %s182
      %p186 = scmp.eq.s32.totalorder %s20, 0
      %p187 = por %p185, %p186
      %p188 = scmp.ne.s32.totalorder %s180, %s182
      %p189 = scmp.eq.s32.totalorder %s25, 1
      %p190 = por %p188, %p189
      %p191 = scmp.ne.s32.totalorder %s182, %s183
      %p192 = scmp.eq.s32.totalorder %s25, 0
      %p193 = por %p191, %p192
      %p194 = scmp.ne.s32.totalorder %s182, %s183
      %p195 = scmp.eq.s32.totalorder %s26, 1
      %p196 = por %p194, %p195
      %p198 = scmp.ne.s32.totalorder %s183, %s197
      %p199 = scmp.eq.s32.totalorder %s26, 0
      %p200 = por %p198, %p199
      %s202 = sadd.s32 %s201, 1
      %p205 = scmp.eq.s32.totalorder %s20, 1
      %p206 = scmp.ne.s32.totalorder %s201, %s203
      %p207 = scmp.eq.s32.totalorder %s20, 0
      %p208 = por %p206, %p207
      %p209 = scmp.ne.s32.totalorder %s201, %s203
      %p210 = scmp.eq.s32.totalorder %s25, 1
      %p211 = por %p209, %p210
      %p212 = scmp.ne.s32.totalorder %s203, %s204
      %p213 = scmp.eq.s32.totalorder %s25, 0
      %p214 = por %p212, %p213
      %p215 = scmp.ne.s32.totalorder %s203, %s204
      %p216 = scmp.eq.s32.totalorder %s26, 1
      %p217 = por %p215, %p216
      %p219 = scmp.ne.s32.totalorder %s204, %s218
      %p220 = scmp.eq.s32.totalorder %s26, 0
      %p221 = por %p219, %p220
      %s222 = ssub.s32 %s20, %s27
      %p223 = scmp.eq.s32.totalorder %s222, 0
      %s225 = sadd.s32 %s224, 1
      %s226 = scalar_select %p223, %s224, %s225
      %p229 = pneg %p223
      %p230 = scmp.eq.s32.totalorder %s20, 1
      %p231 = por %p229, %p230
      %p232 = scmp.ne.s32.totalorder %s224, %s227
      %p233 = scmp.eq.s32.totalorder %s20, 0
      %p234 = por %p232, %p233
      %p235 = scmp.ne.s32.totalorder %s224, %s227
      %p236 = scmp.eq.s32.totalorder %s25, 1
      %p237 = por %p235, %p236
      %p238 = scmp.ne.s32.totalorder %s227, %s228
      %p239 = scmp.eq.s32.totalorder %s25, 0
      %p240 = por %p238, %p239
      %p241 = scmp.ne.s32.totalorder %s227, %s228
      %p242 = scmp.eq.s32.totalorder %s26, 1
      %p243 = por %p241, %p242
      %p245 = scmp.ne.s32.totalorder %s228, %s244
      %p246 = scmp.eq.s32.totalorder %s26, 0
      %p247 = por %p245, %p246
      %p248 = scmp.le.s32.totalorder 1, %s20
      %p249 = scmp.lt.s32.totalorder %s20, 3
      %p250 = pnand %p248, %p249
      %p251 = pneg %p250
      // Predicated region
      $region9: #{tpu_custom_call.1} parent=5 // pred_check
        _
      $region10: #{tpu_custom_call.1} parent=5 // pred_check_branch
        %253 = sbr.rel (%p250) target = $region12
      $region11: #{tpu_custom_call.1} parent=5 // pred_region
        %s254 = ssub.s32 %s20, 1
        // Predicated region
        $region13: #{tpu_custom_call.1} parent=11 // pred_check
          %p255 = pneg %p67
        $region14: #{tpu_custom_call.1} parent=11 // pred_check_branch
          %257 = sbr.rel (%p255) target = $region16
        $region15: #{tpu_custom_call.1} parent=11 // pred_region
          %s259 = ssub.s32 512, 512
          %260 = vsyncadd [#allocation3], %s259
          %s261 = sshll.u32 [#allocation2], 4
          %s262 = int_to_ptr.vmem [resolvable:$true] %s261
          %267 = dma.hbm_to_vmem [thread:$0]  %s1, 512, %s262, [#allocation3], 128, 128, 8
        $region16: #{tpu_custom_call.1} parent=11 // pred_fallthru
          _
        // Predicated region
        $region17: #{tpu_custom_call.1} parent=11 // pred_check
          %p268 = pneg %p88
        $region18: #{tpu_custom_call.1} parent=11 // pred_check_branch
          %270 = sbr.rel (%p268) target = $region20
        $region19: #{tpu_custom_call.1} parent=11 // pred_region
          %s272 = ssub.s32 512, 512
          %273 = vsyncadd [#allocation6], %s272
          %s274 = sshll.u32 [#allocation5], 4
          %s275 = int_to_ptr.vmem [resolvable:$true] %s274
          %280 = dma.hbm_to_vmem [thread:$0]  %s2, 512, %s275, [#allocation6], 128, 128, 8
        $region20: #{tpu_custom_call.1} parent=11 // pred_fallthru
          _
        // Predicated region
        $region21: #{tpu_custom_call.1} parent=11 // pred_check
          %p281 = pneg %p109
        $region22: #{tpu_custom_call.1} parent=11 // pred_check_branch
          %283 = sbr.rel (%p281) target = $region24
        $region23: #{tpu_custom_call.1} parent=11 // pred_region
          _
        $region24: #{tpu_custom_call.1} parent=11 // pred_fallthru
          _
        // Predicated region
        $region25: #{tpu_custom_call.1} parent=11 // pred_check
          %p284 = pneg %p130
        $region26: #{tpu_custom_call.1} parent=11 // pred_check_branch
          %286 = sbr.rel (%p284) target = $region28
        $region27: #{tpu_custom_call.1} parent=11 // pred_region
          _
        $region28: #{tpu_custom_call.1} parent=11 // pred_fallthru
          _
        // Predicated region
        $region29: #{tpu_custom_call.1} parent=11 // pred_check
          %p287 = pneg %p151
        $region30: #{tpu_custom_call.1} parent=11 // pred_check_branch
          %289 = sbr.rel (%p287) target = $region32
        $region31: #{tpu_custom_call.1} parent=11 // pred_region
          _
        $region32: #{tpu_custom_call.1} parent=11 // pred_fallthru
          _
        // Predicated region
        $region33: #{tpu_custom_call.1} parent=11 // pred_check
          %p290 = pneg %p172
        $region34: #{tpu_custom_call.1} parent=11 // pred_check_branch
          %292 = sbr.rel (%p290) target = $region36
        $region35: #{tpu_custom_call.1} parent=11 // pred_region
          _
        $region36: #{tpu_custom_call.1} parent=11 // pred_fallthru
          _
        // Predicated region
        $region37: #{tpu_custom_call.1} parent=11 // pred_check
          %p293 = pneg %p193
        $region38: #{tpu_custom_call.1} parent=11 // pred_check_branch
          %295 = sbr.rel (%p293) target = $region40
        $region39: #{tpu_custom_call.1} parent=11 // pred_region
          _
        $region40: #{tpu_custom_call.1} parent=11 // pred_fallthru
          _
        // Predicated region
        $region41: #{tpu_custom_call.1} parent=11 // pred_check
          %p296 = pneg %p214
        $region42: #{tpu_custom_call.1} parent=11 // pred_check_branch
          %298 = sbr.rel (%p296) target = $region44
        $region43: #{tpu_custom_call.1} parent=11 // pred_region
          _
        $region44: #{tpu_custom_call.1} parent=11 // pred_fallthru
          _
      $region12: #{tpu_custom_call.1} parent=5 // pred_fallthru
        _
      %p299 = scmp.lt.s32.totalorder %s20, 2
      // Predicated region
      $region45: #{tpu_custom_call.1} parent=5 // pred_check
        %p300 = pneg %p299
      $region46: #{tpu_custom_call.1} parent=5 // pred_check_branch
        %302 = sbr.rel (%p300) target = $region48
      $region47: #{tpu_custom_call.1} parent=5 // pred_region
        // Predicated region
        $region49: #{tpu_custom_call.1} parent=47 // pred_check
          %p303 = pneg %p40
        $region50: #{tpu_custom_call.1} parent=47 // pred_check_branch
          %305 = sbr.rel (%p303) target = $region52
        $region51: #{tpu_custom_call.1} parent=47 // pred_region
          %s306 = smul.u32 32, %s20
          %p307 = scmp.lt.s32.totalorder %s306, 63
          %s308 = scalar_select %p307, %s306, 63
          %s309 = smul.addr %s308, 8
          %s310 = scalar_lea.vmem %s0, %s309
          %s311 = smul.u32 32, %s20
        $region52: #{tpu_custom_call.1} parent=47 // pred_fallthru
          _
      $region48: #{tpu_custom_call.1} parent=5 // pred_fallthru
        _
      %p312 = scmp.le.s32.totalorder 1, %s20
      %p313 = scmp.lt.s32.totalorder %s20, 3
      %p314 = pnand %p312, %p313
      %p315 = pneg %p314
      // Predicated region
      $region53: #{tpu_custom_call.1} parent=5 // pred_check
        _
      $region54: #{tpu_custom_call.1} parent=5 // pred_check_branch
        %317 = sbr.rel (%p314) target = $region56
      $region55: #{tpu_custom_call.1} parent=5 // pred_region
        %s318 = ssub.s32 %s20, 1
        // Predicated region
        $region57: #{tpu_custom_call.1} parent=55 // pred_check
          %p319 = pneg %p67
        $region58: #{tpu_custom_call.1} parent=55 // pred_check_branch
          %321 = sbr.rel (%p319) target = $region60
        $region59: #{tpu_custom_call.1} parent=55 // pred_region
          %322 = dma.done [#allocation3], 512
        $region60: #{tpu_custom_call.1} parent=55 // pred_fallthru
          _
        // Predicated region
        $region61: #{tpu_custom_call.1} parent=55 // pred_check
          %p323 = pneg %p88
        $region62: #{tpu_custom_call.1} parent=55 // pred_check_branch
          %325 = sbr.rel (%p323) target = $region64
        $region63: #{tpu_custom_call.1} parent=55 // pred_region
          %326 = dma.done [#allocation6], 512
        $region64: #{tpu_custom_call.1} parent=55 // pred_fallthru
          _
        %s327 = smul.u32 32, %s25
        %p328 = scmp.lt.s32.totalorder %s327, 63
        %s329 = scalar_select %p328, %s327, 63
        %s330 = smul.addr %s329, 8
        %s331 = scalar_lea.vmem %s0, %s330
        %p332 = pneg %p46
        %p333 = pneg %p43
        %p334 = pneg %p67
        %p335 = pneg %p64
        %p336 = pneg %p88
        %p337 = pneg %p85
        %p338 = pneg %p109
        %p339 = pneg %p106
        %p340 = pneg %p130
        %p341 = pneg %p127
        %p342 = pneg %p151
        %p343 = pneg %p148
        %p344 = pneg %p172
        %p345 = pneg %p169
        %p346 = pneg %p193
        %p347 = pneg %p190
        %p348 = pneg %p214
        %p349 = pneg %p211
        %p350 = pneg %p240
        %p351 = pneg %p237
        %s352 = sand.u32 %s227, 1
        %s353 = scalar_lea.sflag [#allocation4], %s352
        %s354 = sand.u32 %s227, 1
        %s355 = smul.addr %s354, 16
        %s356 = scalar_lea.vmem [#allocation7], %s355
        %s357 = smul.u32 32, %s25
        %p358 = scmp.lt.s32.totalorder %s357, 63
        %s359 = scalar_select %p358, %s357, 63
        %s360 = smul.addr %s359, 8
        %s361 = scalar_lea.vmem %s0, %s360
        %s362 = smul.u32 32, %s25
        %s363 = smul.u32 2, %s25
        %v364 = vld [vmem:[%s361] sm:$0xff]
        %v365 = vld [vmem:[%s361 + $0x8] sm:$0xff]
        %v366 = vld [vmem:[%s361 + $0x10] sm:$0xff]
        %v367 = vld [vmem:[%s361 + $0x18] sm:$0xff]
        %v368 = vld [vmem:[%s361 + $0x20] sm:$0xff]
        %v369 = vld [vmem:[%s361 + $0x28] sm:$0xff]
        %v370 = vld [vmem:[%s361 + $0x30] sm:$0xff]
        %v371 = vld [vmem:[%s361 + $0x38] sm:$0xff]
        %v372 = vld [vmem:[%s361 + $0x40] sm:$0xff]
        %v373 = vld [vmem:[%s361 + $0x48] sm:$0xff]
        %v374 = vld [vmem:[%s361 + $0x50] sm:$0xff]
        %v375 = vld [vmem:[%s361 + $0x58] sm:$0xff]
        %v376 = vld [vmem:[%s361 + $0x60] sm:$0xff]
        %v377 = vld [vmem:[%s361 + $0x68] sm:$0xff]
        %v378 = vld [vmem:[%s361 + $0x70] sm:$0xff]
        %v379 = vld [vmem:[%s361 + $0x78] sm:$0xff]
        %v380 = vld [vmem:[%s361 + $0x80] sm:$0xff]
        %v381 = vld [vmem:[%s361 + $0x88] sm:$0xff]
        %v382 = vld [vmem:[%s361 + $0x90] sm:$0xff]
        %v383 = vld [vmem:[%s361 + $0x98] sm:$0xff]
        %v384 = vld [vmem:[%s361 + $0xa0] sm:$0xff]
        %v385 = vld [vmem:[%s361 + $0xa8] sm:$0xff]
        %v386 = vld [vmem:[%s361 + $0xb0] sm:$0xff]
        %v387 = vld [vmem:[%s361 + $0xb8] sm:$0xff]
        %v388 = vld [vmem:[%s361 + $0xc0] sm:$0xff]
        %v389 = vld [vmem:[%s361 + $0xc8] sm:$0xff]
        %v390 = vld [vmem:[%s361 + $0xd0] sm:$0xff]
        %v391 = vld [vmem:[%s361 + $0xd8] sm:$0xff]
        %v392 = vld [vmem:[%s361 + $0xe0] sm:$0xff]
        %v393 = vld [vmem:[%s361 + $0xe8] sm:$0xff]
        %v394 = vld [vmem:[%s361 + $0xf0] sm:$0xff]
        %v395 = vld [vmem:[%s361 + $0xf8] sm:$0xff]
        %v396 = vld [vmem:[#allocation2] sm:$0xff]
        %v397 = vld [vmem:[#allocation2 + $0x8] sm:$0xff]
        %v398 = vld [vmem:[#allocation2 + $0x10] sm:$0xff]
        %v399 = vld [vmem:[#allocation2 + $0x18] sm:$0xff]
        %v400 = vld [vmem:[%s3] sm:$0x1]
        %v402 = vlaneseq
        %v403 = vshrl.u32 %v402, 7
        %v404 = vsub.s32 0, %v403
        %v405 = vrot.slane %v400, %v404
        %vm407 = vcmask 261120
        %v409 = vsel %vm407, %v364, 0
        %v412 = vsel %vm407, %v365, 0
        %v415 = vsel %vm407, %v366, 0
        %v418 = vsel %vm407, %v367, 0
        %v421 = vsel %vm407, %v368, 0
        %v424 = vsel %vm407, %v369, 0
        %v427 = vsel %vm407, %v370, 0
        %v430 = vsel %vm407, %v371, 0
        %v433 = vsel %vm407, %v372, 0
        %v436 = vsel %vm407, %v373, 0
        %v439 = vsel %vm407, %v374, 0
        %v442 = vsel %vm407, %v375, 0
        %v445 = vsel %vm407, %v376, 0
        %v448 = vsel %vm407, %v377, 0
        %v451 = vsel %vm407, %v378, 0
        %v454 = vsel %vm407, %v379, 0
        %v457 = vsel %vm407, %v380, 0
        %v460 = vsel %vm407, %v381, 0
        %v463 = vsel %vm407, %v382, 0
        %v466 = vsel %vm407, %v383, 0
        %v469 = vsel %vm407, %v384, 0
        %v472 = vsel %vm407, %v385, 0
        %v475 = vsel %vm407, %v386, 0
        %v478 = vsel %vm407, %v387, 0
        %v481 = vsel %vm407, %v388, 0
        %v484 = vsel %vm407, %v389, 0
        %v487 = vsel %vm407, %v390, 0
        %v490 = vsel %vm407, %v391, 0
        %v493 = vsel %vm407, %v392, 0
        %v496 = vsel %vm407, %v393, 0
        %v499 = vsel %vm407, %v394, 0
        %v502 = vsel %vm407, %v395, 0
        %504 = vmatprep.subr.mxu0 0.0
        %505 = vmatpush1.msra.mxu0 %v396
        %506 = vmatprep.subr.mxu0 0.0
        %507 = vmatpush1.msra.mxu0 %v397
        %508 = vmatprep.subr.mxu0 0.0
        %509 = vmatpush1.msra.mxu0 %v398
        %510 = vmatprep.subr.mxu0 0.0
        %511 = vmatpush1.msra.mxu0 %v399
        %512 = vmatprep.subr.mxu0 0.0
        %513 = vmatpush1.msra.mxu0 0.0
        %514 = vmatprep.subr.mxu0 0.0
        %515 = vmatpush1.msra.mxu0 0.0
        %516 = vmatprep.subr.mxu0 0.0
        %517 = vmatpush1.msra.mxu0 0.0
        %518 = vmatprep.subr.mxu0 0.0
        %519 = vmatpush1.msra.mxu0 0.0
        %520 = vmatprep.subr.mxu0 0.0
        %521 = vmatpush1.msra.mxu0 0.0
        %522 = vmatprep.subr.mxu0 0.0
        %523 = vmatpush1.msra.mxu0 0.0
        %524 = vmatprep.subr.mxu0 0.0
        %525 = vmatpush1.msra.mxu0 0.0
        %526 = vmatprep.subr.mxu0 0.0
        %527 = vmatpush1.msra.mxu0 0.0
        %528 = vmatprep.subr.mxu0 0.0
        %529 = vmatpush1.msra.mxu0 0.0
        %530 = vmatprep.subr.mxu0 0.0
        %531 = vmatpush1.msra.mxu0 0.0
        %532 = vmatprep.subr.mxu0 0.0
        %533 = vmatpush1.msra.mxu0 0.0
        %534 = vmatprep.subr.mxu0 0.0
        %535 = vmatpush1.msra.mxu0 0.0
        %536 = vmatprep.subr.mxu0 0.0
        %537 = vmatpush1.msra.mxu0 0.0
        %538 = vmatprep.subr.mxu0 0.0
        %539 = vmatpush1.msra.mxu0 0.0
        %540 = vmatprep.subr.mxu0 0.0
        %541 = vmatpush1.msra.mxu0 0.0
        %542 = vmatprep.subr.mxu0 0.0
        %543 = vmatpush1.msra.mxu0 0.0
        %544 = vmatprep.subr.mxu0 0.0
        %545 = vmatpush1.msra.mxu0 0.0
        %546 = vmatprep.subr.mxu0 0.0
        %547 = vmatpush1.msra.mxu0 0.0
        %548 = vmatprep.subr.mxu0 0.0
        %549 = vmatpush1.msra.mxu0 0.0
        %550 = vmatprep.subr.mxu0 0.0
        %551 = vmatpush1.msra.mxu0 0.0
        %552 = vmatprep.subr.mxu0 0.0
        %553 = vmatpush1.msra.mxu0 0.0
        %554 = vmatprep.subr.mxu0 0.0
        %555 = vmatpush1.msra.mxu0 0.0
        %556 = vmatprep.subr.mxu0 0.0
        %557 = vmatpush1.msra.mxu0 0.0
        %558 = vmatprep.subr.mxu0 0.0
        %559 = vmatpush1.msra.mxu0 0.0
        %560 = vmatprep.subr.mxu0 0.0
        %561 = vmatpush1.msra.mxu0 0.0
        %562 = vmatprep.subr.mxu0 0.0
        %563 = vmatpush1.msra.mxu0 0.0
        %564 = vmatprep.subr.mxu0 0.0
        %565 = vmatpush1.msra.mxu0 0.0
        %566 = vmatprep.subr.mxu0 0.0
        %567 = vmatpush1.msra.mxu0 0.0
        %568 = vmatprep.mubr.f32.mxu0 0.0
        %569 = vmatmul.mubr.f32.gmra.mrb[0].mxu0 %v409
        %v570 = vpop.f32.mrb[0].mxu0
        %v571 = vadd.f32 %v405, %v570
        %v572 = vpop.f32.mrb[0].mxu0
        %573 = vmatprep.mubr.f32.mxu0 0.0
        %574 = vmatmul.mubr.f32.gmra.mrb[0].mxu0 %v412
        %v575 = vpop.f32.mrb[0].mxu0
        %v576 = vadd.f32 %v405, %v575
        %v577 = vpop.f32.mrb[0].mxu0
        %578 = vmatprep.mubr.f32.mxu0 0.0
        %579 = vmatmul.mubr.f32.gmra.mrb[0].mxu0 %v415
        %v580 = vpop.f32.mrb[0].mxu0
        %v581 = vadd.f32 %v405, %v580
        %v582 = vpop.f32.mrb[0].mxu0
        %583 = vmatprep.mubr.f32.mxu0 0.0
        %584 = vmatmul.mubr.f32.gmra.mrb[0].mxu0 %v418
        %v585 = vpop.f32.mrb[0].mxu0
        %v586 = vadd.f32 %v405, %v585
        %v587 = vpop.f32.mrb[0].mxu0
        %588 = vmatprep.mubr.f32.mxu0 0.0
        %589 = vmatmul.mubr.f32.gmra.mrb[0].mxu0 %v421
        %v590 = vpop.f32.mrb[0].mxu0
        %v591 = vadd.f32 %v405, %v590
        %v592 = vpop.f32.mrb[0].mxu0
        %593 = vmatprep.mubr.f32.mxu0 0.0
        %594 = vmatmul.mubr.f32.gmra.mrb[0].mxu0 %v424
        %v595 = vpop.f32.mrb[0].mxu0
        %v596 = vadd.f32 %v405, %v595
        %v597 = vpop.f32.mrb[0].mxu0
        %598 = vmatprep.mubr.f32.mxu0 0.0
        %599 = vmatmul.mubr.f32.gmra.mrb[0].mxu0 %v427
        %v600 = vpop.f32.mrb[0].mxu0
        %v601 = vadd.f32 %v405, %v600
        %v602 = vpop.f32.mrb[0].mxu0
        %603 = vmatprep.mubr.f32.mxu0 0.0
        %604 = vmatmul.mubr.f32.gmra.mrb[0].mxu0 %v430
        %v605 = vpop.f32.mrb[0].mxu0
        %v606 = vadd.f32 %v405, %v605
        %v607 = vpop.f32.mrb[0].mxu0
        %608 = vmatprep.mubr.f32.mxu0 0.0
        %609 = vmatmul.mubr.f32.gmra.mrb[0].mxu0 %v433
        %v610 = vpop.f32.mrb[0].mxu0
        %v611 = vadd.f32 %v405, %v610
        %v612 = vpop.f32.mrb[0].mxu0
        %613 = vmatprep.mubr.f32.mxu0 0.0
        %614 = vmatmul.mubr.f32.gmra.mrb[0].mxu0 %v436
        %v615 = vpop.f32.mrb[0].mxu0
        %v616 = vadd.f32 %v405, %v615
        %v617 = vpop.f32.mrb[0].mxu0
        %618 = vmatprep.mubr.f32.mxu0 0.0
        %619 = vmatmul.mubr.f32.gmra.mrb[0].mxu0 %v439
        %v620 = vpop.f32.mrb[0].mxu0
        %v621 = vadd.f32 %v405, %v620
        %v622 = vpop.f32.mrb[0].mxu0
        %623 = vmatprep.mubr.f32.mxu0 0.0
        %624 = vmatmul.mubr.f32.gmra.mrb[0].mxu0 %v442
        %v625 = vpop.f32.mrb[0].mxu0
        %v626 = vadd.f32 %v405, %v625
        %v627 = vpop.f32.mrb[0].mxu0
        %628 = vmatprep.mubr.f32.mxu0 0.0
        %629 = vmatmul.mubr.f32.gmra.mrb[0].mxu0 %v445
        %v630 = vpop.f32.mrb[0].mxu0
        %v631 = vadd.f32 %v405, %v630
        %v632 = vpop.f32.mrb[0].mxu0
        %633 = vmatprep.mubr.f32.mxu0 0.0
        %634 = vmatmul.mubr.f32.gmra.mrb[0].mxu0 %v448
        %v635 = vpop.f32.mrb[0].mxu0
        %v636 = vadd.f32 %v405, %v635
        %v637 = vpop.f32.mrb[0].mxu0
        %638 = vmatprep.mubr.f32.mxu0 0.0
        %639 = vmatmul.mubr.f32.gmra.mrb[0].mxu0 %v451
        %v640 = vpop.f32.mrb[0].mxu0
        %v641 = vadd.f32 %v405, %v640
        %v642 = vpop.f32.mrb[0].mxu0
        %643 = vmatprep.mubr.f32.mxu0 0.0
        %644 = vmatmul.mubr.f32.gmra.mrb[0].mxu0 %v454
        %v645 = vpop.f32.mrb[0].mxu0
        %v646 = vadd.f32 %v405, %v645
        %v647 = vpop.f32.mrb[0].mxu0
        %648 = vmatprep.mubr.f32.mxu0 0.0
        %649 = vmatmul.mubr.f32.gmra.mrb[0].mxu0 %v457
        %v650 = vpop.f32.mrb[0].mxu0
        %v651 = vadd.f32 %v405, %v650
        %v652 = vpop.f32.mrb[0].mxu0
        %653 = vmatprep.mubr.f32.mxu0 0.0
        %654 = vmatmul.mubr.f32.gmra.mrb[0].mxu0 %v460
        %v655 = vpop.f32.mrb[0].mxu0
        %v656 = vadd.f32 %v405, %v655
        %v657 = vpop.f32.mrb[0].mxu0
        %658 = vmatprep.mubr.f32.mxu0 0.0
        %659 = vmatmul.mubr.f32.gmra.mrb[0].mxu0 %v463
        %v660 = vpop.f32.mrb[0].mxu0
        %v661 = vadd.f32 %v405, %v660
        %v662 = vpop.f32.mrb[0].mxu0
        %663 = vmatprep.mubr.f32.mxu0 0.0
        %664 = vmatmul.mubr.f32.gmra.mrb[0].mxu0 %v466
        %v665 = vpop.f32.mrb[0].mxu0
        %v666 = vadd.f32 %v405, %v665
        %v667 = vpop.f32.mrb[0].mxu0
        %668 = vmatprep.mubr.f32.mxu0 0.0
        %669 = vmatmul.mubr.f32.gmra.mrb[0].mxu0 %v469
        %v670 = vpop.f32.mrb[0].mxu0
        %v671 = vadd.f32 %v405, %v670
        %v672 = vpop.f32.mrb[0].mxu0
        %673 = vmatprep.mubr.f32.mxu0 0.0
        %674 = vmatmul.mubr.f32.gmra.mrb[0].mxu0 %v472
        %v675 = vpop.f32.mrb[0].mxu0
        %v676 = vadd.f32 %v405, %v675
        %v677 = vpop.f32.mrb[0].mxu0
        %678 = vmatprep.mubr.f32.mxu0 0.0
        %679 = vmatmul.mubr.f32.gmra.mrb[0].mxu0 %v475
        %v680 = vpop.f32.mrb[0].mxu0
        %v681 = vadd.f32 %v405, %v680
        %v682 = vpop.f32.mrb[0].mxu0
        %683 = vmatprep.mubr.f32.mxu0 0.0
        %684 = vmatmul.mubr.f32.gmra.mrb[0].mxu0 %v478
        %v685 = vpop.f32.mrb[0].mxu0
        %v686 = vadd.f32 %v405, %v685
        %v687 = vpop.f32.mrb[0].mxu0
        %688 = vmatprep.mubr.f32.mxu0 0.0
        %689 = vmatmul.mubr.f32.gmra.mrb[0].mxu0 %v481
        %v690 = vpop.f32.mrb[0].mxu0
        %v691 = vadd.f32 %v405, %v690
        %v692 = vpop.f32.mrb[0].mxu0
        %693 = vmatprep.mubr.f32.mxu0 0.0
        %694 = vmatmul.mubr.f32.gmra.mrb[0].mxu0 %v484
        %v695 = vpop.f32.mrb[0].mxu0
        %v696 = vadd.f32 %v405, %v695
        %v697 = vpop.f32.mrb[0].mxu0
        %698 = vmatprep.mubr.f32.mxu0 0.0
        %699 = vmatmul.mubr.f32.gmra.mrb[0].mxu0 %v487
        %v700 = vpop.f32.mrb[0].mxu0
        %v701 = vadd.f32 %v405, %v700
        %v702 = vpop.f32.mrb[0].mxu0
        %703 = vmatprep.mubr.f32.mxu0 0.0
        %704 = vmatmul.mubr.f32.gmra.mrb[0].mxu0 %v490
        %v705 = vpop.f32.mrb[0].mxu0
        %v706 = vadd.f32 %v405, %v705
        %v707 = vpop.f32.mrb[0].mxu0
        %708 = vmatprep.mubr.f32.mxu0 0.0
        %709 = vmatmul.mubr.f32.gmra.mrb[0].mxu0 %v493
        %v710 = vpop.f32.mrb[0].mxu0
        %v711 = vadd.f32 %v405, %v710
        %v712 = vpop.f32.mrb[0].mxu0
        %713 = vmatprep.mubr.f32.mxu0 0.0
        %714 = vmatmul.mubr.f32.gmra.mrb[0].mxu0 %v496
        %v715 = vpop.f32.mrb[0].mxu0
        %v716 = vadd.f32 %v405, %v715
        %v717 = vpop.f32.mrb[0].mxu0
        %718 = vmatprep.mubr.f32.mxu0 0.0
        %719 = vmatmul.mubr.f32.gmra.mrb[0].mxu0 %v499
        %v720 = vpop.f32.mrb[0].mxu0
        %v721 = vadd.f32 %v405, %v720
        %v722 = vpop.f32.mrb[0].mxu0
        %723 = vmatprep.mubr.f32.mxu0 0.0
        %724 = vmatmul.mubr.f32.gmra.mrb[0].mxu0 %v502
        %v725 = vpop.f32.mrb[0].mxu0
        %v726 = vadd.f32 %v405, %v725
        %v727 = vpop.f32.mrb[0].mxu0
        %728 = vdwg.mxu0
        %v729 = vld [vmem:[%s7] sm:$0xff]
        %v730 = vld [vmem:[%s7 + $0x8] sm:$0xff]
        %v731 = vld [vmem:[%s7 + $0x10] sm:$0xff]
        %v732 = vld [vmem:[%s7 + $0x18] sm:$0xff]
        %v733 = vld [vmem:[%s7 + $0x20] sm:$0xff]
        %v734 = vld [vmem:[%s7 + $0x28] sm:$0xff]
        %v735 = vld [vmem:[%s7 + $0x30] sm:$0xff]
        %v736 = vld [vmem:[%s7 + $0x38] sm:$0xff]
        %v737 = vld [vmem:[%s7 + $0x40] sm:$0xff]
        %v738 = vld [vmem:[%s7 + $0x48] sm:$0xff]
        %v739 = vld [vmem:[%s7 + $0x50] sm:$0xff]
        %v740 = vld [vmem:[%s7 + $0x58] sm:$0xff]
        %v741 = vld [vmem:[%s7 + $0x60] sm:$0xff]
        %v742 = vld [vmem:[%s7 + $0x68] sm:$0xff]
        %v743 = vld [vmem:[%s7 + $0x70] sm:$0xff]
        %v744 = vld [vmem:[%s7 + $0x78] sm:$0xff]
        %v745 = vld [vmem:[%s7 + $0x80] sm:$0xff]
        %v746 = vld [vmem:[%s7 + $0x88] sm:$0xff]
        %v747 = vld [vmem:[%s7 + $0x90] sm:$0xff]
        %v748 = vld [vmem:[%s7 + $0x98] sm:$0xff]
        %v749 = vld [vmem:[%s7 + $0xa0] sm:$0xff]
        %v750 = vld [vmem:[%s7 + $0xa8] sm:$0xff]
        %v751 = vld [vmem:[%s7 + $0xb0] sm:$0xff]
        %v752 = vld [vmem:[%s7 + $0xb8] sm:$0xff]
        %v753 = vld [vmem:[%s7 + $0xc0] sm:$0xff]
        %v754 = vld [vmem:[%s7 + $0xc8] sm:$0xff]
        %v755 = vld [vmem:[%s7 + $0xd0] sm:$0xff]
        %v756 = vld [vmem:[%s7 + $0xd8] sm:$0xff]
        %v757 = vld [vmem:[%s7 + $0xe0] sm:$0xff]
        %v758 = vld [vmem:[%s7 + $0xe8] sm:$0xff]
        %v759 = vld [vmem:[%s7 + $0xf0] sm:$0xff]
        %v760 = vld [vmem:[%s7 + $0xf8] sm:$0xff]
        %v761 = vld [vmem:[%s7 + $0x100] sm:$0xff]
        %v762 = vld [vmem:[%s7 + $0x108] sm:$0xff]
        %v763 = vld [vmem:[%s7 + $0x110] sm:$0xff]
        %v764 = vld [vmem:[%s7 + $0x118] sm:$0xff]
        %v765 = vld [vmem:[%s7 + $0x120] sm:$0xff]
        %v766 = vld [vmem:[%s7 + $0x128] sm:$0xff]
        %v767 = vld [vmem:[%s7 + $0x130] sm:$0xff]
        %v768 = vld [vmem:[%s7 + $0x138] sm:$0xff]
        %v769 = vld [vmem:[%s7 + $0x140] sm:$0xff]
        %v770 = vld [vmem:[%s7 + $0x148] sm:$0xff]
        %v771 = vld [vmem:[%s7 + $0x150] sm:$0xff]
        %v772 = vld [vmem:[%s7 + $0x158] sm:$0xff]
        %v773 = vld [vmem:[%s7 + $0x160] sm:$0xff]
        %v774 = vld [vmem:[%s7 + $0x168] sm:$0xff]
        %v775 = vld [vmem:[%s7 + $0x170] sm:$0xff]
        %v776 = vld [vmem:[%s7 + $0x178] sm:$0xff]
        %v777 = vld [vmem:[%s7 + $0x180] sm:$0xff]
        %v778 = vld [vmem:[%s7 + $0x188] sm:$0xff]
        %v779 = vld [vmem:[%s7 + $0x190] sm:$0xff]
        %v780 = vld [vmem:[%s7 + $0x198] sm:$0xff]
        %v781 = vld [vmem:[%s7 + $0x1a0] sm:$0xff]
        %v782 = vld [vmem:[%s7 + $0x1a8] sm:$0xff]
        %v783 = vld [vmem:[%s7 + $0x1b0] sm:$0xff]
        %v784 = vld [vmem:[%s7 + $0x1b8] sm:$0xff]
        %v785 = vld [vmem:[%s7 + $0x1c0] sm:$0xff]
        %v786 = vld [vmem:[%s7 + $0x1c8] sm:$0xff]
        %v787 = vld [vmem:[%s7 + $0x1d0] sm:$0xff]
        %v788 = vld [vmem:[%s7 + $0x1d8] sm:$0xff]
        %v789 = vld [vmem:[%s7 + $0x1e0] sm:$0xff]
        %v790 = vld [vmem:[%s7 + $0x1e8] sm:$0xff]
        %v791 = vld [vmem:[%s7 + $0x1f0] sm:$0xff]
        %v792 = vld [vmem:[%s7 + $0x1f8] sm:$0xff]
        %825 = vrot.lane.b32.xlu0 %v571, 96
        %v826 = vpop.permute.xlu0 %825
        %827 = vrot.lane.b32.xlu0 %v576, 96
        %v828 = vpop.permute.xlu0 %827
        %829 = vrot.lane.b32.xlu0 %v581, 96
        %v830 = vpop.permute.xlu0 %829
        %831 = vrot.lane.b32.xlu0 %v586, 96
        %v832 = vpop.permute.xlu0 %831
        %833 = vrot.lane.b32.xlu0 %v591, 96
        %v834 = vpop.permute.xlu0 %833
        %835 = vrot.lane.b32.xlu0 %v596, 96
        %v836 = vpop.permute.xlu0 %835
        %837 = vrot.lane.b32.xlu0 %v601, 96
        %v838 = vpop.permute.xlu0 %837
        %839 = vrot.lane.b32.xlu0 %v606, 96
        %v840 = vpop.permute.xlu0 %839
        %841 = vrot.lane.b32.xlu0 %v611, 96
        %v842 = vpop.permute.xlu0 %841
        %843 = vrot.lane.b32.xlu0 %v616, 96
        %v844 = vpop.permute.xlu0 %843
        %845 = vrot.lane.b32.xlu0 %v621, 96
        %v846 = vpop.permute.xlu0 %845
        %847 = vrot.lane.b32.xlu0 %v626, 96
        %v848 = vpop.permute.xlu0 %847
        %849 = vrot.lane.b32.xlu0 %v631, 96
        %v850 = vpop.permute.xlu0 %849
        %851 = vrot.lane.b32.xlu0 %v636, 96
        %v852 = vpop.permute.xlu0 %851
        %853 = vrot.lane.b32.xlu0 %v641, 96
        %v854 = vpop.permute.xlu0 %853
        %855 = vrot.lane.b32.xlu0 %v646, 96
        %v856 = vpop.permute.xlu0 %855
        %857 = vrot.lane.b32.xlu0 %v651, 96
        %v858 = vpop.permute.xlu0 %857
        %859 = vrot.lane.b32.xlu0 %v656, 96
        %v860 = vpop.permute.xlu0 %859
        %861 = vrot.lane.b32.xlu0 %v661, 96
        %v862 = vpop.permute.xlu0 %861
        %863 = vrot.lane.b32.xlu0 %v666, 96
        %v864 = vpop.permute.xlu0 %863
        %865 = vrot.lane.b32.xlu0 %v671, 96
        %v866 = vpop.permute.xlu0 %865
        %867 = vrot.lane.b32.xlu0 %v676, 96
        %v868 = vpop.permute.xlu0 %867
        %869 = vrot.lane.b32.xlu0 %v681, 96
        %v870 = vpop.permute.xlu0 %869
        %871 = vrot.lane.b32.xlu0 %v686, 96
        %v872 = vpop.permute.xlu0 %871
        %873 = vrot.lane.b32.xlu0 %v691, 96
        %v874 = vpop.permute.xlu0 %873
        %875 = vrot.lane.b32.xlu0 %v696, 96
        %v876 = vpop.permute.xlu0 %875
        %877 = vrot.lane.b32.xlu0 %v701, 96
        %v878 = vpop.permute.xlu0 %877
        %879 = vrot.lane.b32.xlu0 %v706, 96
        %v880 = vpop.permute.xlu0 %879
        %881 = vrot.lane.b32.xlu0 %v711, 96
        %v882 = vpop.permute.xlu0 %881
        %883 = vrot.lane.b32.xlu0 %v716, 96
        %v884 = vpop.permute.xlu0 %883
        %885 = vrot.lane.b32.xlu0 %v721, 96
        %v886 = vpop.permute.xlu0 %885
        %887 = vrot.lane.b32.xlu0 %v726, 96
        %v888 = vpop.permute.xlu0 %887
        %vm889 = vcmask 64512
        %v890 = vsel %vm889, %v571, 0
        %v892 = vsel %vm889, %v576, 0
        %v894 = vsel %vm889, %v581, 0
        %v896 = vsel %vm889, %v586, 0
        %v898 = vsel %vm889, %v591, 0
        %v900 = vsel %vm889, %v596, 0
        %v902 = vsel %vm889, %v601, 0
        %v904 = vsel %vm889, %v606, 0
        %v906 = vsel %vm889, %v611, 0
        %v908 = vsel %vm889, %v616, 0
        %v910 = vsel %vm889, %v621, 0
        %v912 = vsel %vm889, %v626, 0
        %v914 = vsel %vm889, %v631, 0
        %v916 = vsel %vm889, %v636, 0
        %v918 = vsel %vm889, %v641, 0
        %v920 = vsel %vm889, %v646, 0
        %v922 = vsel %vm889, %v651, 0
        %v924 = vsel %vm889, %v656, 0
        %v926 = vsel %vm889, %v661, 0
        %v928 = vsel %vm889, %v666, 0
        %v930 = vsel %vm889, %v671, 0
        %v932 = vsel %vm889, %v676, 0
        %v934 = vsel %vm889, %v681, 0
        %v936 = vsel %vm889, %v686, 0
        %v938 = vsel %vm889, %v691, 0
        %v940 = vsel %vm889, %v696, 0
        %v942 = vsel %vm889, %v701, 0
        %v944 = vsel %vm889, %v706, 0
        %v946 = vsel %vm889, %v711, 0
        %v948 = vsel %vm889, %v716, 0
        %v950 = vsel %vm889, %v721, 0
        %v952 = vsel %vm889, %v726, 0
        %v954 = vsel %vm889, %v826, 0
        %v956 = vsel %vm889, %v828, 0
        %v958 = vsel %vm889, %v830, 0
        %v960 = vsel %vm889, %v832, 0
        %v962 = vsel %vm889, %v834, 0
        %v964 = vsel %vm889, %v836, 0
        %v966 = vsel %vm889, %v838, 0
        %v968 = vsel %vm889, %v840, 0
        %v970 = vsel %vm889, %v842, 0
        %v972 = vsel %vm889, %v844, 0
        %v974 = vsel %vm889, %v846, 0
        %v976 = vsel %vm889, %v848, 0
        %v978 = vsel %vm889, %v850, 0
        %v980 = vsel %vm889, %v852, 0
        %v982 = vsel %vm889, %v854, 0
        %v984 = vsel %vm889, %v856, 0
        %v986 = vsel %vm889, %v858, 0
        %v988 = vsel %vm889, %v860, 0
        %v990 = vsel %vm889, %v862, 0
        %v992 = vsel %vm889, %v864, 0
        %v994 = vsel %vm889, %v866, 0
        %v996 = vsel %vm889, %v868, 0
        %v998 = vsel %vm889, %v870, 0
        %v1000 = vsel %vm889, %v872, 0
        %v1002 = vsel %vm889, %v874, 0
        %v1004 = vsel %vm889, %v876, 0
        %v1006 = vsel %vm889, %v878, 0
        %v1008 = vsel %vm889, %v880, 0
        %v1010 = vsel %vm889, %v882, 0
        %v1012 = vsel %vm889, %v884, 0
        %v1014 = vsel %vm889, %v886, 0
        %v1016 = vsel %vm889, %v888, 0
        %1018 = vmatprep.subr.mxu0 0.0
        %1019 = vmatpush1.xpose.msra.mxu0 %v954
        %1020 = vmatprep.subr.mxu0 0.0
        %1021 = vmatpush1.xpose.msra.mxu0 %v956
        %1022 = vmatprep.subr.mxu0 0.0
        %1023 = vmatpush1.xpose.msra.mxu0 %v958
        %1024 = vmatprep.subr.mxu0 0.0
        %1025 = vmatpush1.xpose.msra.mxu0 %v960
        %1026 = vmatprep.subr.mxu0 0.0
        %1027 = vmatpush1.xpose.msra.mxu0 %v962
        %1028 = vmatprep.subr.mxu0 0.0
        %1029 = vmatpush1.xpose.msra.mxu0 %v964
        %1030 = vmatprep.subr.mxu0 0.0
        %1031 = vmatpush1.xpose.msra.mxu0 %v966
        %1032 = vmatprep.subr.mxu0 0.0
        %1033 = vmatpush1.xpose.msra.mxu0 %v968
        %1034 = vmatprep.subr.mxu0 0.0
        %1035 = vmatpush1.xpose.msra.mxu0 %v970
        %1036 = vmatprep.subr.mxu0 0.0
        %1037 = vmatpush1.xpose.msra.mxu0 %v972
        %1038 = vmatprep.subr.mxu0 0.0
        %1039 = vmatpush1.xpose.msra.mxu0 %v974
        %1040 = vmatprep.subr.mxu0 0.0
        %1041 = vmatpush1.xpose.msra.mxu0 %v976
        %1042 = vmatprep.subr.mxu0 0.0
        %1043 = vmatpush1.xpose.msra.mxu0 %v978
        %1044 = vmatprep.subr.mxu0 0.0
        %1045 = vmatpush1.xpose.msra.mxu0 %v980
        %1046 = vmatprep.subr.mxu0 0.0
        %1047 = vmatpush1.xpose.msra.mxu0 %v982
        %1048 = vmatprep.subr.mxu0 0.0
        %1049 = vmatpush1.xpose.msra.mxu0 %v984
        %1050 = vmatprep.subr.mxu0 0.0
        %1051 = vmatpush1.xpose.msra.mxu0 %v986
        %1052 = vmatprep.subr.mxu0 0.0
        %1053 = vmatpush1.xpose.msra.mxu0 %v988
        %1054 = vmatprep.subr.mxu0 0.0
        %1055 = vmatpush1.xpose.msra.mxu0 %v990
        %1056 = vmatprep.subr.mxu0 0.0
        %1057 = vmatpush1.xpose.msra.mxu0 %v992
        %1058 = vmatprep.subr.mxu0 0.0
        %1059 = vmatpush1.xpose.msra.mxu0 %v994
        %1060 = vmatprep.subr.mxu0 0.0
        %1061 = vmatpush1.xpose.msra.mxu0 %v996
        %1062 = vmatprep.subr.mxu0 0.0
        %1063 = vmatpush1.xpose.msra.mxu0 %v998
        %1064 = vmatprep.subr.mxu0 0.0
        %1065 = vmatpush1.xpose.msra.mxu0 %v1000
        %1066 = vmatprep.subr.mxu0 0.0
        %1067 = vmatpush1.xpose.msra.mxu0 %v1002
        %1068 = vmatprep.subr.mxu0 0.0
        %1069 = vmatpush1.xpose.msra.mxu0 %v1004
        %1070 = vmatprep.subr.mxu0 0.0
        %1071 = vmatpush1.xpose.msra.mxu0 %v1006
        %1072 = vmatprep.subr.mxu0 0.0
        %1073 = vmatpush1.xpose.msra.mxu0 %v1008
        %1074 = vmatprep.subr.mxu0 0.0
        %1075 = vmatpush1.xpose.msra.mxu0 %v1010
        %1076 = vmatprep.subr.mxu0 0.0
        %1077 = vmatpush1.xpose.msra.mxu0 %v1012
        %1078 = vmatprep.subr.mxu0 0.0
        %1079 = vmatpush1.xpose.msra.mxu0 %v1014
        %1080 = vmatprep.subr.mxu0 0.0
        %1081 = vmatpush1.xpose.msra.mxu0 %v1016
        %1082 = vmatprep.mubr.f32.mxu0 0.0
        %1083 = vmatmul.mubr.f32.gmra.mrb[0].mxu0 %v890
        %v1084 = vpop.f32.mrb[0].mxu0
        %v1085 = vadd.f32 0.0, %v1084
        %v1086 = vpop.f32.mrb[0].mxu0
        %v1087 = vadd.f32 0.0, %v1086
        %1088 = vmatprep.mubr.f32.mxu0 0.0
        %1089 = vmatmul.mubr.f32.gmra.mrb[0].mxu0 %v892
        %v1090 = vpop.f32.mrb[0].mxu0
        %v1091 = vadd.f32 0.0, %v1090
        %v1092 = vpop.f32.mrb[0].mxu0
        %v1093 = vadd.f32 0.0, %v1092
        %1094 = vmatprep.mubr.f32.mxu0 0.0
        %1095 = vmatmul.mubr.f32.gmra.mrb[0].mxu0 %v894
        %v1096 = vpop.f32.mrb[0].mxu0
        %v1097 = vadd.f32 0.0, %v1096
        %v1098 = vpop.f32.mrb[0].mxu0
        %v1099 = vadd.f32 0.0, %v1098
        %1100 = vmatprep.mubr.f32.mxu0 0.0
        %1101 = vmatmul.mubr.f32.gmra.mrb[0].mxu0 %v896
        %v1102 = vpop.f32.mrb[0].mxu0
        %v1103 = vadd.f32 0.0, %v1102
        %v1104 = vpop.f32.mrb[0].mxu0
        %v1105 = vadd.f32 0.0, %v1104
        %1106 = vmatprep.mubr.f32.mxu0 0.0
        %1107 = vmatmul.mubr.f32.gmra.mrb[0].mxu0 %v898
        %v1108 = vpop.f32.mrb[0].mxu0
        %v1109 = vadd.f32 0.0, %v1108
        %v1110 = vpop.f32.mrb[0].mxu0
        %v1111 = vadd.f32 0.0, %v1110
        %1112 = vmatprep.mubr.f32.mxu0 0.0
        %1113 = vmatmul.mubr.f32.gmra.mrb[0].mxu0 %v900
        %v1114 = vpop.f32.mrb[0].mxu0
        %v1115 = vadd.f32 0.0, %v1114
        %v1116 = vpop.f32.mrb[0].mxu0
        %v1117 = vadd.f32 0.0, %v1116
        %1118 = vmatprep.mubr.f32.mxu0 0.0
        %1119 = vmatmul.mubr.f32.gmra.mrb[0].mxu0 %v902
        %v1120 = vpop.f32.mrb[0].mxu0
        %v1121 = vadd.f32 0.0, %v1120
        %v1122 = vpop.f32.mrb[0].mxu0
        %v1123 = vadd.f32 0.0, %v1122
        %1124 = vmatprep.mubr.f32.mxu0 0.0
        %1125 = vmatmul.mubr.f32.gmra.mrb[0].mxu0 %v904
        %v1126 = vpop.f32.mrb[0].mxu0
        %v1127 = vadd.f32 0.0, %v1126
        %v1128 = vpop.f32.mrb[0].mxu0
        %v1129 = vadd.f32 0.0, %v1128
        %1130 = vmatprep.mubr.f32.mxu0 0.0
        %1131 = vmatmul.mubr.f32.gmra.mrb[0].mxu0 %v906
        %v1132 = vpop.f32.mrb[0].mxu0
        %v1133 = vadd.f32 0.0, %v1132
        %v1134 = vpop.f32.mrb[0].mxu0
        %v1135 = vadd.f32 0.0, %v1134
        %1136 = vmatprep.mubr.f32.mxu0 0.0
        %1137 = vmatmul.mubr.f32.gmra.mrb[0].mxu0 %v908
        %v1138 = vpop.f32.mrb[0].mxu0
        %v1139 = vadd.f32 0.0, %v1138
        %v1140 = vpop.f32.mrb[0].mxu0
        %v1141 = vadd.f32 0.0, %v1140
        %1142 = vmatprep.mubr.f32.mxu0 0.0
        %1143 = vmatmul.mubr.f32.gmra.mrb[0].mxu0 %v910
        %v1144 = vpop.f32.mrb[0].mxu0
        %v1145 = vadd.f32 0.0, %v1144
        %v1146 = vpop.f32.mrb[0].mxu0
        %v1147 = vadd.f32 0.0, %v1146
        %1148 = vmatprep.mubr.f32.mxu0 0.0
        %1149 = vmatmul.mubr.f32.gmra.mrb[0].mxu0 %v912
        %v1150 = vpop.f32.mrb[0].mxu0
        %v1151 = vadd.f32 0.0, %v1150
        %v1152 = vpop.f32.mrb[0].mxu0
        %v1153 = vadd.f32 0.0, %v1152
        %1154 = vmatprep.mubr.f32.mxu0 0.0
        %1155 = vmatmul.mubr.f32.gmra.mrb[0].mxu0 %v914
        %v1156 = vpop.f32.mrb[0].mxu0
        %v1157 = vadd.f32 0.0, %v1156
        %v1158 = vpop.f32.mrb[0].mxu0
        %v1159 = vadd.f32 0.0, %v1158
        %1160 = vmatprep.mubr.f32.mxu0 0.0
        %1161 = vmatmul.mubr.f32.gmra.mrb[0].mxu0 %v916
        %v1162 = vpop.f32.mrb[0].mxu0
        %v1163 = vadd.f32 0.0, %v1162
        %v1164 = vpop.f32.mrb[0].mxu0
        %v1165 = vadd.f32 0.0, %v1164
        %1166 = vmatprep.mubr.f32.mxu0 0.0
        %1167 = vmatmul.mubr.f32.gmra.mrb[0].mxu0 %v918
        %v1168 = vpop.f32.mrb[0].mxu0
        %v1169 = vadd.f32 0.0, %v1168
        %v1170 = vpop.f32.mrb[0].mxu0
        %v1171 = vadd.f32 0.0, %v1170
        %1172 = vmatprep.mubr.f32.mxu0 0.0
        %1173 = vmatmul.mubr.f32.gmra.mrb[0].mxu0 %v920
        %v1174 = vpop.f32.mrb[0].mxu0
        %v1175 = vadd.f32 0.0, %v1174
        %v1176 = vpop.f32.mrb[0].mxu0
        %v1177 = vadd.f32 0.0, %v1176
        %1178 = vmatprep.mubr.f32.mxu0 0.0
        %1179 = vmatmul.mubr.f32.gmra.mrb[0].mxu0 %v922
        %v1180 = vpop.f32.mrb[0].mxu0
        %v1181 = vadd.f32 0.0, %v1180
        %v1182 = vpop.f32.mrb[0].mxu0
        %v1183 = vadd.f32 0.0, %v1182
        %1184 = vmatprep.mubr.f32.mxu0 0.0
        %1185 = vmatmul.mubr.f32.gmra.mrb[0].mxu0 %v924
        %v1186 = vpop.f32.mrb[0].mxu0
        %v1187 = vadd.f32 0.0, %v1186
        %v1188 = vpop.f32.mrb[0].mxu0
        %v1189 = vadd.f32 0.0, %v1188
        %1190 = vmatprep.mubr.f32.mxu0 0.0
        %1191 = vmatmul.mubr.f32.gmra.mrb[0].mxu0 %v926
        %v1192 = vpop.f32.mrb[0].mxu0
        %v1193 = vadd.f32 0.0, %v1192
        %v1194 = vpop.f32.mrb[0].mxu0
        %v1195 = vadd.f32 0.0, %v1194
        %1196 = vmatprep.mubr.f32.mxu0 0.0
        %1197 = vmatmul.mubr.f32.gmra.mrb[0].mxu0 %v928
        %v1198 = vpop.f32.mrb[0].mxu0
        %v1199 = vadd.f32 0.0, %v1198
        %v1200 = vpop.f32.mrb[0].mxu0
        %v1201 = vadd.f32 0.0, %v1200
        %1202 = vmatprep.mubr.f32.mxu0 0.0
        %1203 = vmatmul.mubr.f32.gmra.mrb[0].mxu0 %v930
        %v1204 = vpop.f32.mrb[0].mxu0
        %v1205 = vadd.f32 0.0, %v1204
        %v1206 = vpop.f32.mrb[0].mxu0
        %v1207 = vadd.f32 0.0, %v1206
        %1208 = vmatprep.mubr.f32.mxu0 0.0
        %1209 = vmatmul.mubr.f32.gmra.mrb[0].mxu0 %v932
        %v1210 = vpop.f32.mrb[0].mxu0
        %v1211 = vadd.f32 0.0, %v1210
        %v1212 = vpop.f32.mrb[0].mxu0
        %v1213 = vadd.f32 0.0, %v1212
        %1214 = vmatprep.mubr.f32.mxu0 0.0
        %1215 = vmatmul.mubr.f32.gmra.mrb[0].mxu0 %v934
        %v1216 = vpop.f32.mrb[0].mxu0
        %v1217 = vadd.f32 0.0, %v1216
        %v1218 = vpop.f32.mrb[0].mxu0
        %v1219 = vadd.f32 0.0, %v1218
        %1220 = vmatprep.mubr.f32.mxu0 0.0
        %1221 = vmatmul.mubr.f32.gmra.mrb[0].mxu0 %v936
        %v1222 = vpop.f32.mrb[0].mxu0
        %v1223 = vadd.f32 0.0, %v1222
        %v1224 = vpop.f32.mrb[0].mxu0
        %v1225 = vadd.f32 0.0, %v1224
        %1226 = vmatprep.mubr.f32.mxu0 0.0
        %1227 = vmatmul.mubr.f32.gmra.mrb[0].mxu0 %v938
        %v1228 = vpop.f32.mrb[0].mxu0
        %v1229 = vadd.f32 0.0, %v1228
        %v1230 = vpop.f32.mrb[0].mxu0
        %v1231 = vadd.f32 0.0, %v1230
        %1232 = vmatprep.mubr.f32.mxu0 0.0
        %1233 = vmatmul.mubr.f32.gmra.mrb[0].mxu0 %v940
        %v1234 = vpop.f32.mrb[0].mxu0
        %v1235 = vadd.f32 0.0, %v1234
        %v1236 = vpop.f32.mrb[0].mxu0
        %v1237 = vadd.f32 0.0, %v1236
        %1238 = vmatprep.mubr.f32.mxu0 0.0
        %1239 = vmatmul.mubr.f32.gmra.mrb[0].mxu0 %v942
        %v1240 = vpop.f32.mrb[0].mxu0
        %v1241 = vadd.f32 0.0, %v1240
        %v1242 = vpop.f32.mrb[0].mxu0
        %v1243 = vadd.f32 0.0, %v1242
        %1244 = vmatprep.mubr.f32.mxu0 0.0
        %1245 = vmatmul.mubr.f32.gmra.mrb[0].mxu0 %v944
        %v1246 = vpop.f32.mrb[0].mxu0
        %v1247 = vadd.f32 0.0, %v1246
        %v1248 = vpop.f32.mrb[0].mxu0
        %v1249 = vadd.f32 0.0, %v1248
        %1250 = vmatprep.mubr.f32.mxu0 0.0
        %1251 = vmatmul.mubr.f32.gmra.mrb[0].mxu0 %v946
        %v1252 = vpop.f32.mrb[0].mxu0
        %v1253 = vadd.f32 0.0, %v1252
        %v1254 = vpop.f32.mrb[0].mxu0
        %v1255 = vadd.f32 0.0, %v1254
        %1256 = vmatprep.mubr.f32.mxu0 0.0
        %1257 = vmatmul.mubr.f32.gmra.mrb[0].mxu0 %v948
        %v1258 = vpop.f32.mrb[0].mxu0
        %v1259 = vadd.f32 0.0, %v1258
        %v1260 = vpop.f32.mrb[0].mxu0
        %v1261 = vadd.f32 0.0, %v1260
        %1262 = vmatprep.mubr.f32.mxu0 0.0
        %1263 = vmatmul.mubr.f32.gmra.mrb[0].mxu0 %v950
        %v1264 = vpop.f32.mrb[0].mxu0
        %v1265 = vadd.f32 0.0, %v1264
        %v1266 = vpop.f32.mrb[0].mxu0
        %v1267 = vadd.f32 0.0, %v1266
        %1268 = vmatprep.mubr.f32.mxu0 0.0
        %1269 = vmatmul.mubr.f32.gmra.mrb[0].mxu0 %v952
        %v1270 = vpop.f32.mrb[0].mxu0
        %v1271 = vadd.f32 0.0, %v1270
        %v1272 = vpop.f32.mrb[0].mxu0
        %v1273 = vadd.f32 0.0, %v1272
        %1274 = vdwg.mxu0
        %v1275 = vmul.f32 %v1085, 0.35355338
        %v1276 = vmul.f32 %v1087, 0.35355338
        %v1277 = vmul.f32 %v1091, 0.35355338
        %v1278 = vmul.f32 %v1093, 0.35355338
        %v1279 = vmul.f32 %v1097, 0.35355338
        %v1280 = vmul.f32 %v1099, 0.35355338
        %v1281 = vmul.f32 %v1103, 0.35355338
        %v1282 = vmul.f32 %v1105, 0.35355338
        %v1283 = vmul.f32 %v1109, 0.35355338
        %v1284 = vmul.f32 %v1111, 0.35355338
        %v1285 = vmul.f32 %v1115, 0.35355338
        %v1286 = vmul.f32 %v1117, 0.35355338
        %v1287 = vmul.f32 %v1121, 0.35355338
        %v1288 = vmul.f32 %v1123, 0.35355338
        %v1289 = vmul.f32 %v1127, 0.35355338
        %v1290 = vmul.f32 %v1129, 0.35355338
        %v1291 = vmul.f32 %v1133, 0.35355338
        %v1292 = vmul.f32 %v1135, 0.35355338
        %v1293 = vmul.f32 %v1139, 0.35355338
        %v1294 = vmul.f32 %v1141, 0.35355338
        %v1295 = vmul.f32 %v1145, 0.35355338
        %v1296 = vmul.f32 %v1147, 0.35355338
        %v1297 = vmul.f32 %v1151, 0.35355338
        %v1298 = vmul.f32 %v1153, 0.35355338
        %v1299 = vmul.f32 %v1157, 0.35355338
        %v1300 = vmul.f32 %v1159, 0.35355338
        %v1301 = vmul.f32 %v1163, 0.35355338
        %v1302 = vmul.f32 %v1165, 0.35355338
        %v1303 = vmul.f32 %v1169, 0.35355338
        %v1304 = vmul.f32 %v1171, 0.35355338
        %v1305 = vmul.f32 %v1175, 0.35355338
        %v1306 = vmul.f32 %v1177, 0.35355338
        %v1307 = vmul.f32 %v1181, 0.35355338
        %v1308 = vmul.f32 %v1183, 0.35355338
        %v1309 = vmul.f32 %v1187, 0.35355338
        %v1310 = vmul.f32 %v1189, 0.35355338
        %v1311 = vmul.f32 %v1193, 0.35355338
        %v1312 = vmul.f32 %v1195, 0.35355338
        %v1313 = vmul.f32 %v1199, 0.35355338
        %v1314 = vmul.f32 %v1201, 0.35355338
        %v1315 = vmul.f32 %v1205, 0.35355338
        %v1316 = vmul.f32 %v1207, 0.35355338
        %v1317 = vmul.f32 %v1211, 0.35355338
        %v1318 = vmul.f32 %v1213, 0.35355338
        %v1319 = vmul.f32 %v1217, 0.35355338
        %v1320 = vmul.f32 %v1219, 0.35355338
        %v1321 = vmul.f32 %v1223, 0.35355338
        %v1322 = vmul.f32 %v1225, 0.35355338
        %v1323 = vmul.f32 %v1229, 0.35355338
        %v1324 = vmul.f32 %v1231, 0.35355338
        %v1325 = vmul.f32 %v1235, 0.35355338
        %v1326 = vmul.f32 %v1237, 0.35355338
        %v1327 = vmul.f32 %v1241, 0.35355338
        %v1328 = vmul.f32 %v1243, 0.35355338
        %v1329 = vmul.f32 %v1247, 0.35355338
        %v1330 = vmul.f32 %v1249, 0.35355338
        %v1331 = vmul.f32 %v1253, 0.35355338
        %v1332 = vmul.f32 %v1255, 0.35355338
        %v1333 = vmul.f32 %v1259, 0.35355338
        %v1334 = vmul.f32 %v1261, 0.35355338
        %v1335 = vmul.f32 %v1265, 0.35355338
        %v1336 = vmul.f32 %v1267, 0.35355338
        %v1337 = vmul.f32 %v1271, 0.35355338
        %v1338 = vmul.f32 %v1273, 0.35355338
        %v1339 = vadd.f32 %v1275, %v729
        %v1340 = vadd.f32 %v1276, %v730
        %v1341 = vadd.f32 %v1277, %v731
        %v1342 = vadd.f32 %v1278, %v732
        %v1343 = vadd.f32 %v1279, %v733
        %v1344 = vadd.f32 %v1280, %v734
        %v1345 = vadd.f32 %v1281, %v735
        %v1346 = vadd.f32 %v1282, %v736
        %v1347 = vadd.f32 %v1283, %v737
        %v1348 = vadd.f32 %v1284, %v738
        %v1349 = vadd.f32 %v1285, %v739
        %v1350 = vadd.f32 %v1286, %v740
        %v1351 = vadd.f32 %v1287, %v741
        %v1352 = vadd.f32 %v1288, %v742
        %v1353 = vadd.f32 %v1289, %v743
        %v1354 = vadd.f32 %v1290, %v744
        %v1355 = vadd.f32 %v1291, %v745
        %v1356 = vadd.f32 %v1292, %v746
        %v1357 = vadd.f32 %v1293, %v747
        %v1358 = vadd.f32 %v1294, %v748
        %v1359 = vadd.f32 %v1295, %v749
        %v1360 = vadd.f32 %v1296, %v750
        %v1361 = vadd.f32 %v1297, %v751
        %v1362 = vadd.f32 %v1298, %v752
        %v1363 = vadd.f32 %v1299, %v753
        %v1364 = vadd.f32 %v1300, %v754
        %v1365 = vadd.f32 %v1301, %v755
        %v1366 = vadd.f32 %v1302, %v756
        %v1367 = vadd.f32 %v1303, %v757
        %v1368 = vadd.f32 %v1304, %v758
        %v1369 = vadd.f32 %v1305, %v759
        %v1370 = vadd.f32 %v1306, %v760
        %v1371 = vadd.f32 %v1307, %v761
        %v1372 = vadd.f32 %v1308, %v762
        %v1373 = vadd.f32 %v1309, %v763
        %v1374 = vadd.f32 %v1310, %v764
        %v1375 = vadd.f32 %v1311, %v765
        %v1376 = vadd.f32 %v1312, %v766
        %v1377 = vadd.f32 %v1313, %v767
        %v1378 = vadd.f32 %v1314, %v768
        %v1379 = vadd.f32 %v1315, %v769
        %v1380 = vadd.f32 %v1316, %v770
        %v1381 = vadd.f32 %v1317, %v771
        %v1382 = vadd.f32 %v1318, %v772
        %v1383 = vadd.f32 %v1319, %v773
        %v1384 = vadd.f32 %v1320, %v774
        %v1385 = vadd.f32 %v1321, %v775
        %v1386 = vadd.f32 %v1322, %v776
        %v1387 = vadd.f32 %v1323, %v777
        %v1388 = vadd.f32 %v1324, %v778
        %v1389 = vadd.f32 %v1325, %v779
        %v1390 = vadd.f32 %v1326, %v780
        %v1391 = vadd.f32 %v1327, %v781
        %v1392 = vadd.f32 %v1328, %v782
        %v1393 = vadd.f32 %v1329, %v783
        %v1394 = vadd.f32 %v1330, %v784
        %v1395 = vadd.f32 %v1331, %v785
        %v1396 = vadd.f32 %v1332, %v786
        %v1397 = vadd.f32 %v1333, %v787
        %v1398 = vadd.f32 %v1334, %v788
        %v1399 = vadd.f32 %v1335, %v789
        %v1400 = vadd.f32 %v1336, %v790
        %v1401 = vadd.f32 %v1337, %v791
        %v1402 = vadd.f32 %v1338, %v792
        %v1403 = vmax.f32 %v1339, %v1340
        %1404 = vmax.xlane.f32.xlu0 %v1403
        %v1405 = vpop.xlane.xlu0 %1404
        %v1406 = vmax.f32 %v1341, %v1342
        %1407 = vmax.xlane.f32.xlu0 %v1406
        %v1408 = vpop.xlane.xlu0 %1407
        %v1409 = vmax.f32 %v1343, %v1344
        %1410 = vmax.xlane.f32.xlu0 %v1409
        %v1411 = vpop.xlane.xlu0 %1410
        %v1412 = vmax.f32 %v1345, %v1346
        %1413 = vmax.xlane.f32.xlu0 %v1412
        %v1414 = vpop.xlane.xlu0 %1413
        %v1415 = vmax.f32 %v1347, %v1348
        %1416 = vmax.xlane.f32.xlu0 %v1415
        %v1417 = vpop.xlane.xlu0 %1416
        %v1418 = vmax.f32 %v1349, %v1350
        %1419 = vmax.xlane.f32.xlu0 %v1418
        %v1420 = vpop.xlane.xlu0 %1419
        %v1421 = vmax.f32 %v1351, %v1352
        %1422 = vmax.xlane.f32.xlu0 %v1421
        %v1423 = vpop.xlane.xlu0 %1422
        %v1424 = vmax.f32 %v1353, %v1354
        %1425 = vmax.xlane.f32.xlu0 %v1424
        %v1426 = vpop.xlane.xlu0 %1425
        %v1427 = vmax.f32 %v1355, %v1356
        %1428 = vmax.xlane.f32.xlu0 %v1427
        %v1429 = vpop.xlane.xlu0 %1428
        %v1430 = vmax.f32 %v1357, %v1358
        %1431 = vmax.xlane.f32.xlu0 %v1430
        %v1432 = vpop.xlane.xlu0 %1431
        %v1433 = vmax.f32 %v1359, %v1360
        %1434 = vmax.xlane.f32.xlu0 %v1433
        %v1435 = vpop.xlane.xlu0 %1434
        %v1436 = vmax.f32 %v1361, %v1362
        %1437 = vmax.xlane.f32.xlu0 %v1436
        %v1438 = vpop.xlane.xlu0 %1437
        %v1439 = vmax.f32 %v1363, %v1364
        %1440 = vmax.xlane.f32.xlu0 %v1439
        %v1441 = vpop.xlane.xlu0 %1440
        %v1442 = vmax.f32 %v1365, %v1366
        %1443 = vmax.xlane.f32.xlu0 %v1442
        %v1444 = vpop.xlane.xlu0 %1443
        %v1445 = vmax.f32 %v1367, %v1368
        %1446 = vmax.xlane.f32.xlu0 %v1445
        %v1447 = vpop.xlane.xlu0 %1446
        %v1448 = vmax.f32 %v1369, %v1370
        %1449 = vmax.xlane.f32.xlu0 %v1448
        %v1450 = vpop.xlane.xlu0 %1449
        %v1451 = vmax.f32 %v1371, %v1372
        %1452 = vmax.xlane.f32.xlu0 %v1451
        %v1453 = vpop.xlane.xlu0 %1452
        %v1454 = vmax.f32 %v1373, %v1374
        %1455 = vmax.xlane.f32.xlu0 %v1454
        %v1456 = vpop.xlane.xlu0 %1455
        %v1457 = vmax.f32 %v1375, %v1376
        %1458 = vmax.xlane.f32.xlu0 %v1457
        %v1459 = vpop.xlane.xlu0 %1458
        %v1460 = vmax.f32 %v1377, %v1378
        %1461 = vmax.xlane.f32.xlu0 %v1460
        %v1462 = vpop.xlane.xlu0 %1461
        %v1463 = vmax.f32 %v1379, %v1380
        %1464 = vmax.xlane.f32.xlu0 %v1463
        %v1465 = vpop.xlane.xlu0 %1464
        %v1466 = vmax.f32 %v1381, %v1382
        %1467 = vmax.xlane.f32.xlu0 %v1466
        %v1468 = vpop.xlane.xlu0 %1467
        %v1469 = vmax.f32 %v1383, %v1384
        %1470 = vmax.xlane.f32.xlu0 %v1469
        %v1471 = vpop.xlane.xlu0 %1470
        %v1472 = vmax.f32 %v1385, %v1386
        %1473 = vmax.xlane.f32.xlu0 %v1472
        %v1474 = vpop.xlane.xlu0 %1473
        %v1475 = vmax.f32 %v1387, %v1388
        %1476 = vmax.xlane.f32.xlu0 %v1475
        %v1477 = vpop.xlane.xlu0 %1476
        %v1478 = vmax.f32 %v1389, %v1390
        %1479 = vmax.xlane.f32.xlu0 %v1478
        %v1480 = vpop.xlane.xlu0 %1479
        %v1481 = vmax.f32 %v1391, %v1392
        %1482 = vmax.xlane.f32.xlu0 %v1481
        %v1483 = vpop.xlane.xlu0 %1482
        %v1484 = vmax.f32 %v1393, %v1394
        %1485 = vmax.xlane.f32.xlu0 %v1484
        %v1486 = vpop.xlane.xlu0 %1485
        %v1487 = vmax.f32 %v1395, %v1396
        %1488 = vmax.xlane.f32.xlu0 %v1487
        %v1489 = vpop.xlane.xlu0 %1488
        %v1490 = vmax.f32 %v1397, %v1398
        %1491 = vmax.xlane.f32.xlu0 %v1490
        %v1492 = vpop.xlane.xlu0 %1491
        %v1493 = vmax.f32 %v1399, %v1400
        %1494 = vmax.xlane.f32.xlu0 %v1493
        %v1495 = vpop.xlane.xlu0 %1494
        %v1496 = vmax.f32 %v1401, %v1402
        %1497 = vmax.xlane.f32.xlu0 %v1496
        %v1498 = vpop.xlane.xlu0 %1497
        %v1499 = vsub.f32 %v1339, %v1405
        %v1500 = vsub.f32 %v1340, %v1405
        %v1501 = vsub.f32 %v1341, %v1408
        %v1502 = vsub.f32 %v1342, %v1408
        %v1503 = vsub.f32 %v1343, %v1411
        %v1504 = vsub.f32 %v1344, %v1411
        %v1505 = vsub.f32 %v1345, %v1414
        %v1506 = vsub.f32 %v1346, %v1414
        %v1507 = vsub.f32 %v1347, %v1417
        %v1508 = vsub.f32 %v1348, %v1417
        %v1509 = vsub.f32 %v1349, %v1420
        %v1510 = vsub.f32 %v1350, %v1420
        %v1511 = vsub.f32 %v1351, %v1423
        %v1512 = vsub.f32 %v1352, %v1423
        %v1513 = vsub.f32 %v1353, %v1426
        %v1514 = vsub.f32 %v1354, %v1426
        %v1515 = vsub.f32 %v1355, %v1429
        %v1516 = vsub.f32 %v1356, %v1429
        %v1517 = vsub.f32 %v1357, %v1432
        %v1518 = vsub.f32 %v1358, %v1432
        %v1519 = vsub.f32 %v1359, %v1435
        %v1520 = vsub.f32 %v1360, %v1435
        %v1521 = vsub.f32 %v1361, %v1438
        %v1522 = vsub.f32 %v1362, %v1438
        %v1523 = vsub.f32 %v1363, %v1441
        %v1524 = vsub.f32 %v1364, %v1441
        %v1525 = vsub.f32 %v1365, %v1444
        %v1526 = vsub.f32 %v1366, %v1444
        %v1527 = vsub.f32 %v1367, %v1447
        %v1528 = vsub.f32 %v1368, %v1447
        %v1529 = vsub.f32 %v1369, %v1450
        %v1530 = vsub.f32 %v1370, %v1450
        %v1531 = vsub.f32 %v1371, %v1453
        %v1532 = vsub.f32 %v1372, %v1453
        %v1533 = vsub.f32 %v1373, %v1456
        %v1534 = vsub.f32 %v1374, %v1456
        %v1535 = vsub.f32 %v1375, %v1459
        %v1536 = vsub.f32 %v1376, %v1459
        %v1537 = vsub.f32 %v1377, %v1462
        %v1538 = vsub.f32 %v1378, %v1462
        %v1539 = vsub.f32 %v1379, %v1465
        %v1540 = vsub.f32 %v1380, %v1465
        %v1541 = vsub.f32 %v1381, %v1468
        %v1542 = vsub.f32 %v1382, %v1468
        %v1543 = vsub.f32 %v1383, %v1471
        %v1544 = vsub.f32 %v1384, %v1471
        %v1545 = vsub.f32 %v1385, %v1474
        %v1546 = vsub.f32 %v1386, %v1474
        %v1547 = vsub.f32 %v1387, %v1477
        %v1548 = vsub.f32 %v1388, %v1477
        %v1549 = vsub.f32 %v1389, %v1480
        %v1550 = vsub.f32 %v1390, %v1480
        %v1551 = vsub.f32 %v1391, %v1483
        %v1552 = vsub.f32 %v1392, %v1483
        %v1553 = vsub.f32 %v1393, %v1486
        %v1554 = vsub.f32 %v1394, %v1486
        %v1555 = vsub.f32 %v1395, %v1489
        %v1556 = vsub.f32 %v1396, %v1489
        %v1557 = vsub.f32 %v1397, %v1492
        %v1558 = vsub.f32 %v1398, %v1492
        %v1559 = vsub.f32 %v1399, %v1495
        %v1560 = vsub.f32 %v1400, %v1495
        %v1561 = vsub.f32 %v1401, %v1498
        %v1562 = vsub.f32 %v1402, %v1498
        %v1563 = vmul.f32 %v1499, 1.442695
        %v1564 = vpow.pop %v1563
        %v1565 = vmul.f32 %v1500, 1.442695
        %v1566 = vpow.pop %v1565
        %v1567 = vmul.f32 %v1501, 1.442695
        %v1568 = vpow.pop %v1567
        %v1569 = vmul.f32 %v1502, 1.442695
        %v1570 = vpow.pop %v1569
        %v1571 = vmul.f32 %v1503, 1.442695
        %v1572 = vpow.pop %v1571
        %v1573 = vmul.f32 %v1504, 1.442695
        %v1574 = vpow.pop %v1573
        %v1575 = vmul.f32 %v1505, 1.442695
        %v1576 = vpow.pop %v1575
        %v1577 = vmul.f32 %v1506, 1.442695
        %v1578 = vpow.pop %v1577
        %v1579 = vmul.f32 %v1507, 1.442695
        %v1580 = vpow.pop %v1579
        %v1581 = vmul.f32 %v1508, 1.442695
        %v1582 = vpow.pop %v1581
        %v1583 = vmul.f32 %v1509, 1.442695
        %v1584 = vpow.pop %v1583
        %v1585 = vmul.f32 %v1510, 1.442695
        %v1586 = vpow.pop %v1585
        %v1587 = vmul.f32 %v1511, 1.442695
        %v1588 = vpow.pop %v1587
        %v1589 = vmul.f32 %v1512, 1.442695
        %v1590 = vpow.pop %v1589
        %v1591 = vmul.f32 %v1513, 1.442695
        %v1592 = vpow.pop %v1591
        %v1593 = vmul.f32 %v1514, 1.442695
        %v1594 = vpow.pop %v1593
        %v1595 = vmul.f32 %v1515, 1.442695
        %v1596 = vpow.pop %v1595
        %v1597 = vmul.f32 %v1516, 1.442695
        %v1598 = vpow.pop %v1597
        %v1599 = vmul.f32 %v1517, 1.442695
        %v1600 = vpow.pop %v1599
        %v1601 = vmul.f32 %v1518, 1.442695
        %v1602 = vpow.pop %v1601
        %v1603 = vmul.f32 %v1519, 1.442695
        %v1604 = vpow.pop %v1603
        %v1605 = vmul.f32 %v1520, 1.442695
        %v1606 = vpow.pop %v1605
        %v1607 = vmul.f32 %v1521, 1.442695
        %v1608 = vpow.pop %v1607
        %v1609 = vmul.f32 %v1522, 1.442695
        %v1610 = vpow.pop %v1609
        %v1611 = vmul.f32 %v1523, 1.442695
        %v1612 = vpow.pop %v1611
        %v1613 = vmul.f32 %v1524, 1.442695
        %v1614 = vpow.pop %v1613
        %v1615 = vmul.f32 %v1525, 1.442695
        %v1616 = vpow.pop %v1615
        %v1617 = vmul.f32 %v1526, 1.442695
        %v1618 = vpow.pop %v1617
        %v1619 = vmul.f32 %v1527, 1.442695
        %v1620 = vpow.pop %v1619
        %v1621 = vmul.f32 %v1528, 1.442695
        %v1622 = vpow.pop %v1621
        %v1623 = vmul.f32 %v1529, 1.442695
        %v1624 = vpow.pop %v1623
        %v1625 = vmul.f32 %v1530, 1.442695
        %v1626 = vpow.pop %v1625
        %v1627 = vmul.f32 %v1531, 1.442695
        %v1628 = vpow.pop %v1627
        %v1629 = vmul.f32 %v1532, 1.442695
        %v1630 = vpow.pop %v1629
        %v1631 = vmul.f32 %v1533, 1.442695
        %v1632 = vpow.pop %v1631
        %v1633 = vmul.f32 %v1534, 1.442695
        %v1634 = vpow.pop %v1633
        %v1635 = vmul.f32 %v1535, 1.442695
        %v1636 = vpow.pop %v1635
        %v1637 = vmul.f32 %v1536, 1.442695
        %v1638 = vpow.pop %v1637
        %v1639 = vmul.f32 %v1537, 1.442695
        %v1640 = vpow.pop %v1639
        %v1641 = vmul.f32 %v1538, 1.442695
        %v1642 = vpow.pop %v1641
        %v1643 = vmul.f32 %v1539, 1.442695
        %v1644 = vpow.pop %v1643
        %v1645 = vmul.f32 %v1540, 1.442695
        %v1646 = vpow.pop %v1645
        %v1647 = vmul.f32 %v1541, 1.442695
        %v1648 = vpow.pop %v1647
        %v1649 = vmul.f32 %v1542, 1.442695
        %v1650 = vpow.pop %v1649
        %v1651 = vmul.f32 %v1543, 1.442695
        %v1652 = vpow.pop %v1651
        %v1653 = vmul.f32 %v1544, 1.442695
        %v1654 = vpow.pop %v1653
        %v1655 = vmul.f32 %v1545, 1.442695
        %v1656 = vpow.pop %v1655
        %v1657 = vmul.f32 %v1546, 1.442695
        %v1658 = vpow.pop %v1657
        %v1659 = vmul.f32 %v1547, 1.442695
        %v1660 = vpow.pop %v1659
        %v1661 = vmul.f32 %v1548, 1.442695
        %v1662 = vpow.pop %v1661
        %v1663 = vmul.f32 %v1549, 1.442695
        %v1664 = vpow.pop %v1663
        %v1665 = vmul.f32 %v1550, 1.442695
        %v1666 = vpow.pop %v1665
        %v1667 = vmul.f32 %v1551, 1.442695
        %v1668 = vpow.pop %v1667
        %v1669 = vmul.f32 %v1552, 1.442695
        %v1670 = vpow.pop %v1669
        %v1671 = vmul.f32 %v1553, 1.442695
        %v1672 = vpow.pop %v1671
        %v1673 = vmul.f32 %v1554, 1.442695
        %v1674 = vpow.pop %v1673
        %v1675 = vmul.f32 %v1555, 1.442695
        %v1676 = vpow.pop %v1675
        %v1677 = vmul.f32 %v1556, 1.442695
        %v1678 = vpow.pop %v1677
        %v1679 = vmul.f32 %v1557, 1.442695
        %v1680 = vpow.pop %v1679
        %v1681 = vmul.f32 %v1558, 1.442695
        %v1682 = vpow.pop %v1681
        %v1683 = vmul.f32 %v1559, 1.442695
        %v1684 = vpow.pop %v1683
        %v1685 = vmul.f32 %v1560, 1.442695
        %v1686 = vpow.pop %v1685
        %v1687 = vmul.f32 %v1561, 1.442695
        %v1688 = vpow.pop %v1687
        %v1689 = vmul.f32 %v1562, 1.442695
        %v1690 = vpow.pop %v1689
        %v1691 = vadd.f32 %v1564, %v1566
        %1692 = vadd.xlane.f32.xlu0 %v1691
        %v1693 = vpop.xlane.xlu0 %1692
        %v1694 = vadd.f32 %v1568, %v1570
        %1695 = vadd.xlane.f32.xlu0 %v1694
        %v1696 = vpop.xlane.xlu0 %1695
        %v1697 = vadd.f32 %v1572, %v1574
        %1698 = vadd.xlane.f32.xlu0 %v1697
        %v1699 = vpop.xlane.xlu0 %1698
        %v1700 = vadd.f32 %v1576, %v1578
        %1701 = vadd.xlane.f32.xlu0 %v1700
        %v1702 = vpop.xlane.xlu0 %1701
        %v1703 = vadd.f32 %v1580, %v1582
        %1704 = vadd.xlane.f32.xlu0 %v1703
        %v1705 = vpop.xlane.xlu0 %1704
        %v1706 = vadd.f32 %v1584, %v1586
        %1707 = vadd.xlane.f32.xlu0 %v1706
        %v1708 = vpop.xlane.xlu0 %1707
        %v1709 = vadd.f32 %v1588, %v1590
        %1710 = vadd.xlane.f32.xlu0 %v1709
        %v1711 = vpop.xlane.xlu0 %1710
        %v1712 = vadd.f32 %v1592, %v1594
        %1713 = vadd.xlane.f32.xlu0 %v1712
        %v1714 = vpop.xlane.xlu0 %1713
        %v1715 = vadd.f32 %v1596, %v1598
        %1716 = vadd.xlane.f32.xlu0 %v1715
        %v1717 = vpop.xlane.xlu0 %1716
        %v1718 = vadd.f32 %v1600, %v1602
        %1719 = vadd.xlane.f32.xlu0 %v1718
        %v1720 = vpop.xlane.xlu0 %1719
        %v1721 = vadd.f32 %v1604, %v1606
        %1722 = vadd.xlane.f32.xlu0 %v1721
        %v1723 = vpop.xlane.xlu0 %1722
        %v1724 = vadd.f32 %v1608, %v1610
        %1725 = vadd.xlane.f32.xlu0 %v1724
        %v1726 = vpop.xlane.xlu0 %1725
        %v1727 = vadd.f32 %v1612, %v1614
        %1728 = vadd.xlane.f32.xlu0 %v1727
        %v1729 = vpop.xlane.xlu0 %1728
        %v1730 = vadd.f32 %v1616, %v1618
        %1731 = vadd.xlane.f32.xlu0 %v1730
        %v1732 = vpop.xlane.xlu0 %1731
        %v1733 = vadd.f32 %v1620, %v1622
        %1734 = vadd.xlane.f32.xlu0 %v1733
        %v1735 = vpop.xlane.xlu0 %1734
        %v1736 = vadd.f32 %v1624, %v1626
        %1737 = vadd.xlane.f32.xlu0 %v1736
        %v1738 = vpop.xlane.xlu0 %1737
        %v1739 = vadd.f32 %v1628, %v1630
        %1740 = vadd.xlane.f32.xlu0 %v1739
        %v1741 = vpop.xlane.xlu0 %1740
        %v1742 = vadd.f32 %v1632, %v1634
        %1743 = vadd.xlane.f32.xlu0 %v1742
        %v1744 = vpop.xlane.xlu0 %1743
        %v1745 = vadd.f32 %v1636, %v1638
        %1746 = vadd.xlane.f32.xlu0 %v1745
        %v1747 = vpop.xlane.xlu0 %1746
        %v1748 = vadd.f32 %v1640, %v1642
        %1749 = vadd.xlane.f32.xlu0 %v1748
        %v1750 = vpop.xlane.xlu0 %1749
        %v1751 = vadd.f32 %v1644, %v1646
        %1752 = vadd.xlane.f32.xlu0 %v1751
        %v1753 = vpop.xlane.xlu0 %1752
        %v1754 = vadd.f32 %v1648, %v1650
        %1755 = vadd.xlane.f32.xlu0 %v1754
        %v1756 = vpop.xlane.xlu0 %1755
        %v1757 = vadd.f32 %v1652, %v1654
        %1758 = vadd.xlane.f32.xlu0 %v1757
        %v1759 = vpop.xlane.xlu0 %1758
        %v1760 = vadd.f32 %v1656, %v1658
        %1761 = vadd.xlane.f32.xlu0 %v1760
        %v1762 = vpop.xlane.xlu0 %1761
        %v1763 = vadd.f32 %v1660, %v1662
        %1764 = vadd.xlane.f32.xlu0 %v1763
        %v1765 = vpop.xlane.xlu0 %1764
        %v1766 = vadd.f32 %v1664, %v1666
        %1767 = vadd.xlane.f32.xlu0 %v1766
        %v1768 = vpop.xlane.xlu0 %1767
        %v1769 = vadd.f32 %v1668, %v1670
        %1770 = vadd.xlane.f32.xlu0 %v1769
        %v1771 = vpop.xlane.xlu0 %1770
        %v1772 = vadd.f32 %v1672, %v1674
        %1773 = vadd.xlane.f32.xlu0 %v1772
        %v1774 = vpop.xlane.xlu0 %1773
        %v1775 = vadd.f32 %v1676, %v1678
        %1776 = vadd.xlane.f32.xlu0 %v1775
        %v1777 = vpop.xlane.xlu0 %1776
        %v1778 = vadd.f32 %v1680, %v1682
        %1779 = vadd.xlane.f32.xlu0 %v1778
        %v1780 = vpop.xlane.xlu0 %1779
        %v1781 = vadd.f32 %v1684, %v1686
        %1782 = vadd.xlane.f32.xlu0 %v1781
        %v1783 = vpop.xlane.xlu0 %1782
        %v1784 = vadd.f32 %v1688, %v1690
        %1785 = vadd.xlane.f32.xlu0 %v1784
        %v1786 = vpop.xlane.xlu0 %1785
        %v1787 = vrcp.pop %v1693
        %v1788 = vrcp.pop %v1696
        %v1789 = vrcp.pop %v1699
        %v1790 = vrcp.pop %v1702
        %v1791 = vrcp.pop %v1705
        %v1792 = vrcp.pop %v1708
        %v1793 = vrcp.pop %v1711
        %v1794 = vrcp.pop %v1714
        %v1795 = vrcp.pop %v1717
        %v1796 = vrcp.pop %v1720
        %v1797 = vrcp.pop %v1723
        %v1798 = vrcp.pop %v1726
        %v1799 = vrcp.pop %v1729
        %v1800 = vrcp.pop %v1732
        %v1801 = vrcp.pop %v1735
        %v1802 = vrcp.pop %v1738
        %v1803 = vrcp.pop %v1741
        %v1804 = vrcp.pop %v1744
        %v1805 = vrcp.pop %v1747
        %v1806 = vrcp.pop %v1750
        %v1807 = vrcp.pop %v1753
        %v1808 = vrcp.pop %v1756
        %v1809 = vrcp.pop %v1759
        %v1810 = vrcp.pop %v1762
        %v1811 = vrcp.pop %v1765
        %v1812 = vrcp.pop %v1768
        %v1813 = vrcp.pop %v1771
        %v1814 = vrcp.pop %v1774
        %v1815 = vrcp.pop %v1777
        %v1816 = vrcp.pop %v1780
        %v1817 = vrcp.pop %v1783
        %v1818 = vrcp.pop %v1786
        %v1819 = vmul.f32 %v1564, %v1787
        %v1820 = vmul.f32 %v1566, %v1787
        %v1821 = vmul.f32 %v1568, %v1788
        %v1822 = vmul.f32 %v1570, %v1788
        %v1823 = vmul.f32 %v1572, %v1789
        %v1824 = vmul.f32 %v1574, %v1789
        %v1825 = vmul.f32 %v1576, %v1790
        %v1826 = vmul.f32 %v1578, %v1790
        %v1827 = vmul.f32 %v1580, %v1791
        %v1828 = vmul.f32 %v1582, %v1791
        %v1829 = vmul.f32 %v1584, %v1792
        %v1830 = vmul.f32 %v1586, %v1792
        %v1831 = vmul.f32 %v1588, %v1793
        %v1832 = vmul.f32 %v1590, %v1793
        %v1833 = vmul.f32 %v1592, %v1794
        %v1834 = vmul.f32 %v1594, %v1794
        %v1835 = vmul.f32 %v1596, %v1795
        %v1836 = vmul.f32 %v1598, %v1795
        %v1837 = vmul.f32 %v1600, %v1796
        %v1838 = vmul.f32 %v1602, %v1796
        %v1839 = vmul.f32 %v1604, %v1797
        %v1840 = vmul.f32 %v1606, %v1797
        %v1841 = vmul.f32 %v1608, %v1798
        %v1842 = vmul.f32 %v1610, %v1798
        %v1843 = vmul.f32 %v1612, %v1799
        %v1844 = vmul.f32 %v1614, %v1799
        %v1845 = vmul.f32 %v1616, %v1800
        %v1846 = vmul.f32 %v1618, %v1800
        %v1847 = vmul.f32 %v1620, %v1801
        %v1848 = vmul.f32 %v1622, %v1801
        %v1849 = vmul.f32 %v1624, %v1802
        %v1850 = vmul.f32 %v1626, %v1802
        %v1851 = vmul.f32 %v1628, %v1803
        %v1852 = vmul.f32 %v1630, %v1803
        %v1853 = vmul.f32 %v1632, %v1804
        %v1854 = vmul.f32 %v1634, %v1804
        %v1855 = vmul.f32 %v1636, %v1805
        %v1856 = vmul.f32 %v1638, %v1805
        %v1857 = vmul.f32 %v1640, %v1806
        %v1858 = vmul.f32 %v1642, %v1806
        %v1859 = vmul.f32 %v1644, %v1807
        %v1860 = vmul.f32 %v1646, %v1807
        %v1861 = vmul.f32 %v1648, %v1808
        %v1862 = vmul.f32 %v1650, %v1808
        %v1863 = vmul.f32 %v1652, %v1809
        %v1864 = vmul.f32 %v1654, %v1809
        %v1865 = vmul.f32 %v1656, %v1810
        %v1866 = vmul.f32 %v1658, %v1810
        %v1867 = vmul.f32 %v1660, %v1811
        %v1868 = vmul.f32 %v1662, %v1811
        %v1869 = vmul.f32 %v1664, %v1812
        %v1870 = vmul.f32 %v1666, %v1812
        %v1871 = vmul.f32 %v1668, %v1813
        %v1872 = vmul.f32 %v1670, %v1813
        %v1873 = vmul.f32 %v1672, %v1814
        %v1874 = vmul.f32 %v1674, %v1814
        %v1875 = vmul.f32 %v1676, %v1815
        %v1876 = vmul.f32 %v1678, %v1815
        %v1877 = vmul.f32 %v1680, %v1816
        %v1878 = vmul.f32 %v1682, %v1816
        %v1879 = vmul.f32 %v1684, %v1817
        %v1880 = vmul.f32 %v1686, %v1817
        %v1881 = vmul.f32 %v1688, %v1818
        %v1882 = vmul.f32 %v1690, %v1818
        %1883 = vrot.lane.b32.xlu0 %v571, 64
        %v1884 = vpop.permute.xlu0 %1883
        %1885 = vrot.lane.b32.xlu0 %v576, 64
        %v1886 = vpop.permute.xlu0 %1885
        %1887 = vrot.lane.b32.xlu0 %v581, 64
        %v1888 = vpop.permute.xlu0 %1887
        %1889 = vrot.lane.b32.xlu0 %v586, 64
        %v1890 = vpop.permute.xlu0 %1889
        %1891 = vrot.lane.b32.xlu0 %v591, 64
        %v1892 = vpop.permute.xlu0 %1891
        %1893 = vrot.lane.b32.xlu0 %v596, 64
        %v1894 = vpop.permute.xlu0 %1893
        %1895 = vrot.lane.b32.xlu0 %v601, 64
        %v1896 = vpop.permute.xlu0 %1895
        %1897 = vrot.lane.b32.xlu0 %v606, 64
        %v1898 = vpop.permute.xlu0 %1897
        %1899 = vrot.lane.b32.xlu0 %v611, 64
        %v1900 = vpop.permute.xlu0 %1899
        %1901 = vrot.lane.b32.xlu0 %v616, 64
        %v1902 = vpop.permute.xlu0 %1901
        %1903 = vrot.lane.b32.xlu0 %v621, 64
        %v1904 = vpop.permute.xlu0 %1903
        %1905 = vrot.lane.b32.xlu0 %v626, 64
        %v1906 = vpop.permute.xlu0 %1905
        %1907 = vrot.lane.b32.xlu0 %v631, 64
        %v1908 = vpop.permute.xlu0 %1907
        %1909 = vrot.lane.b32.xlu0 %v636, 64
        %v1910 = vpop.permute.xlu0 %1909
        %1911 = vrot.lane.b32.xlu0 %v641, 64
        %v1912 = vpop.permute.xlu0 %1911
        %1913 = vrot.lane.b32.xlu0 %v646, 64
        %v1914 = vpop.permute.xlu0 %1913
        %1915 = vrot.lane.b32.xlu0 %v651, 64
        %v1916 = vpop.permute.xlu0 %1915
        %1917 = vrot.lane.b32.xlu0 %v656, 64
        %v1918 = vpop.permute.xlu0 %1917
        %1919 = vrot.lane.b32.xlu0 %v661, 64
        %v1920 = vpop.permute.xlu0 %1919
        %1921 = vrot.lane.b32.xlu0 %v666, 64
        %v1922 = vpop.permute.xlu0 %1921
        %1923 = vrot.lane.b32.xlu0 %v671, 64
        %v1924 = vpop.permute.xlu0 %1923
        %1925 = vrot.lane.b32.xlu0 %v676, 64
        %v1926 = vpop.permute.xlu0 %1925
        %1927 = vrot.lane.b32.xlu0 %v681, 64
        %v1928 = vpop.permute.xlu0 %1927
        %1929 = vrot.lane.b32.xlu0 %v686, 64
        %v1930 = vpop.permute.xlu0 %1929
        %1931 = vrot.lane.b32.xlu0 %v691, 64
        %v1932 = vpop.permute.xlu0 %1931
        %1933 = vrot.lane.b32.xlu0 %v696, 64
        %v1934 = vpop.permute.xlu0 %1933
        %1935 = vrot.lane.b32.xlu0 %v701, 64
        %v1936 = vpop.permute.xlu0 %1935
        %1937 = vrot.lane.b32.xlu0 %v706, 64
        %v1938 = vpop.permute.xlu0 %1937
        %1939 = vrot.lane.b32.xlu0 %v711, 64
        %v1940 = vpop.permute.xlu0 %1939
        %1941 = vrot.lane.b32.xlu0 %v716, 64
        %v1942 = vpop.permute.xlu0 %1941
        %1943 = vrot.lane.b32.xlu0 %v721, 64
        %v1944 = vpop.permute.xlu0 %1943
        %1945 = vrot.lane.b32.xlu0 %v726, 64
        %v1946 = vpop.permute.xlu0 %1945
        %1979 = vmatprep.subr.mxu0 0.0
        %1980 = vmatpush1.msra.mxu0 %v1884
        %1981 = vmatprep.subr.mxu0 0.0
        %1982 = vmatpush1.msra.mxu0 %v1886
        %1983 = vmatprep.subr.mxu0 0.0
        %1984 = vmatpush1.msra.mxu0 %v1888
        %1985 = vmatprep.subr.mxu0 0.0
        %1986 = vmatpush1.msra.mxu0 %v1890
        %1987 = vmatprep.subr.mxu0 0.0
        %1988 = vmatpush1.msra.mxu0 %v1892
        %1989 = vmatprep.subr.mxu0 0.0
        %1990 = vmatpush1.msra.mxu0 %v1894
        %1991 = vmatprep.subr.mxu0 0.0
        %1992 = vmatpush1.msra.mxu0 %v1896
        %1993 = vmatprep.subr.mxu0 0.0
        %1994 = vmatpush1.msra.mxu0 %v1898
        %1995 = vmatprep.subr.mxu0 0.0
        %1996 = vmatpush1.msra.mxu0 %v1900
        %1997 = vmatprep.subr.mxu0 0.0
        %1998 = vmatpush1.msra.mxu0 %v1902
        %1999 = vmatprep.subr.mxu0 0.0
        %2000 = vmatpush1.msra.mxu0 %v1904
        %2001 = vmatprep.subr.mxu0 0.0
        %2002 = vmatpush1.msra.mxu0 %v1906
        %2003 = vmatprep.subr.mxu0 0.0
        %2004 = vmatpush1.msra.mxu0 %v1908
        %2005 = vmatprep.subr.mxu0 0.0
        %2006 = vmatpush1.msra.mxu0 %v1910
        %2007 = vmatprep.subr.mxu0 0.0
        %2008 = vmatpush1.msra.mxu0 %v1912
        %2009 = vmatprep.subr.mxu0 0.0
        %2010 = vmatpush1.msra.mxu0 %v1914
        %2011 = vmatprep.subr.mxu0 0.0
        %2012 = vmatpush1.msra.mxu0 %v1916
        %2013 = vmatprep.subr.mxu0 0.0
        %2014 = vmatpush1.msra.mxu0 %v1918
        %2015 = vmatprep.subr.mxu0 0.0
        %2016 = vmatpush1.msra.mxu0 %v1920
        %2017 = vmatprep.subr.mxu0 0.0
        %2018 = vmatpush1.msra.mxu0 %v1922
        %2019 = vmatprep.subr.mxu0 0.0
        %2020 = vmatpush1.msra.mxu0 %v1924
        %2021 = vmatprep.subr.mxu0 0.0
        %2022 = vmatpush1.msra.mxu0 %v1926
        %2023 = vmatprep.subr.mxu0 0.0
        %2024 = vmatpush1.msra.mxu0 %v1928
        %2025 = vmatprep.subr.mxu0 0.0
        %2026 = vmatpush1.msra.mxu0 %v1930
        %2027 = vmatprep.subr.mxu0 0.0
        %2028 = vmatpush1.msra.mxu0 %v1932
        %2029 = vmatprep.subr.mxu0 0.0
        %2030 = vmatpush1.msra.mxu0 %v1934
        %2031 = vmatprep.subr.mxu0 0.0
        %2032 = vmatpush1.msra.mxu0 %v1936
        %2033 = vmatprep.subr.mxu0 0.0
        %2034 = vmatpush1.msra.mxu0 %v1938
        %2035 = vmatprep.subr.mxu0 0.0
        %2036 = vmatpush1.msra.mxu0 %v1940
        %2037 = vmatprep.subr.mxu0 0.0
        %2038 = vmatpush1.msra.mxu0 %v1942
        %2039 = vmatprep.subr.mxu0 0.0
        %2040 = vmatpush1.msra.mxu0 %v1944
        %2041 = vmatprep.subr.mxu0 0.0
        %2042 = vmatpush1.msra.mxu0 %v1946
        %2043 = vmatprep.mubr.f32.mxu0 %v1820
        %2044 = vmatmul.mubr.f32.gmra.mrb[0].mxu0 %v1819
        %v2045 = vpop.f32.mrb[0].mxu0
        %v2046 = vadd.f32 0.0, %v2045
        %v2047 = vpop.f32.mrb[0].mxu0
        %2048 = vmatprep.mubr.f32.mxu0 %v1822
        %2049 = vmatmul.mubr.f32.gmra.mrb[0].mxu0 %v1821
        %v2050 = vpop.f32.mrb[0].mxu0
        %v2051 = vadd.f32 0.0, %v2050
        %v2052 = vpop.f32.mrb[0].mxu0
        %2053 = vmatprep.mubr.f32.mxu0 %v1824
        %2054 = vmatmul.mubr.f32.gmra.mrb[0].mxu0 %v1823
        %v2055 = vpop.f32.mrb[0].mxu0
        %v2056 = vadd.f32 0.0, %v2055
        %v2057 = vpop.f32.mrb[0].mxu0
        %2058 = vmatprep.mubr.f32.mxu0 %v1826
        %2059 = vmatmul.mubr.f32.gmra.mrb[0].mxu0 %v1825
        %v2060 = vpop.f32.mrb[0].mxu0
        %v2061 = vadd.f32 0.0, %v2060
        %v2062 = vpop.f32.mrb[0].mxu0
        %2063 = vmatprep.mubr.f32.mxu0 %v1828
        %2064 = vmatmul.mubr.f32.gmra.mrb[0].mxu0 %v1827
        %v2065 = vpop.f32.mrb[0].mxu0
        %v2066 = vadd.f32 0.0, %v2065
        %v2067 = vpop.f32.mrb[0].mxu0
        %2068 = vmatprep.mubr.f32.mxu0 %v1830
        %2069 = vmatmul.mubr.f32.gmra.mrb[0].mxu0 %v1829
        %v2070 = vpop.f32.mrb[0].mxu0
        %v2071 = vadd.f32 0.0, %v2070
        %v2072 = vpop.f32.mrb[0].mxu0
        %2073 = vmatprep.mubr.f32.mxu0 %v1832
        %2074 = vmatmul.mubr.f32.gmra.mrb[0].mxu0 %v1831
        %v2075 = vpop.f32.mrb[0].mxu0
        %v2076 = vadd.f32 0.0, %v2075
        %v2077 = vpop.f32.mrb[0].mxu0
        %2078 = vmatprep.mubr.f32.mxu0 %v1834
        %2079 = vmatmul.mubr.f32.gmra.mrb[0].mxu0 %v1833
        %v2080 = vpop.f32.mrb[0].mxu0
        %v2081 = vadd.f32 0.0, %v2080
        %v2082 = vpop.f32.mrb[0].mxu0
        %2083 = vmatprep.mubr.f32.mxu0 %v1836
        %2084 = vmatmul.mubr.f32.gmra.mrb[0].mxu0 %v1835
        %v2085 = vpop.f32.mrb[0].mxu0
        %v2086 = vadd.f32 0.0, %v2085
        %v2087 = vpop.f32.mrb[0].mxu0
        %2088 = vmatprep.mubr.f32.mxu0 %v1838
        %2089 = vmatmul.mubr.f32.gmra.mrb[0].mxu0 %v1837
        %v2090 = vpop.f32.mrb[0].mxu0
        %v2091 = vadd.f32 0.0, %v2090
        %v2092 = vpop.f32.mrb[0].mxu0
        %2093 = vmatprep.mubr.f32.mxu0 %v1840
        %2094 = vmatmul.mubr.f32.gmra.mrb[0].mxu0 %v1839
        %v2095 = vpop.f32.mrb[0].mxu0
        %v2096 = vadd.f32 0.0, %v2095
        %v2097 = vpop.f32.mrb[0].mxu0
        %2098 = vmatprep.mubr.f32.mxu0 %v1842
        %2099 = vmatmul.mubr.f32.gmra.mrb[0].mxu0 %v1841
        %v2100 = vpop.f32.mrb[0].mxu0
        %v2101 = vadd.f32 0.0, %v2100
        %v2102 = vpop.f32.mrb[0].mxu0
        %2103 = vmatprep.mubr.f32.mxu0 %v1844
        %2104 = vmatmul.mubr.f32.gmra.mrb[0].mxu0 %v1843
        %v2105 = vpop.f32.mrb[0].mxu0
        %v2106 = vadd.f32 0.0, %v2105
        %v2107 = vpop.f32.mrb[0].mxu0
        %2108 = vmatprep.mubr.f32.mxu0 %v1846
        %2109 = vmatmul.mubr.f32.gmra.mrb[0].mxu0 %v1845
        %v2110 = vpop.f32.mrb[0].mxu0
        %v2111 = vadd.f32 0.0, %v2110
        %v2112 = vpop.f32.mrb[0].mxu0
        %2113 = vmatprep.mubr.f32.mxu0 %v1848
        %2114 = vmatmul.mubr.f32.gmra.mrb[0].mxu0 %v1847
        %v2115 = vpop.f32.mrb[0].mxu0
        %v2116 = vadd.f32 0.0, %v2115
        %v2117 = vpop.f32.mrb[0].mxu0
        %2118 = vmatprep.mubr.f32.mxu0 %v1850
        %2119 = vmatmul.mubr.f32.gmra.mrb[0].mxu0 %v1849
        %v2120 = vpop.f32.mrb[0].mxu0
        %v2121 = vadd.f32 0.0, %v2120
        %v2122 = vpop.f32.mrb[0].mxu0
        %2123 = vmatprep.mubr.f32.mxu0 %v1852
        %2124 = vmatmul.mubr.f32.gmra.mrb[0].mxu0 %v1851
        %v2125 = vpop.f32.mrb[0].mxu0
        %v2126 = vadd.f32 0.0, %v2125
        %v2127 = vpop.f32.mrb[0].mxu0
        %2128 = vmatprep.mubr.f32.mxu0 %v1854
        %2129 = vmatmul.mubr.f32.gmra.mrb[0].mxu0 %v1853
        %v2130 = vpop.f32.mrb[0].mxu0
        %v2131 = vadd.f32 0.0, %v2130
        %v2132 = vpop.f32.mrb[0].mxu0
        %2133 = vmatprep.mubr.f32.mxu0 %v1856
        %2134 = vmatmul.mubr.f32.gmra.mrb[0].mxu0 %v1855
        %v2135 = vpop.f32.mrb[0].mxu0
        %v2136 = vadd.f32 0.0, %v2135
        %v2137 = vpop.f32.mrb[0].mxu0
        %2138 = vmatprep.mubr.f32.mxu0 %v1858
        %2139 = vmatmul.mubr.f32.gmra.mrb[0].mxu0 %v1857
        %v2140 = vpop.f32.mrb[0].mxu0
        %v2141 = vadd.f32 0.0, %v2140
        %v2142 = vpop.f32.mrb[0].mxu0
        %2143 = vmatprep.mubr.f32.mxu0 %v1860
        %2144 = vmatmul.mubr.f32.gmra.mrb[0].mxu0 %v1859
        %v2145 = vpop.f32.mrb[0].mxu0
        %v2146 = vadd.f32 0.0, %v2145
        %v2147 = vpop.f32.mrb[0].mxu0
        %2148 = vmatprep.mubr.f32.mxu0 %v1862
        %2149 = vmatmul.mubr.f32.gmra.mrb[0].mxu0 %v1861
        %v2150 = vpop.f32.mrb[0].mxu0
        %v2151 = vadd.f32 0.0, %v2150
        %v2152 = vpop.f32.mrb[0].mxu0
        %2153 = vmatprep.mubr.f32.mxu0 %v1864
        %2154 = vmatmul.mubr.f32.gmra.mrb[0].mxu0 %v1863
        %v2155 = vpop.f32.mrb[0].mxu0
        %v2156 = vadd.f32 0.0, %v2155
        %v2157 = vpop.f32.mrb[0].mxu0
        %2158 = vmatprep.mubr.f32.mxu0 %v1866
        %2159 = vmatmul.mubr.f32.gmra.mrb[0].mxu0 %v1865
        %v2160 = vpop.f32.mrb[0].mxu0
        %v2161 = vadd.f32 0.0, %v2160
        %v2162 = vpop.f32.mrb[0].mxu0
        %2163 = vmatprep.mubr.f32.mxu0 %v1868
        %2164 = vmatmul.mubr.f32.gmra.mrb[0].mxu0 %v1867
        %v2165 = vpop.f32.mrb[0].mxu0
        %v2166 = vadd.f32 0.0, %v2165
        %v2167 = vpop.f32.mrb[0].mxu0
        %2168 = vmatprep.mubr.f32.mxu0 %v1870
        %2169 = vmatmul.mubr.f32.gmra.mrb[0].mxu0 %v1869
        %v2170 = vpop.f32.mrb[0].mxu0
        %v2171 = vadd.f32 0.0, %v2170
        %v2172 = vpop.f32.mrb[0].mxu0
        %2173 = vmatprep.mubr.f32.mxu0 %v1872
        %2174 = vmatmul.mubr.f32.gmra.mrb[0].mxu0 %v1871
        %v2175 = vpop.f32.mrb[0].mxu0
        %v2176 = vadd.f32 0.0, %v2175
        %v2177 = vpop.f32.mrb[0].mxu0
        %2178 = vmatprep.mubr.f32.mxu0 %v1874
        %2179 = vmatmul.mubr.f32.gmra.mrb[0].mxu0 %v1873
        %v2180 = vpop.f32.mrb[0].mxu0
        %v2181 = vadd.f32 0.0, %v2180
        %v2182 = vpop.f32.mrb[0].mxu0
        %2183 = vmatprep.mubr.f32.mxu0 %v1876
        %2184 = vmatmul.mubr.f32.gmra.mrb[0].mxu0 %v1875
        %v2185 = vpop.f32.mrb[0].mxu0
        %v2186 = vadd.f32 0.0, %v2185
        %v2187 = vpop.f32.mrb[0].mxu0
        %2188 = vmatprep.mubr.f32.mxu0 %v1878
        %2189 = vmatmul.mubr.f32.gmra.mrb[0].mxu0 %v1877
        %v2190 = vpop.f32.mrb[0].mxu0
        %v2191 = vadd.f32 0.0, %v2190
        %v2192 = vpop.f32.mrb[0].mxu0
        %2193 = vmatprep.mubr.f32.mxu0 %v1880
        %2194 = vmatmul.mubr.f32.gmra.mrb[0].mxu0 %v1879
        %v2195 = vpop.f32.mrb[0].mxu0
        %v2196 = vadd.f32 0.0, %v2195
        %v2197 = vpop.f32.mrb[0].mxu0
        %2198 = vmatprep.mubr.f32.mxu0 %v1882
        %2199 = vmatmul.mubr.f32.gmra.mrb[0].mxu0 %v1881
        %v2200 = vpop.f32.mrb[0].mxu0
        %v2201 = vadd.f32 0.0, %v2200
        %v2202 = vpop.f32.mrb[0].mxu0
        %2203 = vdwg.mxu0
        %v2204 = vld [vmem:[#allocation5] sm:$0xff]
        %2205 = vrot.lane.b32.xlu0 %v571, 120
        %v2206 = vpop.permute.xlu0 %2205
        %2207 = vrot.lane.b32.xlu0 %v576, 120
        %v2208 = vpop.permute.xlu0 %2207
        %2209 = vrot.lane.b32.xlu0 %v581, 120
        %v2210 = vpop.permute.xlu0 %2209
        %2211 = vrot.lane.b32.xlu0 %v586, 120
        %v2212 = vpop.permute.xlu0 %2211
        %2213 = vrot.lane.b32.xlu0 %v591, 120
        %v2214 = vpop.permute.xlu0 %2213
        %2215 = vrot.lane.b32.xlu0 %v596, 120
        %v2216 = vpop.permute.xlu0 %2215
        %2217 = vrot.lane.b32.xlu0 %v601, 120
        %v2218 = vpop.permute.xlu0 %2217
        %2219 = vrot.lane.b32.xlu0 %v606, 120
        %v2220 = vpop.permute.xlu0 %2219
        %2221 = vrot.lane.b32.xlu0 %v611, 120
        %v2222 = vpop.permute.xlu0 %2221
        %2223 = vrot.lane.b32.xlu0 %v616, 120
        %v2224 = vpop.permute.xlu0 %2223
        %2225 = vrot.lane.b32.xlu0 %v621, 120
        %v2226 = vpop.permute.xlu0 %2225
        %2227 = vrot.lane.b32.xlu0 %v626, 120
        %v2228 = vpop.permute.xlu0 %2227
        %2229 = vrot.lane.b32.xlu0 %v631, 120
        %v2230 = vpop.permute.xlu0 %2229
        %2231 = vrot.lane.b32.xlu0 %v636, 120
        %v2232 = vpop.permute.xlu0 %2231
        %2233 = vrot.lane.b32.xlu0 %v641, 120
        %v2234 = vpop.permute.xlu0 %2233
        %2235 = vrot.lane.b32.xlu0 %v646, 120
        %v2236 = vpop.permute.xlu0 %2235
        %2237 = vrot.lane.b32.xlu0 %v651, 120
        %v2238 = vpop.permute.xlu0 %2237
        %2239 = vrot.lane.b32.xlu0 %v656, 120
        %v2240 = vpop.permute.xlu0 %2239
        %2241 = vrot.lane.b32.xlu0 %v661, 120
        %v2242 = vpop.permute.xlu0 %2241
        %2243 = vrot.lane.b32.xlu0 %v666, 120
        %v2244 = vpop.permute.xlu0 %2243
        %2245 = vrot.lane.b32.xlu0 %v671, 120
        %v2246 = vpop.permute.xlu0 %2245
        %2247 = vrot.lane.b32.xlu0 %v676, 120
        %v2248 = vpop.permute.xlu0 %2247
        %2249 = vrot.lane.b32.xlu0 %v681, 120
        %v2250 = vpop.permute.xlu0 %2249
        %2251 = vrot.lane.b32.xlu0 %v686, 120
        %v2252 = vpop.permute.xlu0 %2251
        %2253 = vrot.lane.b32.xlu0 %v691, 120
        %v2254 = vpop.permute.xlu0 %2253
        %2255 = vrot.lane.b32.xlu0 %v696, 120
        %v2256 = vpop.permute.xlu0 %2255
        %2257 = vrot.lane.b32.xlu0 %v701, 120
        %v2258 = vpop.permute.xlu0 %2257
        %2259 = vrot.lane.b32.xlu0 %v706, 120
        %v2260 = vpop.permute.xlu0 %2259
        %2261 = vrot.lane.b32.xlu0 %v711, 120
        %v2262 = vpop.permute.xlu0 %2261
        %2263 = vrot.lane.b32.xlu0 %v716, 120
        %v2264 = vpop.permute.xlu0 %2263
        %2265 = vrot.lane.b32.xlu0 %v721, 120
        %v2266 = vpop.permute.xlu0 %2265
        %2267 = vrot.lane.b32.xlu0 %v726, 120
        %v2268 = vpop.permute.xlu0 %2267
        %2269 = vrot.lane.b32.xlu0 %v571, 88
        %v2270 = vpop.permute.xlu0 %2269
        %2271 = vrot.lane.b32.xlu0 %v576, 88
        %v2272 = vpop.permute.xlu0 %2271
        %2273 = vrot.lane.b32.xlu0 %v581, 88
        %v2274 = vpop.permute.xlu0 %2273
        %2275 = vrot.lane.b32.xlu0 %v586, 88
        %v2276 = vpop.permute.xlu0 %2275
        %2277 = vrot.lane.b32.xlu0 %v591, 88
        %v2278 = vpop.permute.xlu0 %2277
        %2279 = vrot.lane.b32.xlu0 %v596, 88
        %v2280 = vpop.permute.xlu0 %2279
        %2281 = vrot.lane.b32.xlu0 %v601, 88
        %v2282 = vpop.permute.xlu0 %2281
        %2283 = vrot.lane.b32.xlu0 %v606, 88
        %v2284 = vpop.permute.xlu0 %2283
        %2285 = vrot.lane.b32.xlu0 %v611, 88
        %v2286 = vpop.permute.xlu0 %2285
        %2287 = vrot.lane.b32.xlu0 %v616, 88
        %v2288 = vpop.permute.xlu0 %2287
        %2289 = vrot.lane.b32.xlu0 %v621, 88
        %v2290 = vpop.permute.xlu0 %2289
        %2291 = vrot.lane.b32.xlu0 %v626, 88
        %v2292 = vpop.permute.xlu0 %2291
        %2293 = vrot.lane.b32.xlu0 %v631, 88
        %v2294 = vpop.permute.xlu0 %2293
        %2295 = vrot.lane.b32.xlu0 %v636, 88
        %v2296 = vpop.permute.xlu0 %2295
        %2297 = vrot.lane.b32.xlu0 %v641, 88
        %v2298 = vpop.permute.xlu0 %2297
        %2299 = vrot.lane.b32.xlu0 %v646, 88
        %v2300 = vpop.permute.xlu0 %2299
        %2301 = vrot.lane.b32.xlu0 %v651, 88
        %v2302 = vpop.permute.xlu0 %2301
        %2303 = vrot.lane.b32.xlu0 %v656, 88
        %v2304 = vpop.permute.xlu0 %2303
        %2305 = vrot.lane.b32.xlu0 %v661, 88
        %v2306 = vpop.permute.xlu0 %2305
        %2307 = vrot.lane.b32.xlu0 %v666, 88
        %v2308 = vpop.permute.xlu0 %2307
        %2309 = vrot.lane.b32.xlu0 %v671, 88
        %v2310 = vpop.permute.xlu0 %2309
        %2311 = vrot.lane.b32.xlu0 %v676, 88
        %v2312 = vpop.permute.xlu0 %2311
        %2313 = vrot.lane.b32.xlu0 %v681, 88
        %v2314 = vpop.permute.xlu0 %2313
        %2315 = vrot.lane.b32.xlu0 %v686, 88
        %v2316 = vpop.permute.xlu0 %2315
        %2317 = vrot.lane.b32.xlu0 %v691, 88
        %v2318 = vpop.permute.xlu0 %2317
        %2319 = vrot.lane.b32.xlu0 %v696, 88
        %v2320 = vpop.permute.xlu0 %2319
        %2321 = vrot.lane.b32.xlu0 %v701, 88
        %v2322 = vpop.permute.xlu0 %2321
        %2323 = vrot.lane.b32.xlu0 %v706, 88
        %v2324 = vpop.permute.xlu0 %2323
        %2325 = vrot.lane.b32.xlu0 %v711, 88
        %v2326 = vpop.permute.xlu0 %2325
        %2327 = vrot.lane.b32.xlu0 %v716, 88
        %v2328 = vpop.permute.xlu0 %2327
        %2329 = vrot.lane.b32.xlu0 %v721, 88
        %v2330 = vpop.permute.xlu0 %2329
        %2331 = vrot.lane.b32.xlu0 %v726, 88
        %v2332 = vpop.permute.xlu0 %2331
        %v2333 = vsel %vm889, %v2206, 0
        %v2335 = vsel %vm889, %v2208, 0
        %v2337 = vsel %vm889, %v2210, 0
        %v2339 = vsel %vm889, %v2212, 0
        %v2341 = vsel %vm889, %v2214, 0
        %v2343 = vsel %vm889, %v2216, 0
        %v2345 = vsel %vm889, %v2218, 0
        %v2347 = vsel %vm889, %v2220, 0
        %v2349 = vsel %vm889, %v2222, 0
        %v2351 = vsel %vm889, %v2224, 0
        %v2353 = vsel %vm889, %v2226, 0
        %v2355 = vsel %vm889, %v2228, 0
        %v2357 = vsel %vm889, %v2230, 0
        %v2359 = vsel %vm889, %v2232, 0
        %v2361 = vsel %vm889, %v2234, 0
        %v2363 = vsel %vm889, %v2236, 0
        %v2365 = vsel %vm889, %v2238, 0
        %v2367 = vsel %vm889, %v2240, 0
        %v2369 = vsel %vm889, %v2242, 0
        %v2371 = vsel %vm889, %v2244, 0
        %v2373 = vsel %vm889, %v2246, 0
        %v2375 = vsel %vm889, %v2248, 0
        %v2377 = vsel %vm889, %v2250, 0
        %v2379 = vsel %vm889, %v2252, 0
        %v2381 = vsel %vm889, %v2254, 0
        %v2383 = vsel %vm889, %v2256, 0
        %v2385 = vsel %vm889, %v2258, 0
        %v2387 = vsel %vm889, %v2260, 0
        %v2389 = vsel %vm889, %v2262, 0
        %v2391 = vsel %vm889, %v2264, 0
        %v2393 = vsel %vm889, %v2266, 0
        %v2395 = vsel %vm889, %v2268, 0
        %v2397 = vsel %vm889, %v2270, 0
        %v2399 = vsel %vm889, %v2272, 0
        %v2401 = vsel %vm889, %v2274, 0
        %v2403 = vsel %vm889, %v2276, 0
        %v2405 = vsel %vm889, %v2278, 0
        %v2407 = vsel %vm889, %v2280, 0
        %v2409 = vsel %vm889, %v2282, 0
        %v2411 = vsel %vm889, %v2284, 0
        %v2413 = vsel %vm889, %v2286, 0
        %v2415 = vsel %vm889, %v2288, 0
        %v2417 = vsel %vm889, %v2290, 0
        %v2419 = vsel %vm889, %v2292, 0
        %v2421 = vsel %vm889, %v2294, 0
        %v2423 = vsel %vm889, %v2296, 0
        %v2425 = vsel %vm889, %v2298, 0
        %v2427 = vsel %vm889, %v2300, 0
        %v2429 = vsel %vm889, %v2302, 0
        %v2431 = vsel %vm889, %v2304, 0
        %v2433 = vsel %vm889, %v2306, 0
        %v2435 = vsel %vm889, %v2308, 0
        %v2437 = vsel %vm889, %v2310, 0
        %v2439 = vsel %vm889, %v2312, 0
        %v2441 = vsel %vm889, %v2314, 0
        %v2443 = vsel %vm889, %v2316, 0
        %v2445 = vsel %vm889, %v2318, 0
        %v2447 = vsel %vm889, %v2320, 0
        %v2449 = vsel %vm889, %v2322, 0
        %v2451 = vsel %vm889, %v2324, 0
        %v2453 = vsel %vm889, %v2326, 0
        %v2455 = vsel %vm889, %v2328, 0
        %v2457 = vsel %vm889, %v2330, 0
        %v2459 = vsel %vm889, %v2332, 0
        %2461 = vmatprep.subr.mxu0 0.0
        %2462 = vmatpush1.xpose.msra.mxu0 %v2397
        %2463 = vmatprep.subr.mxu0 0.0
        %2464 = vmatpush1.xpose.msra.mxu0 %v2399
        %2465 = vmatprep.subr.mxu0 0.0
        %2466 = vmatpush1.xpose.msra.mxu0 %v2401
        %2467 = vmatprep.subr.mxu0 0.0
        %2468 = vmatpush1.xpose.msra.mxu0 %v2403
        %2469 = vmatprep.subr.mxu0 0.0
        %2470 = vmatpush1.xpose.msra.mxu0 %v2405
        %2471 = vmatprep.subr.mxu0 0.0
        %2472 = vmatpush1.xpose.msra.mxu0 %v2407
        %2473 = vmatprep.subr.mxu0 0.0
        %2474 = vmatpush1.xpose.msra.mxu0 %v2409
        %2475 = vmatprep.subr.mxu0 0.0
        %2476 = vmatpush1.xpose.msra.mxu0 %v2411
        %2477 = vmatprep.subr.mxu0 0.0
        %2478 = vmatpush1.xpose.msra.mxu0 %v2413
        %2479 = vmatprep.subr.mxu0 0.0
        %2480 = vmatpush1.xpose.msra.mxu0 %v2415
        %2481 = vmatprep.subr.mxu0 0.0
        %2482 = vmatpush1.xpose.msra.mxu0 %v2417
        %2483 = vmatprep.subr.mxu0 0.0
        %2484 = vmatpush1.xpose.msra.mxu0 %v2419
        %2485 = vmatprep.subr.mxu0 0.0
        %2486 = vmatpush1.xpose.msra.mxu0 %v2421
        %2487 = vmatprep.subr.mxu0 0.0
        %2488 = vmatpush1.xpose.msra.mxu0 %v2423
        %2489 = vmatprep.subr.mxu0 0.0
        %2490 = vmatpush1.xpose.msra.mxu0 %v2425
        %2491 = vmatprep.subr.mxu0 0.0
        %2492 = vmatpush1.xpose.msra.mxu0 %v2427
        %2493 = vmatprep.subr.mxu0 0.0
        %2494 = vmatpush1.xpose.msra.mxu0 %v2429
        %2495 = vmatprep.subr.mxu0 0.0
        %2496 = vmatpush1.xpose.msra.mxu0 %v2431
        %2497 = vmatprep.subr.mxu0 0.0
        %2498 = vmatpush1.xpose.msra.mxu0 %v2433
        %2499 = vmatprep.subr.mxu0 0.0
        %2500 = vmatpush1.xpose.msra.mxu0 %v2435
        %2501 = vmatprep.subr.mxu0 0.0
        %2502 = vmatpush1.xpose.msra.mxu0 %v2437
        %2503 = vmatprep.subr.mxu0 0.0
        %2504 = vmatpush1.xpose.msra.mxu0 %v2439
        %2505 = vmatprep.subr.mxu0 0.0
        %2506 = vmatpush1.xpose.msra.mxu0 %v2441
        %2507 = vmatprep.subr.mxu0 0.0
        %2508 = vmatpush1.xpose.msra.mxu0 %v2443
        %2509 = vmatprep.subr.mxu0 0.0
        %2510 = vmatpush1.xpose.msra.mxu0 %v2445
        %2511 = vmatprep.subr.mxu0 0.0
        %2512 = vmatpush1.xpose.msra.mxu0 %v2447
        %2513 = vmatprep.subr.mxu0 0.0
        %2514 = vmatpush1.xpose.msra.mxu0 %v2449
        %2515 = vmatprep.subr.mxu0 0.0
        %2516 = vmatpush1.xpose.msra.mxu0 %v2451
        %2517 = vmatprep.subr.mxu0 0.0
        %2518 = vmatpush1.xpose.msra.mxu0 %v2453
        %2519 = vmatprep.subr.mxu0 0.0
        %2520 = vmatpush1.xpose.msra.mxu0 %v2455
        %2521 = vmatprep.subr.mxu0 0.0
        %2522 = vmatpush1.xpose.msra.mxu0 %v2457
        %2523 = vmatprep.subr.mxu0 0.0
        %2524 = vmatpush1.xpose.msra.mxu0 %v2459
        %2525 = vmatprep.mubr.f32.mxu0 0.0
        %2526 = vmatmul.mubr.f32.gmra.mrb[0].mxu0 %v2333
        %v2527 = vpop.f32.mrb[0].mxu0
        %v2528 = vadd.f32 0.0, %v2527
        %v2529 = vpop.f32.mrb[0].mxu0
        %v2530 = vadd.f32 0.0, %v2529
        %2531 = vmatprep.mubr.f32.mxu0 0.0
        %2532 = vmatmul.mubr.f32.gmra.mrb[0].mxu0 %v2335
        %v2533 = vpop.f32.mrb[0].mxu0
        %v2534 = vadd.f32 0.0, %v2533
        %v2535 = vpop.f32.mrb[0].mxu0
        %v2536 = vadd.f32 0.0, %v2535
        %2537 = vmatprep.mubr.f32.mxu0 0.0
        %2538 = vmatmul.mubr.f32.gmra.mrb[0].mxu0 %v2337
        %v2539 = vpop.f32.mrb[0].mxu0
        %v2540 = vadd.f32 0.0, %v2539
        %v2541 = vpop.f32.mrb[0].mxu0
        %v2542 = vadd.f32 0.0, %v2541
        %2543 = vmatprep.mubr.f32.mxu0 0.0
        %2544 = vmatmul.mubr.f32.gmra.mrb[0].mxu0 %v2339
        %v2545 = vpop.f32.mrb[0].mxu0
        %v2546 = vadd.f32 0.0, %v2545
        %v2547 = vpop.f32.mrb[0].mxu0
        %v2548 = vadd.f32 0.0, %v2547
        %2549 = vmatprep.mubr.f32.mxu0 0.0
        %2550 = vmatmul.mubr.f32.gmra.mrb[0].mxu0 %v2341
        %v2551 = vpop.f32.mrb[0].mxu0
        %v2552 = vadd.f32 0.0, %v2551
        %v2553 = vpop.f32.mrb[0].mxu0
        %v2554 = vadd.f32 0.0, %v2553
        %2555 = vmatprep.mubr.f32.mxu0 0.0
        %2556 = vmatmul.mubr.f32.gmra.mrb[0].mxu0 %v2343
        %v2557 = vpop.f32.mrb[0].mxu0
        %v2558 = vadd.f32 0.0, %v2557
        %v2559 = vpop.f32.mrb[0].mxu0
        %v2560 = vadd.f32 0.0, %v2559
        %2561 = vmatprep.mubr.f32.mxu0 0.0
        %2562 = vmatmul.mubr.f32.gmra.mrb[0].mxu0 %v2345
        %v2563 = vpop.f32.mrb[0].mxu0
        %v2564 = vadd.f32 0.0, %v2563
        %v2565 = vpop.f32.mrb[0].mxu0
        %v2566 = vadd.f32 0.0, %v2565
        %2567 = vmatprep.mubr.f32.mxu0 0.0
        %2568 = vmatmul.mubr.f32.gmra.mrb[0].mxu0 %v2347
        %v2569 = vpop.f32.mrb[0].mxu0
        %v2570 = vadd.f32 0.0, %v2569
        %v2571 = vpop.f32.mrb[0].mxu0
        %v2572 = vadd.f32 0.0, %v2571
        %2573 = vmatprep.mubr.f32.mxu0 0.0
        %2574 = vmatmul.mubr.f32.gmra.mrb[0].mxu0 %v2349
        %v2575 = vpop.f32.mrb[0].mxu0
        %v2576 = vadd.f32 0.0, %v2575
        %v2577 = vpop.f32.mrb[0].mxu0
        %v2578 = vadd.f32 0.0, %v2577
        %2579 = vmatprep.mubr.f32.mxu0 0.0
        %2580 = vmatmul.mubr.f32.gmra.mrb[0].mxu0 %v2351
        %v2581 = vpop.f32.mrb[0].mxu0
        %v2582 = vadd.f32 0.0, %v2581
        %v2583 = vpop.f32.mrb[0].mxu0
        %v2584 = vadd.f32 0.0, %v2583
        %2585 = vmatprep.mubr.f32.mxu0 0.0
        %2586 = vmatmul.mubr.f32.gmra.mrb[0].mxu0 %v2353
        %v2587 = vpop.f32.mrb[0].mxu0
        %v2588 = vadd.f32 0.0, %v2587
        %v2589 = vpop.f32.mrb[0].mxu0
        %v2590 = vadd.f32 0.0, %v2589
        %2591 = vmatprep.mubr.f32.mxu0 0.0
        %2592 = vmatmul.mubr.f32.gmra.mrb[0].mxu0 %v2355
        %v2593 = vpop.f32.mrb[0].mxu0
        %v2594 = vadd.f32 0.0, %v2593
        %v2595 = vpop.f32.mrb[0].mxu0
        %v2596 = vadd.f32 0.0, %v2595
        %2597 = vmatprep.mubr.f32.mxu0 0.0
        %2598 = vmatmul.mubr.f32.gmra.mrb[0].mxu0 %v2357
        %v2599 = vpop.f32.mrb[0].mxu0
        %v2600 = vadd.f32 0.0, %v2599
        %v2601 = vpop.f32.mrb[0].mxu0
        %v2602 = vadd.f32 0.0, %v2601
        %2603 = vmatprep.mubr.f32.mxu0 0.0
        %2604 = vmatmul.mubr.f32.gmra.mrb[0].mxu0 %v2359
        %v2605 = vpop.f32.mrb[0].mxu0
        %v2606 = vadd.f32 0.0, %v2605
        %v2607 = vpop.f32.mrb[0].mxu0
        %v2608 = vadd.f32 0.0, %v2607
        %2609 = vmatprep.mubr.f32.mxu0 0.0
        %2610 = vmatmul.mubr.f32.gmra.mrb[0].mxu0 %v2361
        %v2611 = vpop.f32.mrb[0].mxu0
        %v2612 = vadd.f32 0.0, %v2611
        %v2613 = vpop.f32.mrb[0].mxu0
        %v2614 = vadd.f32 0.0, %v2613
        %2615 = vmatprep.mubr.f32.mxu0 0.0
        %2616 = vmatmul.mubr.f32.gmra.mrb[0].mxu0 %v2363
        %v2617 = vpop.f32.mrb[0].mxu0
        %v2618 = vadd.f32 0.0, %v2617
        %v2619 = vpop.f32.mrb[0].mxu0
        %v2620 = vadd.f32 0.0, %v2619
        %2621 = vmatprep.mubr.f32.mxu0 0.0
        %2622 = vmatmul.mubr.f32.gmra.mrb[0].mxu0 %v2365
        %v2623 = vpop.f32.mrb[0].mxu0
        %v2624 = vadd.f32 0.0, %v2623
        %v2625 = vpop.f32.mrb[0].mxu0
        %v2626 = vadd.f32 0.0, %v2625
        %2627 = vmatprep.mubr.f32.mxu0 0.0
        %2628 = vmatmul.mubr.f32.gmra.mrb[0].mxu0 %v2367
        %v2629 = vpop.f32.mrb[0].mxu0
        %v2630 = vadd.f32 0.0, %v2629
        %v2631 = vpop.f32.mrb[0].mxu0
        %v2632 = vadd.f32 0.0, %v2631
        %2633 = vmatprep.mubr.f32.mxu0 0.0
        %2634 = vmatmul.mubr.f32.gmra.mrb[0].mxu0 %v2369
        %v2635 = vpop.f32.mrb[0].mxu0
        %v2636 = vadd.f32 0.0, %v2635
        %v2637 = vpop.f32.mrb[0].mxu0
        %v2638 = vadd.f32 0.0, %v2637
        %2639 = vmatprep.mubr.f32.mxu0 0.0
        %2640 = vmatmul.mubr.f32.gmra.mrb[0].mxu0 %v2371
        %v2641 = vpop.f32.mrb[0].mxu0
        %v2642 = vadd.f32 0.0, %v2641
        %v2643 = vpop.f32.mrb[0].mxu0
        %v2644 = vadd.f32 0.0, %v2643
        %2645 = vmatprep.mubr.f32.mxu0 0.0
        %2646 = vmatmul.mubr.f32.gmra.mrb[0].mxu0 %v2373
        %v2647 = vpop.f32.mrb[0].mxu0
        %v2648 = vadd.f32 0.0, %v2647
        %v2649 = vpop.f32.mrb[0].mxu0
        %v2650 = vadd.f32 0.0, %v2649
        %2651 = vmatprep.mubr.f32.mxu0 0.0
        %2652 = vmatmul.mubr.f32.gmra.mrb[0].mxu0 %v2375
        %v2653 = vpop.f32.mrb[0].mxu0
        %v2654 = vadd.f32 0.0, %v2653
        %v2655 = vpop.f32.mrb[0].mxu0
        %v2656 = vadd.f32 0.0, %v2655
        %2657 = vmatprep.mubr.f32.mxu0 0.0
        %2658 = vmatmul.mubr.f32.gmra.mrb[0].mxu0 %v2377
        %v2659 = vpop.f32.mrb[0].mxu0
        %v2660 = vadd.f32 0.0, %v2659
        %v2661 = vpop.f32.mrb[0].mxu0
        %v2662 = vadd.f32 0.0, %v2661
        %2663 = vmatprep.mubr.f32.mxu0 0.0
        %2664 = vmatmul.mubr.f32.gmra.mrb[0].mxu0 %v2379
        %v2665 = vpop.f32.mrb[0].mxu0
        %v2666 = vadd.f32 0.0, %v2665
        %v2667 = vpop.f32.mrb[0].mxu0
        %v2668 = vadd.f32 0.0, %v2667
        %2669 = vmatprep.mubr.f32.mxu0 0.0
        %2670 = vmatmul.mubr.f32.gmra.mrb[0].mxu0 %v2381
        %v2671 = vpop.f32.mrb[0].mxu0
        %v2672 = vadd.f32 0.0, %v2671
        %v2673 = vpop.f32.mrb[0].mxu0
        %v2674 = vadd.f32 0.0, %v2673
        %2675 = vmatprep.mubr.f32.mxu0 0.0
        %2676 = vmatmul.mubr.f32.gmra.mrb[0].mxu0 %v2383
        %v2677 = vpop.f32.mrb[0].mxu0
        %v2678 = vadd.f32 0.0, %v2677
        %v2679 = vpop.f32.mrb[0].mxu0
        %v2680 = vadd.f32 0.0, %v2679
        %2681 = vmatprep.mubr.f32.mxu0 0.0
        %2682 = vmatmul.mubr.f32.gmra.mrb[0].mxu0 %v2385
        %v2683 = vpop.f32.mrb[0].mxu0
        %v2684 = vadd.f32 0.0, %v2683
        %v2685 = vpop.f32.mrb[0].mxu0
        %v2686 = vadd.f32 0.0, %v2685
        %2687 = vmatprep.mubr.f32.mxu0 0.0
        %2688 = vmatmul.mubr.f32.gmra.mrb[0].mxu0 %v2387
        %v2689 = vpop.f32.mrb[0].mxu0
        %v2690 = vadd.f32 0.0, %v2689
        %v2691 = vpop.f32.mrb[0].mxu0
        %v2692 = vadd.f32 0.0, %v2691
        %2693 = vmatprep.mubr.f32.mxu0 0.0
        %2694 = vmatmul.mubr.f32.gmra.mrb[0].mxu0 %v2389
        %v2695 = vpop.f32.mrb[0].mxu0
        %v2696 = vadd.f32 0.0, %v2695
        %v2697 = vpop.f32.mrb[0].mxu0
        %v2698 = vadd.f32 0.0, %v2697
        %2699 = vmatprep.mubr.f32.mxu0 0.0
        %2700 = vmatmul.mubr.f32.gmra.mrb[0].mxu0 %v2391
        %v2701 = vpop.f32.mrb[0].mxu0
        %v2702 = vadd.f32 0.0, %v2701
        %v2703 = vpop.f32.mrb[0].mxu0
        %v2704 = vadd.f32 0.0, %v2703
        %2705 = vmatprep.mubr.f32.mxu0 0.0
        %2706 = vmatmul.mubr.f32.gmra.mrb[0].mxu0 %v2393
        %v2707 = vpop.f32.mrb[0].mxu0
        %v2708 = vadd.f32 0.0, %v2707
        %v2709 = vpop.f32.mrb[0].mxu0
        %v2710 = vadd.f32 0.0, %v2709
        %2711 = vmatprep.mubr.f32.mxu0 0.0
        %2712 = vmatmul.mubr.f32.gmra.mrb[0].mxu0 %v2395
        %v2713 = vpop.f32.mrb[0].mxu0
        %v2714 = vadd.f32 0.0, %v2713
        %v2715 = vpop.f32.mrb[0].mxu0
        %v2716 = vadd.f32 0.0, %v2715
        %2717 = vdwg.mxu0
        %v2718 = vmul.f32 %v2528, 0.35355338
        %v2719 = vmul.f32 %v2530, 0.35355338
        %v2720 = vmul.f32 %v2534, 0.35355338
        %v2721 = vmul.f32 %v2536, 0.35355338
        %v2722 = vmul.f32 %v2540, 0.35355338
        %v2723 = vmul.f32 %v2542, 0.35355338
        %v2724 = vmul.f32 %v2546, 0.35355338
        %v2725 = vmul.f32 %v2548, 0.35355338
        %v2726 = vmul.f32 %v2552, 0.35355338
        %v2727 = vmul.f32 %v2554, 0.35355338
        %v2728 = vmul.f32 %v2558, 0.35355338
        %v2729 = vmul.f32 %v2560, 0.35355338
        %v2730 = vmul.f32 %v2564, 0.35355338
        %v2731 = vmul.f32 %v2566, 0.35355338
        %v2732 = vmul.f32 %v2570, 0.35355338
        %v2733 = vmul.f32 %v2572, 0.35355338
        %v2734 = vmul.f32 %v2576, 0.35355338
        %v2735 = vmul.f32 %v2578, 0.35355338
        %v2736 = vmul.f32 %v2582, 0.35355338
        %v2737 = vmul.f32 %v2584, 0.35355338
        %v2738 = vmul.f32 %v2588, 0.35355338
        %v2739 = vmul.f32 %v2590, 0.35355338
        %v2740 = vmul.f32 %v2594, 0.35355338
        %v2741 = vmul.f32 %v2596, 0.35355338
        %v2742 = vmul.f32 %v2600, 0.35355338
        %v2743 = vmul.f32 %v2602, 0.35355338
        %v2744 = vmul.f32 %v2606, 0.35355338
        %v2745 = vmul.f32 %v2608, 0.35355338
        %v2746 = vmul.f32 %v2612, 0.35355338
        %v2747 = vmul.f32 %v2614, 0.35355338
        %v2748 = vmul.f32 %v2618, 0.35355338
        %v2749 = vmul.f32 %v2620, 0.35355338
        %v2750 = vmul.f32 %v2624, 0.35355338
        %v2751 = vmul.f32 %v2626, 0.35355338
        %v2752 = vmul.f32 %v2630, 0.35355338
        %v2753 = vmul.f32 %v2632, 0.35355338
        %v2754 = vmul.f32 %v2636, 0.35355338
        %v2755 = vmul.f32 %v2638, 0.35355338
        %v2756 = vmul.f32 %v2642, 0.35355338
        %v2757 = vmul.f32 %v2644, 0.35355338
        %v2758 = vmul.f32 %v2648, 0.35355338
        %v2759 = vmul.f32 %v2650, 0.35355338
        %v2760 = vmul.f32 %v2654, 0.35355338
        %v2761 = vmul.f32 %v2656, 0.35355338
        %v2762 = vmul.f32 %v2660, 0.35355338
        %v2763 = vmul.f32 %v2662, 0.35355338
        %v2764 = vmul.f32 %v2666, 0.35355338
        %v2765 = vmul.f32 %v2668, 0.35355338
        %v2766 = vmul.f32 %v2672, 0.35355338
        %v2767 = vmul.f32 %v2674, 0.35355338
        %v2768 = vmul.f32 %v2678, 0.35355338
        %v2769 = vmul.f32 %v2680, 0.35355338
        %v2770 = vmul.f32 %v2684, 0.35355338
        %v2771 = vmul.f32 %v2686, 0.35355338
        %v2772 = vmul.f32 %v2690, 0.35355338
        %v2773 = vmul.f32 %v2692, 0.35355338
        %v2774 = vmul.f32 %v2696, 0.35355338
        %v2775 = vmul.f32 %v2698, 0.35355338
        %v2776 = vmul.f32 %v2702, 0.35355338
        %v2777 = vmul.f32 %v2704, 0.35355338
        %v2778 = vmul.f32 %v2708, 0.35355338
        %v2779 = vmul.f32 %v2710, 0.35355338
        %v2780 = vmul.f32 %v2714, 0.35355338
        %v2781 = vmul.f32 %v2716, 0.35355338
        %v2782 = vadd.f32 %v2718, %v729
        %v2783 = vadd.f32 %v2719, %v730
        %v2784 = vadd.f32 %v2720, %v731
        %v2785 = vadd.f32 %v2721, %v732
        %v2786 = vadd.f32 %v2722, %v733
        %v2787 = vadd.f32 %v2723, %v734
        %v2788 = vadd.f32 %v2724, %v735
        %v2789 = vadd.f32 %v2725, %v736
        %v2790 = vadd.f32 %v2726, %v737
        %v2791 = vadd.f32 %v2727, %v738
        %v2792 = vadd.f32 %v2728, %v739
        %v2793 = vadd.f32 %v2729, %v740
        %v2794 = vadd.f32 %v2730, %v741
        %v2795 = vadd.f32 %v2731, %v742
        %v2796 = vadd.f32 %v2732, %v743
        %v2797 = vadd.f32 %v2733, %v744
        %v2798 = vadd.f32 %v2734, %v745
        %v2799 = vadd.f32 %v2735, %v746
        %v2800 = vadd.f32 %v2736, %v747
        %v2801 = vadd.f32 %v2737, %v748
        %v2802 = vadd.f32 %v2738, %v749
        %v2803 = vadd.f32 %v2739, %v750
        %v2804 = vadd.f32 %v2740, %v751
        %v2805 = vadd.f32 %v2741, %v752
        %v2806 = vadd.f32 %v2742, %v753
        %v2807 = vadd.f32 %v2743, %v754
        %v2808 = vadd.f32 %v2744, %v755
        %v2809 = vadd.f32 %v2745, %v756
        %v2810 = vadd.f32 %v2746, %v757
        %v2811 = vadd.f32 %v2747, %v758
        %v2812 = vadd.f32 %v2748, %v759
        %v2813 = vadd.f32 %v2749, %v760
        %v2814 = vadd.f32 %v2750, %v761
        %v2815 = vadd.f32 %v2751, %v762
        %v2816 = vadd.f32 %v2752, %v763
        %v2817 = vadd.f32 %v2753, %v764
        %v2818 = vadd.f32 %v2754, %v765
        %v2819 = vadd.f32 %v2755, %v766
        %v2820 = vadd.f32 %v2756, %v767
        %v2821 = vadd.f32 %v2757, %v768
        %v2822 = vadd.f32 %v2758, %v769
        %v2823 = vadd.f32 %v2759, %v770
        %v2824 = vadd.f32 %v2760, %v771
        %v2825 = vadd.f32 %v2761, %v772
        %v2826 = vadd.f32 %v2762, %v773
        %v2827 = vadd.f32 %v2763, %v774
        %v2828 = vadd.f32 %v2764, %v775
        %v2829 = vadd.f32 %v2765, %v776
        %v2830 = vadd.f32 %v2766, %v777
        %v2831 = vadd.f32 %v2767, %v778
        %v2832 = vadd.f32 %v2768, %v779
        %v2833 = vadd.f32 %v2769, %v780
        %v2834 = vadd.f32 %v2770, %v781
        %v2835 = vadd.f32 %v2771, %v782
        %v2836 = vadd.f32 %v2772, %v783
        %v2837 = vadd.f32 %v2773, %v784
        %v2838 = vadd.f32 %v2774, %v785
        %v2839 = vadd.f32 %v2775, %v786
        %v2840 = vadd.f32 %v2776, %v787
        %v2841 = vadd.f32 %v2777, %v788
        %v2842 = vadd.f32 %v2778, %v789
        %v2843 = vadd.f32 %v2779, %v790
        %v2844 = vadd.f32 %v2780, %v791
        %v2845 = vadd.f32 %v2781, %v792
        %v2846 = vmax.f32 %v2782, %v2783
        %2847 = vmax.xlane.f32.xlu0 %v2846
        %v2848 = vpop.xlane.xlu0 %2847
        %v2849 = vmax.f32 %v2784, %v2785
        %2850 = vmax.xlane.f32.xlu0 %v2849
        %v2851 = vpop.xlane.xlu0 %2850
        %v2852 = vmax.f32 %v2786, %v2787
        %2853 = vmax.xlane.f32.xlu0 %v2852
        %v2854 = vpop.xlane.xlu0 %2853
        %v2855 = vmax.f32 %v2788, %v2789
        %2856 = vmax.xlane.f32.xlu0 %v2855
        %v2857 = vpop.xlane.xlu0 %2856
        %v2858 = vmax.f32 %v2790, %v2791
        %2859 = vmax.xlane.f32.xlu0 %v2858
        %v2860 = vpop.xlane.xlu0 %2859
        %v2861 = vmax.f32 %v2792, %v2793
        %2862 = vmax.xlane.f32.xlu0 %v2861
        %v2863 = vpop.xlane.xlu0 %2862
        %v2864 = vmax.f32 %v2794, %v2795
        %2865 = vmax.xlane.f32.xlu0 %v2864
        %v2866 = vpop.xlane.xlu0 %2865
        %v2867 = vmax.f32 %v2796, %v2797
        %2868 = vmax.xlane.f32.xlu0 %v2867
        %v2869 = vpop.xlane.xlu0 %2868
        %v2870 = vmax.f32 %v2798, %v2799
        %2871 = vmax.xlane.f32.xlu0 %v2870
        %v2872 = vpop.xlane.xlu0 %2871
        %v2873 = vmax.f32 %v2800, %v2801
        %2874 = vmax.xlane.f32.xlu0 %v2873
        %v2875 = vpop.xlane.xlu0 %2874
        %v2876 = vmax.f32 %v2802, %v2803
        %2877 = vmax.xlane.f32.xlu0 %v2876
        %v2878 = vpop.xlane.xlu0 %2877
        %v2879 = vmax.f32 %v2804, %v2805
        %2880 = vmax.xlane.f32.xlu0 %v2879
        %v2881 = vpop.xlane.xlu0 %2880
        %v2882 = vmax.f32 %v2806, %v2807
        %2883 = vmax.xlane.f32.xlu0 %v2882
        %v2884 = vpop.xlane.xlu0 %2883
        %v2885 = vmax.f32 %v2808, %v2809
        %2886 = vmax.xlane.f32.xlu0 %v2885
        %v2887 = vpop.xlane.xlu0 %2886
        %v2888 = vmax.f32 %v2810, %v2811
        %2889 = vmax.xlane.f32.xlu0 %v2888
        %v2890 = vpop.xlane.xlu0 %2889
        %v2891 = vmax.f32 %v2812, %v2813
        %2892 = vmax.xlane.f32.xlu0 %v2891
        %v2893 = vpop.xlane.xlu0 %2892
        %v2894 = vmax.f32 %v2814, %v2815
        %2895 = vmax.xlane.f32.xlu0 %v2894
        %v2896 = vpop.xlane.xlu0 %2895
        %v2897 = vmax.f32 %v2816, %v2817
        %2898 = vmax.xlane.f32.xlu0 %v2897
        %v2899 = vpop.xlane.xlu0 %2898
        %v2900 = vmax.f32 %v2818, %v2819
        %2901 = vmax.xlane.f32.xlu0 %v2900
        %v2902 = vpop.xlane.xlu0 %2901
        %v2903 = vmax.f32 %v2820, %v2821
        %2904 = vmax.xlane.f32.xlu0 %v2903
        %v2905 = vpop.xlane.xlu0 %2904
        %v2906 = vmax.f32 %v2822, %v2823
        %2907 = vmax.xlane.f32.xlu0 %v2906
        %v2908 = vpop.xlane.xlu0 %2907
        %v2909 = vmax.f32 %v2824, %v2825
        %2910 = vmax.xlane.f32.xlu0 %v2909
        %v2911 = vpop.xlane.xlu0 %2910
        %v2912 = vmax.f32 %v2826, %v2827
        %2913 = vmax.xlane.f32.xlu0 %v2912
        %v2914 = vpop.xlane.xlu0 %2913
        %v2915 = vmax.f32 %v2828, %v2829
        %2916 = vmax.xlane.f32.xlu0 %v2915
        %v2917 = vpop.xlane.xlu0 %2916
        %v2918 = vmax.f32 %v2830, %v2831
        %2919 = vmax.xlane.f32.xlu0 %v2918
        %v2920 = vpop.xlane.xlu0 %2919
        %v2921 = vmax.f32 %v2832, %v2833
        %2922 = vmax.xlane.f32.xlu0 %v2921
        %v2923 = vpop.xlane.xlu0 %2922
        %v2924 = vmax.f32 %v2834, %v2835
        %2925 = vmax.xlane.f32.xlu0 %v2924
        %v2926 = vpop.xlane.xlu0 %2925
        %v2927 = vmax.f32 %v2836, %v2837
        %2928 = vmax.xlane.f32.xlu0 %v2927
        %v2929 = vpop.xlane.xlu0 %2928
        %v2930 = vmax.f32 %v2838, %v2839
        %2931 = vmax.xlane.f32.xlu0 %v2930
        %v2932 = vpop.xlane.xlu0 %2931
        %v2933 = vmax.f32 %v2840, %v2841
        %2934 = vmax.xlane.f32.xlu0 %v2933
        %v2935 = vpop.xlane.xlu0 %2934
        %v2936 = vmax.f32 %v2842, %v2843
        %2937 = vmax.xlane.f32.xlu0 %v2936
        %v2938 = vpop.xlane.xlu0 %2937
        %v2939 = vmax.f32 %v2844, %v2845
        %2940 = vmax.xlane.f32.xlu0 %v2939
        %v2941 = vpop.xlane.xlu0 %2940
        %v2942 = vsub.f32 %v2782, %v2848
        %v2943 = vsub.f32 %v2783, %v2848
        %v2944 = vsub.f32 %v2784, %v2851
        %v2945 = vsub.f32 %v2785, %v2851
        %v2946 = vsub.f32 %v2786, %v2854
        %v2947 = vsub.f32 %v2787, %v2854
        %v2948 = vsub.f32 %v2788, %v2857
        %v2949 = vsub.f32 %v2789, %v2857
        %v2950 = vsub.f32 %v2790, %v2860
        %v2951 = vsub.f32 %v2791, %v2860
        %v2952 = vsub.f32 %v2792, %v2863
        %v2953 = vsub.f32 %v2793, %v2863
        %v2954 = vsub.f32 %v2794, %v2866
        %v2955 = vsub.f32 %v2795, %v2866
        %v2956 = vsub.f32 %v2796, %v2869
        %v2957 = vsub.f32 %v2797, %v2869
        %v2958 = vsub.f32 %v2798, %v2872
        %v2959 = vsub.f32 %v2799, %v2872
        %v2960 = vsub.f32 %v2800, %v2875
        %v2961 = vsub.f32 %v2801, %v2875
        %v2962 = vsub.f32 %v2802, %v2878
        %v2963 = vsub.f32 %v2803, %v2878
        %v2964 = vsub.f32 %v2804, %v2881
        %v2965 = vsub.f32 %v2805, %v2881
        %v2966 = vsub.f32 %v2806, %v2884
        %v2967 = vsub.f32 %v2807, %v2884
        %v2968 = vsub.f32 %v2808, %v2887
        %v2969 = vsub.f32 %v2809, %v2887
        %v2970 = vsub.f32 %v2810, %v2890
        %v2971 = vsub.f32 %v2811, %v2890
        %v2972 = vsub.f32 %v2812, %v2893
        %v2973 = vsub.f32 %v2813, %v2893
        %v2974 = vsub.f32 %v2814, %v2896
        %v2975 = vsub.f32 %v2815, %v2896
        %v2976 = vsub.f32 %v2816, %v2899
        %v2977 = vsub.f32 %v2817, %v2899
        %v2978 = vsub.f32 %v2818, %v2902
        %v2979 = vsub.f32 %v2819, %v2902
        %v2980 = vsub.f32 %v2820, %v2905
        %v2981 = vsub.f32 %v2821, %v2905
        %v2982 = vsub.f32 %v2822, %v2908
        %v2983 = vsub.f32 %v2823, %v2908
        %v2984 = vsub.f32 %v2824, %v2911
        %v2985 = vsub.f32 %v2825, %v2911
        %v2986 = vsub.f32 %v2826, %v2914
        %v2987 = vsub.f32 %v2827, %v2914
        %v2988 = vsub.f32 %v2828, %v2917
        %v2989 = vsub.f32 %v2829, %v2917
        %v2990 = vsub.f32 %v2830, %v2920
        %v2991 = vsub.f32 %v2831, %v2920
        %v2992 = vsub.f32 %v2832, %v2923
        %v2993 = vsub.f32 %v2833, %v2923
        %v2994 = vsub.f32 %v2834, %v2926
        %v2995 = vsub.f32 %v2835, %v2926
        %v2996 = vsub.f32 %v2836, %v2929
        %v2997 = vsub.f32 %v2837, %v2929
        %v2998 = vsub.f32 %v2838, %v2932
        %v2999 = vsub.f32 %v2839, %v2932
        %v3000 = vsub.f32 %v2840, %v2935
        %v3001 = vsub.f32 %v2841, %v2935
        %v3002 = vsub.f32 %v2842, %v2938
        %v3003 = vsub.f32 %v2843, %v2938
        %v3004 = vsub.f32 %v2844, %v2941
        %v3005 = vsub.f32 %v2845, %v2941
        %v3006 = vmul.f32 %v2942, 1.442695
        %v3007 = vpow.pop %v3006
        %v3008 = vmul.f32 %v2943, 1.442695
        %v3009 = vpow.pop %v3008
        %v3010 = vmul.f32 %v2944, 1.442695
        %v3011 = vpow.pop %v3010
        %v3012 = vmul.f32 %v2945, 1.442695
        %v3013 = vpow.pop %v3012
        %v3014 = vmul.f32 %v2946, 1.442695
        %v3015 = vpow.pop %v3014
        %v3016 = vmul.f32 %v2947, 1.442695
        %v3017 = vpow.pop %v3016
        %v3018 = vmul.f32 %v2948, 1.442695
        %v3019 = vpow.pop %v3018
        %v3020 = vmul.f32 %v2949, 1.442695
        %v3021 = vpow.pop %v3020
        %v3022 = vmul.f32 %v2950, 1.442695
        %v3023 = vpow.pop %v3022
        %v3024 = vmul.f32 %v2951, 1.442695
        %v3025 = vpow.pop %v3024
        %v3026 = vmul.f32 %v2952, 1.442695
        %v3027 = vpow.pop %v3026
        %v3028 = vmul.f32 %v2953, 1.442695
        %v3029 = vpow.pop %v3028
        %v3030 = vmul.f32 %v2954, 1.442695
        %v3031 = vpow.pop %v3030
        %v3032 = vmul.f32 %v2955, 1.442695
        %v3033 = vpow.pop %v3032
        %v3034 = vmul.f32 %v2956, 1.442695
        %v3035 = vpow.pop %v3034
        %v3036 = vmul.f32 %v2957, 1.442695
        %v3037 = vpow.pop %v3036
        %v3038 = vmul.f32 %v2958, 1.442695
        %v3039 = vpow.pop %v3038
        %v3040 = vmul.f32 %v2959, 1.442695
        %v3041 = vpow.pop %v3040
        %v3042 = vmul.f32 %v2960, 1.442695
        %v3043 = vpow.pop %v3042
        %v3044 = vmul.f32 %v2961, 1.442695
        %v3045 = vpow.pop %v3044
        %v3046 = vmul.f32 %v2962, 1.442695
        %v3047 = vpow.pop %v3046
        %v3048 = vmul.f32 %v2963, 1.442695
        %v3049 = vpow.pop %v3048
        %v3050 = vmul.f32 %v2964, 1.442695
        %v3051 = vpow.pop %v3050
        %v3052 = vmul.f32 %v2965, 1.442695
        %v3053 = vpow.pop %v3052
        %v3054 = vmul.f32 %v2966, 1.442695
        %v3055 = vpow.pop %v3054
        %v3056 = vmul.f32 %v2967, 1.442695
        %v3057 = vpow.pop %v3056
        %v3058 = vmul.f32 %v2968, 1.442695
        %v3059 = vpow.pop %v3058
        %v3060 = vmul.f32 %v2969, 1.442695
        %v3061 = vpow.pop %v3060
        %v3062 = vmul.f32 %v2970, 1.442695
        %v3063 = vpow.pop %v3062
        %v3064 = vmul.f32 %v2971, 1.442695
        %v3065 = vpow.pop %v3064
        %v3066 = vmul.f32 %v2972, 1.442695
        %v3067 = vpow.pop %v3066
        %v3068 = vmul.f32 %v2973, 1.442695
        %v3069 = vpow.pop %v3068
        %v3070 = vmul.f32 %v2974, 1.442695
        %v3071 = vpow.pop %v3070
        %v3072 = vmul.f32 %v2975, 1.442695
        %v3073 = vpow.pop %v3072
        %v3074 = vmul.f32 %v2976, 1.442695
        %v3075 = vpow.pop %v3074
        %v3076 = vmul.f32 %v2977, 1.442695
        %v3077 = vpow.pop %v3076
        %v3078 = vmul.f32 %v2978, 1.442695
        %v3079 = vpow.pop %v3078
        %v3080 = vmul.f32 %v2979, 1.442695
        %v3081 = vpow.pop %v3080
        %v3082 = vmul.f32 %v2980, 1.442695
        %v3083 = vpow.pop %v3082
        %v3084 = vmul.f32 %v2981, 1.442695
        %v3085 = vpow.pop %v3084
        %v3086 = vmul.f32 %v2982, 1.442695
        %v3087 = vpow.pop %v3086
        %v3088 = vmul.f32 %v2983, 1.442695
        %v3089 = vpow.pop %v3088
        %v3090 = vmul.f32 %v2984, 1.442695
        %v3091 = vpow.pop %v3090
        %v3092 = vmul.f32 %v2985, 1.442695
        %v3093 = vpow.pop %v3092
        %v3094 = vmul.f32 %v2986, 1.442695
        %v3095 = vpow.pop %v3094
        %v3096 = vmul.f32 %v2987, 1.442695
        %v3097 = vpow.pop %v3096
        %v3098 = vmul.f32 %v2988, 1.442695
        %v3099 = vpow.pop %v3098
        %v3100 = vmul.f32 %v2989, 1.442695
        %v3101 = vpow.pop %v3100
        %v3102 = vmul.f32 %v2990, 1.442695
        %v3103 = vpow.pop %v3102
        %v3104 = vmul.f32 %v2991, 1.442695
        %v3105 = vpow.pop %v3104
        %v3106 = vmul.f32 %v2992, 1.442695
        %v3107 = vpow.pop %v3106
        %v3108 = vmul.f32 %v2993, 1.442695
        %v3109 = vpow.pop %v3108
        %v3110 = vmul.f32 %v2994, 1.442695
        %v3111 = vpow.pop %v3110
        %v3112 = vmul.f32 %v2995, 1.442695
        %v3113 = vpow.pop %v3112
        %v3114 = vmul.f32 %v2996, 1.442695
        %v3115 = vpow.pop %v3114
        %v3116 = vmul.f32 %v2997, 1.442695
        %v3117 = vpow.pop %v3116
        %v3118 = vmul.f32 %v2998, 1.442695
        %v3119 = vpow.pop %v3118
        %v3120 = vmul.f32 %v2999, 1.442695
        %v3121 = vpow.pop %v3120
        %v3122 = vmul.f32 %v3000, 1.442695
        %v3123 = vpow.pop %v3122
        %v3124 = vmul.f32 %v3001, 1.442695
        %v3125 = vpow.pop %v3124
        %v3126 = vmul.f32 %v3002, 1.442695
        %v3127 = vpow.pop %v3126
        %v3128 = vmul.f32 %v3003, 1.442695
        %v3129 = vpow.pop %v3128
        %v3130 = vmul.f32 %v3004, 1.442695
        %v3131 = vpow.pop %v3130
        %v3132 = vmul.f32 %v3005, 1.442695
        %v3133 = vpow.pop %v3132
        %v3134 = vadd.f32 %v3007, %v3009
        %3135 = vadd.xlane.f32.xlu0 %v3134
        %v3136 = vpop.xlane.xlu0 %3135
        %v3137 = vadd.f32 %v3011, %v3013
        %3138 = vadd.xlane.f32.xlu0 %v3137
        %v3139 = vpop.xlane.xlu0 %3138
        %v3140 = vadd.f32 %v3015, %v3017
        %3141 = vadd.xlane.f32.xlu0 %v3140
        %v3142 = vpop.xlane.xlu0 %3141
        %v3143 = vadd.f32 %v3019, %v3021
        %3144 = vadd.xlane.f32.xlu0 %v3143
        %v3145 = vpop.xlane.xlu0 %3144
        %v3146 = vadd.f32 %v3023, %v3025
        %3147 = vadd.xlane.f32.xlu0 %v3146
        %v3148 = vpop.xlane.xlu0 %3147
        %v3149 = vadd.f32 %v3027, %v3029
        %3150 = vadd.xlane.f32.xlu0 %v3149
        %v3151 = vpop.xlane.xlu0 %3150
        %v3152 = vadd.f32 %v3031, %v3033
        %3153 = vadd.xlane.f32.xlu0 %v3152
        %v3154 = vpop.xlane.xlu0 %3153
        %v3155 = vadd.f32 %v3035, %v3037
        %3156 = vadd.xlane.f32.xlu0 %v3155
        %v3157 = vpop.xlane.xlu0 %3156
        %v3158 = vadd.f32 %v3039, %v3041
        %3159 = vadd.xlane.f32.xlu0 %v3158
        %v3160 = vpop.xlane.xlu0 %3159
        %v3161 = vadd.f32 %v3043, %v3045
        %3162 = vadd.xlane.f32.xlu0 %v3161
        %v3163 = vpop.xlane.xlu0 %3162
        %v3164 = vadd.f32 %v3047, %v3049
        %3165 = vadd.xlane.f32.xlu0 %v3164
        %v3166 = vpop.xlane.xlu0 %3165
        %v3167 = vadd.f32 %v3051, %v3053
        %3168 = vadd.xlane.f32.xlu0 %v3167
        %v3169 = vpop.xlane.xlu0 %3168
        %v3170 = vadd.f32 %v3055, %v3057
        %3171 = vadd.xlane.f32.xlu0 %v3170
        %v3172 = vpop.xlane.xlu0 %3171
        %v3173 = vadd.f32 %v3059, %v3061
        %3174 = vadd.xlane.f32.xlu0 %v3173
        %v3175 = vpop.xlane.xlu0 %3174
        %v3176 = vadd.f32 %v3063, %v3065
        %3177 = vadd.xlane.f32.xlu0 %v3176
        %v3178 = vpop.xlane.xlu0 %3177
        %v3179 = vadd.f32 %v3067, %v3069
        %3180 = vadd.xlane.f32.xlu0 %v3179
        %v3181 = vpop.xlane.xlu0 %3180
        %v3182 = vadd.f32 %v3071, %v3073
        %3183 = vadd.xlane.f32.xlu0 %v3182
        %v3184 = vpop.xlane.xlu0 %3183
        %v3185 = vadd.f32 %v3075, %v3077
        %3186 = vadd.xlane.f32.xlu0 %v3185
        %v3187 = vpop.xlane.xlu0 %3186
        %v3188 = vadd.f32 %v3079, %v3081
        %3189 = vadd.xlane.f32.xlu0 %v3188
        %v3190 = vpop.xlane.xlu0 %3189
        %v3191 = vadd.f32 %v3083, %v3085
        %3192 = vadd.xlane.f32.xlu0 %v3191
        %v3193 = vpop.xlane.xlu0 %3192
        %v3194 = vadd.f32 %v3087, %v3089
        %3195 = vadd.xlane.f32.xlu0 %v3194
        %v3196 = vpop.xlane.xlu0 %3195
        %v3197 = vadd.f32 %v3091, %v3093
        %3198 = vadd.xlane.f32.xlu0 %v3197
        %v3199 = vpop.xlane.xlu0 %3198
        %v3200 = vadd.f32 %v3095, %v3097
        %3201 = vadd.xlane.f32.xlu0 %v3200
        %v3202 = vpop.xlane.xlu0 %3201
        %v3203 = vadd.f32 %v3099, %v3101
        %3204 = vadd.xlane.f32.xlu0 %v3203
        %v3205 = vpop.xlane.xlu0 %3204
        %v3206 = vadd.f32 %v3103, %v3105
        %3207 = vadd.xlane.f32.xlu0 %v3206
        %v3208 = vpop.xlane.xlu0 %3207
        %v3209 = vadd.f32 %v3107, %v3109
        %3210 = vadd.xlane.f32.xlu0 %v3209
        %v3211 = vpop.xlane.xlu0 %3210
        %v3212 = vadd.f32 %v3111, %v3113
        %3213 = vadd.xlane.f32.xlu0 %v3212
        %v3214 = vpop.xlane.xlu0 %3213
        %v3215 = vadd.f32 %v3115, %v3117
        %3216 = vadd.xlane.f32.xlu0 %v3215
        %v3217 = vpop.xlane.xlu0 %3216
        %v3218 = vadd.f32 %v3119, %v3121
        %3219 = vadd.xlane.f32.xlu0 %v3218
        %v3220 = vpop.xlane.xlu0 %3219
        %v3221 = vadd.f32 %v3123, %v3125
        %3222 = vadd.xlane.f32.xlu0 %v3221
        %v3223 = vpop.xlane.xlu0 %3222
        %v3224 = vadd.f32 %v3127, %v3129
        %3225 = vadd.xlane.f32.xlu0 %v3224
        %v3226 = vpop.xlane.xlu0 %3225
        %v3227 = vadd.f32 %v3131, %v3133
        %3228 = vadd.xlane.f32.xlu0 %v3227
        %v3229 = vpop.xlane.xlu0 %3228
        %v3230 = vrcp.pop %v3136
        %v3231 = vrcp.pop %v3139
        %v3232 = vrcp.pop %v3142
        %v3233 = vrcp.pop %v3145
        %v3234 = vrcp.pop %v3148
        %v3235 = vrcp.pop %v3151
        %v3236 = vrcp.pop %v3154
        %v3237 = vrcp.pop %v3157
        %v3238 = vrcp.pop %v3160
        %v3239 = vrcp.pop %v3163
        %v3240 = vrcp.pop %v3166
        %v3241 = vrcp.pop %v3169
        %v3242 = vrcp.pop %v3172
        %v3243 = vrcp.pop %v3175
        %v3244 = vrcp.pop %v3178
        %v3245 = vrcp.pop %v3181
        %v3246 = vrcp.pop %v3184
        %v3247 = vrcp.pop %v3187
        %v3248 = vrcp.pop %v3190
        %v3249 = vrcp.pop %v3193
        %v3250 = vrcp.pop %v3196
        %v3251 = vrcp.pop %v3199
        %v3252 = vrcp.pop %v3202
        %v3253 = vrcp.pop %v3205
        %v3254 = vrcp.pop %v3208
        %v3255 = vrcp.pop %v3211
        %v3256 = vrcp.pop %v3214
        %v3257 = vrcp.pop %v3217
        %v3258 = vrcp.pop %v3220
        %v3259 = vrcp.pop %v3223
        %v3260 = vrcp.pop %v3226
        %v3261 = vrcp.pop %v3229
        %v3262 = vmul.f32 %v3007, %v3230
        %v3263 = vmul.f32 %v3009, %v3230
        %v3264 = vmul.f32 %v3011, %v3231
        %v3265 = vmul.f32 %v3013, %v3231
        %v3266 = vmul.f32 %v3015, %v3232
        %v3267 = vmul.f32 %v3017, %v3232
        %v3268 = vmul.f32 %v3019, %v3233
        %v3269 = vmul.f32 %v3021, %v3233
        %v3270 = vmul.f32 %v3023, %v3234
        %v3271 = vmul.f32 %v3025, %v3234
        %v3272 = vmul.f32 %v3027, %v3235
        %v3273 = vmul.f32 %v3029, %v3235
        %v3274 = vmul.f32 %v3031, %v3236
        %v3275 = vmul.f32 %v3033, %v3236
        %v3276 = vmul.f32 %v3035, %v3237
        %v3277 = vmul.f32 %v3037, %v3237
        %v3278 = vmul.f32 %v3039, %v3238
        %v3279 = vmul.f32 %v3041, %v3238
        %v3280 = vmul.f32 %v3043, %v3239
        %v3281 = vmul.f32 %v3045, %v3239
        %v3282 = vmul.f32 %v3047, %v3240
        %v3283 = vmul.f32 %v3049, %v3240
        %v3284 = vmul.f32 %v3051, %v3241
        %v3285 = vmul.f32 %v3053, %v3241
        %v3286 = vmul.f32 %v3055, %v3242
        %v3287 = vmul.f32 %v3057, %v3242
        %v3288 = vmul.f32 %v3059, %v3243
        %v3289 = vmul.f32 %v3061, %v3243
        %v3290 = vmul.f32 %v3063, %v3244
        %v3291 = vmul.f32 %v3065, %v3244
        %v3292 = vmul.f32 %v3067, %v3245
        %v3293 = vmul.f32 %v3069, %v3245
        %v3294 = vmul.f32 %v3071, %v3246
        %v3295 = vmul.f32 %v3073, %v3246
        %v3296 = vmul.f32 %v3075, %v3247
        %v3297 = vmul.f32 %v3077, %v3247
        %v3298 = vmul.f32 %v3079, %v3248
        %v3299 = vmul.f32 %v3081, %v3248
        %v3300 = vmul.f32 %v3083, %v3249
        %v3301 = vmul.f32 %v3085, %v3249
        %v3302 = vmul.f32 %v3087, %v3250
        %v3303 = vmul.f32 %v3089, %v3250
        %v3304 = vmul.f32 %v3091, %v3251
        %v3305 = vmul.f32 %v3093, %v3251
        %v3306 = vmul.f32 %v3095, %v3252
        %v3307 = vmul.f32 %v3097, %v3252
        %v3308 = vmul.f32 %v3099, %v3253
        %v3309 = vmul.f32 %v3101, %v3253
        %v3310 = vmul.f32 %v3103, %v3254
        %v3311 = vmul.f32 %v3105, %v3254
        %v3312 = vmul.f32 %v3107, %v3255
        %v3313 = vmul.f32 %v3109, %v3255
        %v3314 = vmul.f32 %v3111, %v3256
        %v3315 = vmul.f32 %v3113, %v3256
        %v3316 = vmul.f32 %v3115, %v3257
        %v3317 = vmul.f32 %v3117, %v3257
        %v3318 = vmul.f32 %v3119, %v3258
        %v3319 = vmul.f32 %v3121, %v3258
        %v3320 = vmul.f32 %v3123, %v3259
        %v3321 = vmul.f32 %v3125, %v3259
        %v3322 = vmul.f32 %v3127, %v3260
        %v3323 = vmul.f32 %v3129, %v3260
        %v3324 = vmul.f32 %v3131, %v3261
        %v3325 = vmul.f32 %v3133, %v3261
        %3326 = vrot.lane.b32.xlu0 %v571, 56
        %v3327 = vpop.permute.xlu0 %3326
        %3328 = vrot.lane.b32.xlu0 %v576, 56
        %v3329 = vpop.permute.xlu0 %3328
        %3330 = vrot.lane.b32.xlu0 %v581, 56
        %v3331 = vpop.permute.xlu0 %3330
        %3332 = vrot.lane.b32.xlu0 %v586, 56
        %v3333 = vpop.permute.xlu0 %3332
        %3334 = vrot.lane.b32.xlu0 %v591, 56
        %v3335 = vpop.permute.xlu0 %3334
        %3336 = vrot.lane.b32.xlu0 %v596, 56
        %v3337 = vpop.permute.xlu0 %3336
        %3338 = vrot.lane.b32.xlu0 %v601, 56
        %v3339 = vpop.permute.xlu0 %3338
        %3340 = vrot.lane.b32.xlu0 %v606, 56
        %v3341 = vpop.permute.xlu0 %3340
        %3342 = vrot.lane.b32.xlu0 %v611, 56
        %v3343 = vpop.permute.xlu0 %3342
        %3344 = vrot.lane.b32.xlu0 %v616, 56
        %v3345 = vpop.permute.xlu0 %3344
        %3346 = vrot.lane.b32.xlu0 %v621, 56
        %v3347 = vpop.permute.xlu0 %3346
        %3348 = vrot.lane.b32.xlu0 %v626, 56
        %v3349 = vpop.permute.xlu0 %3348
        %3350 = vrot.lane.b32.xlu0 %v631, 56
        %v3351 = vpop.permute.xlu0 %3350
        %3352 = vrot.lane.b32.xlu0 %v636, 56
        %v3353 = vpop.permute.xlu0 %3352
        %3354 = vrot.lane.b32.xlu0 %v641, 56
        %v3355 = vpop.permute.xlu0 %3354
        %3356 = vrot.lane.b32.xlu0 %v646, 56
        %v3357 = vpop.permute.xlu0 %3356
        %3358 = vrot.lane.b32.xlu0 %v651, 56
        %v3359 = vpop.permute.xlu0 %3358
        %3360 = vrot.lane.b32.xlu0 %v656, 56
        %v3361 = vpop.permute.xlu0 %3360
        %3362 = vrot.lane.b32.xlu0 %v661, 56
        %v3363 = vpop.permute.xlu0 %3362
        %3364 = vrot.lane.b32.xlu0 %v666, 56
        %v3365 = vpop.permute.xlu0 %3364
        %3366 = vrot.lane.b32.xlu0 %v671, 56
        %v3367 = vpop.permute.xlu0 %3366
        %3368 = vrot.lane.b32.xlu0 %v676, 56
        %v3369 = vpop.permute.xlu0 %3368
        %3370 = vrot.lane.b32.xlu0 %v681, 56
        %v3371 = vpop.permute.xlu0 %3370
        %3372 = vrot.lane.b32.xlu0 %v686, 56
        %v3373 = vpop.permute.xlu0 %3372
        %3374 = vrot.lane.b32.xlu0 %v691, 56
        %v3375 = vpop.permute.xlu0 %3374
        %3376 = vrot.lane.b32.xlu0 %v696, 56
        %v3377 = vpop.permute.xlu0 %3376
        %3378 = vrot.lane.b32.xlu0 %v701, 56
        %v3379 = vpop.permute.xlu0 %3378
        %3380 = vrot.lane.b32.xlu0 %v706, 56
        %v3381 = vpop.permute.xlu0 %3380
        %3382 = vrot.lane.b32.xlu0 %v711, 56
        %v3383 = vpop.permute.xlu0 %3382
        %3384 = vrot.lane.b32.xlu0 %v716, 56
        %v3385 = vpop.permute.xlu0 %3384
        %3386 = vrot.lane.b32.xlu0 %v721, 56
        %v3387 = vpop.permute.xlu0 %3386
        %3388 = vrot.lane.b32.xlu0 %v726, 56
        %v3389 = vpop.permute.xlu0 %3388
        %3422 = vmatprep.subr.mxu0 0.0
        %3423 = vmatpush1.msra.mxu0 %v3327
        %3424 = vmatprep.subr.mxu0 0.0
        %3425 = vmatpush1.msra.mxu0 %v3329
        %3426 = vmatprep.subr.mxu0 0.0
        %3427 = vmatpush1.msra.mxu0 %v3331
        %3428 = vmatprep.subr.mxu0 0.0
        %3429 = vmatpush1.msra.mxu0 %v3333
        %3430 = vmatprep.subr.mxu0 0.0
        %3431 = vmatpush1.msra.mxu0 %v3335
        %3432 = vmatprep.subr.mxu0 0.0
        %3433 = vmatpush1.msra.mxu0 %v3337
        %3434 = vmatprep.subr.mxu0 0.0
        %3435 = vmatpush1.msra.mxu0 %v3339
        %3436 = vmatprep.subr.mxu0 0.0
        %3437 = vmatpush1.msra.mxu0 %v3341
        %3438 = vmatprep.subr.mxu0 0.0
        %3439 = vmatpush1.msra.mxu0 %v3343
        %3440 = vmatprep.subr.mxu0 0.0
        %3441 = vmatpush1.msra.mxu0 %v3345
        %3442 = vmatprep.subr.mxu0 0.0
        %3443 = vmatpush1.msra.mxu0 %v3347
        %3444 = vmatprep.subr.mxu0 0.0
        %3445 = vmatpush1.msra.mxu0 %v3349
        %3446 = vmatprep.subr.mxu0 0.0
        %3447 = vmatpush1.msra.mxu0 %v3351
        %3448 = vmatprep.subr.mxu0 0.0
        %3449 = vmatpush1.msra.mxu0 %v3353
        %3450 = vmatprep.subr.mxu0 0.0
        %3451 = vmatpush1.msra.mxu0 %v3355
        %3452 = vmatprep.subr.mxu0 0.0
        %3453 = vmatpush1.msra.mxu0 %v3357
        %3454 = vmatprep.subr.mxu0 0.0
        %3455 = vmatpush1.msra.mxu0 %v3359
        %3456 = vmatprep.subr.mxu0 0.0
        %3457 = vmatpush1.msra.mxu0 %v3361
        %3458 = vmatprep.subr.mxu0 0.0
        %3459 = vmatpush1.msra.mxu0 %v3363
        %3460 = vmatprep.subr.mxu0 0.0
        %3461 = vmatpush1.msra.mxu0 %v3365
        %3462 = vmatprep.subr.mxu0 0.0
        %3463 = vmatpush1.msra.mxu0 %v3367
        %3464 = vmatprep.subr.mxu0 0.0
        %3465 = vmatpush1.msra.mxu0 %v3369
        %3466 = vmatprep.subr.mxu0 0.0
        %3467 = vmatpush1.msra.mxu0 %v3371
        %3468 = vmatprep.subr.mxu0 0.0
        %3469 = vmatpush1.msra.mxu0 %v3373
        %3470 = vmatprep.subr.mxu0 0.0
        %3471 = vmatpush1.msra.mxu0 %v3375
        %3472 = vmatprep.subr.mxu0 0.0
        %3473 = vmatpush1.msra.mxu0 %v3377
        %3474 = vmatprep.subr.mxu0 0.0
        %3475 = vmatpush1.msra.mxu0 %v3379
        %3476 = vmatprep.subr.mxu0 0.0
        %3477 = vmatpush1.msra.mxu0 %v3381
        %3478 = vmatprep.subr.mxu0 0.0
        %3479 = vmatpush1.msra.mxu0 %v3383
        %3480 = vmatprep.subr.mxu0 0.0
        %3481 = vmatpush1.msra.mxu0 %v3385
        %3482 = vmatprep.subr.mxu0 0.0
        %3483 = vmatpush1.msra.mxu0 %v3387
        %3484 = vmatprep.subr.mxu0 0.0
        %3485 = vmatpush1.msra.mxu0 %v3389
        %3486 = vmatprep.mubr.f32.mxu0 %v3263
        %3487 = vmatmul.mubr.f32.gmra.mrb[0].mxu0 %v3262
        %v3488 = vpop.f32.mrb[0].mxu0
        %v3489 = vadd.f32 0.0, %v3488
        %v3490 = vpop.f32.mrb[0].mxu0
        %3491 = vmatprep.mubr.f32.mxu0 %v3265
        %3492 = vmatmul.mubr.f32.gmra.mrb[0].mxu0 %v3264
        %v3493 = vpop.f32.mrb[0].mxu0
        %v3494 = vadd.f32 0.0, %v3493
        %v3495 = vpop.f32.mrb[0].mxu0
        %3496 = vmatprep.mubr.f32.mxu0 %v3267
        %3497 = vmatmul.mubr.f32.gmra.mrb[0].mxu0 %v3266
        %v3498 = vpop.f32.mrb[0].mxu0
        %v3499 = vadd.f32 0.0, %v3498
        %v3500 = vpop.f32.mrb[0].mxu0
        %3501 = vmatprep.mubr.f32.mxu0 %v3269
        %3502 = vmatmul.mubr.f32.gmra.mrb[0].mxu0 %v3268
        %v3503 = vpop.f32.mrb[0].mxu0
        %v3504 = vadd.f32 0.0, %v3503
        %v3505 = vpop.f32.mrb[0].mxu0
        %3506 = vmatprep.mubr.f32.mxu0 %v3271
        %3507 = vmatmul.mubr.f32.gmra.mrb[0].mxu0 %v3270
        %v3508 = vpop.f32.mrb[0].mxu0
        %v3509 = vadd.f32 0.0, %v3508
        %v3510 = vpop.f32.mrb[0].mxu0
        %3511 = vmatprep.mubr.f32.mxu0 %v3273
        %3512 = vmatmul.mubr.f32.gmra.mrb[0].mxu0 %v3272
        %v3513 = vpop.f32.mrb[0].mxu0
        %v3514 = vadd.f32 0.0, %v3513
        %v3515 = vpop.f32.mrb[0].mxu0
        %3516 = vmatprep.mubr.f32.mxu0 %v3275
        %3517 = vmatmul.mubr.f32.gmra.mrb[0].mxu0 %v3274
        %v3518 = vpop.f32.mrb[0].mxu0
        %v3519 = vadd.f32 0.0, %v3518
        %v3520 = vpop.f32.mrb[0].mxu0
        %3521 = vmatprep.mubr.f32.mxu0 %v3277
        %3522 = vmatmul.mubr.f32.gmra.mrb[0].mxu0 %v3276
        %v3523 = vpop.f32.mrb[0].mxu0
        %v3524 = vadd.f32 0.0, %v3523
        %v3525 = vpop.f32.mrb[0].mxu0
        %3526 = vmatprep.mubr.f32.mxu0 %v3279
        %3527 = vmatmul.mubr.f32.gmra.mrb[0].mxu0 %v3278
        %v3528 = vpop.f32.mrb[0].mxu0
        %v3529 = vadd.f32 0.0, %v3528
        %v3530 = vpop.f32.mrb[0].mxu0
        %3531 = vmatprep.mubr.f32.mxu0 %v3281
        %3532 = vmatmul.mubr.f32.gmra.mrb[0].mxu0 %v3280
        %v3533 = vpop.f32.mrb[0].mxu0
        %v3534 = vadd.f32 0.0, %v3533
        %v3535 = vpop.f32.mrb[0].mxu0
        %3536 = vmatprep.mubr.f32.mxu0 %v3283
        %3537 = vmatmul.mubr.f32.gmra.mrb[0].mxu0 %v3282
        %v3538 = vpop.f32.mrb[0].mxu0
        %v3539 = vadd.f32 0.0, %v3538
        %v3540 = vpop.f32.mrb[0].mxu0
        %3541 = vmatprep.mubr.f32.mxu0 %v3285
        %3542 = vmatmul.mubr.f32.gmra.mrb[0].mxu0 %v3284
        %v3543 = vpop.f32.mrb[0].mxu0
        %v3544 = vadd.f32 0.0, %v3543
        %v3545 = vpop.f32.mrb[0].mxu0
        %3546 = vmatprep.mubr.f32.mxu0 %v3287
        %3547 = vmatmul.mubr.f32.gmra.mrb[0].mxu0 %v3286
        %v3548 = vpop.f32.mrb[0].mxu0
        %v3549 = vadd.f32 0.0, %v3548
        %v3550 = vpop.f32.mrb[0].mxu0
        %3551 = vmatprep.mubr.f32.mxu0 %v3289
        %3552 = vmatmul.mubr.f32.gmra.mrb[0].mxu0 %v3288
        %v3553 = vpop.f32.mrb[0].mxu0
        %v3554 = vadd.f32 0.0, %v3553
        %v3555 = vpop.f32.mrb[0].mxu0
        %3556 = vmatprep.mubr.f32.mxu0 %v3291
        %3557 = vmatmul.mubr.f32.gmra.mrb[0].mxu0 %v3290
        %v3558 = vpop.f32.mrb[0].mxu0
        %v3559 = vadd.f32 0.0, %v3558
        %v3560 = vpop.f32.mrb[0].mxu0
        %3561 = vmatprep.mubr.f32.mxu0 %v3293
        %3562 = vmatmul.mubr.f32.gmra.mrb[0].mxu0 %v3292
        %v3563 = vpop.f32.mrb[0].mxu0
        %v3564 = vadd.f32 0.0, %v3563
        %v3565 = vpop.f32.mrb[0].mxu0
        %3566 = vmatprep.mubr.f32.mxu0 %v3295
        %3567 = vmatmul.mubr.f32.gmra.mrb[0].mxu0 %v3294
        %v3568 = vpop.f32.mrb[0].mxu0
        %v3569 = vadd.f32 0.0, %v3568
        %v3570 = vpop.f32.mrb[0].mxu0
        %3571 = vmatprep.mubr.f32.mxu0 %v3297
        %3572 = vmatmul.mubr.f32.gmra.mrb[0].mxu0 %v3296
        %v3573 = vpop.f32.mrb[0].mxu0
        %v3574 = vadd.f32 0.0, %v3573
        %v3575 = vpop.f32.mrb[0].mxu0
        %3576 = vmatprep.mubr.f32.mxu0 %v3299
        %3577 = vmatmul.mubr.f32.gmra.mrb[0].mxu0 %v3298
        %v3578 = vpop.f32.mrb[0].mxu0
        %v3579 = vadd.f32 0.0, %v3578
        %v3580 = vpop.f32.mrb[0].mxu0
        %3581 = vmatprep.mubr.f32.mxu0 %v3301
        %3582 = vmatmul.mubr.f32.gmra.mrb[0].mxu0 %v3300
        %v3583 = vpop.f32.mrb[0].mxu0
        %v3584 = vadd.f32 0.0, %v3583
        %v3585 = vpop.f32.mrb[0].mxu0
        %3586 = vmatprep.mubr.f32.mxu0 %v3303
        %3587 = vmatmul.mubr.f32.gmra.mrb[0].mxu0 %v3302
        %v3588 = vpop.f32.mrb[0].mxu0
        %v3589 = vadd.f32 0.0, %v3588
        %v3590 = vpop.f32.mrb[0].mxu0
        %3591 = vmatprep.mubr.f32.mxu0 %v3305
        %3592 = vmatmul.mubr.f32.gmra.mrb[0].mxu0 %v3304
        %v3593 = vpop.f32.mrb[0].mxu0
        %v3594 = vadd.f32 0.0, %v3593
        %v3595 = vpop.f32.mrb[0].mxu0
        %3596 = vmatprep.mubr.f32.mxu0 %v3307
        %3597 = vmatmul.mubr.f32.gmra.mrb[0].mxu0 %v3306
        %v3598 = vpop.f32.mrb[0].mxu0
        %v3599 = vadd.f32 0.0, %v3598
        %v3600 = vpop.f32.mrb[0].mxu0
        %3601 = vmatprep.mubr.f32.mxu0 %v3309
        %3602 = vmatmul.mubr.f32.gmra.mrb[0].mxu0 %v3308
        %v3603 = vpop.f32.mrb[0].mxu0
        %v3604 = vadd.f32 0.0, %v3603
        %v3605 = vpop.f32.mrb[0].mxu0
        %3606 = vmatprep.mubr.f32.mxu0 %v3311
        %3607 = vmatmul.mubr.f32.gmra.mrb[0].mxu0 %v3310
        %v3608 = vpop.f32.mrb[0].mxu0
        %v3609 = vadd.f32 0.0, %v3608
        %v3610 = vpop.f32.mrb[0].mxu0
        %3611 = vmatprep.mubr.f32.mxu0 %v3313
        %3612 = vmatmul.mubr.f32.gmra.mrb[0].mxu0 %v3312
        %v3613 = vpop.f32.mrb[0].mxu0
        %v3614 = vadd.f32 0.0, %v3613
        %v3615 = vpop.f32.mrb[0].mxu0
        %3616 = vmatprep.mubr.f32.mxu0 %v3315
        %3617 = vmatmul.mubr.f32.gmra.mrb[0].mxu0 %v3314
        %v3618 = vpop.f32.mrb[0].mxu0
        %v3619 = vadd.f32 0.0, %v3618
        %v3620 = vpop.f32.mrb[0].mxu0
        %3621 = vmatprep.mubr.f32.mxu0 %v3317
        %3622 = vmatmul.mubr.f32.gmra.mrb[0].mxu0 %v3316
        %v3623 = vpop.f32.mrb[0].mxu0
        %v3624 = vadd.f32 0.0, %v3623
        %v3625 = vpop.f32.mrb[0].mxu0
        %3626 = vmatprep.mubr.f32.mxu0 %v3319
        %3627 = vmatmul.mubr.f32.gmra.mrb[0].mxu0 %v3318
        %v3628 = vpop.f32.mrb[0].mxu0
        %v3629 = vadd.f32 0.0, %v3628
        %v3630 = vpop.f32.mrb[0].mxu0
        %3631 = vmatprep.mubr.f32.mxu0 %v3321
        %3632 = vmatmul.mubr.f32.gmra.mrb[0].mxu0 %v3320
        %v3633 = vpop.f32.mrb[0].mxu0
        %v3634 = vadd.f32 0.0, %v3633
        %v3635 = vpop.f32.mrb[0].mxu0
        %3636 = vmatprep.mubr.f32.mxu0 %v3323
        %3637 = vmatmul.mubr.f32.gmra.mrb[0].mxu0 %v3322
        %v3638 = vpop.f32.mrb[0].mxu0
        %v3639 = vadd.f32 0.0, %v3638
        %v3640 = vpop.f32.mrb[0].mxu0
        %3641 = vmatprep.mubr.f32.mxu0 %v3325
        %3642 = vmatmul.mubr.f32.gmra.mrb[0].mxu0 %v3324
        %v3643 = vpop.f32.mrb[0].mxu0
        %v3644 = vadd.f32 0.0, %v3643
        %v3645 = vpop.f32.mrb[0].mxu0
        %3646 = vdwg.mxu0
        %v3647 = vld [vmem:[#allocation5 + $0x8] sm:$0xff]
        %v3649 = vsel %vm889, %v3489, 0
        %v3652 = vsel %vm889, %v3494, 0
        %v3655 = vsel %vm889, %v3499, 0
        %v3658 = vsel %vm889, %v3504, 0
        %v3661 = vsel %vm889, %v3509, 0
        %v3664 = vsel %vm889, %v3514, 0
        %v3667 = vsel %vm889, %v3519, 0
        %v3670 = vsel %vm889, %v3524, 0
        %v3673 = vsel %vm889, %v3529, 0
        %v3676 = vsel %vm889, %v3534, 0
        %v3679 = vsel %vm889, %v3539, 0
        %v3682 = vsel %vm889, %v3544, 0
        %v3685 = vsel %vm889, %v3549, 0
        %v3688 = vsel %vm889, %v3554, 0
        %v3691 = vsel %vm889, %v3559, 0
        %v3694 = vsel %vm889, %v3564, 0
        %v3697 = vsel %vm889, %v3569, 0
        %v3700 = vsel %vm889, %v3574, 0
        %v3703 = vsel %vm889, %v3579, 0
        %v3706 = vsel %vm889, %v3584, 0
        %v3709 = vsel %vm889, %v3589, 0
        %v3712 = vsel %vm889, %v3594, 0
        %v3715 = vsel %vm889, %v3599, 0
        %v3718 = vsel %vm889, %v3604, 0
        %v3721 = vsel %vm889, %v3609, 0
        %v3724 = vsel %vm889, %v3614, 0
        %v3727 = vsel %vm889, %v3619, 0
        %v3730 = vsel %vm889, %v3624, 0
        %v3733 = vsel %vm889, %v3629, 0
        %v3736 = vsel %vm889, %v3634, 0
        %v3739 = vsel %vm889, %v3639, 0
        %v3742 = vsel %vm889, %v3644, 0
        %3744 = vmatprep.subr.mxu0 0.0
        %3745 = vmatpush1.msra.mxu0 %v3647
        %3746 = vmatprep.subr.mxu0 0.0
        %3747 = vmatpush1.msra.mxu0 0.0
        %3748 = vmatprep.subr.mxu0 0.0
        %3749 = vmatpush1.msra.mxu0 0.0
        %3750 = vmatprep.subr.mxu0 0.0
        %3751 = vmatpush1.msra.mxu0 0.0
        %3752 = vmatprep.subr.mxu0 0.0
        %3753 = vmatpush1.msra.mxu0 0.0
        %3754 = vmatprep.subr.mxu0 0.0
        %3755 = vmatpush1.msra.mxu0 0.0
        %3756 = vmatprep.subr.mxu0 0.0
        %3757 = vmatpush1.msra.mxu0 0.0
        %3758 = vmatprep.subr.mxu0 0.0
        %3759 = vmatpush1.msra.mxu0 0.0
        %3760 = vmatprep.subr.mxu0 0.0
        %3761 = vmatpush1.msra.mxu0 0.0
        %3762 = vmatprep.subr.mxu0 0.0
        %3763 = vmatpush1.msra.mxu0 0.0
        %3764 = vmatprep.subr.mxu0 0.0
        %3765 = vmatpush1.msra.mxu0 0.0
        %3766 = vmatprep.subr.mxu0 0.0
        %3767 = vmatpush1.msra.mxu0 0.0
        %3768 = vmatprep.subr.mxu0 0.0
        %3769 = vmatpush1.msra.mxu0 0.0
        %3770 = vmatprep.subr.mxu0 0.0
        %3771 = vmatpush1.msra.mxu0 0.0
        %3772 = vmatprep.subr.mxu0 0.0
        %3773 = vmatpush1.msra.mxu0 0.0
        %3774 = vmatprep.subr.mxu0 0.0
        %3775 = vmatpush1.msra.mxu0 0.0
        %3776 = vmatprep.subr.mxu0 0.0
        %3777 = vmatpush1.msra.mxu0 0.0
        %3778 = vmatprep.subr.mxu0 0.0
        %3779 = vmatpush1.msra.mxu0 0.0
        %3780 = vmatprep.subr.mxu0 0.0
        %3781 = vmatpush1.msra.mxu0 0.0
        %3782 = vmatprep.subr.mxu0 0.0
        %3783 = vmatpush1.msra.mxu0 0.0
        %3784 = vmatprep.subr.mxu0 0.0
        %3785 = vmatpush1.msra.mxu0 0.0
        %3786 = vmatprep.subr.mxu0 0.0
        %3787 = vmatpush1.msra.mxu0 0.0
        %3788 = vmatprep.subr.mxu0 0.0
        %3789 = vmatpush1.msra.mxu0 0.0
        %3790 = vmatprep.subr.mxu0 0.0
        %3791 = vmatpush1.msra.mxu0 0.0
        %3792 = vmatprep.subr.mxu0 0.0
        %3793 = vmatpush1.msra.mxu0 0.0
        %3794 = vmatprep.subr.mxu0 0.0
        %3795 = vmatpush1.msra.mxu0 0.0
        %3796 = vmatprep.subr.mxu0 0.0
        %3797 = vmatpush1.msra.mxu0 0.0
        %3798 = vmatprep.subr.mxu0 0.0
        %3799 = vmatpush1.msra.mxu0 0.0
        %3800 = vmatprep.subr.mxu0 0.0
        %3801 = vmatpush1.msra.mxu0 0.0
        %3802 = vmatprep.subr.mxu0 0.0
        %3803 = vmatpush1.msra.mxu0 0.0
        %3804 = vmatprep.subr.mxu0 0.0
        %3805 = vmatpush1.msra.mxu0 0.0
        %3806 = vmatprep.subr.mxu0 0.0
        %3807 = vmatpush1.msra.mxu0 0.0
        %3808 = vmatprep.mubr.f32.mxu0 0.0
        %3809 = vmatmul.mubr.f32.gmra.mrb[0].mxu0 %v3649
        %v3810 = vpop.f32.mrb[0].mxu0
        %v3811 = vadd.f32 0.0, %v3810
        %v3812 = vpop.f32.mrb[0].mxu0
        %3813 = vmatprep.mubr.f32.mxu0 0.0
        %3814 = vmatmul.mubr.f32.gmra.mrb[0].mxu0 %v3652
        %v3815 = vpop.f32.mrb[0].mxu0
        %v3816 = vadd.f32 0.0, %v3815
        %v3817 = vpop.f32.mrb[0].mxu0
        %3818 = vmatprep.mubr.f32.mxu0 0.0
        %3819 = vmatmul.mubr.f32.gmra.mrb[0].mxu0 %v3655
        %v3820 = vpop.f32.mrb[0].mxu0
        %v3821 = vadd.f32 0.0, %v3820
        %v3822 = vpop.f32.mrb[0].mxu0
        %3823 = vmatprep.mubr.f32.mxu0 0.0
        %3824 = vmatmul.mubr.f32.gmra.mrb[0].mxu0 %v3658
        %v3825 = vpop.f32.mrb[0].mxu0
        %v3826 = vadd.f32 0.0, %v3825
        %v3827 = vpop.f32.mrb[0].mxu0
        %3828 = vmatprep.mubr.f32.mxu0 0.0
        %3829 = vmatmul.mubr.f32.gmra.mrb[0].mxu0 %v3661
        %v3830 = vpop.f32.mrb[0].mxu0
        %v3831 = vadd.f32 0.0, %v3830
        %v3832 = vpop.f32.mrb[0].mxu0
        %3833 = vmatprep.mubr.f32.mxu0 0.0
        %3834 = vmatmul.mubr.f32.gmra.mrb[0].mxu0 %v3664
        %v3835 = vpop.f32.mrb[0].mxu0
        %v3836 = vadd.f32 0.0, %v3835
        %v3837 = vpop.f32.mrb[0].mxu0
        %3838 = vmatprep.mubr.f32.mxu0 0.0
        %3839 = vmatmul.mubr.f32.gmra.mrb[0].mxu0 %v3667
        %v3840 = vpop.f32.mrb[0].mxu0
        %v3841 = vadd.f32 0.0, %v3840
        %v3842 = vpop.f32.mrb[0].mxu0
        %3843 = vmatprep.mubr.f32.mxu0 0.0
        %3844 = vmatmul.mubr.f32.gmra.mrb[0].mxu0 %v3670
        %v3845 = vpop.f32.mrb[0].mxu0
        %v3846 = vadd.f32 0.0, %v3845
        %v3847 = vpop.f32.mrb[0].mxu0
        %3848 = vmatprep.mubr.f32.mxu0 0.0
        %3849 = vmatmul.mubr.f32.gmra.mrb[0].mxu0 %v3673
        %v3850 = vpop.f32.mrb[0].mxu0
        %v3851 = vadd.f32 0.0, %v3850
        %v3852 = vpop.f32.mrb[0].mxu0
        %3853 = vmatprep.mubr.f32.mxu0 0.0
        %3854 = vmatmul.mubr.f32.gmra.mrb[0].mxu0 %v3676
        %v3855 = vpop.f32.mrb[0].mxu0
        %v3856 = vadd.f32 0.0, %v3855
        %v3857 = vpop.f32.mrb[0].mxu0
        %3858 = vmatprep.mubr.f32.mxu0 0.0
        %3859 = vmatmul.mubr.f32.gmra.mrb[0].mxu0 %v3679
        %v3860 = vpop.f32.mrb[0].mxu0
        %v3861 = vadd.f32 0.0, %v3860
        %v3862 = vpop.f32.mrb[0].mxu0
        %3863 = vmatprep.mubr.f32.mxu0 0.0
        %3864 = vmatmul.mubr.f32.gmra.mrb[0].mxu0 %v3682
        %v3865 = vpop.f32.mrb[0].mxu0
        %v3866 = vadd.f32 0.0, %v3865
        %v3867 = vpop.f32.mrb[0].mxu0
        %3868 = vmatprep.mubr.f32.mxu0 0.0
        %3869 = vmatmul.mubr.f32.gmra.mrb[0].mxu0 %v3685
        %v3870 = vpop.f32.mrb[0].mxu0
        %v3871 = vadd.f32 0.0, %v3870
        %v3872 = vpop.f32.mrb[0].mxu0
        %3873 = vmatprep.mubr.f32.mxu0 0.0
        %3874 = vmatmul.mubr.f32.gmra.mrb[0].mxu0 %v3688
        %v3875 = vpop.f32.mrb[0].mxu0
        %v3876 = vadd.f32 0.0, %v3875
        %v3877 = vpop.f32.mrb[0].mxu0
        %3878 = vmatprep.mubr.f32.mxu0 0.0
        %3879 = vmatmul.mubr.f32.gmra.mrb[0].mxu0 %v3691
        %v3880 = vpop.f32.mrb[0].mxu0
        %v3881 = vadd.f32 0.0, %v3880
        %v3882 = vpop.f32.mrb[0].mxu0
        %3883 = vmatprep.mubr.f32.mxu0 0.0
        %3884 = vmatmul.mubr.f32.gmra.mrb[0].mxu0 %v3694
        %v3885 = vpop.f32.mrb[0].mxu0
        %v3886 = vadd.f32 0.0, %v3885
        %v3887 = vpop.f32.mrb[0].mxu0
        %3888 = vmatprep.mubr.f32.mxu0 0.0
        %3889 = vmatmul.mubr.f32.gmra.mrb[0].mxu0 %v3697
        %v3890 = vpop.f32.mrb[0].mxu0
        %v3891 = vadd.f32 0.0, %v3890
        %v3892 = vpop.f32.mrb[0].mxu0
        %3893 = vmatprep.mubr.f32.mxu0 0.0
        %3894 = vmatmul.mubr.f32.gmra.mrb[0].mxu0 %v3700
        %v3895 = vpop.f32.mrb[0].mxu0
        %v3896 = vadd.f32 0.0, %v3895
        %v3897 = vpop.f32.mrb[0].mxu0
        %3898 = vmatprep.mubr.f32.mxu0 0.0
        %3899 = vmatmul.mubr.f32.gmra.mrb[0].mxu0 %v3703
        %v3900 = vpop.f32.mrb[0].mxu0
        %v3901 = vadd.f32 0.0, %v3900
        %v3902 = vpop.f32.mrb[0].mxu0
        %3903 = vmatprep.mubr.f32.mxu0 0.0
        %3904 = vmatmul.mubr.f32.gmra.mrb[0].mxu0 %v3706
        %v3905 = vpop.f32.mrb[0].mxu0
        %v3906 = vadd.f32 0.0, %v3905
        %v3907 = vpop.f32.mrb[0].mxu0
        %3908 = vmatprep.mubr.f32.mxu0 0.0
        %3909 = vmatmul.mubr.f32.gmra.mrb[0].mxu0 %v3709
        %v3910 = vpop.f32.mrb[0].mxu0
        %v3911 = vadd.f32 0.0, %v3910
        %v3912 = vpop.f32.mrb[0].mxu0
        %3913 = vmatprep.mubr.f32.mxu0 0.0
        %3914 = vmatmul.mubr.f32.gmra.mrb[0].mxu0 %v3712
        %v3915 = vpop.f32.mrb[0].mxu0
        %v3916 = vadd.f32 0.0, %v3915
        %v3917 = vpop.f32.mrb[0].mxu0
        %3918 = vmatprep.mubr.f32.mxu0 0.0
        %3919 = vmatmul.mubr.f32.gmra.mrb[0].mxu0 %v3715
        %v3920 = vpop.f32.mrb[0].mxu0
        %v3921 = vadd.f32 0.0, %v3920
        %v3922 = vpop.f32.mrb[0].mxu0
        %3923 = vmatprep.mubr.f32.mxu0 0.0
        %3924 = vmatmul.mubr.f32.gmra.mrb[0].mxu0 %v3718
        %v3925 = vpop.f32.mrb[0].mxu0
        %v3926 = vadd.f32 0.0, %v3925
        %v3927 = vpop.f32.mrb[0].mxu0
        %3928 = vmatprep.mubr.f32.mxu0 0.0
        %3929 = vmatmul.mubr.f32.gmra.mrb[0].mxu0 %v3721
        %v3930 = vpop.f32.mrb[0].mxu0
        %v3931 = vadd.f32 0.0, %v3930
        %v3932 = vpop.f32.mrb[0].mxu0
        %3933 = vmatprep.mubr.f32.mxu0 0.0
        %3934 = vmatmul.mubr.f32.gmra.mrb[0].mxu0 %v3724
        %v3935 = vpop.f32.mrb[0].mxu0
        %v3936 = vadd.f32 0.0, %v3935
        %v3937 = vpop.f32.mrb[0].mxu0
        %3938 = vmatprep.mubr.f32.mxu0 0.0
        %3939 = vmatmul.mubr.f32.gmra.mrb[0].mxu0 %v3727
        %v3940 = vpop.f32.mrb[0].mxu0
        %v3941 = vadd.f32 0.0, %v3940
        %v3942 = vpop.f32.mrb[0].mxu0
        %3943 = vmatprep.mubr.f32.mxu0 0.0
        %3944 = vmatmul.mubr.f32.gmra.mrb[0].mxu0 %v3730
        %v3945 = vpop.f32.mrb[0].mxu0
        %v3946 = vadd.f32 0.0, %v3945
        %v3947 = vpop.f32.mrb[0].mxu0
        %3948 = vmatprep.mubr.f32.mxu0 0.0
        %3949 = vmatmul.mubr.f32.gmra.mrb[0].mxu0 %v3733
        %v3950 = vpop.f32.mrb[0].mxu0
        %v3951 = vadd.f32 0.0, %v3950
        %v3952 = vpop.f32.mrb[0].mxu0
        %3953 = vmatprep.mubr.f32.mxu0 0.0
        %3954 = vmatmul.mubr.f32.gmra.mrb[0].mxu0 %v3736
        %v3955 = vpop.f32.mrb[0].mxu0
        %v3956 = vadd.f32 0.0, %v3955
        %v3957 = vpop.f32.mrb[0].mxu0
        %3958 = vmatprep.mubr.f32.mxu0 0.0
        %3959 = vmatmul.mubr.f32.gmra.mrb[0].mxu0 %v3739
        %v3960 = vpop.f32.mrb[0].mxu0
        %v3961 = vadd.f32 0.0, %v3960
        %v3962 = vpop.f32.mrb[0].mxu0
        %3963 = vmatprep.mubr.f32.mxu0 0.0
        %3964 = vmatmul.mubr.f32.gmra.mrb[0].mxu0 %v3742
        %v3965 = vpop.f32.mrb[0].mxu0
        %v3966 = vadd.f32 0.0, %v3965
        %v3967 = vpop.f32.mrb[0].mxu0
        %3968 = vdwg.mxu0
        %v3970 = vsel %vm889, %v2046, 0
        %v3973 = vsel %vm889, %v2051, 0
        %v3976 = vsel %vm889, %v2056, 0
        %v3979 = vsel %vm889, %v2061, 0
        %v3982 = vsel %vm889, %v2066, 0
        %v3985 = vsel %vm889, %v2071, 0
        %v3988 = vsel %vm889, %v2076, 0
        %v3991 = vsel %vm889, %v2081, 0
        %v3994 = vsel %vm889, %v2086, 0
        %v3997 = vsel %vm889, %v2091, 0
        %v4000 = vsel %vm889, %v2096, 0
        %v4003 = vsel %vm889, %v2101, 0
        %v4006 = vsel %vm889, %v2106, 0
        %v4009 = vsel %vm889, %v2111, 0
        %v4012 = vsel %vm889, %v2116, 0
        %v4015 = vsel %vm889, %v2121, 0
        %v4018 = vsel %vm889, %v2126, 0
        %v4021 = vsel %vm889, %v2131, 0
        %v4024 = vsel %vm889, %v2136, 0
        %v4027 = vsel %vm889, %v2141, 0
        %v4030 = vsel %vm889, %v2146, 0
        %v4033 = vsel %vm889, %v2151, 0
        %v4036 = vsel %vm889, %v2156, 0
        %v4039 = vsel %vm889, %v2161, 0
        %v4042 = vsel %vm889, %v2166, 0
        %v4045 = vsel %vm889, %v2171, 0
        %v4048 = vsel %vm889, %v2176, 0
        %v4051 = vsel %vm889, %v2181, 0
        %v4054 = vsel %vm889, %v2186, 0
        %v4057 = vsel %vm889, %v2191, 0
        %v4060 = vsel %vm889, %v2196, 0
        %v4063 = vsel %vm889, %v2201, 0
        %4065 = vmatprep.subr.mxu0 0.0
        %4066 = vmatpush1.msra.mxu0 %v2204
        %4067 = vmatprep.subr.mxu0 0.0
        %4068 = vmatpush1.msra.mxu0 0.0
        %4069 = vmatprep.subr.mxu0 0.0
        %4070 = vmatpush1.msra.mxu0 0.0
        %4071 = vmatprep.subr.mxu0 0.0
        %4072 = vmatpush1.msra.mxu0 0.0
        %4073 = vmatprep.subr.mxu0 0.0
        %4074 = vmatpush1.msra.mxu0 0.0
        %4075 = vmatprep.subr.mxu0 0.0
        %4076 = vmatpush1.msra.mxu0 0.0
        %4077 = vmatprep.subr.mxu0 0.0
        %4078 = vmatpush1.msra.mxu0 0.0
        %4079 = vmatprep.subr.mxu0 0.0
        %4080 = vmatpush1.msra.mxu0 0.0
        %4081 = vmatprep.subr.mxu0 0.0
        %4082 = vmatpush1.msra.mxu0 0.0
        %4083 = vmatprep.subr.mxu0 0.0
        %4084 = vmatpush1.msra.mxu0 0.0
        %4085 = vmatprep.subr.mxu0 0.0
        %4086 = vmatpush1.msra.mxu0 0.0
        %4087 = vmatprep.subr.mxu0 0.0
        %4088 = vmatpush1.msra.mxu0 0.0
        %4089 = vmatprep.subr.mxu0 0.0
        %4090 = vmatpush1.msra.mxu0 0.0
        %4091 = vmatprep.subr.mxu0 0.0
        %4092 = vmatpush1.msra.mxu0 0.0
        %4093 = vmatprep.subr.mxu0 0.0
        %4094 = vmatpush1.msra.mxu0 0.0
        %4095 = vmatprep.subr.mxu0 0.0
        %4096 = vmatpush1.msra.mxu0 0.0
        %4097 = vmatprep.subr.mxu0 0.0
        %4098 = vmatpush1.msra.mxu0 0.0
        %4099 = vmatprep.subr.mxu0 0.0
        %4100 = vmatpush1.msra.mxu0 0.0
        %4101 = vmatprep.subr.mxu0 0.0
        %4102 = vmatpush1.msra.mxu0 0.0
        %4103 = vmatprep.subr.mxu0 0.0
        %4104 = vmatpush1.msra.mxu0 0.0
        %4105 = vmatprep.subr.mxu0 0.0
        %4106 = vmatpush1.msra.mxu0 0.0
        %4107 = vmatprep.subr.mxu0 0.0
        %4108 = vmatpush1.msra.mxu0 0.0
        %4109 = vmatprep.subr.mxu0 0.0
        %4110 = vmatpush1.msra.mxu0 0.0
        %4111 = vmatprep.subr.mxu0 0.0
        %4112 = vmatpush1.msra.mxu0 0.0
        %4113 = vmatprep.subr.mxu0 0.0
        %4114 = vmatpush1.msra.mxu0 0.0
        %4115 = vmatprep.subr.mxu0 0.0
        %4116 = vmatpush1.msra.mxu0 0.0
        %4117 = vmatprep.subr.mxu0 0.0
        %4118 = vmatpush1.msra.mxu0 0.0
        %4119 = vmatprep.subr.mxu0 0.0
        %4120 = vmatpush1.msra.mxu0 0.0
        %4121 = vmatprep.subr.mxu0 0.0
        %4122 = vmatpush1.msra.mxu0 0.0
        %4123 = vmatprep.subr.mxu0 0.0
        %4124 = vmatpush1.msra.mxu0 0.0
        %4125 = vmatprep.subr.mxu0 0.0
        %4126 = vmatpush1.msra.mxu0 0.0
        %4127 = vmatprep.subr.mxu0 0.0
        %4128 = vmatpush1.msra.mxu0 0.0
        %4129 = vmatprep.mubr.f32.mxu0 0.0
        %4130 = vmatmul.mubr.f32.gmra.mrb[0].mxu0 %v3970
        %v4131 = vpop.f32.mrb[0].mxu0
        %v4132 = vadd.f32 %v3811, %v4131
        %v4133 = vpop.f32.mrb[0].mxu0
        %4134 = vmatprep.mubr.f32.mxu0 0.0
        %4135 = vmatmul.mubr.f32.gmra.mrb[0].mxu0 %v3973
        %v4136 = vpop.f32.mrb[0].mxu0
        %v4137 = vadd.f32 %v3816, %v4136
        %v4138 = vpop.f32.mrb[0].mxu0
        %4139 = vmatprep.mubr.f32.mxu0 0.0
        %4140 = vmatmul.mubr.f32.gmra.mrb[0].mxu0 %v3976
        %v4141 = vpop.f32.mrb[0].mxu0
        %v4142 = vadd.f32 %v3821, %v4141
        %v4143 = vpop.f32.mrb[0].mxu0
        %4144 = vmatprep.mubr.f32.mxu0 0.0
        %4145 = vmatmul.mubr.f32.gmra.mrb[0].mxu0 %v3979
        %v4146 = vpop.f32.mrb[0].mxu0
        %v4147 = vadd.f32 %v3826, %v4146
        %v4148 = vpop.f32.mrb[0].mxu0
        %4149 = vmatprep.mubr.f32.mxu0 0.0
        %4150 = vmatmul.mubr.f32.gmra.mrb[0].mxu0 %v3982
        %v4151 = vpop.f32.mrb[0].mxu0
        %v4152 = vadd.f32 %v3831, %v4151
        %v4153 = vpop.f32.mrb[0].mxu0
        %4154 = vmatprep.mubr.f32.mxu0 0.0
        %4155 = vmatmul.mubr.f32.gmra.mrb[0].mxu0 %v3985
        %v4156 = vpop.f32.mrb[0].mxu0
        %v4157 = vadd.f32 %v3836, %v4156
        %v4158 = vpop.f32.mrb[0].mxu0
        %4159 = vmatprep.mubr.f32.mxu0 0.0
        %4160 = vmatmul.mubr.f32.gmra.mrb[0].mxu0 %v3988
        %v4161 = vpop.f32.mrb[0].mxu0
        %v4162 = vadd.f32 %v3841, %v4161
        %v4163 = vpop.f32.mrb[0].mxu0
        %4164 = vmatprep.mubr.f32.mxu0 0.0
        %4165 = vmatmul.mubr.f32.gmra.mrb[0].mxu0 %v3991
        %v4166 = vpop.f32.mrb[0].mxu0
        %v4167 = vadd.f32 %v3846, %v4166
        %v4168 = vpop.f32.mrb[0].mxu0
        %4169 = vmatprep.mubr.f32.mxu0 0.0
        %4170 = vmatmul.mubr.f32.gmra.mrb[0].mxu0 %v3994
        %v4171 = vpop.f32.mrb[0].mxu0
        %v4172 = vadd.f32 %v3851, %v4171
        %v4173 = vpop.f32.mrb[0].mxu0
        %4174 = vmatprep.mubr.f32.mxu0 0.0
        %4175 = vmatmul.mubr.f32.gmra.mrb[0].mxu0 %v3997
        %v4176 = vpop.f32.mrb[0].mxu0
        %v4177 = vadd.f32 %v3856, %v4176
        %v4178 = vpop.f32.mrb[0].mxu0
        %4179 = vmatprep.mubr.f32.mxu0 0.0
        %4180 = vmatmul.mubr.f32.gmra.mrb[0].mxu0 %v4000
        %v4181 = vpop.f32.mrb[0].mxu0
        %v4182 = vadd.f32 %v3861, %v4181
        %v4183 = vpop.f32.mrb[0].mxu0
        %4184 = vmatprep.mubr.f32.mxu0 0.0
        %4185 = vmatmul.mubr.f32.gmra.mrb[0].mxu0 %v4003
        %v4186 = vpop.f32.mrb[0].mxu0
        %v4187 = vadd.f32 %v3866, %v4186
        %v4188 = vpop.f32.mrb[0].mxu0
        %4189 = vmatprep.mubr.f32.mxu0 0.0
        %4190 = vmatmul.mubr.f32.gmra.mrb[0].mxu0 %v4006
        %v4191 = vpop.f32.mrb[0].mxu0
        %v4192 = vadd.f32 %v3871, %v4191
        %v4193 = vpop.f32.mrb[0].mxu0
        %4194 = vmatprep.mubr.f32.mxu0 0.0
        %4195 = vmatmul.mubr.f32.gmra.mrb[0].mxu0 %v4009
        %v4196 = vpop.f32.mrb[0].mxu0
        %v4197 = vadd.f32 %v3876, %v4196
        %v4198 = vpop.f32.mrb[0].mxu0
        %4199 = vmatprep.mubr.f32.mxu0 0.0
        %4200 = vmatmul.mubr.f32.gmra.mrb[0].mxu0 %v4012
        %v4201 = vpop.f32.mrb[0].mxu0
        %v4202 = vadd.f32 %v3881, %v4201
        %v4203 = vpop.f32.mrb[0].mxu0
        %4204 = vmatprep.mubr.f32.mxu0 0.0
        %4205 = vmatmul.mubr.f32.gmra.mrb[0].mxu0 %v4015
        %v4206 = vpop.f32.mrb[0].mxu0
        %v4207 = vadd.f32 %v3886, %v4206
        %v4208 = vpop.f32.mrb[0].mxu0
        %4209 = vmatprep.mubr.f32.mxu0 0.0
        %4210 = vmatmul.mubr.f32.gmra.mrb[0].mxu0 %v4018
        %v4211 = vpop.f32.mrb[0].mxu0
        %v4212 = vadd.f32 %v3891, %v4211
        %v4213 = vpop.f32.mrb[0].mxu0
        %4214 = vmatprep.mubr.f32.mxu0 0.0
        %4215 = vmatmul.mubr.f32.gmra.mrb[0].mxu0 %v4021
        %v4216 = vpop.f32.mrb[0].mxu0
        %v4217 = vadd.f32 %v3896, %v4216
        %v4218 = vpop.f32.mrb[0].mxu0
        %4219 = vmatprep.mubr.f32.mxu0 0.0
        %4220 = vmatmul.mubr.f32.gmra.mrb[0].mxu0 %v4024
        %v4221 = vpop.f32.mrb[0].mxu0
        %v4222 = vadd.f32 %v3901, %v4221
        %v4223 = vpop.f32.mrb[0].mxu0
        %4224 = vmatprep.mubr.f32.mxu0 0.0
        %4225 = vmatmul.mubr.f32.gmra.mrb[0].mxu0 %v4027
        %v4226 = vpop.f32.mrb[0].mxu0
        %v4227 = vadd.f32 %v3906, %v4226
        %v4228 = vpop.f32.mrb[0].mxu0
        %4229 = vmatprep.mubr.f32.mxu0 0.0
        %4230 = vmatmul.mubr.f32.gmra.mrb[0].mxu0 %v4030
        %v4231 = vpop.f32.mrb[0].mxu0
        %v4232 = vadd.f32 %v3911, %v4231
        %v4233 = vpop.f32.mrb[0].mxu0
        %4234 = vmatprep.mubr.f32.mxu0 0.0
        %4235 = vmatmul.mubr.f32.gmra.mrb[0].mxu0 %v4033
        %v4236 = vpop.f32.mrb[0].mxu0
        %v4237 = vadd.f32 %v3916, %v4236
        %v4238 = vpop.f32.mrb[0].mxu0
        %4239 = vmatprep.mubr.f32.mxu0 0.0
        %4240 = vmatmul.mubr.f32.gmra.mrb[0].mxu0 %v4036
        %v4241 = vpop.f32.mrb[0].mxu0
        %v4242 = vadd.f32 %v3921, %v4241
        %v4243 = vpop.f32.mrb[0].mxu0
        %4244 = vmatprep.mubr.f32.mxu0 0.0
        %4245 = vmatmul.mubr.f32.gmra.mrb[0].mxu0 %v4039
        %v4246 = vpop.f32.mrb[0].mxu0
        %v4247 = vadd.f32 %v3926, %v4246
        %v4248 = vpop.f32.mrb[0].mxu0
        %4249 = vmatprep.mubr.f32.mxu0 0.0
        %4250 = vmatmul.mubr.f32.gmra.mrb[0].mxu0 %v4042
        %v4251 = vpop.f32.mrb[0].mxu0
        %v4252 = vadd.f32 %v3931, %v4251
        %v4253 = vpop.f32.mrb[0].mxu0
        %4254 = vmatprep.mubr.f32.mxu0 0.0
        %4255 = vmatmul.mubr.f32.gmra.mrb[0].mxu0 %v4045
        %v4256 = vpop.f32.mrb[0].mxu0
        %v4257 = vadd.f32 %v3936, %v4256
        %v4258 = vpop.f32.mrb[0].mxu0
        %4259 = vmatprep.mubr.f32.mxu0 0.0
        %4260 = vmatmul.mubr.f32.gmra.mrb[0].mxu0 %v4048
        %v4261 = vpop.f32.mrb[0].mxu0
        %v4262 = vadd.f32 %v3941, %v4261
        %v4263 = vpop.f32.mrb[0].mxu0
        %4264 = vmatprep.mubr.f32.mxu0 0.0
        %4265 = vmatmul.mubr.f32.gmra.mrb[0].mxu0 %v4051
        %v4266 = vpop.f32.mrb[0].mxu0
        %v4267 = vadd.f32 %v3946, %v4266
        %v4268 = vpop.f32.mrb[0].mxu0
        %4269 = vmatprep.mubr.f32.mxu0 0.0
        %4270 = vmatmul.mubr.f32.gmra.mrb[0].mxu0 %v4054
        %v4271 = vpop.f32.mrb[0].mxu0
        %v4272 = vadd.f32 %v3951, %v4271
        %v4273 = vpop.f32.mrb[0].mxu0
        %4274 = vmatprep.mubr.f32.mxu0 0.0
        %4275 = vmatmul.mubr.f32.gmra.mrb[0].mxu0 %v4057
        %v4276 = vpop.f32.mrb[0].mxu0
        %v4277 = vadd.f32 %v3956, %v4276
        %v4278 = vpop.f32.mrb[0].mxu0
        %4279 = vmatprep.mubr.f32.mxu0 0.0
        %4280 = vmatmul.mubr.f32.gmra.mrb[0].mxu0 %v4060
        %v4281 = vpop.f32.mrb[0].mxu0
        %v4282 = vadd.f32 %v3961, %v4281
        %v4283 = vpop.f32.mrb[0].mxu0
        %4284 = vmatprep.mubr.f32.mxu0 0.0
        %4285 = vmatmul.mubr.f32.gmra.mrb[0].mxu0 %v4063
        %v4286 = vpop.f32.mrb[0].mxu0
        %v4287 = vadd.f32 %v3966, %v4286
        %v4288 = vpop.f32.mrb[0].mxu0
        %4289 = vdwg.mxu0
        %4290 = vrot.lane.b32.xlu0 %v571, 112
        %v4291 = vpop.permute.xlu0 %4290
        %4292 = vrot.lane.b32.xlu0 %v576, 112
        %v4293 = vpop.permute.xlu0 %4292
        %4294 = vrot.lane.b32.xlu0 %v581, 112
        %v4295 = vpop.permute.xlu0 %4294
        %4296 = vrot.lane.b32.xlu0 %v586, 112
        %v4297 = vpop.permute.xlu0 %4296
        %4298 = vrot.lane.b32.xlu0 %v591, 112
        %v4299 = vpop.permute.xlu0 %4298
        %4300 = vrot.lane.b32.xlu0 %v596, 112
        %v4301 = vpop.permute.xlu0 %4300
        %4302 = vrot.lane.b32.xlu0 %v601, 112
        %v4303 = vpop.permute.xlu0 %4302
        %4304 = vrot.lane.b32.xlu0 %v606, 112
        %v4305 = vpop.permute.xlu0 %4304
        %4306 = vrot.lane.b32.xlu0 %v611, 112
        %v4307 = vpop.permute.xlu0 %4306
        %4308 = vrot.lane.b32.xlu0 %v616, 112
        %v4309 = vpop.permute.xlu0 %4308
        %4310 = vrot.lane.b32.xlu0 %v621, 112
        %v4311 = vpop.permute.xlu0 %4310
        %4312 = vrot.lane.b32.xlu0 %v626, 112
        %v4313 = vpop.permute.xlu0 %4312
        %4314 = vrot.lane.b32.xlu0 %v631, 112
        %v4315 = vpop.permute.xlu0 %4314
        %4316 = vrot.lane.b32.xlu0 %v636, 112
        %v4317 = vpop.permute.xlu0 %4316
        %4318 = vrot.lane.b32.xlu0 %v641, 112
        %v4319 = vpop.permute.xlu0 %4318
        %4320 = vrot.lane.b32.xlu0 %v646, 112
        %v4321 = vpop.permute.xlu0 %4320
        %4322 = vrot.lane.b32.xlu0 %v651, 112
        %v4323 = vpop.permute.xlu0 %4322
        %4324 = vrot.lane.b32.xlu0 %v656, 112
        %v4325 = vpop.permute.xlu0 %4324
        %4326 = vrot.lane.b32.xlu0 %v661, 112
        %v4327 = vpop.permute.xlu0 %4326
        %4328 = vrot.lane.b32.xlu0 %v666, 112
        %v4329 = vpop.permute.xlu0 %4328
        %4330 = vrot.lane.b32.xlu0 %v671, 112
        %v4331 = vpop.permute.xlu0 %4330
        %4332 = vrot.lane.b32.xlu0 %v676, 112
        %v4333 = vpop.permute.xlu0 %4332
        %4334 = vrot.lane.b32.xlu0 %v681, 112
        %v4335 = vpop.permute.xlu0 %4334
        %4336 = vrot.lane.b32.xlu0 %v686, 112
        %v4337 = vpop.permute.xlu0 %4336
        %4338 = vrot.lane.b32.xlu0 %v691, 112
        %v4339 = vpop.permute.xlu0 %4338
        %4340 = vrot.lane.b32.xlu0 %v696, 112
        %v4341 = vpop.permute.xlu0 %4340
        %4342 = vrot.lane.b32.xlu0 %v701, 112
        %v4343 = vpop.permute.xlu0 %4342
        %4344 = vrot.lane.b32.xlu0 %v706, 112
        %v4345 = vpop.permute.xlu0 %4344
        %4346 = vrot.lane.b32.xlu0 %v711, 112
        %v4347 = vpop.permute.xlu0 %4346
        %4348 = vrot.lane.b32.xlu0 %v716, 112
        %v4349 = vpop.permute.xlu0 %4348
        %4350 = vrot.lane.b32.xlu0 %v721, 112
        %v4351 = vpop.permute.xlu0 %4350
        %4352 = vrot.lane.b32.xlu0 %v726, 112
        %v4353 = vpop.permute.xlu0 %4352
        %4354 = vrot.lane.b32.xlu0 %v571, 80
        %v4355 = vpop.permute.xlu0 %4354
        %4356 = vrot.lane.b32.xlu0 %v576, 80
        %v4357 = vpop.permute.xlu0 %4356
        %4358 = vrot.lane.b32.xlu0 %v581, 80
        %v4359 = vpop.permute.xlu0 %4358
        %4360 = vrot.lane.b32.xlu0 %v586, 80
        %v4361 = vpop.permute.xlu0 %4360
        %4362 = vrot.lane.b32.xlu0 %v591, 80
        %v4363 = vpop.permute.xlu0 %4362
        %4364 = vrot.lane.b32.xlu0 %v596, 80
        %v4365 = vpop.permute.xlu0 %4364
        %4366 = vrot.lane.b32.xlu0 %v601, 80
        %v4367 = vpop.permute.xlu0 %4366
        %4368 = vrot.lane.b32.xlu0 %v606, 80
        %v4369 = vpop.permute.xlu0 %4368
        %4370 = vrot.lane.b32.xlu0 %v611, 80
        %v4371 = vpop.permute.xlu0 %4370
        %4372 = vrot.lane.b32.xlu0 %v616, 80
        %v4373 = vpop.permute.xlu0 %4372
        %4374 = vrot.lane.b32.xlu0 %v621, 80
        %v4375 = vpop.permute.xlu0 %4374
        %4376 = vrot.lane.b32.xlu0 %v626, 80
        %v4377 = vpop.permute.xlu0 %4376
        %4378 = vrot.lane.b32.xlu0 %v631, 80
        %v4379 = vpop.permute.xlu0 %4378
        %4380 = vrot.lane.b32.xlu0 %v636, 80
        %v4381 = vpop.permute.xlu0 %4380
        %4382 = vrot.lane.b32.xlu0 %v641, 80
        %v4383 = vpop.permute.xlu0 %4382
        %4384 = vrot.lane.b32.xlu0 %v646, 80
        %v4385 = vpop.permute.xlu0 %4384
        %4386 = vrot.lane.b32.xlu0 %v651, 80
        %v4387 = vpop.permute.xlu0 %4386
        %4388 = vrot.lane.b32.xlu0 %v656, 80
        %v4389 = vpop.permute.xlu0 %4388
        %4390 = vrot.lane.b32.xlu0 %v661, 80
        %v4391 = vpop.permute.xlu0 %4390
        %4392 = vrot.lane.b32.xlu0 %v666, 80
        %v4393 = vpop.permute.xlu0 %4392
        %4394 = vrot.lane.b32.xlu0 %v671, 80
        %v4395 = vpop.permute.xlu0 %4394
        %4396 = vrot.lane.b32.xlu0 %v676, 80
        %v4397 = vpop.permute.xlu0 %4396
        %4398 = vrot.lane.b32.xlu0 %v681, 80
        %v4399 = vpop.permute.xlu0 %4398
        %4400 = vrot.lane.b32.xlu0 %v686, 80
        %v4401 = vpop.permute.xlu0 %4400
        %4402 = vrot.lane.b32.xlu0 %v691, 80
        %v4403 = vpop.permute.xlu0 %4402
        %4404 = vrot.lane.b32.xlu0 %v696, 80
        %v4405 = vpop.permute.xlu0 %4404
        %4406 = vrot.lane.b32.xlu0 %v701, 80
        %v4407 = vpop.permute.xlu0 %4406
        %4408 = vrot.lane.b32.xlu0 %v706, 80
        %v4409 = vpop.permute.xlu0 %4408
        %4410 = vrot.lane.b32.xlu0 %v711, 80
        %v4411 = vpop.permute.xlu0 %4410
        %4412 = vrot.lane.b32.xlu0 %v716, 80
        %v4413 = vpop.permute.xlu0 %4412
        %4414 = vrot.lane.b32.xlu0 %v721, 80
        %v4415 = vpop.permute.xlu0 %4414
        %4416 = vrot.lane.b32.xlu0 %v726, 80
        %v4417 = vpop.permute.xlu0 %4416
        %v4418 = vsel %vm889, %v4291, 0
        %v4420 = vsel %vm889, %v4293, 0
        %v4422 = vsel %vm889, %v4295, 0
        %v4424 = vsel %vm889, %v4297, 0
        %v4426 = vsel %vm889, %v4299, 0
        %v4428 = vsel %vm889, %v4301, 0
        %v4430 = vsel %vm889, %v4303, 0
        %v4432 = vsel %vm889, %v4305, 0
        %v4434 = vsel %vm889, %v4307, 0
        %v4436 = vsel %vm889, %v4309, 0
        %v4438 = vsel %vm889, %v4311, 0
        %v4440 = vsel %vm889, %v4313, 0
        %v4442 = vsel %vm889, %v4315, 0
        %v4444 = vsel %vm889, %v4317, 0
        %v4446 = vsel %vm889, %v4319, 0
        %v4448 = vsel %vm889, %v4321, 0
        %v4450 = vsel %vm889, %v4323, 0
        %v4452 = vsel %vm889, %v4325, 0
        %v4454 = vsel %vm889, %v4327, 0
        %v4456 = vsel %vm889, %v4329, 0
        %v4458 = vsel %vm889, %v4331, 0
        %v4460 = vsel %vm889, %v4333, 0
        %v4462 = vsel %vm889, %v4335, 0
        %v4464 = vsel %vm889, %v4337, 0
        %v4466 = vsel %vm889, %v4339, 0
        %v4468 = vsel %vm889, %v4341, 0
        %v4470 = vsel %vm889, %v4343, 0
        %v4472 = vsel %vm889, %v4345, 0
        %v4474 = vsel %vm889, %v4347, 0
        %v4476 = vsel %vm889, %v4349, 0
        %v4478 = vsel %vm889, %v4351, 0
        %v4480 = vsel %vm889, %v4353, 0
        %v4482 = vsel %vm889, %v4355, 0
        %v4484 = vsel %vm889, %v4357, 0
        %v4486 = vsel %vm889, %v4359, 0
        %v4488 = vsel %vm889, %v4361, 0
        %v4490 = vsel %vm889, %v4363, 0
        %v4492 = vsel %vm889, %v4365, 0
        %v4494 = vsel %vm889, %v4367, 0
        %v4496 = vsel %vm889, %v4369, 0
        %v4498 = vsel %vm889, %v4371, 0
        %v4500 = vsel %vm889, %v4373, 0
        %v4502 = vsel %vm889, %v4375, 0
        %v4504 = vsel %vm889, %v4377, 0
        %v4506 = vsel %vm889, %v4379, 0
        %v4508 = vsel %vm889, %v4381, 0
        %v4510 = vsel %vm889, %v4383, 0
        %v4512 = vsel %vm889, %v4385, 0
        %v4514 = vsel %vm889, %v4387, 0
        %v4516 = vsel %vm889, %v4389, 0
        %v4518 = vsel %vm889, %v4391, 0
        %v4520 = vsel %vm889, %v4393, 0
        %v4522 = vsel %vm889, %v4395, 0
        %v4524 = vsel %vm889, %v4397, 0
        %v4526 = vsel %vm889, %v4399, 0
        %v4528 = vsel %vm889, %v4401, 0
        %v4530 = vsel %vm889, %v4403, 0
        %v4532 = vsel %vm889, %v4405, 0
        %v4534 = vsel %vm889, %v4407, 0
        %v4536 = vsel %vm889, %v4409, 0
        %v4538 = vsel %vm889, %v4411, 0
        %v4540 = vsel %vm889, %v4413, 0
        %v4542 = vsel %vm889, %v4415, 0
        %v4544 = vsel %vm889, %v4417, 0
        %4546 = vmatprep.subr.mxu0 0.0
        %4547 = vmatpush1.xpose.msra.mxu0 %v4482
        %4548 = vmatprep.subr.mxu0 0.0
        %4549 = vmatpush1.xpose.msra.mxu0 %v4484
        %4550 = vmatprep.subr.mxu0 0.0
        %4551 = vmatpush1.xpose.msra.mxu0 %v4486
        %4552 = vmatprep.subr.mxu0 0.0
        %4553 = vmatpush1.xpose.msra.mxu0 %v4488
        %4554 = vmatprep.subr.mxu0 0.0
        %4555 = vmatpush1.xpose.msra.mxu0 %v4490
        %4556 = vmatprep.subr.mxu0 0.0
        %4557 = vmatpush1.xpose.msra.mxu0 %v4492
        %4558 = vmatprep.subr.mxu0 0.0
        %4559 = vmatpush1.xpose.msra.mxu0 %v4494
        %4560 = vmatprep.subr.mxu0 0.0
        %4561 = vmatpush1.xpose.msra.mxu0 %v4496
        %4562 = vmatprep.subr.mxu0 0.0
        %4563 = vmatpush1.xpose.msra.mxu0 %v4498
        %4564 = vmatprep.subr.mxu0 0.0
        %4565 = vmatpush1.xpose.msra.mxu0 %v4500
        %4566 = vmatprep.subr.mxu0 0.0
        %4567 = vmatpush1.xpose.msra.mxu0 %v4502
        %4568 = vmatprep.subr.mxu0 0.0
        %4569 = vmatpush1.xpose.msra.mxu0 %v4504
        %4570 = vmatprep.subr.mxu0 0.0
        %4571 = vmatpush1.xpose.msra.mxu0 %v4506
        %4572 = vmatprep.subr.mxu0 0.0
        %4573 = vmatpush1.xpose.msra.mxu0 %v4508
        %4574 = vmatprep.subr.mxu0 0.0
        %4575 = vmatpush1.xpose.msra.mxu0 %v4510
        %4576 = vmatprep.subr.mxu0 0.0
        %4577 = vmatpush1.xpose.msra.mxu0 %v4512
        %4578 = vmatprep.subr.mxu0 0.0
        %4579 = vmatpush1.xpose.msra.mxu0 %v4514
        %4580 = vmatprep.subr.mxu0 0.0
        %4581 = vmatpush1.xpose.msra.mxu0 %v4516
        %4582 = vmatprep.subr.mxu0 0.0
        %4583 = vmatpush1.xpose.msra.mxu0 %v4518
        %4584 = vmatprep.subr.mxu0 0.0
        %4585 = vmatpush1.xpose.msra.mxu0 %v4520
        %4586 = vmatprep.subr.mxu0 0.0
        %4587 = vmatpush1.xpose.msra.mxu0 %v4522
        %4588 = vmatprep.subr.mxu0 0.0
        %4589 = vmatpush1.xpose.msra.mxu0 %v4524
        %4590 = vmatprep.subr.mxu0 0.0
        %4591 = vmatpush1.xpose.msra.mxu0 %v4526
        %4592 = vmatprep.subr.mxu0 0.0
        %4593 = vmatpush1.xpose.msra.mxu0 %v4528
        %4594 = vmatprep.subr.mxu0 0.0
        %4595 = vmatpush1.xpose.msra.mxu0 %v4530
        %4596 = vmatprep.subr.mxu0 0.0
        %4597 = vmatpush1.xpose.msra.mxu0 %v4532
        %4598 = vmatprep.subr.mxu0 0.0
        %4599 = vmatpush1.xpose.msra.mxu0 %v4534
        %4600 = vmatprep.subr.mxu0 0.0
        %4601 = vmatpush1.xpose.msra.mxu0 %v4536
        %4602 = vmatprep.subr.mxu0 0.0
        %4603 = vmatpush1.xpose.msra.mxu0 %v4538
        %4604 = vmatprep.subr.mxu0 0.0
        %4605 = vmatpush1.xpose.msra.mxu0 %v4540
        %4606 = vmatprep.subr.mxu0 0.0
        %4607 = vmatpush1.xpose.msra.mxu0 %v4542
        %4608 = vmatprep.subr.mxu0 0.0
        %4609 = vmatpush1.xpose.msra.mxu0 %v4544
        %4610 = vmatprep.mubr.f32.mxu0 0.0
        %4611 = vmatmul.mubr.f32.gmra.mrb[0].mxu0 %v4418
        %v4612 = vpop.f32.mrb[0].mxu0
        %v4613 = vadd.f32 0.0, %v4612
        %v4614 = vpop.f32.mrb[0].mxu0
        %v4615 = vadd.f32 0.0, %v4614
        %4616 = vmatprep.mubr.f32.mxu0 0.0
        %4617 = vmatmul.mubr.f32.gmra.mrb[0].mxu0 %v4420
        %v4618 = vpop.f32.mrb[0].mxu0
        %v4619 = vadd.f32 0.0, %v4618
        %v4620 = vpop.f32.mrb[0].mxu0
        %v4621 = vadd.f32 0.0, %v4620
        %4622 = vmatprep.mubr.f32.mxu0 0.0
        %4623 = vmatmul.mubr.f32.gmra.mrb[0].mxu0 %v4422
        %v4624 = vpop.f32.mrb[0].mxu0
        %v4625 = vadd.f32 0.0, %v4624
        %v4626 = vpop.f32.mrb[0].mxu0
        %v4627 = vadd.f32 0.0, %v4626
        %4628 = vmatprep.mubr.f32.mxu0 0.0
        %4629 = vmatmul.mubr.f32.gmra.mrb[0].mxu0 %v4424
        %v4630 = vpop.f32.mrb[0].mxu0
        %v4631 = vadd.f32 0.0, %v4630
        %v4632 = vpop.f32.mrb[0].mxu0
        %v4633 = vadd.f32 0.0, %v4632
        %4634 = vmatprep.mubr.f32.mxu0 0.0
        %4635 = vmatmul.mubr.f32.gmra.mrb[0].mxu0 %v4426
        %v4636 = vpop.f32.mrb[0].mxu0
        %v4637 = vadd.f32 0.0, %v4636
        %v4638 = vpop.f32.mrb[0].mxu0
        %v4639 = vadd.f32 0.0, %v4638
        %4640 = vmatprep.mubr.f32.mxu0 0.0
        %4641 = vmatmul.mubr.f32.gmra.mrb[0].mxu0 %v4428
        %v4642 = vpop.f32.mrb[0].mxu0
        %v4643 = vadd.f32 0.0, %v4642
        %v4644 = vpop.f32.mrb[0].mxu0
        %v4645 = vadd.f32 0.0, %v4644
        %4646 = vmatprep.mubr.f32.mxu0 0.0
        %4647 = vmatmul.mubr.f32.gmra.mrb[0].mxu0 %v4430
        %v4648 = vpop.f32.mrb[0].mxu0
        %v4649 = vadd.f32 0.0, %v4648
        %v4650 = vpop.f32.mrb[0].mxu0
        %v4651 = vadd.f32 0.0, %v4650
        %4652 = vmatprep.mubr.f32.mxu0 0.0
        %4653 = vmatmul.mubr.f32.gmra.mrb[0].mxu0 %v4432
        %v4654 = vpop.f32.mrb[0].mxu0
        %v4655 = vadd.f32 0.0, %v4654
        %v4656 = vpop.f32.mrb[0].mxu0
        %v4657 = vadd.f32 0.0, %v4656
        %4658 = vmatprep.mubr.f32.mxu0 0.0
        %4659 = vmatmul.mubr.f32.gmra.mrb[0].mxu0 %v4434
        %v4660 = vpop.f32.mrb[0].mxu0
        %v4661 = vadd.f32 0.0, %v4660
        %v4662 = vpop.f32.mrb[0].mxu0
        %v4663 = vadd.f32 0.0, %v4662
        %4664 = vmatprep.mubr.f32.mxu0 0.0
        %4665 = vmatmul.mubr.f32.gmra.mrb[0].mxu0 %v4436
        %v4666 = vpop.f32.mrb[0].mxu0
        %v4667 = vadd.f32 0.0, %v4666
        %v4668 = vpop.f32.mrb[0].mxu0
        %v4669 = vadd.f32 0.0, %v4668
        %4670 = vmatprep.mubr.f32.mxu0 0.0
        %4671 = vmatmul.mubr.f32.gmra.mrb[0].mxu0 %v4438
        %v4672 = vpop.f32.mrb[0].mxu0
        %v4673 = vadd.f32 0.0, %v4672
        %v4674 = vpop.f32.mrb[0].mxu0
        %v4675 = vadd.f32 0.0, %v4674
        %4676 = vmatprep.mubr.f32.mxu0 0.0
        %4677 = vmatmul.mubr.f32.gmra.mrb[0].mxu0 %v4440
        %v4678 = vpop.f32.mrb[0].mxu0
        %v4679 = vadd.f32 0.0, %v4678
        %v4680 = vpop.f32.mrb[0].mxu0
        %v4681 = vadd.f32 0.0, %v4680
        %4682 = vmatprep.mubr.f32.mxu0 0.0
        %4683 = vmatmul.mubr.f32.gmra.mrb[0].mxu0 %v4442
        %v4684 = vpop.f32.mrb[0].mxu0
        %v4685 = vadd.f32 0.0, %v4684
        %v4686 = vpop.f32.mrb[0].mxu0
        %v4687 = vadd.f32 0.0, %v4686
        %4688 = vmatprep.mubr.f32.mxu0 0.0
        %4689 = vmatmul.mubr.f32.gmra.mrb[0].mxu0 %v4444
        %v4690 = vpop.f32.mrb[0].mxu0
        %v4691 = vadd.f32 0.0, %v4690
        %v4692 = vpop.f32.mrb[0].mxu0
        %v4693 = vadd.f32 0.0, %v4692
        %4694 = vmatprep.mubr.f32.mxu0 0.0
        %4695 = vmatmul.mubr.f32.gmra.mrb[0].mxu0 %v4446
        %v4696 = vpop.f32.mrb[0].mxu0
        %v4697 = vadd.f32 0.0, %v4696
        %v4698 = vpop.f32.mrb[0].mxu0
        %v4699 = vadd.f32 0.0, %v4698
        %4700 = vmatprep.mubr.f32.mxu0 0.0
        %4701 = vmatmul.mubr.f32.gmra.mrb[0].mxu0 %v4448
        %v4702 = vpop.f32.mrb[0].mxu0
        %v4703 = vadd.f32 0.0, %v4702
        %v4704 = vpop.f32.mrb[0].mxu0
        %v4705 = vadd.f32 0.0, %v4704
        %4706 = vmatprep.mubr.f32.mxu0 0.0
        %4707 = vmatmul.mubr.f32.gmra.mrb[0].mxu0 %v4450
        %v4708 = vpop.f32.mrb[0].mxu0
        %v4709 = vadd.f32 0.0, %v4708
        %v4710 = vpop.f32.mrb[0].mxu0
        %v4711 = vadd.f32 0.0, %v4710
        %4712 = vmatprep.mubr.f32.mxu0 0.0
        %4713 = vmatmul.mubr.f32.gmra.mrb[0].mxu0 %v4452
        %v4714 = vpop.f32.mrb[0].mxu0
        %v4715 = vadd.f32 0.0, %v4714
        %v4716 = vpop.f32.mrb[0].mxu0
        %v4717 = vadd.f32 0.0, %v4716
        %4718 = vmatprep.mubr.f32.mxu0 0.0
        %4719 = vmatmul.mubr.f32.gmra.mrb[0].mxu0 %v4454
        %v4720 = vpop.f32.mrb[0].mxu0
        %v4721 = vadd.f32 0.0, %v4720
        %v4722 = vpop.f32.mrb[0].mxu0
        %v4723 = vadd.f32 0.0, %v4722
        %4724 = vmatprep.mubr.f32.mxu0 0.0
        %4725 = vmatmul.mubr.f32.gmra.mrb[0].mxu0 %v4456
        %v4726 = vpop.f32.mrb[0].mxu0
        %v4727 = vadd.f32 0.0, %v4726
        %v4728 = vpop.f32.mrb[0].mxu0
        %v4729 = vadd.f32 0.0, %v4728
        %4730 = vmatprep.mubr.f32.mxu0 0.0
        %4731 = vmatmul.mubr.f32.gmra.mrb[0].mxu0 %v4458
        %v4732 = vpop.f32.mrb[0].mxu0
        %v4733 = vadd.f32 0.0, %v4732
        %v4734 = vpop.f32.mrb[0].mxu0
        %v4735 = vadd.f32 0.0, %v4734
        %4736 = vmatprep.mubr.f32.mxu0 0.0
        %4737 = vmatmul.mubr.f32.gmra.mrb[0].mxu0 %v4460
        %v4738 = vpop.f32.mrb[0].mxu0
        %v4739 = vadd.f32 0.0, %v4738
        %v4740 = vpop.f32.mrb[0].mxu0
        %v4741 = vadd.f32 0.0, %v4740
        %4742 = vmatprep.mubr.f32.mxu0 0.0
        %4743 = vmatmul.mubr.f32.gmra.mrb[0].mxu0 %v4462
        %v4744 = vpop.f32.mrb[0].mxu0
        %v4745 = vadd.f32 0.0, %v4744
        %v4746 = vpop.f32.mrb[0].mxu0
        %v4747 = vadd.f32 0.0, %v4746
        %4748 = vmatprep.mubr.f32.mxu0 0.0
        %4749 = vmatmul.mubr.f32.gmra.mrb[0].mxu0 %v4464
        %v4750 = vpop.f32.mrb[0].mxu0
        %v4751 = vadd.f32 0.0, %v4750
        %v4752 = vpop.f32.mrb[0].mxu0
        %v4753 = vadd.f32 0.0, %v4752
        %4754 = vmatprep.mubr.f32.mxu0 0.0
        %4755 = vmatmul.mubr.f32.gmra.mrb[0].mxu0 %v4466
        %v4756 = vpop.f32.mrb[0].mxu0
        %v4757 = vadd.f32 0.0, %v4756
        %v4758 = vpop.f32.mrb[0].mxu0
        %v4759 = vadd.f32 0.0, %v4758
        %4760 = vmatprep.mubr.f32.mxu0 0.0
        %4761 = vmatmul.mubr.f32.gmra.mrb[0].mxu0 %v4468
        %v4762 = vpop.f32.mrb[0].mxu0
        %v4763 = vadd.f32 0.0, %v4762
        %v4764 = vpop.f32.mrb[0].mxu0
        %v4765 = vadd.f32 0.0, %v4764
        %4766 = vmatprep.mubr.f32.mxu0 0.0
        %4767 = vmatmul.mubr.f32.gmra.mrb[0].mxu0 %v4470
        %v4768 = vpop.f32.mrb[0].mxu0
        %v4769 = vadd.f32 0.0, %v4768
        %v4770 = vpop.f32.mrb[0].mxu0
        %v4771 = vadd.f32 0.0, %v4770
        %4772 = vmatprep.mubr.f32.mxu0 0.0
        %4773 = vmatmul.mubr.f32.gmra.mrb[0].mxu0 %v4472
        %v4774 = vpop.f32.mrb[0].mxu0
        %v4775 = vadd.f32 0.0, %v4774
        %v4776 = vpop.f32.mrb[0].mxu0
        %v4777 = vadd.f32 0.0, %v4776
        %4778 = vmatprep.mubr.f32.mxu0 0.0
        %4779 = vmatmul.mubr.f32.gmra.mrb[0].mxu0 %v4474
        %v4780 = vpop.f32.mrb[0].mxu0
        %v4781 = vadd.f32 0.0, %v4780
        %v4782 = vpop.f32.mrb[0].mxu0
        %v4783 = vadd.f32 0.0, %v4782
        %4784 = vmatprep.mubr.f32.mxu0 0.0
        %4785 = vmatmul.mubr.f32.gmra.mrb[0].mxu0 %v4476
        %v4786 = vpop.f32.mrb[0].mxu0
        %v4787 = vadd.f32 0.0, %v4786
        %v4788 = vpop.f32.mrb[0].mxu0
        %v4789 = vadd.f32 0.0, %v4788
        %4790 = vmatprep.mubr.f32.mxu0 0.0
        %4791 = vmatmul.mubr.f32.gmra.mrb[0].mxu0 %v4478
        %v4792 = vpop.f32.mrb[0].mxu0
        %v4793 = vadd.f32 0.0, %v4792
        %v4794 = vpop.f32.mrb[0].mxu0
        %v4795 = vadd.f32 0.0, %v4794
        %4796 = vmatprep.mubr.f32.mxu0 0.0
        %4797 = vmatmul.mubr.f32.gmra.mrb[0].mxu0 %v4480
        %v4798 = vpop.f32.mrb[0].mxu0
        %v4799 = vadd.f32 0.0, %v4798
        %v4800 = vpop.f32.mrb[0].mxu0
        %v4801 = vadd.f32 0.0, %v4800
        %4802 = vdwg.mxu0
        %v4803 = vmul.f32 %v4613, 0.35355338
        %v4804 = vmul.f32 %v4615, 0.35355338
        %v4805 = vmul.f32 %v4619, 0.35355338
        %v4806 = vmul.f32 %v4621, 0.35355338
        %v4807 = vmul.f32 %v4625, 0.35355338
        %v4808 = vmul.f32 %v4627, 0.35355338
        %v4809 = vmul.f32 %v4631, 0.35355338
        %v4810 = vmul.f32 %v4633, 0.35355338
        %v4811 = vmul.f32 %v4637, 0.35355338
        %v4812 = vmul.f32 %v4639, 0.35355338
        %v4813 = vmul.f32 %v4643, 0.35355338
        %v4814 = vmul.f32 %v4645, 0.35355338
        %v4815 = vmul.f32 %v4649, 0.35355338
        %v4816 = vmul.f32 %v4651, 0.35355338
        %v4817 = vmul.f32 %v4655, 0.35355338
        %v4818 = vmul.f32 %v4657, 0.35355338
        %v4819 = vmul.f32 %v4661, 0.35355338
        %v4820 = vmul.f32 %v4663, 0.35355338
        %v4821 = vmul.f32 %v4667, 0.35355338
        %v4822 = vmul.f32 %v4669, 0.35355338
        %v4823 = vmul.f32 %v4673, 0.35355338
        %v4824 = vmul.f32 %v4675, 0.35355338
        %v4825 = vmul.f32 %v4679, 0.35355338
        %v4826 = vmul.f32 %v4681, 0.35355338
        %v4827 = vmul.f32 %v4685, 0.35355338
        %v4828 = vmul.f32 %v4687, 0.35355338
        %v4829 = vmul.f32 %v4691, 0.35355338
        %v4830 = vmul.f32 %v4693, 0.35355338
        %v4831 = vmul.f32 %v4697, 0.35355338
        %v4832 = vmul.f32 %v4699, 0.35355338
        %v4833 = vmul.f32 %v4703, 0.35355338
        %v4834 = vmul.f32 %v4705, 0.35355338
        %v4835 = vmul.f32 %v4709, 0.35355338
        %v4836 = vmul.f32 %v4711, 0.35355338
        %v4837 = vmul.f32 %v4715, 0.35355338
        %v4838 = vmul.f32 %v4717, 0.35355338
        %v4839 = vmul.f32 %v4721, 0.35355338
        %v4840 = vmul.f32 %v4723, 0.35355338
        %v4841 = vmul.f32 %v4727, 0.35355338
        %v4842 = vmul.f32 %v4729, 0.35355338
        %v4843 = vmul.f32 %v4733, 0.35355338
        %v4844 = vmul.f32 %v4735, 0.35355338
        %v4845 = vmul.f32 %v4739, 0.35355338
        %v4846 = vmul.f32 %v4741, 0.35355338
        %v4847 = vmul.f32 %v4745, 0.35355338
        %v4848 = vmul.f32 %v4747, 0.35355338
        %v4849 = vmul.f32 %v4751, 0.35355338
        %v4850 = vmul.f32 %v4753, 0.35355338
        %v4851 = vmul.f32 %v4757, 0.35355338
        %v4852 = vmul.f32 %v4759, 0.35355338
        %v4853 = vmul.f32 %v4763, 0.35355338
        %v4854 = vmul.f32 %v4765, 0.35355338
        %v4855 = vmul.f32 %v4769, 0.35355338
        %v4856 = vmul.f32 %v4771, 0.35355338
        %v4857 = vmul.f32 %v4775, 0.35355338
        %v4858 = vmul.f32 %v4777, 0.35355338
        %v4859 = vmul.f32 %v4781, 0.35355338
        %v4860 = vmul.f32 %v4783, 0.35355338
        %v4861 = vmul.f32 %v4787, 0.35355338
        %v4862 = vmul.f32 %v4789, 0.35355338
        %v4863 = vmul.f32 %v4793, 0.35355338
        %v4864 = vmul.f32 %v4795, 0.35355338
        %v4865 = vmul.f32 %v4799, 0.35355338
        %v4866 = vmul.f32 %v4801, 0.35355338
        %v4867 = vadd.f32 %v4803, %v729
        %v4868 = vadd.f32 %v4804, %v730
        %v4869 = vadd.f32 %v4805, %v731
        %v4870 = vadd.f32 %v4806, %v732
        %v4871 = vadd.f32 %v4807, %v733
        %v4872 = vadd.f32 %v4808, %v734
        %v4873 = vadd.f32 %v4809, %v735
        %v4874 = vadd.f32 %v4810, %v736
        %v4875 = vadd.f32 %v4811, %v737
        %v4876 = vadd.f32 %v4812, %v738
        %v4877 = vadd.f32 %v4813, %v739
        %v4878 = vadd.f32 %v4814, %v740
        %v4879 = vadd.f32 %v4815, %v741
        %v4880 = vadd.f32 %v4816, %v742
        %v4881 = vadd.f32 %v4817, %v743
        %v4882 = vadd.f32 %v4818, %v744
        %v4883 = vadd.f32 %v4819, %v745
        %v4884 = vadd.f32 %v4820, %v746
        %v4885 = vadd.f32 %v4821, %v747
        %v4886 = vadd.f32 %v4822, %v748
        %v4887 = vadd.f32 %v4823, %v749
        %v4888 = vadd.f32 %v4824, %v750
        %v4889 = vadd.f32 %v4825, %v751
        %v4890 = vadd.f32 %v4826, %v752
        %v4891 = vadd.f32 %v4827, %v753
        %v4892 = vadd.f32 %v4828, %v754
        %v4893 = vadd.f32 %v4829, %v755
        %v4894 = vadd.f32 %v4830, %v756
        %v4895 = vadd.f32 %v4831, %v757
        %v4896 = vadd.f32 %v4832, %v758
        %v4897 = vadd.f32 %v4833, %v759
        %v4898 = vadd.f32 %v4834, %v760
        %v4899 = vadd.f32 %v4835, %v761
        %v4900 = vadd.f32 %v4836, %v762
        %v4901 = vadd.f32 %v4837, %v763
        %v4902 = vadd.f32 %v4838, %v764
        %v4903 = vadd.f32 %v4839, %v765
        %v4904 = vadd.f32 %v4840, %v766
        %v4905 = vadd.f32 %v4841, %v767
        %v4906 = vadd.f32 %v4842, %v768
        %v4907 = vadd.f32 %v4843, %v769
        %v4908 = vadd.f32 %v4844, %v770
        %v4909 = vadd.f32 %v4845, %v771
        %v4910 = vadd.f32 %v4846, %v772
        %v4911 = vadd.f32 %v4847, %v773
        %v4912 = vadd.f32 %v4848, %v774
        %v4913 = vadd.f32 %v4849, %v775
        %v4914 = vadd.f32 %v4850, %v776
        %v4915 = vadd.f32 %v4851, %v777
        %v4916 = vadd.f32 %v4852, %v778
        %v4917 = vadd.f32 %v4853, %v779
        %v4918 = vadd.f32 %v4854, %v780
        %v4919 = vadd.f32 %v4855, %v781
        %v4920 = vadd.f32 %v4856, %v782
        %v4921 = vadd.f32 %v4857, %v783
        %v4922 = vadd.f32 %v4858, %v784
        %v4923 = vadd.f32 %v4859, %v785
        %v4924 = vadd.f32 %v4860, %v786
        %v4925 = vadd.f32 %v4861, %v787
        %v4926 = vadd.f32 %v4862, %v788
        %v4927 = vadd.f32 %v4863, %v789
        %v4928 = vadd.f32 %v4864, %v790
        %v4929 = vadd.f32 %v4865, %v791
        %v4930 = vadd.f32 %v4866, %v792
        %v4931 = vmax.f32 %v4867, %v4868
        %4932 = vmax.xlane.f32.xlu0 %v4931
        %v4933 = vpop.xlane.xlu0 %4932
        %v4934 = vmax.f32 %v4869, %v4870
        %4935 = vmax.xlane.f32.xlu0 %v4934
        %v4936 = vpop.xlane.xlu0 %4935
        %v4937 = vmax.f32 %v4871, %v4872
        %4938 = vmax.xlane.f32.xlu0 %v4937
        %v4939 = vpop.xlane.xlu0 %4938
        %v4940 = vmax.f32 %v4873, %v4874
        %4941 = vmax.xlane.f32.xlu0 %v4940
        %v4942 = vpop.xlane.xlu0 %4941
        %v4943 = vmax.f32 %v4875, %v4876
        %4944 = vmax.xlane.f32.xlu0 %v4943
        %v4945 = vpop.xlane.xlu0 %4944
        %v4946 = vmax.f32 %v4877, %v4878
        %4947 = vmax.xlane.f32.xlu0 %v4946
        %v4948 = vpop.xlane.xlu0 %4947
        %v4949 = vmax.f32 %v4879, %v4880
        %4950 = vmax.xlane.f32.xlu0 %v4949
        %v4951 = vpop.xlane.xlu0 %4950
        %v4952 = vmax.f32 %v4881, %v4882
        %4953 = vmax.xlane.f32.xlu0 %v4952
        %v4954 = vpop.xlane.xlu0 %4953
        %v4955 = vmax.f32 %v4883, %v4884
        %4956 = vmax.xlane.f32.xlu0 %v4955
        %v4957 = vpop.xlane.xlu0 %4956
        %v4958 = vmax.f32 %v4885, %v4886
        %4959 = vmax.xlane.f32.xlu0 %v4958
        %v4960 = vpop.xlane.xlu0 %4959
        %v4961 = vmax.f32 %v4887, %v4888
        %4962 = vmax.xlane.f32.xlu0 %v4961
        %v4963 = vpop.xlane.xlu0 %4962
        %v4964 = vmax.f32 %v4889, %v4890
        %4965 = vmax.xlane.f32.xlu0 %v4964
        %v4966 = vpop.xlane.xlu0 %4965
        %v4967 = vmax.f32 %v4891, %v4892
        %4968 = vmax.xlane.f32.xlu0 %v4967
        %v4969 = vpop.xlane.xlu0 %4968
        %v4970 = vmax.f32 %v4893, %v4894
        %4971 = vmax.xlane.f32.xlu0 %v4970
        %v4972 = vpop.xlane.xlu0 %4971
        %v4973 = vmax.f32 %v4895, %v4896
        %4974 = vmax.xlane.f32.xlu0 %v4973
        %v4975 = vpop.xlane.xlu0 %4974
        %v4976 = vmax.f32 %v4897, %v4898
        %4977 = vmax.xlane.f32.xlu0 %v4976
        %v4978 = vpop.xlane.xlu0 %4977
        %v4979 = vmax.f32 %v4899, %v4900
        %4980 = vmax.xlane.f32.xlu0 %v4979
        %v4981 = vpop.xlane.xlu0 %4980
        %v4982 = vmax.f32 %v4901, %v4902
        %4983 = vmax.xlane.f32.xlu0 %v4982
        %v4984 = vpop.xlane.xlu0 %4983
        %v4985 = vmax.f32 %v4903, %v4904
        %4986 = vmax.xlane.f32.xlu0 %v4985
        %v4987 = vpop.xlane.xlu0 %4986
        %v4988 = vmax.f32 %v4905, %v4906
        %4989 = vmax.xlane.f32.xlu0 %v4988
        %v4990 = vpop.xlane.xlu0 %4989
        %v4991 = vmax.f32 %v4907, %v4908
        %4992 = vmax.xlane.f32.xlu0 %v4991
        %v4993 = vpop.xlane.xlu0 %4992
        %v4994 = vmax.f32 %v4909, %v4910
        %4995 = vmax.xlane.f32.xlu0 %v4994
        %v4996 = vpop.xlane.xlu0 %4995
        %v4997 = vmax.f32 %v4911, %v4912
        %4998 = vmax.xlane.f32.xlu0 %v4997
        %v4999 = vpop.xlane.xlu0 %4998
        %v5000 = vmax.f32 %v4913, %v4914
        %5001 = vmax.xlane.f32.xlu0 %v5000
        %v5002 = vpop.xlane.xlu0 %5001
        %v5003 = vmax.f32 %v4915, %v4916
        %5004 = vmax.xlane.f32.xlu0 %v5003
        %v5005 = vpop.xlane.xlu0 %5004
        %v5006 = vmax.f32 %v4917, %v4918
        %5007 = vmax.xlane.f32.xlu0 %v5006
        %v5008 = vpop.xlane.xlu0 %5007
        %v5009 = vmax.f32 %v4919, %v4920
        %5010 = vmax.xlane.f32.xlu0 %v5009
        %v5011 = vpop.xlane.xlu0 %5010
        %v5012 = vmax.f32 %v4921, %v4922
        %5013 = vmax.xlane.f32.xlu0 %v5012
        %v5014 = vpop.xlane.xlu0 %5013
        %v5015 = vmax.f32 %v4923, %v4924
        %5016 = vmax.xlane.f32.xlu0 %v5015
        %v5017 = vpop.xlane.xlu0 %5016
        %v5018 = vmax.f32 %v4925, %v4926
        %5019 = vmax.xlane.f32.xlu0 %v5018
        %v5020 = vpop.xlane.xlu0 %5019
        %v5021 = vmax.f32 %v4927, %v4928
        %5022 = vmax.xlane.f32.xlu0 %v5021
        %v5023 = vpop.xlane.xlu0 %5022
        %v5024 = vmax.f32 %v4929, %v4930
        %5025 = vmax.xlane.f32.xlu0 %v5024
        %v5026 = vpop.xlane.xlu0 %5025
        %v5027 = vsub.f32 %v4867, %v4933
        %v5028 = vsub.f32 %v4868, %v4933
        %v5029 = vsub.f32 %v4869, %v4936
        %v5030 = vsub.f32 %v4870, %v4936
        %v5031 = vsub.f32 %v4871, %v4939
        %v5032 = vsub.f32 %v4872, %v4939
        %v5033 = vsub.f32 %v4873, %v4942
        %v5034 = vsub.f32 %v4874, %v4942
        %v5035 = vsub.f32 %v4875, %v4945
        %v5036 = vsub.f32 %v4876, %v4945
        %v5037 = vsub.f32 %v4877, %v4948
        %v5038 = vsub.f32 %v4878, %v4948
        %v5039 = vsub.f32 %v4879, %v4951
        %v5040 = vsub.f32 %v4880, %v4951
        %v5041 = vsub.f32 %v4881, %v4954
        %v5042 = vsub.f32 %v4882, %v4954
        %v5043 = vsub.f32 %v4883, %v4957
        %v5044 = vsub.f32 %v4884, %v4957
        %v5045 = vsub.f32 %v4885, %v4960
        %v5046 = vsub.f32 %v4886, %v4960
        %v5047 = vsub.f32 %v4887, %v4963
        %v5048 = vsub.f32 %v4888, %v4963
        %v5049 = vsub.f32 %v4889, %v4966
        %v5050 = vsub.f32 %v4890, %v4966
        %v5051 = vsub.f32 %v4891, %v4969
        %v5052 = vsub.f32 %v4892, %v4969
        %v5053 = vsub.f32 %v4893, %v4972
        %v5054 = vsub.f32 %v4894, %v4972
        %v5055 = vsub.f32 %v4895, %v4975
        %v5056 = vsub.f32 %v4896, %v4975
        %v5057 = vsub.f32 %v4897, %v4978
        %v5058 = vsub.f32 %v4898, %v4978
        %v5059 = vsub.f32 %v4899, %v4981
        %v5060 = vsub.f32 %v4900, %v4981
        %v5061 = vsub.f32 %v4901, %v4984
        %v5062 = vsub.f32 %v4902, %v4984
        %v5063 = vsub.f32 %v4903, %v4987
        %v5064 = vsub.f32 %v4904, %v4987
        %v5065 = vsub.f32 %v4905, %v4990
        %v5066 = vsub.f32 %v4906, %v4990
        %v5067 = vsub.f32 %v4907, %v4993
        %v5068 = vsub.f32 %v4908, %v4993
        %v5069 = vsub.f32 %v4909, %v4996
        %v5070 = vsub.f32 %v4910, %v4996
        %v5071 = vsub.f32 %v4911, %v4999
        %v5072 = vsub.f32 %v4912, %v4999
        %v5073 = vsub.f32 %v4913, %v5002
        %v5074 = vsub.f32 %v4914, %v5002
        %v5075 = vsub.f32 %v4915, %v5005
        %v5076 = vsub.f32 %v4916, %v5005
        %v5077 = vsub.f32 %v4917, %v5008
        %v5078 = vsub.f32 %v4918, %v5008
        %v5079 = vsub.f32 %v4919, %v5011
        %v5080 = vsub.f32 %v4920, %v5011
        %v5081 = vsub.f32 %v4921, %v5014
        %v5082 = vsub.f32 %v4922, %v5014
        %v5083 = vsub.f32 %v4923, %v5017
        %v5084 = vsub.f32 %v4924, %v5017
        %v5085 = vsub.f32 %v4925, %v5020
        %v5086 = vsub.f32 %v4926, %v5020
        %v5087 = vsub.f32 %v4927, %v5023
        %v5088 = vsub.f32 %v4928, %v5023
        %v5089 = vsub.f32 %v4929, %v5026
        %v5090 = vsub.f32 %v4930, %v5026
        %v5091 = vmul.f32 %v5027, 1.442695
        %v5092 = vpow.pop %v5091
        %v5093 = vmul.f32 %v5028, 1.442695
        %v5094 = vpow.pop %v5093
        %v5095 = vmul.f32 %v5029, 1.442695
        %v5096 = vpow.pop %v5095
        %v5097 = vmul.f32 %v5030, 1.442695
        %v5098 = vpow.pop %v5097
        %v5099 = vmul.f32 %v5031, 1.442695
        %v5100 = vpow.pop %v5099
        %v5101 = vmul.f32 %v5032, 1.442695
        %v5102 = vpow.pop %v5101
        %v5103 = vmul.f32 %v5033, 1.442695
        %v5104 = vpow.pop %v5103
        %v5105 = vmul.f32 %v5034, 1.442695
        %v5106 = vpow.pop %v5105
        %v5107 = vmul.f32 %v5035, 1.442695
        %v5108 = vpow.pop %v5107
        %v5109 = vmul.f32 %v5036, 1.442695
        %v5110 = vpow.pop %v5109
        %v5111 = vmul.f32 %v5037, 1.442695
        %v5112 = vpow.pop %v5111
        %v5113 = vmul.f32 %v5038, 1.442695
        %v5114 = vpow.pop %v5113
        %v5115 = vmul.f32 %v5039, 1.442695
        %v5116 = vpow.pop %v5115
        %v5117 = vmul.f32 %v5040, 1.442695
        %v5118 = vpow.pop %v5117
        %v5119 = vmul.f32 %v5041, 1.442695
        %v5120 = vpow.pop %v5119
        %v5121 = vmul.f32 %v5042, 1.442695
        %v5122 = vpow.pop %v5121
        %v5123 = vmul.f32 %v5043, 1.442695
        %v5124 = vpow.pop %v5123
        %v5125 = vmul.f32 %v5044, 1.442695
        %v5126 = vpow.pop %v5125
        %v5127 = vmul.f32 %v5045, 1.442695
        %v5128 = vpow.pop %v5127
        %v5129 = vmul.f32 %v5046, 1.442695
        %v5130 = vpow.pop %v5129
        %v5131 = vmul.f32 %v5047, 1.442695
        %v5132 = vpow.pop %v5131
        %v5133 = vmul.f32 %v5048, 1.442695
        %v5134 = vpow.pop %v5133
        %v5135 = vmul.f32 %v5049, 1.442695
        %v5136 = vpow.pop %v5135
        %v5137 = vmul.f32 %v5050, 1.442695
        %v5138 = vpow.pop %v5137
        %v5139 = vmul.f32 %v5051, 1.442695
        %v5140 = vpow.pop %v5139
        %v5141 = vmul.f32 %v5052, 1.442695
        %v5142 = vpow.pop %v5141
        %v5143 = vmul.f32 %v5053, 1.442695
        %v5144 = vpow.pop %v5143
        %v5145 = vmul.f32 %v5054, 1.442695
        %v5146 = vpow.pop %v5145
        %v5147 = vmul.f32 %v5055, 1.442695
        %v5148 = vpow.pop %v5147
        %v5149 = vmul.f32 %v5056, 1.442695
        %v5150 = vpow.pop %v5149
        %v5151 = vmul.f32 %v5057, 1.442695
        %v5152 = vpow.pop %v5151
        %v5153 = vmul.f32 %v5058, 1.442695
        %v5154 = vpow.pop %v5153
        %v5155 = vmul.f32 %v5059, 1.442695
        %v5156 = vpow.pop %v5155
        %v5157 = vmul.f32 %v5060, 1.442695
        %v5158 = vpow.pop %v5157
        %v5159 = vmul.f32 %v5061, 1.442695
        %v5160 = vpow.pop %v5159
        %v5161 = vmul.f32 %v5062, 1.442695
        %v5162 = vpow.pop %v5161
        %v5163 = vmul.f32 %v5063, 1.442695
        %v5164 = vpow.pop %v5163
        %v5165 = vmul.f32 %v5064, 1.442695
        %v5166 = vpow.pop %v5165
        %v5167 = vmul.f32 %v5065, 1.442695
        %v5168 = vpow.pop %v5167
        %v5169 = vmul.f32 %v5066, 1.442695
        %v5170 = vpow.pop %v5169
        %v5171 = vmul.f32 %v5067, 1.442695
        %v5172 = vpow.pop %v5171
        %v5173 = vmul.f32 %v5068, 1.442695
        %v5174 = vpow.pop %v5173
        %v5175 = vmul.f32 %v5069, 1.442695
        %v5176 = vpow.pop %v5175
        %v5177 = vmul.f32 %v5070, 1.442695
        %v5178 = vpow.pop %v5177
        %v5179 = vmul.f32 %v5071, 1.442695
        %v5180 = vpow.pop %v5179
        %v5181 = vmul.f32 %v5072, 1.442695
        %v5182 = vpow.pop %v5181
        %v5183 = vmul.f32 %v5073, 1.442695
        %v5184 = vpow.pop %v5183
        %v5185 = vmul.f32 %v5074, 1.442695
        %v5186 = vpow.pop %v5185
        %v5187 = vmul.f32 %v5075, 1.442695
        %v5188 = vpow.pop %v5187
        %v5189 = vmul.f32 %v5076, 1.442695
        %v5190 = vpow.pop %v5189
        %v5191 = vmul.f32 %v5077, 1.442695
        %v5192 = vpow.pop %v5191
        %v5193 = vmul.f32 %v5078, 1.442695
        %v5194 = vpow.pop %v5193
        %v5195 = vmul.f32 %v5079, 1.442695
        %v5196 = vpow.pop %v5195
        %v5197 = vmul.f32 %v5080, 1.442695
        %v5198 = vpow.pop %v5197
        %v5199 = vmul.f32 %v5081, 1.442695
        %v5200 = vpow.pop %v5199
        %v5201 = vmul.f32 %v5082, 1.442695
        %v5202 = vpow.pop %v5201
        %v5203 = vmul.f32 %v5083, 1.442695
        %v5204 = vpow.pop %v5203
        %v5205 = vmul.f32 %v5084, 1.442695
        %v5206 = vpow.pop %v5205
        %v5207 = vmul.f32 %v5085, 1.442695
        %v5208 = vpow.pop %v5207
        %v5209 = vmul.f32 %v5086, 1.442695
        %v5210 = vpow.pop %v5209
        %v5211 = vmul.f32 %v5087, 1.442695
        %v5212 = vpow.pop %v5211
        %v5213 = vmul.f32 %v5088, 1.442695
        %v5214 = vpow.pop %v5213
        %v5215 = vmul.f32 %v5089, 1.442695
        %v5216 = vpow.pop %v5215
        %v5217 = vmul.f32 %v5090, 1.442695
        %v5218 = vpow.pop %v5217
        %v5219 = vadd.f32 %v5092, %v5094
        %5220 = vadd.xlane.f32.xlu0 %v5219
        %v5221 = vpop.xlane.xlu0 %5220
        %v5222 = vadd.f32 %v5096, %v5098
        %5223 = vadd.xlane.f32.xlu0 %v5222
        %v5224 = vpop.xlane.xlu0 %5223
        %v5225 = vadd.f32 %v5100, %v5102
        %5226 = vadd.xlane.f32.xlu0 %v5225
        %v5227 = vpop.xlane.xlu0 %5226
        %v5228 = vadd.f32 %v5104, %v5106
        %5229 = vadd.xlane.f32.xlu0 %v5228
        %v5230 = vpop.xlane.xlu0 %5229
        %v5231 = vadd.f32 %v5108, %v5110
        %5232 = vadd.xlane.f32.xlu0 %v5231
        %v5233 = vpop.xlane.xlu0 %5232
        %v5234 = vadd.f32 %v5112, %v5114
        %5235 = vadd.xlane.f32.xlu0 %v5234
        %v5236 = vpop.xlane.xlu0 %5235
        %v5237 = vadd.f32 %v5116, %v5118
        %5238 = vadd.xlane.f32.xlu0 %v5237
        %v5239 = vpop.xlane.xlu0 %5238
        %v5240 = vadd.f32 %v5120, %v5122
        %5241 = vadd.xlane.f32.xlu0 %v5240
        %v5242 = vpop.xlane.xlu0 %5241
        %v5243 = vadd.f32 %v5124, %v5126
        %5244 = vadd.xlane.f32.xlu0 %v5243
        %v5245 = vpop.xlane.xlu0 %5244
        %v5246 = vadd.f32 %v5128, %v5130
        %5247 = vadd.xlane.f32.xlu0 %v5246
        %v5248 = vpop.xlane.xlu0 %5247
        %v5249 = vadd.f32 %v5132, %v5134
        %5250 = vadd.xlane.f32.xlu0 %v5249
        %v5251 = vpop.xlane.xlu0 %5250
        %v5252 = vadd.f32 %v5136, %v5138
        %5253 = vadd.xlane.f32.xlu0 %v5252
        %v5254 = vpop.xlane.xlu0 %5253
        %v5255 = vadd.f32 %v5140, %v5142
        %5256 = vadd.xlane.f32.xlu0 %v5255
        %v5257 = vpop.xlane.xlu0 %5256
        %v5258 = vadd.f32 %v5144, %v5146
        %5259 = vadd.xlane.f32.xlu0 %v5258
        %v5260 = vpop.xlane.xlu0 %5259
        %v5261 = vadd.f32 %v5148, %v5150
        %5262 = vadd.xlane.f32.xlu0 %v5261
        %v5263 = vpop.xlane.xlu0 %5262
        %v5264 = vadd.f32 %v5152, %v5154
        %5265 = vadd.xlane.f32.xlu0 %v5264
        %v5266 = vpop.xlane.xlu0 %5265
        %v5267 = vadd.f32 %v5156, %v5158
        %5268 = vadd.xlane.f32.xlu0 %v5267
        %v5269 = vpop.xlane.xlu0 %5268
        %v5270 = vadd.f32 %v5160, %v5162
        %5271 = vadd.xlane.f32.xlu0 %v5270
        %v5272 = vpop.xlane.xlu0 %5271
        %v5273 = vadd.f32 %v5164, %v5166
        %5274 = vadd.xlane.f32.xlu0 %v5273
        %v5275 = vpop.xlane.xlu0 %5274
        %v5276 = vadd.f32 %v5168, %v5170
        %5277 = vadd.xlane.f32.xlu0 %v5276
        %v5278 = vpop.xlane.xlu0 %5277
        %v5279 = vadd.f32 %v5172, %v5174
        %5280 = vadd.xlane.f32.xlu0 %v5279
        %v5281 = vpop.xlane.xlu0 %5280
        %v5282 = vadd.f32 %v5176, %v5178
        %5283 = vadd.xlane.f32.xlu0 %v5282
        %v5284 = vpop.xlane.xlu0 %5283
        %v5285 = vadd.f32 %v5180, %v5182
        %5286 = vadd.xlane.f32.xlu0 %v5285
        %v5287 = vpop.xlane.xlu0 %5286
        %v5288 = vadd.f32 %v5184, %v5186
        %5289 = vadd.xlane.f32.xlu0 %v5288
        %v5290 = vpop.xlane.xlu0 %5289
        %v5291 = vadd.f32 %v5188, %v5190
        %5292 = vadd.xlane.f32.xlu0 %v5291
        %v5293 = vpop.xlane.xlu0 %5292
        %v5294 = vadd.f32 %v5192, %v5194
        %5295 = vadd.xlane.f32.xlu0 %v5294
        %v5296 = vpop.xlane.xlu0 %5295
        %v5297 = vadd.f32 %v5196, %v5198
        %5298 = vadd.xlane.f32.xlu0 %v5297
        %v5299 = vpop.xlane.xlu0 %5298
        %v5300 = vadd.f32 %v5200, %v5202
        %5301 = vadd.xlane.f32.xlu0 %v5300
        %v5302 = vpop.xlane.xlu0 %5301
        %v5303 = vadd.f32 %v5204, %v5206
        %5304 = vadd.xlane.f32.xlu0 %v5303
        %v5305 = vpop.xlane.xlu0 %5304
        %v5306 = vadd.f32 %v5208, %v5210
        %5307 = vadd.xlane.f32.xlu0 %v5306
        %v5308 = vpop.xlane.xlu0 %5307
        %v5309 = vadd.f32 %v5212, %v5214
        %5310 = vadd.xlane.f32.xlu0 %v5309
        %v5311 = vpop.xlane.xlu0 %5310
        %v5312 = vadd.f32 %v5216, %v5218
        %5313 = vadd.xlane.f32.xlu0 %v5312
        %v5314 = vpop.xlane.xlu0 %5313
        %v5315 = vrcp.pop %v5221
        %v5316 = vrcp.pop %v5224
        %v5317 = vrcp.pop %v5227
        %v5318 = vrcp.pop %v5230
        %v5319 = vrcp.pop %v5233
        %v5320 = vrcp.pop %v5236
        %v5321 = vrcp.pop %v5239
        %v5322 = vrcp.pop %v5242
        %v5323 = vrcp.pop %v5245
        %v5324 = vrcp.pop %v5248
        %v5325 = vrcp.pop %v5251
        %v5326 = vrcp.pop %v5254
        %v5327 = vrcp.pop %v5257
        %v5328 = vrcp.pop %v5260
        %v5329 = vrcp.pop %v5263
        %v5330 = vrcp.pop %v5266
        %v5331 = vrcp.pop %v5269
        %v5332 = vrcp.pop %v5272
        %v5333 = vrcp.pop %v5275
        %v5334 = vrcp.pop %v5278
        %v5335 = vrcp.pop %v5281
        %v5336 = vrcp.pop %v5284
        %v5337 = vrcp.pop %v5287
        %v5338 = vrcp.pop %v5290
        %v5339 = vrcp.pop %v5293
        %v5340 = vrcp.pop %v5296
        %v5341 = vrcp.pop %v5299
        %v5342 = vrcp.pop %v5302
        %v5343 = vrcp.pop %v5305
        %v5344 = vrcp.pop %v5308
        %v5345 = vrcp.pop %v5311
        %v5346 = vrcp.pop %v5314
        %v5347 = vmul.f32 %v5092, %v5315
        %v5348 = vmul.f32 %v5094, %v5315
        %v5349 = vmul.f32 %v5096, %v5316
        %v5350 = vmul.f32 %v5098, %v5316
        %v5351 = vmul.f32 %v5100, %v5317
        %v5352 = vmul.f32 %v5102, %v5317
        %v5353 = vmul.f32 %v5104, %v5318
        %v5354 = vmul.f32 %v5106, %v5318
        %v5355 = vmul.f32 %v5108, %v5319
        %v5356 = vmul.f32 %v5110, %v5319
        %v5357 = vmul.f32 %v5112, %v5320
        %v5358 = vmul.f32 %v5114, %v5320
        %v5359 = vmul.f32 %v5116, %v5321
        %v5360 = vmul.f32 %v5118, %v5321
        %v5361 = vmul.f32 %v5120, %v5322
        %v5362 = vmul.f32 %v5122, %v5322
        %v5363 = vmul.f32 %v5124, %v5323
        %v5364 = vmul.f32 %v5126, %v5323
        %v5365 = vmul.f32 %v5128, %v5324
        %v5366 = vmul.f32 %v5130, %v5324
        %v5367 = vmul.f32 %v5132, %v5325
        %v5368 = vmul.f32 %v5134, %v5325
        %v5369 = vmul.f32 %v5136, %v5326
        %v5370 = vmul.f32 %v5138, %v5326
        %v5371 = vmul.f32 %v5140, %v5327
        %v5372 = vmul.f32 %v5142, %v5327
        %v5373 = vmul.f32 %v5144, %v5328
        %v5374 = vmul.f32 %v5146, %v5328
        %v5375 = vmul.f32 %v5148, %v5329
        %v5376 = vmul.f32 %v5150, %v5329
        %v5377 = vmul.f32 %v5152, %v5330
        %v5378 = vmul.f32 %v5154, %v5330
        %v5379 = vmul.f32 %v5156, %v5331
        %v5380 = vmul.f32 %v5158, %v5331
        %v5381 = vmul.f32 %v5160, %v5332
        %v5382 = vmul.f32 %v5162, %v5332
        %v5383 = vmul.f32 %v5164, %v5333
        %v5384 = vmul.f32 %v5166, %v5333
        %v5385 = vmul.f32 %v5168, %v5334
        %v5386 = vmul.f32 %v5170, %v5334
        %v5387 = vmul.f32 %v5172, %v5335
        %v5388 = vmul.f32 %v5174, %v5335
        %v5389 = vmul.f32 %v5176, %v5336
        %v5390 = vmul.f32 %v5178, %v5336
        %v5391 = vmul.f32 %v5180, %v5337
        %v5392 = vmul.f32 %v5182, %v5337
        %v5393 = vmul.f32 %v5184, %v5338
        %v5394 = vmul.f32 %v5186, %v5338
        %v5395 = vmul.f32 %v5188, %v5339
        %v5396 = vmul.f32 %v5190, %v5339
        %v5397 = vmul.f32 %v5192, %v5340
        %v5398 = vmul.f32 %v5194, %v5340
        %v5399 = vmul.f32 %v5196, %v5341
        %v5400 = vmul.f32 %v5198, %v5341
        %v5401 = vmul.f32 %v5200, %v5342
        %v5402 = vmul.f32 %v5202, %v5342
        %v5403 = vmul.f32 %v5204, %v5343
        %v5404 = vmul.f32 %v5206, %v5343
        %v5405 = vmul.f32 %v5208, %v5344
        %v5406 = vmul.f32 %v5210, %v5344
        %v5407 = vmul.f32 %v5212, %v5345
        %v5408 = vmul.f32 %v5214, %v5345
        %v5409 = vmul.f32 %v5216, %v5346
        %v5410 = vmul.f32 %v5218, %v5346
        %5411 = vrot.lane.b32.xlu0 %v571, 48
        %v5412 = vpop.permute.xlu0 %5411
        %5413 = vrot.lane.b32.xlu0 %v576, 48
        %v5414 = vpop.permute.xlu0 %5413
        %5415 = vrot.lane.b32.xlu0 %v581, 48
        %v5416 = vpop.permute.xlu0 %5415
        %5417 = vrot.lane.b32.xlu0 %v586, 48
        %v5418 = vpop.permute.xlu0 %5417
        %5419 = vrot.lane.b32.xlu0 %v591, 48
        %v5420 = vpop.permute.xlu0 %5419
        %5421 = vrot.lane.b32.xlu0 %v596, 48
        %v5422 = vpop.permute.xlu0 %5421
        %5423 = vrot.lane.b32.xlu0 %v601, 48
        %v5424 = vpop.permute.xlu0 %5423
        %5425 = vrot.lane.b32.xlu0 %v606, 48
        %v5426 = vpop.permute.xlu0 %5425
        %5427 = vrot.lane.b32.xlu0 %v611, 48
        %v5428 = vpop.permute.xlu0 %5427
        %5429 = vrot.lane.b32.xlu0 %v616, 48
        %v5430 = vpop.permute.xlu0 %5429
        %5431 = vrot.lane.b32.xlu0 %v621, 48
        %v5432 = vpop.permute.xlu0 %5431
        %5433 = vrot.lane.b32.xlu0 %v626, 48
        %v5434 = vpop.permute.xlu0 %5433
        %5435 = vrot.lane.b32.xlu0 %v631, 48
        %v5436 = vpop.permute.xlu0 %5435
        %5437 = vrot.lane.b32.xlu0 %v636, 48
        %v5438 = vpop.permute.xlu0 %5437
        %5439 = vrot.lane.b32.xlu0 %v641, 48
        %v5440 = vpop.permute.xlu0 %5439
        %5441 = vrot.lane.b32.xlu0 %v646, 48
        %v5442 = vpop.permute.xlu0 %5441
        %5443 = vrot.lane.b32.xlu0 %v651, 48
        %v5444 = vpop.permute.xlu0 %5443
        %5445 = vrot.lane.b32.xlu0 %v656, 48
        %v5446 = vpop.permute.xlu0 %5445
        %5447 = vrot.lane.b32.xlu0 %v661, 48
        %v5448 = vpop.permute.xlu0 %5447
        %5449 = vrot.lane.b32.xlu0 %v666, 48
        %v5450 = vpop.permute.xlu0 %5449
        %5451 = vrot.lane.b32.xlu0 %v671, 48
        %v5452 = vpop.permute.xlu0 %5451
        %5453 = vrot.lane.b32.xlu0 %v676, 48
        %v5454 = vpop.permute.xlu0 %5453
        %5455 = vrot.lane.b32.xlu0 %v681, 48
        %v5456 = vpop.permute.xlu0 %5455
        %5457 = vrot.lane.b32.xlu0 %v686, 48
        %v5458 = vpop.permute.xlu0 %5457
        %5459 = vrot.lane.b32.xlu0 %v691, 48
        %v5460 = vpop.permute.xlu0 %5459
        %5461 = vrot.lane.b32.xlu0 %v696, 48
        %v5462 = vpop.permute.xlu0 %5461
        %5463 = vrot.lane.b32.xlu0 %v701, 48
        %v5464 = vpop.permute.xlu0 %5463
        %5465 = vrot.lane.b32.xlu0 %v706, 48
        %v5466 = vpop.permute.xlu0 %5465
        %5467 = vrot.lane.b32.xlu0 %v711, 48
        %v5468 = vpop.permute.xlu0 %5467
        %5469 = vrot.lane.b32.xlu0 %v716, 48
        %v5470 = vpop.permute.xlu0 %5469
        %5471 = vrot.lane.b32.xlu0 %v721, 48
        %v5472 = vpop.permute.xlu0 %5471
        %5473 = vrot.lane.b32.xlu0 %v726, 48
        %v5474 = vpop.permute.xlu0 %5473
        %5507 = vmatprep.subr.mxu0 0.0
        %5508 = vmatpush1.msra.mxu0 %v5412
        %5509 = vmatprep.subr.mxu0 0.0
        %5510 = vmatpush1.msra.mxu0 %v5414
        %5511 = vmatprep.subr.mxu0 0.0
        %5512 = vmatpush1.msra.mxu0 %v5416
        %5513 = vmatprep.subr.mxu0 0.0
        %5514 = vmatpush1.msra.mxu0 %v5418
        %5515 = vmatprep.subr.mxu0 0.0
        %5516 = vmatpush1.msra.mxu0 %v5420
        %5517 = vmatprep.subr.mxu0 0.0
        %5518 = vmatpush1.msra.mxu0 %v5422
        %5519 = vmatprep.subr.mxu0 0.0
        %5520 = vmatpush1.msra.mxu0 %v5424
        %5521 = vmatprep.subr.mxu0 0.0
        %5522 = vmatpush1.msra.mxu0 %v5426
        %5523 = vmatprep.subr.mxu0 0.0
        %5524 = vmatpush1.msra.mxu0 %v5428
        %5525 = vmatprep.subr.mxu0 0.0
        %5526 = vmatpush1.msra.mxu0 %v5430
        %5527 = vmatprep.subr.mxu0 0.0
        %5528 = vmatpush1.msra.mxu0 %v5432
        %5529 = vmatprep.subr.mxu0 0.0
        %5530 = vmatpush1.msra.mxu0 %v5434
        %5531 = vmatprep.subr.mxu0 0.0
        %5532 = vmatpush1.msra.mxu0 %v5436
        %5533 = vmatprep.subr.mxu0 0.0
        %5534 = vmatpush1.msra.mxu0 %v5438
        %5535 = vmatprep.subr.mxu0 0.0
        %5536 = vmatpush1.msra.mxu0 %v5440
        %5537 = vmatprep.subr.mxu0 0.0
        %5538 = vmatpush1.msra.mxu0 %v5442
        %5539 = vmatprep.subr.mxu0 0.0
        %5540 = vmatpush1.msra.mxu0 %v5444
        %5541 = vmatprep.subr.mxu0 0.0
        %5542 = vmatpush1.msra.mxu0 %v5446
        %5543 = vmatprep.subr.mxu0 0.0
        %5544 = vmatpush1.msra.mxu0 %v5448
        %5545 = vmatprep.subr.mxu0 0.0
        %5546 = vmatpush1.msra.mxu0 %v5450
        %5547 = vmatprep.subr.mxu0 0.0
        %5548 = vmatpush1.msra.mxu0 %v5452
        %5549 = vmatprep.subr.mxu0 0.0
        %5550 = vmatpush1.msra.mxu0 %v5454
        %5551 = vmatprep.subr.mxu0 0.0
        %5552 = vmatpush1.msra.mxu0 %v5456
        %5553 = vmatprep.subr.mxu0 0.0
        %5554 = vmatpush1.msra.mxu0 %v5458
        %5555 = vmatprep.subr.mxu0 0.0
        %5556 = vmatpush1.msra.mxu0 %v5460
        %5557 = vmatprep.subr.mxu0 0.0
        %5558 = vmatpush1.msra.mxu0 %v5462
        %5559 = vmatprep.subr.mxu0 0.0
        %5560 = vmatpush1.msra.mxu0 %v5464
        %5561 = vmatprep.subr.mxu0 0.0
        %5562 = vmatpush1.msra.mxu0 %v5466
        %5563 = vmatprep.subr.mxu0 0.0
        %5564 = vmatpush1.msra.mxu0 %v5468
        %5565 = vmatprep.subr.mxu0 0.0
        %5566 = vmatpush1.msra.mxu0 %v5470
        %5567 = vmatprep.subr.mxu0 0.0
        %5568 = vmatpush1.msra.mxu0 %v5472
        %5569 = vmatprep.subr.mxu0 0.0
        %5570 = vmatpush1.msra.mxu0 %v5474
        %5571 = vmatprep.mubr.f32.mxu0 %v5348
        %5572 = vmatmul.mubr.f32.gmra.mrb[0].mxu0 %v5347
        %v5573 = vpop.f32.mrb[0].mxu0
        %v5574 = vadd.f32 0.0, %v5573
        %v5575 = vpop.f32.mrb[0].mxu0
        %5576 = vmatprep.mubr.f32.mxu0 %v5350
        %5577 = vmatmul.mubr.f32.gmra.mrb[0].mxu0 %v5349
        %v5578 = vpop.f32.mrb[0].mxu0
        %v5579 = vadd.f32 0.0, %v5578
        %v5580 = vpop.f32.mrb[0].mxu0
        %5581 = vmatprep.mubr.f32.mxu0 %v5352
        %5582 = vmatmul.mubr.f32.gmra.mrb[0].mxu0 %v5351
        %v5583 = vpop.f32.mrb[0].mxu0
        %v5584 = vadd.f32 0.0, %v5583
        %v5585 = vpop.f32.mrb[0].mxu0
        %5586 = vmatprep.mubr.f32.mxu0 %v5354
        %5587 = vmatmul.mubr.f32.gmra.mrb[0].mxu0 %v5353
        %v5588 = vpop.f32.mrb[0].mxu0
        %v5589 = vadd.f32 0.0, %v5588
        %v5590 = vpop.f32.mrb[0].mxu0
        %5591 = vmatprep.mubr.f32.mxu0 %v5356
        %5592 = vmatmul.mubr.f32.gmra.mrb[0].mxu0 %v5355
        %v5593 = vpop.f32.mrb[0].mxu0
        %v5594 = vadd.f32 0.0, %v5593
        %v5595 = vpop.f32.mrb[0].mxu0
        %5596 = vmatprep.mubr.f32.mxu0 %v5358
        %5597 = vmatmul.mubr.f32.gmra.mrb[0].mxu0 %v5357
        %v5598 = vpop.f32.mrb[0].mxu0
        %v5599 = vadd.f32 0.0, %v5598
        %v5600 = vpop.f32.mrb[0].mxu0
        %5601 = vmatprep.mubr.f32.mxu0 %v5360
        %5602 = vmatmul.mubr.f32.gmra.mrb[0].mxu0 %v5359
        %v5603 = vpop.f32.mrb[0].mxu0
        %v5604 = vadd.f32 0.0, %v5603
        %v5605 = vpop.f32.mrb[0].mxu0
        %5606 = vmatprep.mubr.f32.mxu0 %v5362
        %5607 = vmatmul.mubr.f32.gmra.mrb[0].mxu0 %v5361
        %v5608 = vpop.f32.mrb[0].mxu0
        %v5609 = vadd.f32 0.0, %v5608
        %v5610 = vpop.f32.mrb[0].mxu0
        %5611 = vmatprep.mubr.f32.mxu0 %v5364
        %5612 = vmatmul.mubr.f32.gmra.mrb[0].mxu0 %v5363
        %v5613 = vpop.f32.mrb[0].mxu0
        %v5614 = vadd.f32 0.0, %v5613
        %v5615 = vpop.f32.mrb[0].mxu0
        %5616 = vmatprep.mubr.f32.mxu0 %v5366
        %5617 = vmatmul.mubr.f32.gmra.mrb[0].mxu0 %v5365
        %v5618 = vpop.f32.mrb[0].mxu0
        %v5619 = vadd.f32 0.0, %v5618
        %v5620 = vpop.f32.mrb[0].mxu0
        %5621 = vmatprep.mubr.f32.mxu0 %v5368
        %5622 = vmatmul.mubr.f32.gmra.mrb[0].mxu0 %v5367
        %v5623 = vpop.f32.mrb[0].mxu0
        %v5624 = vadd.f32 0.0, %v5623
        %v5625 = vpop.f32.mrb[0].mxu0
        %5626 = vmatprep.mubr.f32.mxu0 %v5370
        %5627 = vmatmul.mubr.f32.gmra.mrb[0].mxu0 %v5369
        %v5628 = vpop.f32.mrb[0].mxu0
        %v5629 = vadd.f32 0.0, %v5628
        %v5630 = vpop.f32.mrb[0].mxu0
        %5631 = vmatprep.mubr.f32.mxu0 %v5372
        %5632 = vmatmul.mubr.f32.gmra.mrb[0].mxu0 %v5371
        %v5633 = vpop.f32.mrb[0].mxu0
        %v5634 = vadd.f32 0.0, %v5633
        %v5635 = vpop.f32.mrb[0].mxu0
        %5636 = vmatprep.mubr.f32.mxu0 %v5374
        %5637 = vmatmul.mubr.f32.gmra.mrb[0].mxu0 %v5373
        %v5638 = vpop.f32.mrb[0].mxu0
        %v5639 = vadd.f32 0.0, %v5638
        %v5640 = vpop.f32.mrb[0].mxu0
        %5641 = vmatprep.mubr.f32.mxu0 %v5376
        %5642 = vmatmul.mubr.f32.gmra.mrb[0].mxu0 %v5375
        %v5643 = vpop.f32.mrb[0].mxu0
        %v5644 = vadd.f32 0.0, %v5643
        %v5645 = vpop.f32.mrb[0].mxu0
        %5646 = vmatprep.mubr.f32.mxu0 %v5378
        %5647 = vmatmul.mubr.f32.gmra.mrb[0].mxu0 %v5377
        %v5648 = vpop.f32.mrb[0].mxu0
        %v5649 = vadd.f32 0.0, %v5648
        %v5650 = vpop.f32.mrb[0].mxu0
        %5651 = vmatprep.mubr.f32.mxu0 %v5380
        %5652 = vmatmul.mubr.f32.gmra.mrb[0].mxu0 %v5379
        %v5653 = vpop.f32.mrb[0].mxu0
        %v5654 = vadd.f32 0.0, %v5653
        %v5655 = vpop.f32.mrb[0].mxu0
        %5656 = vmatprep.mubr.f32.mxu0 %v5382
        %5657 = vmatmul.mubr.f32.gmra.mrb[0].mxu0 %v5381
        %v5658 = vpop.f32.mrb[0].mxu0
        %v5659 = vadd.f32 0.0, %v5658
        %v5660 = vpop.f32.mrb[0].mxu0
        %5661 = vmatprep.mubr.f32.mxu0 %v5384
        %5662 = vmatmul.mubr.f32.gmra.mrb[0].mxu0 %v5383
        %v5663 = vpop.f32.mrb[0].mxu0
        %v5664 = vadd.f32 0.0, %v5663
        %v5665 = vpop.f32.mrb[0].mxu0
        %5666 = vmatprep.mubr.f32.mxu0 %v5386
        %5667 = vmatmul.mubr.f32.gmra.mrb[0].mxu0 %v5385
        %v5668 = vpop.f32.mrb[0].mxu0
        %v5669 = vadd.f32 0.0, %v5668
        %v5670 = vpop.f32.mrb[0].mxu0
        %5671 = vmatprep.mubr.f32.mxu0 %v5388
        %5672 = vmatmul.mubr.f32.gmra.mrb[0].mxu0 %v5387
        %v5673 = vpop.f32.mrb[0].mxu0
        %v5674 = vadd.f32 0.0, %v5673
        %v5675 = vpop.f32.mrb[0].mxu0
        %5676 = vmatprep.mubr.f32.mxu0 %v5390
        %5677 = vmatmul.mubr.f32.gmra.mrb[0].mxu0 %v5389
        %v5678 = vpop.f32.mrb[0].mxu0
        %v5679 = vadd.f32 0.0, %v5678
        %v5680 = vpop.f32.mrb[0].mxu0
        %5681 = vmatprep.mubr.f32.mxu0 %v5392
        %5682 = vmatmul.mubr.f32.gmra.mrb[0].mxu0 %v5391
        %v5683 = vpop.f32.mrb[0].mxu0
        %v5684 = vadd.f32 0.0, %v5683
        %v5685 = vpop.f32.mrb[0].mxu0
        %5686 = vmatprep.mubr.f32.mxu0 %v5394
        %5687 = vmatmul.mubr.f32.gmra.mrb[0].mxu0 %v5393
        %v5688 = vpop.f32.mrb[0].mxu0
        %v5689 = vadd.f32 0.0, %v5688
        %v5690 = vpop.f32.mrb[0].mxu0
        %5691 = vmatprep.mubr.f32.mxu0 %v5396
        %5692 = vmatmul.mubr.f32.gmra.mrb[0].mxu0 %v5395
        %v5693 = vpop.f32.mrb[0].mxu0
        %v5694 = vadd.f32 0.0, %v5693
        %v5695 = vpop.f32.mrb[0].mxu0
        %5696 = vmatprep.mubr.f32.mxu0 %v5398
        %5697 = vmatmul.mubr.f32.gmra.mrb[0].mxu0 %v5397
        %v5698 = vpop.f32.mrb[0].mxu0
        %v5699 = vadd.f32 0.0, %v5698
        %v5700 = vpop.f32.mrb[0].mxu0
        %5701 = vmatprep.mubr.f32.mxu0 %v5400
        %5702 = vmatmul.mubr.f32.gmra.mrb[0].mxu0 %v5399
        %v5703 = vpop.f32.mrb[0].mxu0
        %v5704 = vadd.f32 0.0, %v5703
        %v5705 = vpop.f32.mrb[0].mxu0
        %5706 = vmatprep.mubr.f32.mxu0 %v5402
        %5707 = vmatmul.mubr.f32.gmra.mrb[0].mxu0 %v5401
        %v5708 = vpop.f32.mrb[0].mxu0
        %v5709 = vadd.f32 0.0, %v5708
        %v5710 = vpop.f32.mrb[0].mxu0
        %5711 = vmatprep.mubr.f32.mxu0 %v5404
        %5712 = vmatmul.mubr.f32.gmra.mrb[0].mxu0 %v5403
        %v5713 = vpop.f32.mrb[0].mxu0
        %v5714 = vadd.f32 0.0, %v5713
        %v5715 = vpop.f32.mrb[0].mxu0
        %5716 = vmatprep.mubr.f32.mxu0 %v5406
        %5717 = vmatmul.mubr.f32.gmra.mrb[0].mxu0 %v5405
        %v5718 = vpop.f32.mrb[0].mxu0
        %v5719 = vadd.f32 0.0, %v5718
        %v5720 = vpop.f32.mrb[0].mxu0
        %5721 = vmatprep.mubr.f32.mxu0 %v5408
        %5722 = vmatmul.mubr.f32.gmra.mrb[0].mxu0 %v5407
        %v5723 = vpop.f32.mrb[0].mxu0
        %v5724 = vadd.f32 0.0, %v5723
        %v5725 = vpop.f32.mrb[0].mxu0
        %5726 = vmatprep.mubr.f32.mxu0 %v5410
        %5727 = vmatmul.mubr.f32.gmra.mrb[0].mxu0 %v5409
        %v5728 = vpop.f32.mrb[0].mxu0
        %v5729 = vadd.f32 0.0, %v5728
        %v5730 = vpop.f32.mrb[0].mxu0
        %5731 = vdwg.mxu0
        %v5732 = vld [vmem:[#allocation5 + $0x10] sm:$0xff]
        %v5734 = vsel %vm889, %v5574, 0
        %v5737 = vsel %vm889, %v5579, 0
        %v5740 = vsel %vm889, %v5584, 0
        %v5743 = vsel %vm889, %v5589, 0
        %v5746 = vsel %vm889, %v5594, 0
        %v5749 = vsel %vm889, %v5599, 0
        %v5752 = vsel %vm889, %v5604, 0
        %v5755 = vsel %vm889, %v5609, 0
        %v5758 = vsel %vm889, %v5614, 0
        %v5761 = vsel %vm889, %v5619, 0
        %v5764 = vsel %vm889, %v5624, 0
        %v5767 = vsel %vm889, %v5629, 0
        %v5770 = vsel %vm889, %v5634, 0
        %v5773 = vsel %vm889, %v5639, 0
        %v5776 = vsel %vm889, %v5644, 0
        %v5779 = vsel %vm889, %v5649, 0
        %v5782 = vsel %vm889, %v5654, 0
        %v5785 = vsel %vm889, %v5659, 0
        %v5788 = vsel %vm889, %v5664, 0
        %v5791 = vsel %vm889, %v5669, 0
        %v5794 = vsel %vm889, %v5674, 0
        %v5797 = vsel %vm889, %v5679, 0
        %v5800 = vsel %vm889, %v5684, 0
        %v5803 = vsel %vm889, %v5689, 0
        %v5806 = vsel %vm889, %v5694, 0
        %v5809 = vsel %vm889, %v5699, 0
        %v5812 = vsel %vm889, %v5704, 0
        %v5815 = vsel %vm889, %v5709, 0
        %v5818 = vsel %vm889, %v5714, 0
        %v5821 = vsel %vm889, %v5719, 0
        %v5824 = vsel %vm889, %v5724, 0
        %v5827 = vsel %vm889, %v5729, 0
        %5829 = vmatprep.subr.mxu0 0.0
        %5830 = vmatpush1.msra.mxu0 %v5732
        %5831 = vmatprep.subr.mxu0 0.0
        %5832 = vmatpush1.msra.mxu0 0.0
        %5833 = vmatprep.subr.mxu0 0.0
        %5834 = vmatpush1.msra.mxu0 0.0
        %5835 = vmatprep.subr.mxu0 0.0
        %5836 = vmatpush1.msra.mxu0 0.0
        %5837 = vmatprep.subr.mxu0 0.0
        %5838 = vmatpush1.msra.mxu0 0.0
        %5839 = vmatprep.subr.mxu0 0.0
        %5840 = vmatpush1.msra.mxu0 0.0
        %5841 = vmatprep.subr.mxu0 0.0
        %5842 = vmatpush1.msra.mxu0 0.0
        %5843 = vmatprep.subr.mxu0 0.0
        %5844 = vmatpush1.msra.mxu0 0.0
        %5845 = vmatprep.subr.mxu0 0.0
        %5846 = vmatpush1.msra.mxu0 0.0
        %5847 = vmatprep.subr.mxu0 0.0
        %5848 = vmatpush1.msra.mxu0 0.0
        %5849 = vmatprep.subr.mxu0 0.0
        %5850 = vmatpush1.msra.mxu0 0.0
        %5851 = vmatprep.subr.mxu0 0.0
        %5852 = vmatpush1.msra.mxu0 0.0
        %5853 = vmatprep.subr.mxu0 0.0
        %5854 = vmatpush1.msra.mxu0 0.0
        %5855 = vmatprep.subr.mxu0 0.0
        %5856 = vmatpush1.msra.mxu0 0.0
        %5857 = vmatprep.subr.mxu0 0.0
        %5858 = vmatpush1.msra.mxu0 0.0
        %5859 = vmatprep.subr.mxu0 0.0
        %5860 = vmatpush1.msra.mxu0 0.0
        %5861 = vmatprep.subr.mxu0 0.0
        %5862 = vmatpush1.msra.mxu0 0.0
        %5863 = vmatprep.subr.mxu0 0.0
        %5864 = vmatpush1.msra.mxu0 0.0
        %5865 = vmatprep.subr.mxu0 0.0
        %5866 = vmatpush1.msra.mxu0 0.0
        %5867 = vmatprep.subr.mxu0 0.0
        %5868 = vmatpush1.msra.mxu0 0.0
        %5869 = vmatprep.subr.mxu0 0.0
        %5870 = vmatpush1.msra.mxu0 0.0
        %5871 = vmatprep.subr.mxu0 0.0
        %5872 = vmatpush1.msra.mxu0 0.0
        %5873 = vmatprep.subr.mxu0 0.0
        %5874 = vmatpush1.msra.mxu0 0.0
        %5875 = vmatprep.subr.mxu0 0.0
        %5876 = vmatpush1.msra.mxu0 0.0
        %5877 = vmatprep.subr.mxu0 0.0
        %5878 = vmatpush1.msra.mxu0 0.0
        %5879 = vmatprep.subr.mxu0 0.0
        %5880 = vmatpush1.msra.mxu0 0.0
        %5881 = vmatprep.subr.mxu0 0.0
        %5882 = vmatpush1.msra.mxu0 0.0
        %5883 = vmatprep.subr.mxu0 0.0
        %5884 = vmatpush1.msra.mxu0 0.0
        %5885 = vmatprep.subr.mxu0 0.0
        %5886 = vmatpush1.msra.mxu0 0.0
        %5887 = vmatprep.subr.mxu0 0.0
        %5888 = vmatpush1.msra.mxu0 0.0
        %5889 = vmatprep.subr.mxu0 0.0
        %5890 = vmatpush1.msra.mxu0 0.0
        %5891 = vmatprep.subr.mxu0 0.0
        %5892 = vmatpush1.msra.mxu0 0.0
        %5893 = vmatprep.mubr.f32.mxu0 0.0
        %5894 = vmatmul.mubr.f32.gmra.mrb[0].mxu0 %v5734
        %v5895 = vpop.f32.mrb[0].mxu0
        %v5896 = vadd.f32 0.0, %v5895
        %v5897 = vpop.f32.mrb[0].mxu0
        %5898 = vmatprep.mubr.f32.mxu0 0.0
        %5899 = vmatmul.mubr.f32.gmra.mrb[0].mxu0 %v5737
        %v5900 = vpop.f32.mrb[0].mxu0
        %v5901 = vadd.f32 0.0, %v5900
        %v5902 = vpop.f32.mrb[0].mxu0
        %5903 = vmatprep.mubr.f32.mxu0 0.0
        %5904 = vmatmul.mubr.f32.gmra.mrb[0].mxu0 %v5740
        %v5905 = vpop.f32.mrb[0].mxu0
        %v5906 = vadd.f32 0.0, %v5905
        %v5907 = vpop.f32.mrb[0].mxu0
        %5908 = vmatprep.mubr.f32.mxu0 0.0
        %5909 = vmatmul.mubr.f32.gmra.mrb[0].mxu0 %v5743
        %v5910 = vpop.f32.mrb[0].mxu0
        %v5911 = vadd.f32 0.0, %v5910
        %v5912 = vpop.f32.mrb[0].mxu0
        %5913 = vmatprep.mubr.f32.mxu0 0.0
        %5914 = vmatmul.mubr.f32.gmra.mrb[0].mxu0 %v5746
        %v5915 = vpop.f32.mrb[0].mxu0
        %v5916 = vadd.f32 0.0, %v5915
        %v5917 = vpop.f32.mrb[0].mxu0
        %5918 = vmatprep.mubr.f32.mxu0 0.0
        %5919 = vmatmul.mubr.f32.gmra.mrb[0].mxu0 %v5749
        %v5920 = vpop.f32.mrb[0].mxu0
        %v5921 = vadd.f32 0.0, %v5920
        %v5922 = vpop.f32.mrb[0].mxu0
        %5923 = vmatprep.mubr.f32.mxu0 0.0
        %5924 = vmatmul.mubr.f32.gmra.mrb[0].mxu0 %v5752
        %v5925 = vpop.f32.mrb[0].mxu0
        %v5926 = vadd.f32 0.0, %v5925
        %v5927 = vpop.f32.mrb[0].mxu0
        %5928 = vmatprep.mubr.f32.mxu0 0.0
        %5929 = vmatmul.mubr.f32.gmra.mrb[0].mxu0 %v5755
        %v5930 = vpop.f32.mrb[0].mxu0
        %v5931 = vadd.f32 0.0, %v5930
        %v5932 = vpop.f32.mrb[0].mxu0
        %5933 = vmatprep.mubr.f32.mxu0 0.0
        %5934 = vmatmul.mubr.f32.gmra.mrb[0].mxu0 %v5758
        %v5935 = vpop.f32.mrb[0].mxu0
        %v5936 = vadd.f32 0.0, %v5935
        %v5937 = vpop.f32.mrb[0].mxu0
        %5938 = vmatprep.mubr.f32.mxu0 0.0
        %5939 = vmatmul.mubr.f32.gmra.mrb[0].mxu0 %v5761
        %v5940 = vpop.f32.mrb[0].mxu0
        %v5941 = vadd.f32 0.0, %v5940
        %v5942 = vpop.f32.mrb[0].mxu0
        %5943 = vmatprep.mubr.f32.mxu0 0.0
        %5944 = vmatmul.mubr.f32.gmra.mrb[0].mxu0 %v5764
        %v5945 = vpop.f32.mrb[0].mxu0
        %v5946 = vadd.f32 0.0, %v5945
        %v5947 = vpop.f32.mrb[0].mxu0
        %5948 = vmatprep.mubr.f32.mxu0 0.0
        %5949 = vmatmul.mubr.f32.gmra.mrb[0].mxu0 %v5767
        %v5950 = vpop.f32.mrb[0].mxu0
        %v5951 = vadd.f32 0.0, %v5950
        %v5952 = vpop.f32.mrb[0].mxu0
        %5953 = vmatprep.mubr.f32.mxu0 0.0
        %5954 = vmatmul.mubr.f32.gmra.mrb[0].mxu0 %v5770
        %v5955 = vpop.f32.mrb[0].mxu0
        %v5956 = vadd.f32 0.0, %v5955
        %v5957 = vpop.f32.mrb[0].mxu0
        %5958 = vmatprep.mubr.f32.mxu0 0.0
        %5959 = vmatmul.mubr.f32.gmra.mrb[0].mxu0 %v5773
        %v5960 = vpop.f32.mrb[0].mxu0
        %v5961 = vadd.f32 0.0, %v5960
        %v5962 = vpop.f32.mrb[0].mxu0
        %5963 = vmatprep.mubr.f32.mxu0 0.0
        %5964 = vmatmul.mubr.f32.gmra.mrb[0].mxu0 %v5776
        %v5965 = vpop.f32.mrb[0].mxu0
        %v5966 = vadd.f32 0.0, %v5965
        %v5967 = vpop.f32.mrb[0].mxu0
        %5968 = vmatprep.mubr.f32.mxu0 0.0
        %5969 = vmatmul.mubr.f32.gmra.mrb[0].mxu0 %v5779
        %v5970 = vpop.f32.mrb[0].mxu0
        %v5971 = vadd.f32 0.0, %v5970
        %v5972 = vpop.f32.mrb[0].mxu0
        %5973 = vmatprep.mubr.f32.mxu0 0.0
        %5974 = vmatmul.mubr.f32.gmra.mrb[0].mxu0 %v5782
        %v5975 = vpop.f32.mrb[0].mxu0
        %v5976 = vadd.f32 0.0, %v5975
        %v5977 = vpop.f32.mrb[0].mxu0
        %5978 = vmatprep.mubr.f32.mxu0 0.0
        %5979 = vmatmul.mubr.f32.gmra.mrb[0].mxu0 %v5785
        %v5980 = vpop.f32.mrb[0].mxu0
        %v5981 = vadd.f32 0.0, %v5980
        %v5982 = vpop.f32.mrb[0].mxu0
        %5983 = vmatprep.mubr.f32.mxu0 0.0
        %5984 = vmatmul.mubr.f32.gmra.mrb[0].mxu0 %v5788
        %v5985 = vpop.f32.mrb[0].mxu0
        %v5986 = vadd.f32 0.0, %v5985
        %v5987 = vpop.f32.mrb[0].mxu0
        %5988 = vmatprep.mubr.f32.mxu0 0.0
        %5989 = vmatmul.mubr.f32.gmra.mrb[0].mxu0 %v5791
        %v5990 = vpop.f32.mrb[0].mxu0
        %v5991 = vadd.f32 0.0, %v5990
        %v5992 = vpop.f32.mrb[0].mxu0
        %5993 = vmatprep.mubr.f32.mxu0 0.0
        %5994 = vmatmul.mubr.f32.gmra.mrb[0].mxu0 %v5794
        %v5995 = vpop.f32.mrb[0].mxu0
        %v5996 = vadd.f32 0.0, %v5995
        %v5997 = vpop.f32.mrb[0].mxu0
        %5998 = vmatprep.mubr.f32.mxu0 0.0
        %5999 = vmatmul.mubr.f32.gmra.mrb[0].mxu0 %v5797
        %v6000 = vpop.f32.mrb[0].mxu0
        %v6001 = vadd.f32 0.0, %v6000
        %v6002 = vpop.f32.mrb[0].mxu0
        %6003 = vmatprep.mubr.f32.mxu0 0.0
        %6004 = vmatmul.mubr.f32.gmra.mrb[0].mxu0 %v5800
        %v6005 = vpop.f32.mrb[0].mxu0
        %v6006 = vadd.f32 0.0, %v6005
        %v6007 = vpop.f32.mrb[0].mxu0
        %6008 = vmatprep.mubr.f32.mxu0 0.0
        %6009 = vmatmul.mubr.f32.gmra.mrb[0].mxu0 %v5803
        %v6010 = vpop.f32.mrb[0].mxu0
        %v6011 = vadd.f32 0.0, %v6010
        %v6012 = vpop.f32.mrb[0].mxu0
        %6013 = vmatprep.mubr.f32.mxu0 0.0
        %6014 = vmatmul.mubr.f32.gmra.mrb[0].mxu0 %v5806
        %v6015 = vpop.f32.mrb[0].mxu0
        %v6016 = vadd.f32 0.0, %v6015
        %v6017 = vpop.f32.mrb[0].mxu0
        %6018 = vmatprep.mubr.f32.mxu0 0.0
        %6019 = vmatmul.mubr.f32.gmra.mrb[0].mxu0 %v5809
        %v6020 = vpop.f32.mrb[0].mxu0
        %v6021 = vadd.f32 0.0, %v6020
        %v6022 = vpop.f32.mrb[0].mxu0
        %6023 = vmatprep.mubr.f32.mxu0 0.0
        %6024 = vmatmul.mubr.f32.gmra.mrb[0].mxu0 %v5812
        %v6025 = vpop.f32.mrb[0].mxu0
        %v6026 = vadd.f32 0.0, %v6025
        %v6027 = vpop.f32.mrb[0].mxu0
        %6028 = vmatprep.mubr.f32.mxu0 0.0
        %6029 = vmatmul.mubr.f32.gmra.mrb[0].mxu0 %v5815
        %v6030 = vpop.f32.mrb[0].mxu0
        %v6031 = vadd.f32 0.0, %v6030
        %v6032 = vpop.f32.mrb[0].mxu0
        %6033 = vmatprep.mubr.f32.mxu0 0.0
        %6034 = vmatmul.mubr.f32.gmra.mrb[0].mxu0 %v5818
        %v6035 = vpop.f32.mrb[0].mxu0
        %v6036 = vadd.f32 0.0, %v6035
        %v6037 = vpop.f32.mrb[0].mxu0
        %6038 = vmatprep.mubr.f32.mxu0 0.0
        %6039 = vmatmul.mubr.f32.gmra.mrb[0].mxu0 %v5821
        %v6040 = vpop.f32.mrb[0].mxu0
        %v6041 = vadd.f32 0.0, %v6040
        %v6042 = vpop.f32.mrb[0].mxu0
        %6043 = vmatprep.mubr.f32.mxu0 0.0
        %6044 = vmatmul.mubr.f32.gmra.mrb[0].mxu0 %v5824
        %v6045 = vpop.f32.mrb[0].mxu0
        %v6046 = vadd.f32 0.0, %v6045
        %v6047 = vpop.f32.mrb[0].mxu0
        %6048 = vmatprep.mubr.f32.mxu0 0.0
        %6049 = vmatmul.mubr.f32.gmra.mrb[0].mxu0 %v5827
        %v6050 = vpop.f32.mrb[0].mxu0
        %v6051 = vadd.f32 0.0, %v6050
        %v6052 = vpop.f32.mrb[0].mxu0
        %6053 = vdwg.mxu0
        %v6054 = vadd.f32 %v4132, %v5896
        %v6055 = vadd.f32 %v4137, %v5901
        %v6056 = vadd.f32 %v4142, %v5906
        %v6057 = vadd.f32 %v4147, %v5911
        %v6058 = vadd.f32 %v4152, %v5916
        %v6059 = vadd.f32 %v4157, %v5921
        %v6060 = vadd.f32 %v4162, %v5926
        %v6061 = vadd.f32 %v4167, %v5931
        %v6062 = vadd.f32 %v4172, %v5936
        %v6063 = vadd.f32 %v4177, %v5941
        %v6064 = vadd.f32 %v4182, %v5946
        %v6065 = vadd.f32 %v4187, %v5951
        %v6066 = vadd.f32 %v4192, %v5956
        %v6067 = vadd.f32 %v4197, %v5961
        %v6068 = vadd.f32 %v4202, %v5966
        %v6069 = vadd.f32 %v4207, %v5971
        %v6070 = vadd.f32 %v4212, %v5976
        %v6071 = vadd.f32 %v4217, %v5981
        %v6072 = vadd.f32 %v4222, %v5986
        %v6073 = vadd.f32 %v4227, %v5991
        %v6074 = vadd.f32 %v4232, %v5996
        %v6075 = vadd.f32 %v4237, %v6001
        %v6076 = vadd.f32 %v4242, %v6006
        %v6077 = vadd.f32 %v4247, %v6011
        %v6078 = vadd.f32 %v4252, %v6016
        %v6079 = vadd.f32 %v4257, %v6021
        %v6080 = vadd.f32 %v4262, %v6026
        %v6081 = vadd.f32 %v4267, %v6031
        %v6082 = vadd.f32 %v4272, %v6036
        %v6083 = vadd.f32 %v4277, %v6041
        %v6084 = vadd.f32 %v4282, %v6046
        %v6085 = vadd.f32 %v4287, %v6051
        %6086 = vrot.lane.b32.xlu0 %v571, 104
        %v6087 = vpop.permute.xlu0 %6086
        %6088 = vrot.lane.b32.xlu0 %v576, 104
        %v6089 = vpop.permute.xlu0 %6088
        %6090 = vrot.lane.b32.xlu0 %v581, 104
        %v6091 = vpop.permute.xlu0 %6090
        %6092 = vrot.lane.b32.xlu0 %v586, 104
        %v6093 = vpop.permute.xlu0 %6092
        %6094 = vrot.lane.b32.xlu0 %v591, 104
        %v6095 = vpop.permute.xlu0 %6094
        %6096 = vrot.lane.b32.xlu0 %v596, 104
        %v6097 = vpop.permute.xlu0 %6096
        %6098 = vrot.lane.b32.xlu0 %v601, 104
        %v6099 = vpop.permute.xlu0 %6098
        %6100 = vrot.lane.b32.xlu0 %v606, 104
        %v6101 = vpop.permute.xlu0 %6100
        %6102 = vrot.lane.b32.xlu0 %v611, 104
        %v6103 = vpop.permute.xlu0 %6102
        %6104 = vrot.lane.b32.xlu0 %v616, 104
        %v6105 = vpop.permute.xlu0 %6104
        %6106 = vrot.lane.b32.xlu0 %v621, 104
        %v6107 = vpop.permute.xlu0 %6106
        %6108 = vrot.lane.b32.xlu0 %v626, 104
        %v6109 = vpop.permute.xlu0 %6108
        %6110 = vrot.lane.b32.xlu0 %v631, 104
        %v6111 = vpop.permute.xlu0 %6110
        %6112 = vrot.lane.b32.xlu0 %v636, 104
        %v6113 = vpop.permute.xlu0 %6112
        %6114 = vrot.lane.b32.xlu0 %v641, 104
        %v6115 = vpop.permute.xlu0 %6114
        %6116 = vrot.lane.b32.xlu0 %v646, 104
        %v6117 = vpop.permute.xlu0 %6116
        %6118 = vrot.lane.b32.xlu0 %v651, 104
        %v6119 = vpop.permute.xlu0 %6118
        %6120 = vrot.lane.b32.xlu0 %v656, 104
        %v6121 = vpop.permute.xlu0 %6120
        %6122 = vrot.lane.b32.xlu0 %v661, 104
        %v6123 = vpop.permute.xlu0 %6122
        %6124 = vrot.lane.b32.xlu0 %v666, 104
        %v6125 = vpop.permute.xlu0 %6124
        %6126 = vrot.lane.b32.xlu0 %v671, 104
        %v6127 = vpop.permute.xlu0 %6126
        %6128 = vrot.lane.b32.xlu0 %v676, 104
        %v6129 = vpop.permute.xlu0 %6128
        %6130 = vrot.lane.b32.xlu0 %v681, 104
        %v6131 = vpop.permute.xlu0 %6130
        %6132 = vrot.lane.b32.xlu0 %v686, 104
        %v6133 = vpop.permute.xlu0 %6132
        %6134 = vrot.lane.b32.xlu0 %v691, 104
        %v6135 = vpop.permute.xlu0 %6134
        %6136 = vrot.lane.b32.xlu0 %v696, 104
        %v6137 = vpop.permute.xlu0 %6136
        %6138 = vrot.lane.b32.xlu0 %v701, 104
        %v6139 = vpop.permute.xlu0 %6138
        %6140 = vrot.lane.b32.xlu0 %v706, 104
        %v6141 = vpop.permute.xlu0 %6140
        %6142 = vrot.lane.b32.xlu0 %v711, 104
        %v6143 = vpop.permute.xlu0 %6142
        %6144 = vrot.lane.b32.xlu0 %v716, 104
        %v6145 = vpop.permute.xlu0 %6144
        %6146 = vrot.lane.b32.xlu0 %v721, 104
        %v6147 = vpop.permute.xlu0 %6146
        %6148 = vrot.lane.b32.xlu0 %v726, 104
        %v6149 = vpop.permute.xlu0 %6148
        %6150 = vrot.lane.b32.xlu0 %v571, 72
        %v6151 = vpop.permute.xlu0 %6150
        %6152 = vrot.lane.b32.xlu0 %v576, 72
        %v6153 = vpop.permute.xlu0 %6152
        %6154 = vrot.lane.b32.xlu0 %v581, 72
        %v6155 = vpop.permute.xlu0 %6154
        %6156 = vrot.lane.b32.xlu0 %v586, 72
        %v6157 = vpop.permute.xlu0 %6156
        %6158 = vrot.lane.b32.xlu0 %v591, 72
        %v6159 = vpop.permute.xlu0 %6158
        %6160 = vrot.lane.b32.xlu0 %v596, 72
        %v6161 = vpop.permute.xlu0 %6160
        %6162 = vrot.lane.b32.xlu0 %v601, 72
        %v6163 = vpop.permute.xlu0 %6162
        %6164 = vrot.lane.b32.xlu0 %v606, 72
        %v6165 = vpop.permute.xlu0 %6164
        %6166 = vrot.lane.b32.xlu0 %v611, 72
        %v6167 = vpop.permute.xlu0 %6166
        %6168 = vrot.lane.b32.xlu0 %v616, 72
        %v6169 = vpop.permute.xlu0 %6168
        %6170 = vrot.lane.b32.xlu0 %v621, 72
        %v6171 = vpop.permute.xlu0 %6170
        %6172 = vrot.lane.b32.xlu0 %v626, 72
        %v6173 = vpop.permute.xlu0 %6172
        %6174 = vrot.lane.b32.xlu0 %v631, 72
        %v6175 = vpop.permute.xlu0 %6174
        %6176 = vrot.lane.b32.xlu0 %v636, 72
        %v6177 = vpop.permute.xlu0 %6176
        %6178 = vrot.lane.b32.xlu0 %v641, 72
        %v6179 = vpop.permute.xlu0 %6178
        %6180 = vrot.lane.b32.xlu0 %v646, 72
        %v6181 = vpop.permute.xlu0 %6180
        %6182 = vrot.lane.b32.xlu0 %v651, 72
        %v6183 = vpop.permute.xlu0 %6182
        %6184 = vrot.lane.b32.xlu0 %v656, 72
        %v6185 = vpop.permute.xlu0 %6184
        %6186 = vrot.lane.b32.xlu0 %v661, 72
        %v6187 = vpop.permute.xlu0 %6186
        %6188 = vrot.lane.b32.xlu0 %v666, 72
        %v6189 = vpop.permute.xlu0 %6188
        %6190 = vrot.lane.b32.xlu0 %v671, 72
        %v6191 = vpop.permute.xlu0 %6190
        %6192 = vrot.lane.b32.xlu0 %v676, 72
        %v6193 = vpop.permute.xlu0 %6192
        %6194 = vrot.lane.b32.xlu0 %v681, 72
        %v6195 = vpop.permute.xlu0 %6194
        %6196 = vrot.lane.b32.xlu0 %v686, 72
        %v6197 = vpop.permute.xlu0 %6196
        %6198 = vrot.lane.b32.xlu0 %v691, 72
        %v6199 = vpop.permute.xlu0 %6198
        %6200 = vrot.lane.b32.xlu0 %v696, 72
        %v6201 = vpop.permute.xlu0 %6200
        %6202 = vrot.lane.b32.xlu0 %v701, 72
        %v6203 = vpop.permute.xlu0 %6202
        %6204 = vrot.lane.b32.xlu0 %v706, 72
        %v6205 = vpop.permute.xlu0 %6204
        %6206 = vrot.lane.b32.xlu0 %v711, 72
        %v6207 = vpop.permute.xlu0 %6206
        %6208 = vrot.lane.b32.xlu0 %v716, 72
        %v6209 = vpop.permute.xlu0 %6208
        %6210 = vrot.lane.b32.xlu0 %v721, 72
        %v6211 = vpop.permute.xlu0 %6210
        %6212 = vrot.lane.b32.xlu0 %v726, 72
        %v6213 = vpop.permute.xlu0 %6212
        %v6214 = vsel %vm889, %v6087, 0
        %v6216 = vsel %vm889, %v6089, 0
        %v6218 = vsel %vm889, %v6091, 0
        %v6220 = vsel %vm889, %v6093, 0
        %v6222 = vsel %vm889, %v6095, 0
        %v6224 = vsel %vm889, %v6097, 0
        %v6226 = vsel %vm889, %v6099, 0
        %v6228 = vsel %vm889, %v6101, 0
        %v6230 = vsel %vm889, %v6103, 0
        %v6232 = vsel %vm889, %v6105, 0
        %v6234 = vsel %vm889, %v6107, 0
        %v6236 = vsel %vm889, %v6109, 0
        %v6238 = vsel %vm889, %v6111, 0
        %v6240 = vsel %vm889, %v6113, 0
        %v6242 = vsel %vm889, %v6115, 0
        %v6244 = vsel %vm889, %v6117, 0
        %v6246 = vsel %vm889, %v6119, 0
        %v6248 = vsel %vm889, %v6121, 0
        %v6250 = vsel %vm889, %v6123, 0
        %v6252 = vsel %vm889, %v6125, 0
        %v6254 = vsel %vm889, %v6127, 0
        %v6256 = vsel %vm889, %v6129, 0
        %v6258 = vsel %vm889, %v6131, 0
        %v6260 = vsel %vm889, %v6133, 0
        %v6262 = vsel %vm889, %v6135, 0
        %v6264 = vsel %vm889, %v6137, 0
        %v6266 = vsel %vm889, %v6139, 0
        %v6268 = vsel %vm889, %v6141, 0
        %v6270 = vsel %vm889, %v6143, 0
        %v6272 = vsel %vm889, %v6145, 0
        %v6274 = vsel %vm889, %v6147, 0
        %v6276 = vsel %vm889, %v6149, 0
        %v6278 = vsel %vm889, %v6151, 0
        %v6280 = vsel %vm889, %v6153, 0
        %v6282 = vsel %vm889, %v6155, 0
        %v6284 = vsel %vm889, %v6157, 0
        %v6286 = vsel %vm889, %v6159, 0
        %v6288 = vsel %vm889, %v6161, 0
        %v6290 = vsel %vm889, %v6163, 0
        %v6292 = vsel %vm889, %v6165, 0
        %v6294 = vsel %vm889, %v6167, 0
        %v6296 = vsel %vm889, %v6169, 0
        %v6298 = vsel %vm889, %v6171, 0
        %v6300 = vsel %vm889, %v6173, 0
        %v6302 = vsel %vm889, %v6175, 0
        %v6304 = vsel %vm889, %v6177, 0
        %v6306 = vsel %vm889, %v6179, 0
        %v6308 = vsel %vm889, %v6181, 0
        %v6310 = vsel %vm889, %v6183, 0
        %v6312 = vsel %vm889, %v6185, 0
        %v6314 = vsel %vm889, %v6187, 0
        %v6316 = vsel %vm889, %v6189, 0
        %v6318 = vsel %vm889, %v6191, 0
        %v6320 = vsel %vm889, %v6193, 0
        %v6322 = vsel %vm889, %v6195, 0
        %v6324 = vsel %vm889, %v6197, 0
        %v6326 = vsel %vm889, %v6199, 0
        %v6328 = vsel %vm889, %v6201, 0
        %v6330 = vsel %vm889, %v6203, 0
        %v6332 = vsel %vm889, %v6205, 0
        %v6334 = vsel %vm889, %v6207, 0
        %v6336 = vsel %vm889, %v6209, 0
        %v6338 = vsel %vm889, %v6211, 0
        %v6340 = vsel %vm889, %v6213, 0
        %6342 = vmatprep.subr.mxu0 0.0
        %6343 = vmatpush1.xpose.msra.mxu0 %v6278
        %6344 = vmatprep.subr.mxu0 0.0
        %6345 = vmatpush1.xpose.msra.mxu0 %v6280
        %6346 = vmatprep.subr.mxu0 0.0
        %6347 = vmatpush1.xpose.msra.mxu0 %v6282
        %6348 = vmatprep.subr.mxu0 0.0
        %6349 = vmatpush1.xpose.msra.mxu0 %v6284
        %6350 = vmatprep.subr.mxu0 0.0
        %6351 = vmatpush1.xpose.msra.mxu0 %v6286
        %6352 = vmatprep.subr.mxu0 0.0
        %6353 = vmatpush1.xpose.msra.mxu0 %v6288
        %6354 = vmatprep.subr.mxu0 0.0
        %6355 = vmatpush1.xpose.msra.mxu0 %v6290
        %6356 = vmatprep.subr.mxu0 0.0
        %6357 = vmatpush1.xpose.msra.mxu0 %v6292
        %6358 = vmatprep.subr.mxu0 0.0
        %6359 = vmatpush1.xpose.msra.mxu0 %v6294
        %6360 = vmatprep.subr.mxu0 0.0
        %6361 = vmatpush1.xpose.msra.mxu0 %v6296
        %6362 = vmatprep.subr.mxu0 0.0
        %6363 = vmatpush1.xpose.msra.mxu0 %v6298
        %6364 = vmatprep.subr.mxu0 0.0
        %6365 = vmatpush1.xpose.msra.mxu0 %v6300
        %6366 = vmatprep.subr.mxu0 0.0
        %6367 = vmatpush1.xpose.msra.mxu0 %v6302
        %6368 = vmatprep.subr.mxu0 0.0
        %6369 = vmatpush1.xpose.msra.mxu0 %v6304
        %6370 = vmatprep.subr.mxu0 0.0
        %6371 = vmatpush1.xpose.msra.mxu0 %v6306
        %6372 = vmatprep.subr.mxu0 0.0
        %6373 = vmatpush1.xpose.msra.mxu0 %v6308
        %6374 = vmatprep.subr.mxu0 0.0
        %6375 = vmatpush1.xpose.msra.mxu0 %v6310
        %6376 = vmatprep.subr.mxu0 0.0
        %6377 = vmatpush1.xpose.msra.mxu0 %v6312
        %6378 = vmatprep.subr.mxu0 0.0
        %6379 = vmatpush1.xpose.msra.mxu0 %v6314
        %6380 = vmatprep.subr.mxu0 0.0
        %6381 = vmatpush1.xpose.msra.mxu0 %v6316
        %6382 = vmatprep.subr.mxu0 0.0
        %6383 = vmatpush1.xpose.msra.mxu0 %v6318
        %6384 = vmatprep.subr.mxu0 0.0
        %6385 = vmatpush1.xpose.msra.mxu0 %v6320
        %6386 = vmatprep.subr.mxu0 0.0
        %6387 = vmatpush1.xpose.msra.mxu0 %v6322
        %6388 = vmatprep.subr.mxu0 0.0
        %6389 = vmatpush1.xpose.msra.mxu0 %v6324
        %6390 = vmatprep.subr.mxu0 0.0
        %6391 = vmatpush1.xpose.msra.mxu0 %v6326
        %6392 = vmatprep.subr.mxu0 0.0
        %6393 = vmatpush1.xpose.msra.mxu0 %v6328
        %6394 = vmatprep.subr.mxu0 0.0
        %6395 = vmatpush1.xpose.msra.mxu0 %v6330
        %6396 = vmatprep.subr.mxu0 0.0
        %6397 = vmatpush1.xpose.msra.mxu0 %v6332
        %6398 = vmatprep.subr.mxu0 0.0
        %6399 = vmatpush1.xpose.msra.mxu0 %v6334
        %6400 = vmatprep.subr.mxu0 0.0
        %6401 = vmatpush1.xpose.msra.mxu0 %v6336
        %6402 = vmatprep.subr.mxu0 0.0
        %6403 = vmatpush1.xpose.msra.mxu0 %v6338
        %6404 = vmatprep.subr.mxu0 0.0
        %6405 = vmatpush1.xpose.msra.mxu0 %v6340
        %6406 = vmatprep.mubr.f32.mxu0 0.0
        %6407 = vmatmul.mubr.f32.gmra.mrb[0].mxu0 %v6214
        %v6408 = vpop.f32.mrb[0].mxu0
        %v6409 = vadd.f32 0.0, %v6408
        %v6410 = vpop.f32.mrb[0].mxu0
        %v6411 = vadd.f32 0.0, %v6410
        %6412 = vmatprep.mubr.f32.mxu0 0.0
        %6413 = vmatmul.mubr.f32.gmra.mrb[0].mxu0 %v6216
        %v6414 = vpop.f32.mrb[0].mxu0
        %v6415 = vadd.f32 0.0, %v6414
        %v6416 = vpop.f32.mrb[0].mxu0
        %v6417 = vadd.f32 0.0, %v6416
        %6418 = vmatprep.mubr.f32.mxu0 0.0
        %6419 = vmatmul.mubr.f32.gmra.mrb[0].mxu0 %v6218
        %v6420 = vpop.f32.mrb[0].mxu0
        %v6421 = vadd.f32 0.0, %v6420
        %v6422 = vpop.f32.mrb[0].mxu0
        %v6423 = vadd.f32 0.0, %v6422
        %6424 = vmatprep.mubr.f32.mxu0 0.0
        %6425 = vmatmul.mubr.f32.gmra.mrb[0].mxu0 %v6220
        %v6426 = vpop.f32.mrb[0].mxu0
        %v6427 = vadd.f32 0.0, %v6426
        %v6428 = vpop.f32.mrb[0].mxu0
        %v6429 = vadd.f32 0.0, %v6428
        %6430 = vmatprep.mubr.f32.mxu0 0.0
        %6431 = vmatmul.mubr.f32.gmra.mrb[0].mxu0 %v6222
        %v6432 = vpop.f32.mrb[0].mxu0
        %v6433 = vadd.f32 0.0, %v6432
        %v6434 = vpop.f32.mrb[0].mxu0
        %v6435 = vadd.f32 0.0, %v6434
        %6436 = vmatprep.mubr.f32.mxu0 0.0
        %6437 = vmatmul.mubr.f32.gmra.mrb[0].mxu0 %v6224
        %v6438 = vpop.f32.mrb[0].mxu0
        %v6439 = vadd.f32 0.0, %v6438
        %v6440 = vpop.f32.mrb[0].mxu0
        %v6441 = vadd.f32 0.0, %v6440
        %6442 = vmatprep.mubr.f32.mxu0 0.0
        %6443 = vmatmul.mubr.f32.gmra.mrb[0].mxu0 %v6226
        %v6444 = vpop.f32.mrb[0].mxu0
        %v6445 = vadd.f32 0.0, %v6444
        %v6446 = vpop.f32.mrb[0].mxu0
        %v6447 = vadd.f32 0.0, %v6446
        %6448 = vmatprep.mubr.f32.mxu0 0.0
        %6449 = vmatmul.mubr.f32.gmra.mrb[0].mxu0 %v6228
        %v6450 = vpop.f32.mrb[0].mxu0
        %v6451 = vadd.f32 0.0, %v6450
        %v6452 = vpop.f32.mrb[0].mxu0
        %v6453 = vadd.f32 0.0, %v6452
        %6454 = vmatprep.mubr.f32.mxu0 0.0
        %6455 = vmatmul.mubr.f32.gmra.mrb[0].mxu0 %v6230
        %v6456 = vpop.f32.mrb[0].mxu0
        %v6457 = vadd.f32 0.0, %v6456
        %v6458 = vpop.f32.mrb[0].mxu0
        %v6459 = vadd.f32 0.0, %v6458
        %6460 = vmatprep.mubr.f32.mxu0 0.0
        %6461 = vmatmul.mubr.f32.gmra.mrb[0].mxu0 %v6232
        %v6462 = vpop.f32.mrb[0].mxu0
        %v6463 = vadd.f32 0.0, %v6462
        %v6464 = vpop.f32.mrb[0].mxu0
        %v6465 = vadd.f32 0.0, %v6464
        %6466 = vmatprep.mubr.f32.mxu0 0.0
        %6467 = vmatmul.mubr.f32.gmra.mrb[0].mxu0 %v6234
        %v6468 = vpop.f32.mrb[0].mxu0
        %v6469 = vadd.f32 0.0, %v6468
        %v6470 = vpop.f32.mrb[0].mxu0
        %v6471 = vadd.f32 0.0, %v6470
        %6472 = vmatprep.mubr.f32.mxu0 0.0
        %6473 = vmatmul.mubr.f32.gmra.mrb[0].mxu0 %v6236
        %v6474 = vpop.f32.mrb[0].mxu0
        %v6475 = vadd.f32 0.0, %v6474
        %v6476 = vpop.f32.mrb[0].mxu0
        %v6477 = vadd.f32 0.0, %v6476
        %6478 = vmatprep.mubr.f32.mxu0 0.0
        %6479 = vmatmul.mubr.f32.gmra.mrb[0].mxu0 %v6238
        %v6480 = vpop.f32.mrb[0].mxu0
        %v6481 = vadd.f32 0.0, %v6480
        %v6482 = vpop.f32.mrb[0].mxu0
        %v6483 = vadd.f32 0.0, %v6482
        %6484 = vmatprep.mubr.f32.mxu0 0.0
        %6485 = vmatmul.mubr.f32.gmra.mrb[0].mxu0 %v6240
        %v6486 = vpop.f32.mrb[0].mxu0
        %v6487 = vadd.f32 0.0, %v6486
        %v6488 = vpop.f32.mrb[0].mxu0
        %v6489 = vadd.f32 0.0, %v6488
        %6490 = vmatprep.mubr.f32.mxu0 0.0
        %6491 = vmatmul.mubr.f32.gmra.mrb[0].mxu0 %v6242
        %v6492 = vpop.f32.mrb[0].mxu0
        %v6493 = vadd.f32 0.0, %v6492
        %v6494 = vpop.f32.mrb[0].mxu0
        %v6495 = vadd.f32 0.0, %v6494
        %6496 = vmatprep.mubr.f32.mxu0 0.0
        %6497 = vmatmul.mubr.f32.gmra.mrb[0].mxu0 %v6244
        %v6498 = vpop.f32.mrb[0].mxu0
        %v6499 = vadd.f32 0.0, %v6498
        %v6500 = vpop.f32.mrb[0].mxu0
        %v6501 = vadd.f32 0.0, %v6500
        %6502 = vmatprep.mubr.f32.mxu0 0.0
        %6503 = vmatmul.mubr.f32.gmra.mrb[0].mxu0 %v6246
        %v6504 = vpop.f32.mrb[0].mxu0
        %v6505 = vadd.f32 0.0, %v6504
        %v6506 = vpop.f32.mrb[0].mxu0
        %v6507 = vadd.f32 0.0, %v6506
        %6508 = vmatprep.mubr.f32.mxu0 0.0
        %6509 = vmatmul.mubr.f32.gmra.mrb[0].mxu0 %v6248
        %v6510 = vpop.f32.mrb[0].mxu0
        %v6511 = vadd.f32 0.0, %v6510
        %v6512 = vpop.f32.mrb[0].mxu0
        %v6513 = vadd.f32 0.0, %v6512
        %6514 = vmatprep.mubr.f32.mxu0 0.0
        %6515 = vmatmul.mubr.f32.gmra.mrb[0].mxu0 %v6250
        %v6516 = vpop.f32.mrb[0].mxu0
        %v6517 = vadd.f32 0.0, %v6516
        %v6518 = vpop.f32.mrb[0].mxu0
        %v6519 = vadd.f32 0.0, %v6518
        %6520 = vmatprep.mubr.f32.mxu0 0.0
        %6521 = vmatmul.mubr.f32.gmra.mrb[0].mxu0 %v6252
        %v6522 = vpop.f32.mrb[0].mxu0
        %v6523 = vadd.f32 0.0, %v6522
        %v6524 = vpop.f32.mrb[0].mxu0
        %v6525 = vadd.f32 0.0, %v6524
        %6526 = vmatprep.mubr.f32.mxu0 0.0
        %6527 = vmatmul.mubr.f32.gmra.mrb[0].mxu0 %v6254
        %v6528 = vpop.f32.mrb[0].mxu0
        %v6529 = vadd.f32 0.0, %v6528
        %v6530 = vpop.f32.mrb[0].mxu0
        %v6531 = vadd.f32 0.0, %v6530
        %6532 = vmatprep.mubr.f32.mxu0 0.0
        %6533 = vmatmul.mubr.f32.gmra.mrb[0].mxu0 %v6256
        %v6534 = vpop.f32.mrb[0].mxu0
        %v6535 = vadd.f32 0.0, %v6534
        %v6536 = vpop.f32.mrb[0].mxu0
        %v6537 = vadd.f32 0.0, %v6536
        %6538 = vmatprep.mubr.f32.mxu0 0.0
        %6539 = vmatmul.mubr.f32.gmra.mrb[0].mxu0 %v6258
        %v6540 = vpop.f32.mrb[0].mxu0
        %v6541 = vadd.f32 0.0, %v6540
        %v6542 = vpop.f32.mrb[0].mxu0
        %v6543 = vadd.f32 0.0, %v6542
        %6544 = vmatprep.mubr.f32.mxu0 0.0
        %6545 = vmatmul.mubr.f32.gmra.mrb[0].mxu0 %v6260
        %v6546 = vpop.f32.mrb[0].mxu0
        %v6547 = vadd.f32 0.0, %v6546
        %v6548 = vpop.f32.mrb[0].mxu0
        %v6549 = vadd.f32 0.0, %v6548
        %6550 = vmatprep.mubr.f32.mxu0 0.0
        %6551 = vmatmul.mubr.f32.gmra.mrb[0].mxu0 %v6262
        %v6552 = vpop.f32.mrb[0].mxu0
        %v6553 = vadd.f32 0.0, %v6552
        %v6554 = vpop.f32.mrb[0].mxu0
        %v6555 = vadd.f32 0.0, %v6554
        %6556 = vmatprep.mubr.f32.mxu0 0.0
        %6557 = vmatmul.mubr.f32.gmra.mrb[0].mxu0 %v6264
        %v6558 = vpop.f32.mrb[0].mxu0
        %v6559 = vadd.f32 0.0, %v6558
        %v6560 = vpop.f32.mrb[0].mxu0
        %v6561 = vadd.f32 0.0, %v6560
        %6562 = vmatprep.mubr.f32.mxu0 0.0
        %6563 = vmatmul.mubr.f32.gmra.mrb[0].mxu0 %v6266
        %v6564 = vpop.f32.mrb[0].mxu0
        %v6565 = vadd.f32 0.0, %v6564
        %v6566 = vpop.f32.mrb[0].mxu0
        %v6567 = vadd.f32 0.0, %v6566
        %6568 = vmatprep.mubr.f32.mxu0 0.0
        %6569 = vmatmul.mubr.f32.gmra.mrb[0].mxu0 %v6268
        %v6570 = vpop.f32.mrb[0].mxu0
        %v6571 = vadd.f32 0.0, %v6570
        %v6572 = vpop.f32.mrb[0].mxu0
        %v6573 = vadd.f32 0.0, %v6572
        %6574 = vmatprep.mubr.f32.mxu0 0.0
        %6575 = vmatmul.mubr.f32.gmra.mrb[0].mxu0 %v6270
        %v6576 = vpop.f32.mrb[0].mxu0
        %v6577 = vadd.f32 0.0, %v6576
        %v6578 = vpop.f32.mrb[0].mxu0
        %v6579 = vadd.f32 0.0, %v6578
        %6580 = vmatprep.mubr.f32.mxu0 0.0
        %6581 = vmatmul.mubr.f32.gmra.mrb[0].mxu0 %v6272
        %v6582 = vpop.f32.mrb[0].mxu0
        %v6583 = vadd.f32 0.0, %v6582
        %v6584 = vpop.f32.mrb[0].mxu0
        %v6585 = vadd.f32 0.0, %v6584
        %6586 = vmatprep.mubr.f32.mxu0 0.0
        %6587 = vmatmul.mubr.f32.gmra.mrb[0].mxu0 %v6274
        %v6588 = vpop.f32.mrb[0].mxu0
        %v6589 = vadd.f32 0.0, %v6588
        %v6590 = vpop.f32.mrb[0].mxu0
        %v6591 = vadd.f32 0.0, %v6590
        %6592 = vmatprep.mubr.f32.mxu0 0.0
        %6593 = vmatmul.mubr.f32.gmra.mrb[0].mxu0 %v6276
        %v6594 = vpop.f32.mrb[0].mxu0
        %v6595 = vadd.f32 0.0, %v6594
        %v6596 = vpop.f32.mrb[0].mxu0
        %v6597 = vadd.f32 0.0, %v6596
        %6598 = vdwg.mxu0
        %v6599 = vmul.f32 %v6409, 0.35355338
        %v6600 = vmul.f32 %v6411, 0.35355338
        %v6601 = vmul.f32 %v6415, 0.35355338
        %v6602 = vmul.f32 %v6417, 0.35355338
        %v6603 = vmul.f32 %v6421, 0.35355338
        %v6604 = vmul.f32 %v6423, 0.35355338
        %v6605 = vmul.f32 %v6427, 0.35355338
        %v6606 = vmul.f32 %v6429, 0.35355338
        %v6607 = vmul.f32 %v6433, 0.35355338
        %v6608 = vmul.f32 %v6435, 0.35355338
        %v6609 = vmul.f32 %v6439, 0.35355338
        %v6610 = vmul.f32 %v6441, 0.35355338
        %v6611 = vmul.f32 %v6445, 0.35355338
        %v6612 = vmul.f32 %v6447, 0.35355338
        %v6613 = vmul.f32 %v6451, 0.35355338
        %v6614 = vmul.f32 %v6453, 0.35355338
        %v6615 = vmul.f32 %v6457, 0.35355338
        %v6616 = vmul.f32 %v6459, 0.35355338
        %v6617 = vmul.f32 %v6463, 0.35355338
        %v6618 = vmul.f32 %v6465, 0.35355338
        %v6619 = vmul.f32 %v6469, 0.35355338
        %v6620 = vmul.f32 %v6471, 0.35355338
        %v6621 = vmul.f32 %v6475, 0.35355338
        %v6622 = vmul.f32 %v6477, 0.35355338
        %v6623 = vmul.f32 %v6481, 0.35355338
        %v6624 = vmul.f32 %v6483, 0.35355338
        %v6625 = vmul.f32 %v6487, 0.35355338
        %v6626 = vmul.f32 %v6489, 0.35355338
        %v6627 = vmul.f32 %v6493, 0.35355338
        %v6628 = vmul.f32 %v6495, 0.35355338
        %v6629 = vmul.f32 %v6499, 0.35355338
        %v6630 = vmul.f32 %v6501, 0.35355338
        %v6631 = vmul.f32 %v6505, 0.35355338
        %v6632 = vmul.f32 %v6507, 0.35355338
        %v6633 = vmul.f32 %v6511, 0.35355338
        %v6634 = vmul.f32 %v6513, 0.35355338
        %v6635 = vmul.f32 %v6517, 0.35355338
        %v6636 = vmul.f32 %v6519, 0.35355338
        %v6637 = vmul.f32 %v6523, 0.35355338
        %v6638 = vmul.f32 %v6525, 0.35355338
        %v6639 = vmul.f32 %v6529, 0.35355338
        %v6640 = vmul.f32 %v6531, 0.35355338
        %v6641 = vmul.f32 %v6535, 0.35355338
        %v6642 = vmul.f32 %v6537, 0.35355338
        %v6643 = vmul.f32 %v6541, 0.35355338
        %v6644 = vmul.f32 %v6543, 0.35355338
        %v6645 = vmul.f32 %v6547, 0.35355338
        %v6646 = vmul.f32 %v6549, 0.35355338
        %v6647 = vmul.f32 %v6553, 0.35355338
        %v6648 = vmul.f32 %v6555, 0.35355338
        %v6649 = vmul.f32 %v6559, 0.35355338
        %v6650 = vmul.f32 %v6561, 0.35355338
        %v6651 = vmul.f32 %v6565, 0.35355338
        %v6652 = vmul.f32 %v6567, 0.35355338
        %v6653 = vmul.f32 %v6571, 0.35355338
        %v6654 = vmul.f32 %v6573, 0.35355338
        %v6655 = vmul.f32 %v6577, 0.35355338
        %v6656 = vmul.f32 %v6579, 0.35355338
        %v6657 = vmul.f32 %v6583, 0.35355338
        %v6658 = vmul.f32 %v6585, 0.35355338
        %v6659 = vmul.f32 %v6589, 0.35355338
        %v6660 = vmul.f32 %v6591, 0.35355338
        %v6661 = vmul.f32 %v6595, 0.35355338
        %v6662 = vmul.f32 %v6597, 0.35355338
        %v6663 = vadd.f32 %v6599, %v729
        %v6664 = vadd.f32 %v6600, %v730
        %v6665 = vadd.f32 %v6601, %v731
        %v6666 = vadd.f32 %v6602, %v732
        %v6667 = vadd.f32 %v6603, %v733
        %v6668 = vadd.f32 %v6604, %v734
        %v6669 = vadd.f32 %v6605, %v735
        %v6670 = vadd.f32 %v6606, %v736
        %v6671 = vadd.f32 %v6607, %v737
        %v6672 = vadd.f32 %v6608, %v738
        %v6673 = vadd.f32 %v6609, %v739
        %v6674 = vadd.f32 %v6610, %v740
        %v6675 = vadd.f32 %v6611, %v741
        %v6676 = vadd.f32 %v6612, %v742
        %v6677 = vadd.f32 %v6613, %v743
        %v6678 = vadd.f32 %v6614, %v744
        %v6679 = vadd.f32 %v6615, %v745
        %v6680 = vadd.f32 %v6616, %v746
        %v6681 = vadd.f32 %v6617, %v747
        %v6682 = vadd.f32 %v6618, %v748
        %v6683 = vadd.f32 %v6619, %v749
        %v6684 = vadd.f32 %v6620, %v750
        %v6685 = vadd.f32 %v6621, %v751
        %v6686 = vadd.f32 %v6622, %v752
        %v6687 = vadd.f32 %v6623, %v753
        %v6688 = vadd.f32 %v6624, %v754
        %v6689 = vadd.f32 %v6625, %v755
        %v6690 = vadd.f32 %v6626, %v756
        %v6691 = vadd.f32 %v6627, %v757
        %v6692 = vadd.f32 %v6628, %v758
        %v6693 = vadd.f32 %v6629, %v759
        %v6694 = vadd.f32 %v6630, %v760
        %v6695 = vadd.f32 %v6631, %v761
        %v6696 = vadd.f32 %v6632, %v762
        %v6697 = vadd.f32 %v6633, %v763
        %v6698 = vadd.f32 %v6634, %v764
        %v6699 = vadd.f32 %v6635, %v765
        %v6700 = vadd.f32 %v6636, %v766
        %v6701 = vadd.f32 %v6637, %v767
        %v6702 = vadd.f32 %v6638, %v768
        %v6703 = vadd.f32 %v6639, %v769
        %v6704 = vadd.f32 %v6640, %v770
        %v6705 = vadd.f32 %v6641, %v771
        %v6706 = vadd.f32 %v6642, %v772
        %v6707 = vadd.f32 %v6643, %v773
        %v6708 = vadd.f32 %v6644, %v774
        %v6709 = vadd.f32 %v6645, %v775
        %v6710 = vadd.f32 %v6646, %v776
        %v6711 = vadd.f32 %v6647, %v777
        %v6712 = vadd.f32 %v6648, %v778
        %v6713 = vadd.f32 %v6649, %v779
        %v6714 = vadd.f32 %v6650, %v780
        %v6715 = vadd.f32 %v6651, %v781
        %v6716 = vadd.f32 %v6652, %v782
        %v6717 = vadd.f32 %v6653, %v783
        %v6718 = vadd.f32 %v6654, %v784
        %v6719 = vadd.f32 %v6655, %v785
        %v6720 = vadd.f32 %v6656, %v786
        %v6721 = vadd.f32 %v6657, %v787
        %v6722 = vadd.f32 %v6658, %v788
        %v6723 = vadd.f32 %v6659, %v789
        %v6724 = vadd.f32 %v6660, %v790
        %v6725 = vadd.f32 %v6661, %v791
        %v6726 = vadd.f32 %v6662, %v792
        %v6727 = vmax.f32 %v6663, %v6664
        %6728 = vmax.xlane.f32.xlu0 %v6727
        %v6729 = vpop.xlane.xlu0 %6728
        %v6730 = vmax.f32 %v6665, %v6666
        %6731 = vmax.xlane.f32.xlu0 %v6730
        %v6732 = vpop.xlane.xlu0 %6731
        %v6733 = vmax.f32 %v6667, %v6668
        %6734 = vmax.xlane.f32.xlu0 %v6733
        %v6735 = vpop.xlane.xlu0 %6734
        %v6736 = vmax.f32 %v6669, %v6670
        %6737 = vmax.xlane.f32.xlu0 %v6736
        %v6738 = vpop.xlane.xlu0 %6737
        %v6739 = vmax.f32 %v6671, %v6672
        %6740 = vmax.xlane.f32.xlu0 %v6739
        %v6741 = vpop.xlane.xlu0 %6740
        %v6742 = vmax.f32 %v6673, %v6674
        %6743 = vmax.xlane.f32.xlu0 %v6742
        %v6744 = vpop.xlane.xlu0 %6743
        %v6745 = vmax.f32 %v6675, %v6676
        %6746 = vmax.xlane.f32.xlu0 %v6745
        %v6747 = vpop.xlane.xlu0 %6746
        %v6748 = vmax.f32 %v6677, %v6678
        %6749 = vmax.xlane.f32.xlu0 %v6748
        %v6750 = vpop.xlane.xlu0 %6749
        %v6751 = vmax.f32 %v6679, %v6680
        %6752 = vmax.xlane.f32.xlu0 %v6751
        %v6753 = vpop.xlane.xlu0 %6752
        %v6754 = vmax.f32 %v6681, %v6682
        %6755 = vmax.xlane.f32.xlu0 %v6754
        %v6756 = vpop.xlane.xlu0 %6755
        %v6757 = vmax.f32 %v6683, %v6684
        %6758 = vmax.xlane.f32.xlu0 %v6757
        %v6759 = vpop.xlane.xlu0 %6758
        %v6760 = vmax.f32 %v6685, %v6686
        %6761 = vmax.xlane.f32.xlu0 %v6760
        %v6762 = vpop.xlane.xlu0 %6761
        %v6763 = vmax.f32 %v6687, %v6688
        %6764 = vmax.xlane.f32.xlu0 %v6763
        %v6765 = vpop.xlane.xlu0 %6764
        %v6766 = vmax.f32 %v6689, %v6690
        %6767 = vmax.xlane.f32.xlu0 %v6766
        %v6768 = vpop.xlane.xlu0 %6767
        %v6769 = vmax.f32 %v6691, %v6692
        %6770 = vmax.xlane.f32.xlu0 %v6769
        %v6771 = vpop.xlane.xlu0 %6770
        %v6772 = vmax.f32 %v6693, %v6694
        %6773 = vmax.xlane.f32.xlu0 %v6772
        %v6774 = vpop.xlane.xlu0 %6773
        %v6775 = vmax.f32 %v6695, %v6696
        %6776 = vmax.xlane.f32.xlu0 %v6775
        %v6777 = vpop.xlane.xlu0 %6776
        %v6778 = vmax.f32 %v6697, %v6698
        %6779 = vmax.xlane.f32.xlu0 %v6778
        %v6780 = vpop.xlane.xlu0 %6779
        %v6781 = vmax.f32 %v6699, %v6700
        %6782 = vmax.xlane.f32.xlu0 %v6781
        %v6783 = vpop.xlane.xlu0 %6782
        %v6784 = vmax.f32 %v6701, %v6702
        %6785 = vmax.xlane.f32.xlu0 %v6784
        %v6786 = vpop.xlane.xlu0 %6785
        %v6787 = vmax.f32 %v6703, %v6704
        %6788 = vmax.xlane.f32.xlu0 %v6787
        %v6789 = vpop.xlane.xlu0 %6788
        %v6790 = vmax.f32 %v6705, %v6706
        %6791 = vmax.xlane.f32.xlu0 %v6790
        %v6792 = vpop.xlane.xlu0 %6791
        %v6793 = vmax.f32 %v6707, %v6708
        %6794 = vmax.xlane.f32.xlu0 %v6793
        %v6795 = vpop.xlane.xlu0 %6794
        %v6796 = vmax.f32 %v6709, %v6710
        %6797 = vmax.xlane.f32.xlu0 %v6796
        %v6798 = vpop.xlane.xlu0 %6797
        %v6799 = vmax.f32 %v6711, %v6712
        %6800 = vmax.xlane.f32.xlu0 %v6799
        %v6801 = vpop.xlane.xlu0 %6800
        %v6802 = vmax.f32 %v6713, %v6714
        %6803 = vmax.xlane.f32.xlu0 %v6802
        %v6804 = vpop.xlane.xlu0 %6803
        %v6805 = vmax.f32 %v6715, %v6716
        %6806 = vmax.xlane.f32.xlu0 %v6805
        %v6807 = vpop.xlane.xlu0 %6806
        %v6808 = vmax.f32 %v6717, %v6718
        %6809 = vmax.xlane.f32.xlu0 %v6808
        %v6810 = vpop.xlane.xlu0 %6809
        %v6811 = vmax.f32 %v6719, %v6720
        %6812 = vmax.xlane.f32.xlu0 %v6811
        %v6813 = vpop.xlane.xlu0 %6812
        %v6814 = vmax.f32 %v6721, %v6722
        %6815 = vmax.xlane.f32.xlu0 %v6814
        %v6816 = vpop.xlane.xlu0 %6815
        %v6817 = vmax.f32 %v6723, %v6724
        %6818 = vmax.xlane.f32.xlu0 %v6817
        %v6819 = vpop.xlane.xlu0 %6818
        %v6820 = vmax.f32 %v6725, %v6726
        %6821 = vmax.xlane.f32.xlu0 %v6820
        %v6822 = vpop.xlane.xlu0 %6821
        %v6823 = vsub.f32 %v6663, %v6729
        %v6824 = vsub.f32 %v6664, %v6729
        %v6825 = vsub.f32 %v6665, %v6732
        %v6826 = vsub.f32 %v6666, %v6732
        %v6827 = vsub.f32 %v6667, %v6735
        %v6828 = vsub.f32 %v6668, %v6735
        %v6829 = vsub.f32 %v6669, %v6738
        %v6830 = vsub.f32 %v6670, %v6738
        %v6831 = vsub.f32 %v6671, %v6741
        %v6832 = vsub.f32 %v6672, %v6741
        %v6833 = vsub.f32 %v6673, %v6744
        %v6834 = vsub.f32 %v6674, %v6744
        %v6835 = vsub.f32 %v6675, %v6747
        %v6836 = vsub.f32 %v6676, %v6747
        %v6837 = vsub.f32 %v6677, %v6750
        %v6838 = vsub.f32 %v6678, %v6750
        %v6839 = vsub.f32 %v6679, %v6753
        %v6840 = vsub.f32 %v6680, %v6753
        %v6841 = vsub.f32 %v6681, %v6756
        %v6842 = vsub.f32 %v6682, %v6756
        %v6843 = vsub.f32 %v6683, %v6759
        %v6844 = vsub.f32 %v6684, %v6759
        %v6845 = vsub.f32 %v6685, %v6762
        %v6846 = vsub.f32 %v6686, %v6762
        %v6847 = vsub.f32 %v6687, %v6765
        %v6848 = vsub.f32 %v6688, %v6765
        %v6849 = vsub.f32 %v6689, %v6768
        %v6850 = vsub.f32 %v6690, %v6768
        %v6851 = vsub.f32 %v6691, %v6771
        %v6852 = vsub.f32 %v6692, %v6771
        %v6853 = vsub.f32 %v6693, %v6774
        %v6854 = vsub.f32 %v6694, %v6774
        %v6855 = vsub.f32 %v6695, %v6777
        %v6856 = vsub.f32 %v6696, %v6777
        %v6857 = vsub.f32 %v6697, %v6780
        %v6858 = vsub.f32 %v6698, %v6780
        %v6859 = vsub.f32 %v6699, %v6783
        %v6860 = vsub.f32 %v6700, %v6783
        %v6861 = vsub.f32 %v6701, %v6786
        %v6862 = vsub.f32 %v6702, %v6786
        %v6863 = vsub.f32 %v6703, %v6789
        %v6864 = vsub.f32 %v6704, %v6789
        %v6865 = vsub.f32 %v6705, %v6792
        %v6866 = vsub.f32 %v6706, %v6792
        %v6867 = vsub.f32 %v6707, %v6795
        %v6868 = vsub.f32 %v6708, %v6795
        %v6869 = vsub.f32 %v6709, %v6798
        %v6870 = vsub.f32 %v6710, %v6798
        %v6871 = vsub.f32 %v6711, %v6801
        %v6872 = vsub.f32 %v6712, %v6801
        %v6873 = vsub.f32 %v6713, %v6804
        %v6874 = vsub.f32 %v6714, %v6804
        %v6875 = vsub.f32 %v6715, %v6807
        %v6876 = vsub.f32 %v6716, %v6807
        %v6877 = vsub.f32 %v6717, %v6810
        %v6878 = vsub.f32 %v6718, %v6810
        %v6879 = vsub.f32 %v6719, %v6813
        %v6880 = vsub.f32 %v6720, %v6813
        %v6881 = vsub.f32 %v6721, %v6816
        %v6882 = vsub.f32 %v6722, %v6816
        %v6883 = vsub.f32 %v6723, %v6819
        %v6884 = vsub.f32 %v6724, %v6819
        %v6885 = vsub.f32 %v6725, %v6822
        %v6886 = vsub.f32 %v6726, %v6822
        %v6887 = vmul.f32 %v6823, 1.442695
        %v6888 = vpow.pop %v6887
        %v6889 = vmul.f32 %v6824, 1.442695
        %v6890 = vpow.pop %v6889
        %v6891 = vmul.f32 %v6825, 1.442695
        %v6892 = vpow.pop %v6891
        %v6893 = vmul.f32 %v6826, 1.442695
        %v6894 = vpow.pop %v6893
        %v6895 = vmul.f32 %v6827, 1.442695
        %v6896 = vpow.pop %v6895
        %v6897 = vmul.f32 %v6828, 1.442695
        %v6898 = vpow.pop %v6897
        %v6899 = vmul.f32 %v6829, 1.442695
        %v6900 = vpow.pop %v6899
        %v6901 = vmul.f32 %v6830, 1.442695
        %v6902 = vpow.pop %v6901
        %v6903 = vmul.f32 %v6831, 1.442695
        %v6904 = vpow.pop %v6903
        %v6905 = vmul.f32 %v6832, 1.442695
        %v6906 = vpow.pop %v6905
        %v6907 = vmul.f32 %v6833, 1.442695
        %v6908 = vpow.pop %v6907
        %v6909 = vmul.f32 %v6834, 1.442695
        %v6910 = vpow.pop %v6909
        %v6911 = vmul.f32 %v6835, 1.442695
        %v6912 = vpow.pop %v6911
        %v6913 = vmul.f32 %v6836, 1.442695
        %v6914 = vpow.pop %v6913
        %v6915 = vmul.f32 %v6837, 1.442695
        %v6916 = vpow.pop %v6915
        %v6917 = vmul.f32 %v6838, 1.442695
        %v6918 = vpow.pop %v6917
        %v6919 = vmul.f32 %v6839, 1.442695
        %v6920 = vpow.pop %v6919
        %v6921 = vmul.f32 %v6840, 1.442695
        %v6922 = vpow.pop %v6921
        %v6923 = vmul.f32 %v6841, 1.442695
        %v6924 = vpow.pop %v6923
        %v6925 = vmul.f32 %v6842, 1.442695
        %v6926 = vpow.pop %v6925
        %v6927 = vmul.f32 %v6843, 1.442695
        %v6928 = vpow.pop %v6927
        %v6929 = vmul.f32 %v6844, 1.442695
        %v6930 = vpow.pop %v6929
        %v6931 = vmul.f32 %v6845, 1.442695
        %v6932 = vpow.pop %v6931
        %v6933 = vmul.f32 %v6846, 1.442695
        %v6934 = vpow.pop %v6933
        %v6935 = vmul.f32 %v6847, 1.442695
        %v6936 = vpow.pop %v6935
        %v6937 = vmul.f32 %v6848, 1.442695
        %v6938 = vpow.pop %v6937
        %v6939 = vmul.f32 %v6849, 1.442695
        %v6940 = vpow.pop %v6939
        %v6941 = vmul.f32 %v6850, 1.442695
        %v6942 = vpow.pop %v6941
        %v6943 = vmul.f32 %v6851, 1.442695
        %v6944 = vpow.pop %v6943
        %v6945 = vmul.f32 %v6852, 1.442695
        %v6946 = vpow.pop %v6945
        %v6947 = vmul.f32 %v6853, 1.442695
        %v6948 = vpow.pop %v6947
        %v6949 = vmul.f32 %v6854, 1.442695
        %v6950 = vpow.pop %v6949
        %v6951 = vmul.f32 %v6855, 1.442695
        %v6952 = vpow.pop %v6951
        %v6953 = vmul.f32 %v6856, 1.442695
        %v6954 = vpow.pop %v6953
        %v6955 = vmul.f32 %v6857, 1.442695
        %v6956 = vpow.pop %v6955
        %v6957 = vmul.f32 %v6858, 1.442695
        %v6958 = vpow.pop %v6957
        %v6959 = vmul.f32 %v6859, 1.442695
        %v6960 = vpow.pop %v6959
        %v6961 = vmul.f32 %v6860, 1.442695
        %v6962 = vpow.pop %v6961
        %v6963 = vmul.f32 %v6861, 1.442695
        %v6964 = vpow.pop %v6963
        %v6965 = vmul.f32 %v6862, 1.442695
        %v6966 = vpow.pop %v6965
        %v6967 = vmul.f32 %v6863, 1.442695
        %v6968 = vpow.pop %v6967
        %v6969 = vmul.f32 %v6864, 1.442695
        %v6970 = vpow.pop %v6969
        %v6971 = vmul.f32 %v6865, 1.442695
        %v6972 = vpow.pop %v6971
        %v6973 = vmul.f32 %v6866, 1.442695
        %v6974 = vpow.pop %v6973
        %v6975 = vmul.f32 %v6867, 1.442695
        %v6976 = vpow.pop %v6975
        %v6977 = vmul.f32 %v6868, 1.442695
        %v6978 = vpow.pop %v6977
        %v6979 = vmul.f32 %v6869, 1.442695
        %v6980 = vpow.pop %v6979
        %v6981 = vmul.f32 %v6870, 1.442695
        %v6982 = vpow.pop %v6981
        %v6983 = vmul.f32 %v6871, 1.442695
        %v6984 = vpow.pop %v6983
        %v6985 = vmul.f32 %v6872, 1.442695
        %v6986 = vpow.pop %v6985
        %v6987 = vmul.f32 %v6873, 1.442695
        %v6988 = vpow.pop %v6987
        %v6989 = vmul.f32 %v6874, 1.442695
        %v6990 = vpow.pop %v6989
        %v6991 = vmul.f32 %v6875, 1.442695
        %v6992 = vpow.pop %v6991
        %v6993 = vmul.f32 %v6876, 1.442695
        %v6994 = vpow.pop %v6993
        %v6995 = vmul.f32 %v6877, 1.442695
        %v6996 = vpow.pop %v6995
        %v6997 = vmul.f32 %v6878, 1.442695
        %v6998 = vpow.pop %v6997
        %v6999 = vmul.f32 %v6879, 1.442695
        %v7000 = vpow.pop %v6999
        %v7001 = vmul.f32 %v6880, 1.442695
        %v7002 = vpow.pop %v7001
        %v7003 = vmul.f32 %v6881, 1.442695
        %v7004 = vpow.pop %v7003
        %v7005 = vmul.f32 %v6882, 1.442695
        %v7006 = vpow.pop %v7005
        %v7007 = vmul.f32 %v6883, 1.442695
        %v7008 = vpow.pop %v7007
        %v7009 = vmul.f32 %v6884, 1.442695
        %v7010 = vpow.pop %v7009
        %v7011 = vmul.f32 %v6885, 1.442695
        %v7012 = vpow.pop %v7011
        %v7013 = vmul.f32 %v6886, 1.442695
        %v7014 = vpow.pop %v7013
        %v7015 = vadd.f32 %v6888, %v6890
        %7016 = vadd.xlane.f32.xlu0 %v7015
        %v7017 = vpop.xlane.xlu0 %7016
        %v7018 = vadd.f32 %v6892, %v6894
        %7019 = vadd.xlane.f32.xlu0 %v7018
        %v7020 = vpop.xlane.xlu0 %7019
        %v7021 = vadd.f32 %v6896, %v6898
        %7022 = vadd.xlane.f32.xlu0 %v7021
        %v7023 = vpop.xlane.xlu0 %7022
        %v7024 = vadd.f32 %v6900, %v6902
        %7025 = vadd.xlane.f32.xlu0 %v7024
        %v7026 = vpop.xlane.xlu0 %7025
        %v7027 = vadd.f32 %v6904, %v6906
        %7028 = vadd.xlane.f32.xlu0 %v7027
        %v7029 = vpop.xlane.xlu0 %7028
        %v7030 = vadd.f32 %v6908, %v6910
        %7031 = vadd.xlane.f32.xlu0 %v7030
        %v7032 = vpop.xlane.xlu0 %7031
        %v7033 = vadd.f32 %v6912, %v6914
        %7034 = vadd.xlane.f32.xlu0 %v7033
        %v7035 = vpop.xlane.xlu0 %7034
        %v7036 = vadd.f32 %v6916, %v6918
        %7037 = vadd.xlane.f32.xlu0 %v7036
        %v7038 = vpop.xlane.xlu0 %7037
        %v7039 = vadd.f32 %v6920, %v6922
        %7040 = vadd.xlane.f32.xlu0 %v7039
        %v7041 = vpop.xlane.xlu0 %7040
        %v7042 = vadd.f32 %v6924, %v6926
        %7043 = vadd.xlane.f32.xlu0 %v7042
        %v7044 = vpop.xlane.xlu0 %7043
        %v7045 = vadd.f32 %v6928, %v6930
        %7046 = vadd.xlane.f32.xlu0 %v7045
        %v7047 = vpop.xlane.xlu0 %7046
        %v7048 = vadd.f32 %v6932, %v6934
        %7049 = vadd.xlane.f32.xlu0 %v7048
        %v7050 = vpop.xlane.xlu0 %7049
        %v7051 = vadd.f32 %v6936, %v6938
        %7052 = vadd.xlane.f32.xlu0 %v7051
        %v7053 = vpop.xlane.xlu0 %7052
        %v7054 = vadd.f32 %v6940, %v6942
        %7055 = vadd.xlane.f32.xlu0 %v7054
        %v7056 = vpop.xlane.xlu0 %7055
        %v7057 = vadd.f32 %v6944, %v6946
        %7058 = vadd.xlane.f32.xlu0 %v7057
        %v7059 = vpop.xlane.xlu0 %7058
        %v7060 = vadd.f32 %v6948, %v6950
        %7061 = vadd.xlane.f32.xlu0 %v7060
        %v7062 = vpop.xlane.xlu0 %7061
        %v7063 = vadd.f32 %v6952, %v6954
        %7064 = vadd.xlane.f32.xlu0 %v7063
        %v7065 = vpop.xlane.xlu0 %7064
        %v7066 = vadd.f32 %v6956, %v6958
        %7067 = vadd.xlane.f32.xlu0 %v7066
        %v7068 = vpop.xlane.xlu0 %7067
        %v7069 = vadd.f32 %v6960, %v6962
        %7070 = vadd.xlane.f32.xlu0 %v7069
        %v7071 = vpop.xlane.xlu0 %7070
        %v7072 = vadd.f32 %v6964, %v6966
        %7073 = vadd.xlane.f32.xlu0 %v7072
        %v7074 = vpop.xlane.xlu0 %7073
        %v7075 = vadd.f32 %v6968, %v6970
        %7076 = vadd.xlane.f32.xlu0 %v7075
        %v7077 = vpop.xlane.xlu0 %7076
        %v7078 = vadd.f32 %v6972, %v6974
        %7079 = vadd.xlane.f32.xlu0 %v7078
        %v7080 = vpop.xlane.xlu0 %7079
        %v7081 = vadd.f32 %v6976, %v6978
        %7082 = vadd.xlane.f32.xlu0 %v7081
        %v7083 = vpop.xlane.xlu0 %7082
        %v7084 = vadd.f32 %v6980, %v6982
        %7085 = vadd.xlane.f32.xlu0 %v7084
        %v7086 = vpop.xlane.xlu0 %7085
        %v7087 = vadd.f32 %v6984, %v6986
        %7088 = vadd.xlane.f32.xlu0 %v7087
        %v7089 = vpop.xlane.xlu0 %7088
        %v7090 = vadd.f32 %v6988, %v6990
        %7091 = vadd.xlane.f32.xlu0 %v7090
        %v7092 = vpop.xlane.xlu0 %7091
        %v7093 = vadd.f32 %v6992, %v6994
        %7094 = vadd.xlane.f32.xlu0 %v7093
        %v7095 = vpop.xlane.xlu0 %7094
        %v7096 = vadd.f32 %v6996, %v6998
        %7097 = vadd.xlane.f32.xlu0 %v7096
        %v7098 = vpop.xlane.xlu0 %7097
        %v7099 = vadd.f32 %v7000, %v7002
        %7100 = vadd.xlane.f32.xlu0 %v7099
        %v7101 = vpop.xlane.xlu0 %7100
        %v7102 = vadd.f32 %v7004, %v7006
        %7103 = vadd.xlane.f32.xlu0 %v7102
        %v7104 = vpop.xlane.xlu0 %7103
        %v7105 = vadd.f32 %v7008, %v7010
        %7106 = vadd.xlane.f32.xlu0 %v7105
        %v7107 = vpop.xlane.xlu0 %7106
        %v7108 = vadd.f32 %v7012, %v7014
        %7109 = vadd.xlane.f32.xlu0 %v7108
        %v7110 = vpop.xlane.xlu0 %7109
        %v7111 = vrcp.pop %v7017
        %v7112 = vrcp.pop %v7020
        %v7113 = vrcp.pop %v7023
        %v7114 = vrcp.pop %v7026
        %v7115 = vrcp.pop %v7029
        %v7116 = vrcp.pop %v7032
        %v7117 = vrcp.pop %v7035
        %v7118 = vrcp.pop %v7038
        %v7119 = vrcp.pop %v7041
        %v7120 = vrcp.pop %v7044
        %v7121 = vrcp.pop %v7047
        %v7122 = vrcp.pop %v7050
        %v7123 = vrcp.pop %v7053
        %v7124 = vrcp.pop %v7056
        %v7125 = vrcp.pop %v7059
        %v7126 = vrcp.pop %v7062
        %v7127 = vrcp.pop %v7065
        %v7128 = vrcp.pop %v7068
        %v7129 = vrcp.pop %v7071
        %v7130 = vrcp.pop %v7074
        %v7131 = vrcp.pop %v7077
        %v7132 = vrcp.pop %v7080
        %v7133 = vrcp.pop %v7083
        %v7134 = vrcp.pop %v7086
        %v7135 = vrcp.pop %v7089
        %v7136 = vrcp.pop %v7092
        %v7137 = vrcp.pop %v7095
        %v7138 = vrcp.pop %v7098
        %v7139 = vrcp.pop %v7101
        %v7140 = vrcp.pop %v7104
        %v7141 = vrcp.pop %v7107
        %v7142 = vrcp.pop %v7110
        %v7143 = vmul.f32 %v6888, %v7111
        %v7144 = vmul.f32 %v6890, %v7111
        %v7145 = vmul.f32 %v6892, %v7112
        %v7146 = vmul.f32 %v6894, %v7112
        %v7147 = vmul.f32 %v6896, %v7113
        %v7148 = vmul.f32 %v6898, %v7113
        %v7149 = vmul.f32 %v6900, %v7114
        %v7150 = vmul.f32 %v6902, %v7114
        %v7151 = vmul.f32 %v6904, %v7115
        %v7152 = vmul.f32 %v6906, %v7115
        %v7153 = vmul.f32 %v6908, %v7116
        %v7154 = vmul.f32 %v6910, %v7116
        %v7155 = vmul.f32 %v6912, %v7117
        %v7156 = vmul.f32 %v6914, %v7117
        %v7157 = vmul.f32 %v6916, %v7118
        %v7158 = vmul.f32 %v6918, %v7118
        %v7159 = vmul.f32 %v6920, %v7119
        %v7160 = vmul.f32 %v6922, %v7119
        %v7161 = vmul.f32 %v6924, %v7120
        %v7162 = vmul.f32 %v6926, %v7120
        %v7163 = vmul.f32 %v6928, %v7121
        %v7164 = vmul.f32 %v6930, %v7121
        %v7165 = vmul.f32 %v6932, %v7122
        %v7166 = vmul.f32 %v6934, %v7122
        %v7167 = vmul.f32 %v6936, %v7123
        %v7168 = vmul.f32 %v6938, %v7123
        %v7169 = vmul.f32 %v6940, %v7124
        %v7170 = vmul.f32 %v6942, %v7124
        %v7171 = vmul.f32 %v6944, %v7125
        %v7172 = vmul.f32 %v6946, %v7125
        %v7173 = vmul.f32 %v6948, %v7126
        %v7174 = vmul.f32 %v6950, %v7126
        %v7175 = vmul.f32 %v6952, %v7127
        %v7176 = vmul.f32 %v6954, %v7127
        %v7177 = vmul.f32 %v6956, %v7128
        %v7178 = vmul.f32 %v6958, %v7128
        %v7179 = vmul.f32 %v6960, %v7129
        %v7180 = vmul.f32 %v6962, %v7129
        %v7181 = vmul.f32 %v6964, %v7130
        %v7182 = vmul.f32 %v6966, %v7130
        %v7183 = vmul.f32 %v6968, %v7131
        %v7184 = vmul.f32 %v6970, %v7131
        %v7185 = vmul.f32 %v6972, %v7132
        %v7186 = vmul.f32 %v6974, %v7132
        %v7187 = vmul.f32 %v6976, %v7133
        %v7188 = vmul.f32 %v6978, %v7133
        %v7189 = vmul.f32 %v6980, %v7134
        %v7190 = vmul.f32 %v6982, %v7134
        %v7191 = vmul.f32 %v6984, %v7135
        %v7192 = vmul.f32 %v6986, %v7135
        %v7193 = vmul.f32 %v6988, %v7136
        %v7194 = vmul.f32 %v6990, %v7136
        %v7195 = vmul.f32 %v6992, %v7137
        %v7196 = vmul.f32 %v6994, %v7137
        %v7197 = vmul.f32 %v6996, %v7138
        %v7198 = vmul.f32 %v6998, %v7138
        %v7199 = vmul.f32 %v7000, %v7139
        %v7200 = vmul.f32 %v7002, %v7139
        %v7201 = vmul.f32 %v7004, %v7140
        %v7202 = vmul.f32 %v7006, %v7140
        %v7203 = vmul.f32 %v7008, %v7141
        %v7204 = vmul.f32 %v7010, %v7141
        %v7205 = vmul.f32 %v7012, %v7142
        %v7206 = vmul.f32 %v7014, %v7142
        %7207 = vrot.lane.b32.xlu0 %v571, 40
        %v7208 = vpop.permute.xlu0 %7207
        %7209 = vrot.lane.b32.xlu0 %v576, 40
        %v7210 = vpop.permute.xlu0 %7209
        %7211 = vrot.lane.b32.xlu0 %v581, 40
        %v7212 = vpop.permute.xlu0 %7211
        %7213 = vrot.lane.b32.xlu0 %v586, 40
        %v7214 = vpop.permute.xlu0 %7213
        %7215 = vrot.lane.b32.xlu0 %v591, 40
        %v7216 = vpop.permute.xlu0 %7215
        %7217 = vrot.lane.b32.xlu0 %v596, 40
        %v7218 = vpop.permute.xlu0 %7217
        %7219 = vrot.lane.b32.xlu0 %v601, 40
        %v7220 = vpop.permute.xlu0 %7219
        %7221 = vrot.lane.b32.xlu0 %v606, 40
        %v7222 = vpop.permute.xlu0 %7221
        %7223 = vrot.lane.b32.xlu0 %v611, 40
        %v7224 = vpop.permute.xlu0 %7223
        %7225 = vrot.lane.b32.xlu0 %v616, 40
        %v7226 = vpop.permute.xlu0 %7225
        %7227 = vrot.lane.b32.xlu0 %v621, 40
        %v7228 = vpop.permute.xlu0 %7227
        %7229 = vrot.lane.b32.xlu0 %v626, 40
        %v7230 = vpop.permute.xlu0 %7229
        %7231 = vrot.lane.b32.xlu0 %v631, 40
        %v7232 = vpop.permute.xlu0 %7231
        %7233 = vrot.lane.b32.xlu0 %v636, 40
        %v7234 = vpop.permute.xlu0 %7233
        %7235 = vrot.lane.b32.xlu0 %v641, 40
        %v7236 = vpop.permute.xlu0 %7235
        %7237 = vrot.lane.b32.xlu0 %v646, 40
        %v7238 = vpop.permute.xlu0 %7237
        %7239 = vrot.lane.b32.xlu0 %v651, 40
        %v7240 = vpop.permute.xlu0 %7239
        %7241 = vrot.lane.b32.xlu0 %v656, 40
        %v7242 = vpop.permute.xlu0 %7241
        %7243 = vrot.lane.b32.xlu0 %v661, 40
        %v7244 = vpop.permute.xlu0 %7243
        %7245 = vrot.lane.b32.xlu0 %v666, 40
        %v7246 = vpop.permute.xlu0 %7245
        %7247 = vrot.lane.b32.xlu0 %v671, 40
        %v7248 = vpop.permute.xlu0 %7247
        %7249 = vrot.lane.b32.xlu0 %v676, 40
        %v7250 = vpop.permute.xlu0 %7249
        %7251 = vrot.lane.b32.xlu0 %v681, 40
        %v7252 = vpop.permute.xlu0 %7251
        %7253 = vrot.lane.b32.xlu0 %v686, 40
        %v7254 = vpop.permute.xlu0 %7253
        %7255 = vrot.lane.b32.xlu0 %v691, 40
        %v7256 = vpop.permute.xlu0 %7255
        %7257 = vrot.lane.b32.xlu0 %v696, 40
        %v7258 = vpop.permute.xlu0 %7257
        %7259 = vrot.lane.b32.xlu0 %v701, 40
        %v7260 = vpop.permute.xlu0 %7259
        %7261 = vrot.lane.b32.xlu0 %v706, 40
        %v7262 = vpop.permute.xlu0 %7261
        %7263 = vrot.lane.b32.xlu0 %v711, 40
        %v7264 = vpop.permute.xlu0 %7263
        %7265 = vrot.lane.b32.xlu0 %v716, 40
        %v7266 = vpop.permute.xlu0 %7265
        %7267 = vrot.lane.b32.xlu0 %v721, 40
        %v7268 = vpop.permute.xlu0 %7267
        %7269 = vrot.lane.b32.xlu0 %v726, 40
        %v7270 = vpop.permute.xlu0 %7269
        %7303 = vmatprep.subr.mxu0 0.0
        %7304 = vmatpush1.msra.mxu0 %v7208
        %7305 = vmatprep.subr.mxu0 0.0
        %7306 = vmatpush1.msra.mxu0 %v7210
        %7307 = vmatprep.subr.mxu0 0.0
        %7308 = vmatpush1.msra.mxu0 %v7212
        %7309 = vmatprep.subr.mxu0 0.0
        %7310 = vmatpush1.msra.mxu0 %v7214
        %7311 = vmatprep.subr.mxu0 0.0
        %7312 = vmatpush1.msra.mxu0 %v7216
        %7313 = vmatprep.subr.mxu0 0.0
        %7314 = vmatpush1.msra.mxu0 %v7218
        %7315 = vmatprep.subr.mxu0 0.0
        %7316 = vmatpush1.msra.mxu0 %v7220
        %7317 = vmatprep.subr.mxu0 0.0
        %7318 = vmatpush1.msra.mxu0 %v7222
        %7319 = vmatprep.subr.mxu0 0.0
        %7320 = vmatpush1.msra.mxu0 %v7224
        %7321 = vmatprep.subr.mxu0 0.0
        %7322 = vmatpush1.msra.mxu0 %v7226
        %7323 = vmatprep.subr.mxu0 0.0
        %7324 = vmatpush1.msra.mxu0 %v7228
        %7325 = vmatprep.subr.mxu0 0.0
        %7326 = vmatpush1.msra.mxu0 %v7230
        %7327 = vmatprep.subr.mxu0 0.0
        %7328 = vmatpush1.msra.mxu0 %v7232
        %7329 = vmatprep.subr.mxu0 0.0
        %7330 = vmatpush1.msra.mxu0 %v7234
        %7331 = vmatprep.subr.mxu0 0.0
        %7332 = vmatpush1.msra.mxu0 %v7236
        %7333 = vmatprep.subr.mxu0 0.0
        %7334 = vmatpush1.msra.mxu0 %v7238
        %7335 = vmatprep.subr.mxu0 0.0
        %7336 = vmatpush1.msra.mxu0 %v7240
        %7337 = vmatprep.subr.mxu0 0.0
        %7338 = vmatpush1.msra.mxu0 %v7242
        %7339 = vmatprep.subr.mxu0 0.0
        %7340 = vmatpush1.msra.mxu0 %v7244
        %7341 = vmatprep.subr.mxu0 0.0
        %7342 = vmatpush1.msra.mxu0 %v7246
        %7343 = vmatprep.subr.mxu0 0.0
        %7344 = vmatpush1.msra.mxu0 %v7248
        %7345 = vmatprep.subr.mxu0 0.0
        %7346 = vmatpush1.msra.mxu0 %v7250
        %7347 = vmatprep.subr.mxu0 0.0
        %7348 = vmatpush1.msra.mxu0 %v7252
        %7349 = vmatprep.subr.mxu0 0.0
        %7350 = vmatpush1.msra.mxu0 %v7254
        %7351 = vmatprep.subr.mxu0 0.0
        %7352 = vmatpush1.msra.mxu0 %v7256
        %7353 = vmatprep.subr.mxu0 0.0
        %7354 = vmatpush1.msra.mxu0 %v7258
        %7355 = vmatprep.subr.mxu0 0.0
        %7356 = vmatpush1.msra.mxu0 %v7260
        %7357 = vmatprep.subr.mxu0 0.0
        %7358 = vmatpush1.msra.mxu0 %v7262
        %7359 = vmatprep.subr.mxu0 0.0
        %7360 = vmatpush1.msra.mxu0 %v7264
        %7361 = vmatprep.subr.mxu0 0.0
        %7362 = vmatpush1.msra.mxu0 %v7266
        %7363 = vmatprep.subr.mxu0 0.0
        %7364 = vmatpush1.msra.mxu0 %v7268
        %7365 = vmatprep.subr.mxu0 0.0
        %7366 = vmatpush1.msra.mxu0 %v7270
        %7367 = vmatprep.mubr.f32.mxu0 %v7144
        %7368 = vmatmul.mubr.f32.gmra.mrb[0].mxu0 %v7143
        %v7369 = vpop.f32.mrb[0].mxu0
        %v7370 = vadd.f32 0.0, %v7369
        %v7371 = vpop.f32.mrb[0].mxu0
        %7372 = vmatprep.mubr.f32.mxu0 %v7146
        %7373 = vmatmul.mubr.f32.gmra.mrb[0].mxu0 %v7145
        %v7374 = vpop.f32.mrb[0].mxu0
        %v7375 = vadd.f32 0.0, %v7374
        %v7376 = vpop.f32.mrb[0].mxu0
        %7377 = vmatprep.mubr.f32.mxu0 %v7148
        %7378 = vmatmul.mubr.f32.gmra.mrb[0].mxu0 %v7147
        %v7379 = vpop.f32.mrb[0].mxu0
        %v7380 = vadd.f32 0.0, %v7379
        %v7381 = vpop.f32.mrb[0].mxu0
        %7382 = vmatprep.mubr.f32.mxu0 %v7150
        %7383 = vmatmul.mubr.f32.gmra.mrb[0].mxu0 %v7149
        %v7384 = vpop.f32.mrb[0].mxu0
        %v7385 = vadd.f32 0.0, %v7384
        %v7386 = vpop.f32.mrb[0].mxu0
        %7387 = vmatprep.mubr.f32.mxu0 %v7152
        %7388 = vmatmul.mubr.f32.gmra.mrb[0].mxu0 %v7151
        %v7389 = vpop.f32.mrb[0].mxu0
        %v7390 = vadd.f32 0.0, %v7389
        %v7391 = vpop.f32.mrb[0].mxu0
        %7392 = vmatprep.mubr.f32.mxu0 %v7154
        %7393 = vmatmul.mubr.f32.gmra.mrb[0].mxu0 %v7153
        %v7394 = vpop.f32.mrb[0].mxu0
        %v7395 = vadd.f32 0.0, %v7394
        %v7396 = vpop.f32.mrb[0].mxu0
        %7397 = vmatprep.mubr.f32.mxu0 %v7156
        %7398 = vmatmul.mubr.f32.gmra.mrb[0].mxu0 %v7155
        %v7399 = vpop.f32.mrb[0].mxu0
        %v7400 = vadd.f32 0.0, %v7399
        %v7401 = vpop.f32.mrb[0].mxu0
        %7402 = vmatprep.mubr.f32.mxu0 %v7158
        %7403 = vmatmul.mubr.f32.gmra.mrb[0].mxu0 %v7157
        %v7404 = vpop.f32.mrb[0].mxu0
        %v7405 = vadd.f32 0.0, %v7404
        %v7406 = vpop.f32.mrb[0].mxu0
        %7407 = vmatprep.mubr.f32.mxu0 %v7160
        %7408 = vmatmul.mubr.f32.gmra.mrb[0].mxu0 %v7159
        %v7409 = vpop.f32.mrb[0].mxu0
        %v7410 = vadd.f32 0.0, %v7409
        %v7411 = vpop.f32.mrb[0].mxu0
        %7412 = vmatprep.mubr.f32.mxu0 %v7162
        %7413 = vmatmul.mubr.f32.gmra.mrb[0].mxu0 %v7161
        %v7414 = vpop.f32.mrb[0].mxu0
        %v7415 = vadd.f32 0.0, %v7414
        %v7416 = vpop.f32.mrb[0].mxu0
        %7417 = vmatprep.mubr.f32.mxu0 %v7164
        %7418 = vmatmul.mubr.f32.gmra.mrb[0].mxu0 %v7163
        %v7419 = vpop.f32.mrb[0].mxu0
        %v7420 = vadd.f32 0.0, %v7419
        %v7421 = vpop.f32.mrb[0].mxu0
        %7422 = vmatprep.mubr.f32.mxu0 %v7166
        %7423 = vmatmul.mubr.f32.gmra.mrb[0].mxu0 %v7165
        %v7424 = vpop.f32.mrb[0].mxu0
        %v7425 = vadd.f32 0.0, %v7424
        %v7426 = vpop.f32.mrb[0].mxu0
        %7427 = vmatprep.mubr.f32.mxu0 %v7168
        %7428 = vmatmul.mubr.f32.gmra.mrb[0].mxu0 %v7167
        %v7429 = vpop.f32.mrb[0].mxu0
        %v7430 = vadd.f32 0.0, %v7429
        %v7431 = vpop.f32.mrb[0].mxu0
        %7432 = vmatprep.mubr.f32.mxu0 %v7170
        %7433 = vmatmul.mubr.f32.gmra.mrb[0].mxu0 %v7169
        %v7434 = vpop.f32.mrb[0].mxu0
        %v7435 = vadd.f32 0.0, %v7434
        %v7436 = vpop.f32.mrb[0].mxu0
        %7437 = vmatprep.mubr.f32.mxu0 %v7172
        %7438 = vmatmul.mubr.f32.gmra.mrb[0].mxu0 %v7171
        %v7439 = vpop.f32.mrb[0].mxu0
        %v7440 = vadd.f32 0.0, %v7439
        %v7441 = vpop.f32.mrb[0].mxu0
        %7442 = vmatprep.mubr.f32.mxu0 %v7174
        %7443 = vmatmul.mubr.f32.gmra.mrb[0].mxu0 %v7173
        %v7444 = vpop.f32.mrb[0].mxu0
        %v7445 = vadd.f32 0.0, %v7444
        %v7446 = vpop.f32.mrb[0].mxu0
        %7447 = vmatprep.mubr.f32.mxu0 %v7176
        %7448 = vmatmul.mubr.f32.gmra.mrb[0].mxu0 %v7175
        %v7449 = vpop.f32.mrb[0].mxu0
        %v7450 = vadd.f32 0.0, %v7449
        %v7451 = vpop.f32.mrb[0].mxu0
        %7452 = vmatprep.mubr.f32.mxu0 %v7178
        %7453 = vmatmul.mubr.f32.gmra.mrb[0].mxu0 %v7177
        %v7454 = vpop.f32.mrb[0].mxu0
        %v7455 = vadd.f32 0.0, %v7454
        %v7456 = vpop.f32.mrb[0].mxu0
        %7457 = vmatprep.mubr.f32.mxu0 %v7180
        %7458 = vmatmul.mubr.f32.gmra.mrb[0].mxu0 %v7179
        %v7459 = vpop.f32.mrb[0].mxu0
        %v7460 = vadd.f32 0.0, %v7459
        %v7461 = vpop.f32.mrb[0].mxu0
        %7462 = vmatprep.mubr.f32.mxu0 %v7182
        %7463 = vmatmul.mubr.f32.gmra.mrb[0].mxu0 %v7181
        %v7464 = vpop.f32.mrb[0].mxu0
        %v7465 = vadd.f32 0.0, %v7464
        %v7466 = vpop.f32.mrb[0].mxu0
        %7467 = vmatprep.mubr.f32.mxu0 %v7184
        %7468 = vmatmul.mubr.f32.gmra.mrb[0].mxu0 %v7183
        %v7469 = vpop.f32.mrb[0].mxu0
        %v7470 = vadd.f32 0.0, %v7469
        %v7471 = vpop.f32.mrb[0].mxu0
        %7472 = vmatprep.mubr.f32.mxu0 %v7186
        %7473 = vmatmul.mubr.f32.gmra.mrb[0].mxu0 %v7185
        %v7474 = vpop.f32.mrb[0].mxu0
        %v7475 = vadd.f32 0.0, %v7474
        %v7476 = vpop.f32.mrb[0].mxu0
        %7477 = vmatprep.mubr.f32.mxu0 %v7188
        %7478 = vmatmul.mubr.f32.gmra.mrb[0].mxu0 %v7187
        %v7479 = vpop.f32.mrb[0].mxu0
        %v7480 = vadd.f32 0.0, %v7479
        %v7481 = vpop.f32.mrb[0].mxu0
        %7482 = vmatprep.mubr.f32.mxu0 %v7190
        %7483 = vmatmul.mubr.f32.gmra.mrb[0].mxu0 %v7189
        %v7484 = vpop.f32.mrb[0].mxu0
        %v7485 = vadd.f32 0.0, %v7484
        %v7486 = vpop.f32.mrb[0].mxu0
        %7487 = vmatprep.mubr.f32.mxu0 %v7192
        %7488 = vmatmul.mubr.f32.gmra.mrb[0].mxu0 %v7191
        %v7489 = vpop.f32.mrb[0].mxu0
        %v7490 = vadd.f32 0.0, %v7489
        %v7491 = vpop.f32.mrb[0].mxu0
        %7492 = vmatprep.mubr.f32.mxu0 %v7194
        %7493 = vmatmul.mubr.f32.gmra.mrb[0].mxu0 %v7193
        %v7494 = vpop.f32.mrb[0].mxu0
        %v7495 = vadd.f32 0.0, %v7494
        %v7496 = vpop.f32.mrb[0].mxu0
        %7497 = vmatprep.mubr.f32.mxu0 %v7196
        %7498 = vmatmul.mubr.f32.gmra.mrb[0].mxu0 %v7195
        %v7499 = vpop.f32.mrb[0].mxu0
        %v7500 = vadd.f32 0.0, %v7499
        %v7501 = vpop.f32.mrb[0].mxu0
        %7502 = vmatprep.mubr.f32.mxu0 %v7198
        %7503 = vmatmul.mubr.f32.gmra.mrb[0].mxu0 %v7197
        %v7504 = vpop.f32.mrb[0].mxu0
        %v7505 = vadd.f32 0.0, %v7504
        %v7506 = vpop.f32.mrb[0].mxu0
        %7507 = vmatprep.mubr.f32.mxu0 %v7200
        %7508 = vmatmul.mubr.f32.gmra.mrb[0].mxu0 %v7199
        %v7509 = vpop.f32.mrb[0].mxu0
        %v7510 = vadd.f32 0.0, %v7509
        %v7511 = vpop.f32.mrb[0].mxu0
        %7512 = vmatprep.mubr.f32.mxu0 %v7202
        %7513 = vmatmul.mubr.f32.gmra.mrb[0].mxu0 %v7201
        %v7514 = vpop.f32.mrb[0].mxu0
        %v7515 = vadd.f32 0.0, %v7514
        %v7516 = vpop.f32.mrb[0].mxu0
        %7517 = vmatprep.mubr.f32.mxu0 %v7204
        %7518 = vmatmul.mubr.f32.gmra.mrb[0].mxu0 %v7203
        %v7519 = vpop.f32.mrb[0].mxu0
        %v7520 = vadd.f32 0.0, %v7519
        %v7521 = vpop.f32.mrb[0].mxu0
        %7522 = vmatprep.mubr.f32.mxu0 %v7206
        %7523 = vmatmul.mubr.f32.gmra.mrb[0].mxu0 %v7205
        %v7524 = vpop.f32.mrb[0].mxu0
        %v7525 = vadd.f32 0.0, %v7524
        %v7526 = vpop.f32.mrb[0].mxu0
        %7527 = vdwg.mxu0
        %v7528 = vld [vmem:[#allocation5 + $0x18] sm:$0xff]
        %v7530 = vsel %vm889, %v7370, 0
        %v7533 = vsel %vm889, %v7375, 0
        %v7536 = vsel %vm889, %v7380, 0
        %v7539 = vsel %vm889, %v7385, 0
        %v7542 = vsel %vm889, %v7390, 0
        %v7545 = vsel %vm889, %v7395, 0
        %v7548 = vsel %vm889, %v7400, 0
        %v7551 = vsel %vm889, %v7405, 0
        %v7554 = vsel %vm889, %v7410, 0
        %v7557 = vsel %vm889, %v7415, 0
        %v7560 = vsel %vm889, %v7420, 0
        %v7563 = vsel %vm889, %v7425, 0
        %v7566 = vsel %vm889, %v7430, 0
        %v7569 = vsel %vm889, %v7435, 0
        %v7572 = vsel %vm889, %v7440, 0
        %v7575 = vsel %vm889, %v7445, 0
        %v7578 = vsel %vm889, %v7450, 0
        %v7581 = vsel %vm889, %v7455, 0
        %v7584 = vsel %vm889, %v7460, 0
        %v7587 = vsel %vm889, %v7465, 0
        %v7590 = vsel %vm889, %v7470, 0
        %v7593 = vsel %vm889, %v7475, 0
        %v7596 = vsel %vm889, %v7480, 0
        %v7599 = vsel %vm889, %v7485, 0
        %v7602 = vsel %vm889, %v7490, 0
        %v7605 = vsel %vm889, %v7495, 0
        %v7608 = vsel %vm889, %v7500, 0
        %v7611 = vsel %vm889, %v7505, 0
        %v7614 = vsel %vm889, %v7510, 0
        %v7617 = vsel %vm889, %v7515, 0
        %v7620 = vsel %vm889, %v7520, 0
        %v7623 = vsel %vm889, %v7525, 0
        %7625 = vmatprep.subr.mxu0 0.0
        %7626 = vmatpush1.msra.mxu0 %v7528
        %7627 = vmatprep.subr.mxu0 0.0
        %7628 = vmatpush1.msra.mxu0 0.0
        %7629 = vmatprep.subr.mxu0 0.0
        %7630 = vmatpush1.msra.mxu0 0.0
        %7631 = vmatprep.subr.mxu0 0.0
        %7632 = vmatpush1.msra.mxu0 0.0
        %7633 = vmatprep.subr.mxu0 0.0
        %7634 = vmatpush1.msra.mxu0 0.0
        %7635 = vmatprep.subr.mxu0 0.0
        %7636 = vmatpush1.msra.mxu0 0.0
        %7637 = vmatprep.subr.mxu0 0.0
        %7638 = vmatpush1.msra.mxu0 0.0
        %7639 = vmatprep.subr.mxu0 0.0
        %7640 = vmatpush1.msra.mxu0 0.0
        %7641 = vmatprep.subr.mxu0 0.0
        %7642 = vmatpush1.msra.mxu0 0.0
        %7643 = vmatprep.subr.mxu0 0.0
        %7644 = vmatpush1.msra.mxu0 0.0
        %7645 = vmatprep.subr.mxu0 0.0
        %7646 = vmatpush1.msra.mxu0 0.0
        %7647 = vmatprep.subr.mxu0 0.0
        %7648 = vmatpush1.msra.mxu0 0.0
        %7649 = vmatprep.subr.mxu0 0.0
        %7650 = vmatpush1.msra.mxu0 0.0
        %7651 = vmatprep.subr.mxu0 0.0
        %7652 = vmatpush1.msra.mxu0 0.0
        %7653 = vmatprep.subr.mxu0 0.0
        %7654 = vmatpush1.msra.mxu0 0.0
        %7655 = vmatprep.subr.mxu0 0.0
        %7656 = vmatpush1.msra.mxu0 0.0
        %7657 = vmatprep.subr.mxu0 0.0
        %7658 = vmatpush1.msra.mxu0 0.0
        %7659 = vmatprep.subr.mxu0 0.0
        %7660 = vmatpush1.msra.mxu0 0.0
        %7661 = vmatprep.subr.mxu0 0.0
        %7662 = vmatpush1.msra.mxu0 0.0
        %7663 = vmatprep.subr.mxu0 0.0
        %7664 = vmatpush1.msra.mxu0 0.0
        %7665 = vmatprep.subr.mxu0 0.0
        %7666 = vmatpush1.msra.mxu0 0.0
        %7667 = vmatprep.subr.mxu0 0.0
        %7668 = vmatpush1.msra.mxu0 0.0
        %7669 = vmatprep.subr.mxu0 0.0
        %7670 = vmatpush1.msra.mxu0 0.0
        %7671 = vmatprep.subr.mxu0 0.0
        %7672 = vmatpush1.msra.mxu0 0.0
        %7673 = vmatprep.subr.mxu0 0.0
        %7674 = vmatpush1.msra.mxu0 0.0
        %7675 = vmatprep.subr.mxu0 0.0
        %7676 = vmatpush1.msra.mxu0 0.0
        %7677 = vmatprep.subr.mxu0 0.0
        %7678 = vmatpush1.msra.mxu0 0.0
        %7679 = vmatprep.subr.mxu0 0.0
        %7680 = vmatpush1.msra.mxu0 0.0
        %7681 = vmatprep.subr.mxu0 0.0
        %7682 = vmatpush1.msra.mxu0 0.0
        %7683 = vmatprep.subr.mxu0 0.0
        %7684 = vmatpush1.msra.mxu0 0.0
        %7685 = vmatprep.subr.mxu0 0.0
        %7686 = vmatpush1.msra.mxu0 0.0
        %7687 = vmatprep.subr.mxu0 0.0
        %7688 = vmatpush1.msra.mxu0 0.0
        %7689 = vmatprep.mubr.f32.mxu0 0.0
        %7690 = vmatmul.mubr.f32.gmra.mrb[0].mxu0 %v7530
        %v7691 = vpop.f32.mrb[0].mxu0
        %v7692 = vadd.f32 0.0, %v7691
        %v7693 = vpop.f32.mrb[0].mxu0
        %7694 = vmatprep.mubr.f32.mxu0 0.0
        %7695 = vmatmul.mubr.f32.gmra.mrb[0].mxu0 %v7533
        %v7696 = vpop.f32.mrb[0].mxu0
        %v7697 = vadd.f32 0.0, %v7696
        %v7698 = vpop.f32.mrb[0].mxu0
        %7699 = vmatprep.mubr.f32.mxu0 0.0
        %7700 = vmatmul.mubr.f32.gmra.mrb[0].mxu0 %v7536
        %v7701 = vpop.f32.mrb[0].mxu0
        %v7702 = vadd.f32 0.0, %v7701
        %v7703 = vpop.f32.mrb[0].mxu0
        %7704 = vmatprep.mubr.f32.mxu0 0.0
        %7705 = vmatmul.mubr.f32.gmra.mrb[0].mxu0 %v7539
        %v7706 = vpop.f32.mrb[0].mxu0
        %v7707 = vadd.f32 0.0, %v7706
        %v7708 = vpop.f32.mrb[0].mxu0
        %7709 = vmatprep.mubr.f32.mxu0 0.0
        %7710 = vmatmul.mubr.f32.gmra.mrb[0].mxu0 %v7542
        %v7711 = vpop.f32.mrb[0].mxu0
        %v7712 = vadd.f32 0.0, %v7711
        %v7713 = vpop.f32.mrb[0].mxu0
        %7714 = vmatprep.mubr.f32.mxu0 0.0
        %7715 = vmatmul.mubr.f32.gmra.mrb[0].mxu0 %v7545
        %v7716 = vpop.f32.mrb[0].mxu0
        %v7717 = vadd.f32 0.0, %v7716
        %v7718 = vpop.f32.mrb[0].mxu0
        %7719 = vmatprep.mubr.f32.mxu0 0.0
        %7720 = vmatmul.mubr.f32.gmra.mrb[0].mxu0 %v7548
        %v7721 = vpop.f32.mrb[0].mxu0
        %v7722 = vadd.f32 0.0, %v7721
        %v7723 = vpop.f32.mrb[0].mxu0
        %7724 = vmatprep.mubr.f32.mxu0 0.0
        %7725 = vmatmul.mubr.f32.gmra.mrb[0].mxu0 %v7551
        %v7726 = vpop.f32.mrb[0].mxu0
        %v7727 = vadd.f32 0.0, %v7726
        %v7728 = vpop.f32.mrb[0].mxu0
        %7729 = vmatprep.mubr.f32.mxu0 0.0
        %7730 = vmatmul.mubr.f32.gmra.mrb[0].mxu0 %v7554
        %v7731 = vpop.f32.mrb[0].mxu0
        %v7732 = vadd.f32 0.0, %v7731
        %v7733 = vpop.f32.mrb[0].mxu0
        %7734 = vmatprep.mubr.f32.mxu0 0.0
        %7735 = vmatmul.mubr.f32.gmra.mrb[0].mxu0 %v7557
        %v7736 = vpop.f32.mrb[0].mxu0
        %v7737 = vadd.f32 0.0, %v7736
        %v7738 = vpop.f32.mrb[0].mxu0
        %7739 = vmatprep.mubr.f32.mxu0 0.0
        %7740 = vmatmul.mubr.f32.gmra.mrb[0].mxu0 %v7560
        %v7741 = vpop.f32.mrb[0].mxu0
        %v7742 = vadd.f32 0.0, %v7741
        %v7743 = vpop.f32.mrb[0].mxu0
        %7744 = vmatprep.mubr.f32.mxu0 0.0
        %7745 = vmatmul.mubr.f32.gmra.mrb[0].mxu0 %v7563
        %v7746 = vpop.f32.mrb[0].mxu0
        %v7747 = vadd.f32 0.0, %v7746
        %v7748 = vpop.f32.mrb[0].mxu0
        %7749 = vmatprep.mubr.f32.mxu0 0.0
        %7750 = vmatmul.mubr.f32.gmra.mrb[0].mxu0 %v7566
        %v7751 = vpop.f32.mrb[0].mxu0
        %v7752 = vadd.f32 0.0, %v7751
        %v7753 = vpop.f32.mrb[0].mxu0
        %7754 = vmatprep.mubr.f32.mxu0 0.0
        %7755 = vmatmul.mubr.f32.gmra.mrb[0].mxu0 %v7569
        %v7756 = vpop.f32.mrb[0].mxu0
        %v7757 = vadd.f32 0.0, %v7756
        %v7758 = vpop.f32.mrb[0].mxu0
        %7759 = vmatprep.mubr.f32.mxu0 0.0
        %7760 = vmatmul.mubr.f32.gmra.mrb[0].mxu0 %v7572
        %v7761 = vpop.f32.mrb[0].mxu0
        %v7762 = vadd.f32 0.0, %v7761
        %v7763 = vpop.f32.mrb[0].mxu0
        %7764 = vmatprep.mubr.f32.mxu0 0.0
        %7765 = vmatmul.mubr.f32.gmra.mrb[0].mxu0 %v7575
        %v7766 = vpop.f32.mrb[0].mxu0
        %v7767 = vadd.f32 0.0, %v7766
        %v7768 = vpop.f32.mrb[0].mxu0
        %7769 = vmatprep.mubr.f32.mxu0 0.0
        %7770 = vmatmul.mubr.f32.gmra.mrb[0].mxu0 %v7578
        %v7771 = vpop.f32.mrb[0].mxu0
        %v7772 = vadd.f32 0.0, %v7771
        %v7773 = vpop.f32.mrb[0].mxu0
        %7774 = vmatprep.mubr.f32.mxu0 0.0
        %7775 = vmatmul.mubr.f32.gmra.mrb[0].mxu0 %v7581
        %v7776 = vpop.f32.mrb[0].mxu0
        %v7777 = vadd.f32 0.0, %v7776
        %v7778 = vpop.f32.mrb[0].mxu0
        %7779 = vmatprep.mubr.f32.mxu0 0.0
        %7780 = vmatmul.mubr.f32.gmra.mrb[0].mxu0 %v7584
        %v7781 = vpop.f32.mrb[0].mxu0
        %v7782 = vadd.f32 0.0, %v7781
        %v7783 = vpop.f32.mrb[0].mxu0
        %7784 = vmatprep.mubr.f32.mxu0 0.0
        %7785 = vmatmul.mubr.f32.gmra.mrb[0].mxu0 %v7587
        %v7786 = vpop.f32.mrb[0].mxu0
        %v7787 = vadd.f32 0.0, %v7786
        %v7788 = vpop.f32.mrb[0].mxu0
        %7789 = vmatprep.mubr.f32.mxu0 0.0
        %7790 = vmatmul.mubr.f32.gmra.mrb[0].mxu0 %v7590
        %v7791 = vpop.f32.mrb[0].mxu0
        %v7792 = vadd.f32 0.0, %v7791
        %v7793 = vpop.f32.mrb[0].mxu0
        %7794 = vmatprep.mubr.f32.mxu0 0.0
        %7795 = vmatmul.mubr.f32.gmra.mrb[0].mxu0 %v7593
        %v7796 = vpop.f32.mrb[0].mxu0
        %v7797 = vadd.f32 0.0, %v7796
        %v7798 = vpop.f32.mrb[0].mxu0
        %7799 = vmatprep.mubr.f32.mxu0 0.0
        %7800 = vmatmul.mubr.f32.gmra.mrb[0].mxu0 %v7596
        %v7801 = vpop.f32.mrb[0].mxu0
        %v7802 = vadd.f32 0.0, %v7801
        %v7803 = vpop.f32.mrb[0].mxu0
        %7804 = vmatprep.mubr.f32.mxu0 0.0
        %7805 = vmatmul.mubr.f32.gmra.mrb[0].mxu0 %v7599
        %v7806 = vpop.f32.mrb[0].mxu0
        %v7807 = vadd.f32 0.0, %v7806
        %v7808 = vpop.f32.mrb[0].mxu0
        %7809 = vmatprep.mubr.f32.mxu0 0.0
        %7810 = vmatmul.mubr.f32.gmra.mrb[0].mxu0 %v7602
        %v7811 = vpop.f32.mrb[0].mxu0
        %v7812 = vadd.f32 0.0, %v7811
        %v7813 = vpop.f32.mrb[0].mxu0
        %7814 = vmatprep.mubr.f32.mxu0 0.0
        %7815 = vmatmul.mubr.f32.gmra.mrb[0].mxu0 %v7605
        %v7816 = vpop.f32.mrb[0].mxu0
        %v7817 = vadd.f32 0.0, %v7816
        %v7818 = vpop.f32.mrb[0].mxu0
        %7819 = vmatprep.mubr.f32.mxu0 0.0
        %7820 = vmatmul.mubr.f32.gmra.mrb[0].mxu0 %v7608
        %v7821 = vpop.f32.mrb[0].mxu0
        %v7822 = vadd.f32 0.0, %v7821
        %v7823 = vpop.f32.mrb[0].mxu0
        %7824 = vmatprep.mubr.f32.mxu0 0.0
        %7825 = vmatmul.mubr.f32.gmra.mrb[0].mxu0 %v7611
        %v7826 = vpop.f32.mrb[0].mxu0
        %v7827 = vadd.f32 0.0, %v7826
        %v7828 = vpop.f32.mrb[0].mxu0
        %7829 = vmatprep.mubr.f32.mxu0 0.0
        %7830 = vmatmul.mubr.f32.gmra.mrb[0].mxu0 %v7614
        %v7831 = vpop.f32.mrb[0].mxu0
        %v7832 = vadd.f32 0.0, %v7831
        %v7833 = vpop.f32.mrb[0].mxu0
        %7834 = vmatprep.mubr.f32.mxu0 0.0
        %7835 = vmatmul.mubr.f32.gmra.mrb[0].mxu0 %v7617
        %v7836 = vpop.f32.mrb[0].mxu0
        %v7837 = vadd.f32 0.0, %v7836
        %v7838 = vpop.f32.mrb[0].mxu0
        %7839 = vmatprep.mubr.f32.mxu0 0.0
        %7840 = vmatmul.mubr.f32.gmra.mrb[0].mxu0 %v7620
        %v7841 = vpop.f32.mrb[0].mxu0
        %v7842 = vadd.f32 0.0, %v7841
        %v7843 = vpop.f32.mrb[0].mxu0
        %7844 = vmatprep.mubr.f32.mxu0 0.0
        %7845 = vmatmul.mubr.f32.gmra.mrb[0].mxu0 %v7623
        %v7846 = vpop.f32.mrb[0].mxu0
        %v7847 = vadd.f32 0.0, %v7846
        %v7848 = vpop.f32.mrb[0].mxu0
        %7849 = vdwg.mxu0
        %v7850 = vadd.f32 %v6054, %v7692
        %v7851 = vadd.f32 %v6055, %v7697
        %v7852 = vadd.f32 %v6056, %v7702
        %v7853 = vadd.f32 %v6057, %v7707
        %v7854 = vadd.f32 %v6058, %v7712
        %v7855 = vadd.f32 %v6059, %v7717
        %v7856 = vadd.f32 %v6060, %v7722
        %v7857 = vadd.f32 %v6061, %v7727
        %v7858 = vadd.f32 %v6062, %v7732
        %v7859 = vadd.f32 %v6063, %v7737
        %v7860 = vadd.f32 %v6064, %v7742
        %v7861 = vadd.f32 %v6065, %v7747
        %v7862 = vadd.f32 %v6066, %v7752
        %v7863 = vadd.f32 %v6067, %v7757
        %v7864 = vadd.f32 %v6068, %v7762
        %v7865 = vadd.f32 %v6069, %v7767
        %v7866 = vadd.f32 %v6070, %v7772
        %v7867 = vadd.f32 %v6071, %v7777
        %v7868 = vadd.f32 %v6072, %v7782
        %v7869 = vadd.f32 %v6073, %v7787
        %v7870 = vadd.f32 %v6074, %v7792
        %v7871 = vadd.f32 %v6075, %v7797
        %v7872 = vadd.f32 %v6076, %v7802
        %v7873 = vadd.f32 %v6077, %v7807
        %v7874 = vadd.f32 %v6078, %v7812
        %v7875 = vadd.f32 %v6079, %v7817
        %v7876 = vadd.f32 %v6080, %v7822
        %v7877 = vadd.f32 %v6081, %v7827
        %v7878 = vadd.f32 %v6082, %v7832
        %v7879 = vadd.f32 %v6083, %v7837
        %v7880 = vadd.f32 %v6084, %v7842
        %v7881 = vadd.f32 %v6085, %v7847
        %v7882 = vld [vmem:[%s4] sm:$0x1]
        %v7884 = vlaneseq
        %v7885 = vshrl.u32 %v7884, 7
        %v7886 = vsub.s32 0, %v7885
        %v7887 = vrot.slane %v7882, %v7886
        %v7889 = vadd.f32 %v7850, %v7887
        %v7890 = vadd.f32 %v7851, %v7887
        %v7891 = vadd.f32 %v7852, %v7887
        %v7892 = vadd.f32 %v7853, %v7887
        %v7893 = vadd.f32 %v7854, %v7887
        %v7894 = vadd.f32 %v7855, %v7887
        %v7895 = vadd.f32 %v7856, %v7887
        %v7896 = vadd.f32 %v7857, %v7887
        %v7897 = vadd.f32 %v7858, %v7887
        %v7898 = vadd.f32 %v7859, %v7887
        %v7899 = vadd.f32 %v7860, %v7887
        %v7900 = vadd.f32 %v7861, %v7887
        %v7901 = vadd.f32 %v7862, %v7887
        %v7902 = vadd.f32 %v7863, %v7887
        %v7903 = vadd.f32 %v7864, %v7887
        %v7904 = vadd.f32 %v7865, %v7887
        %v7905 = vadd.f32 %v7866, %v7887
        %v7906 = vadd.f32 %v7867, %v7887
        %v7907 = vadd.f32 %v7868, %v7887
        %v7908 = vadd.f32 %v7869, %v7887
        %v7909 = vadd.f32 %v7870, %v7887
        %v7910 = vadd.f32 %v7871, %v7887
        %v7911 = vadd.f32 %v7872, %v7887
        %v7912 = vadd.f32 %v7873, %v7887
        %v7913 = vadd.f32 %v7874, %v7887
        %v7914 = vadd.f32 %v7875, %v7887
        %v7915 = vadd.f32 %v7876, %v7887
        %v7916 = vadd.f32 %v7877, %v7887
        %v7917 = vadd.f32 %v7878, %v7887
        %v7918 = vadd.f32 %v7879, %v7887
        %v7919 = vadd.f32 %v7880, %v7887
        %v7920 = vadd.f32 %v7881, %v7887
        %v7921 = vadd.f32 %v7889, %v364
        %v7922 = vadd.f32 %v7890, %v365
        %v7923 = vadd.f32 %v7891, %v366
        %v7924 = vadd.f32 %v7892, %v367
        %v7925 = vadd.f32 %v7893, %v368
        %v7926 = vadd.f32 %v7894, %v369
        %v7927 = vadd.f32 %v7895, %v370
        %v7928 = vadd.f32 %v7896, %v371
        %v7929 = vadd.f32 %v7897, %v372
        %v7930 = vadd.f32 %v7898, %v373
        %v7931 = vadd.f32 %v7899, %v374
        %v7932 = vadd.f32 %v7900, %v375
        %v7933 = vadd.f32 %v7901, %v376
        %v7934 = vadd.f32 %v7902, %v377
        %v7935 = vadd.f32 %v7903, %v378
        %v7936 = vadd.f32 %v7904, %v379
        %v7937 = vadd.f32 %v7905, %v380
        %v7938 = vadd.f32 %v7906, %v381
        %v7939 = vadd.f32 %v7907, %v382
        %v7940 = vadd.f32 %v7908, %v383
        %v7941 = vadd.f32 %v7909, %v384
        %v7942 = vadd.f32 %v7910, %v385
        %v7943 = vadd.f32 %v7911, %v386
        %v7944 = vadd.f32 %v7912, %v387
        %v7945 = vadd.f32 %v7913, %v388
        %v7946 = vadd.f32 %v7914, %v389
        %v7947 = vadd.f32 %v7915, %v390
        %v7948 = vadd.f32 %v7916, %v391
        %v7949 = vadd.f32 %v7917, %v392
        %v7950 = vadd.f32 %v7918, %v393
        %v7951 = vadd.f32 %v7919, %v394
        %v7952 = vadd.f32 %v7920, %v395
        %v7953 = vsel %vm407, %v7921, 0.0
        %7954 = vadd.xlane.f32.xlu0 %v7953
        %v7955 = vpop.xlane.xlu0 %7954
        %v7956 = vsel %vm407, %v7922, 0.0
        %7957 = vadd.xlane.f32.xlu0 %v7956
        %v7958 = vpop.xlane.xlu0 %7957
        %v7959 = vsel %vm407, %v7923, 0.0
        %7960 = vadd.xlane.f32.xlu0 %v7959
        %v7961 = vpop.xlane.xlu0 %7960
        %v7962 = vsel %vm407, %v7924, 0.0
        %7963 = vadd.xlane.f32.xlu0 %v7962
        %v7964 = vpop.xlane.xlu0 %7963
        %v7965 = vsel %vm407, %v7925, 0.0
        %7966 = vadd.xlane.f32.xlu0 %v7965
        %v7967 = vpop.xlane.xlu0 %7966
        %v7968 = vsel %vm407, %v7926, 0.0
        %7969 = vadd.xlane.f32.xlu0 %v7968
        %v7970 = vpop.xlane.xlu0 %7969
        %v7971 = vsel %vm407, %v7927, 0.0
        %7972 = vadd.xlane.f32.xlu0 %v7971
        %v7973 = vpop.xlane.xlu0 %7972
        %v7974 = vsel %vm407, %v7928, 0.0
        %7975 = vadd.xlane.f32.xlu0 %v7974
        %v7976 = vpop.xlane.xlu0 %7975
        %v7977 = vsel %vm407, %v7929, 0.0
        %7978 = vadd.xlane.f32.xlu0 %v7977
        %v7979 = vpop.xlane.xlu0 %7978
        %v7980 = vsel %vm407, %v7930, 0.0
        %7981 = vadd.xlane.f32.xlu0 %v7980
        %v7982 = vpop.xlane.xlu0 %7981
        %v7983 = vsel %vm407, %v7931, 0.0
        %7984 = vadd.xlane.f32.xlu0 %v7983
        %v7985 = vpop.xlane.xlu0 %7984
        %v7986 = vsel %vm407, %v7932, 0.0
        %7987 = vadd.xlane.f32.xlu0 %v7986
        %v7988 = vpop.xlane.xlu0 %7987
        %v7989 = vsel %vm407, %v7933, 0.0
        %7990 = vadd.xlane.f32.xlu0 %v7989
        %v7991 = vpop.xlane.xlu0 %7990
        %v7992 = vsel %vm407, %v7934, 0.0
        %7993 = vadd.xlane.f32.xlu0 %v7992
        %v7994 = vpop.xlane.xlu0 %7993
        %v7995 = vsel %vm407, %v7935, 0.0
        %7996 = vadd.xlane.f32.xlu0 %v7995
        %v7997 = vpop.xlane.xlu0 %7996
        %v7998 = vsel %vm407, %v7936, 0.0
        %7999 = vadd.xlane.f32.xlu0 %v7998
        %v8000 = vpop.xlane.xlu0 %7999
        %v8001 = vsel %vm407, %v7937, 0.0
        %8002 = vadd.xlane.f32.xlu0 %v8001
        %v8003 = vpop.xlane.xlu0 %8002
        %v8004 = vsel %vm407, %v7938, 0.0
        %8005 = vadd.xlane.f32.xlu0 %v8004
        %v8006 = vpop.xlane.xlu0 %8005
        %v8007 = vsel %vm407, %v7939, 0.0
        %8008 = vadd.xlane.f32.xlu0 %v8007
        %v8009 = vpop.xlane.xlu0 %8008
        %v8010 = vsel %vm407, %v7940, 0.0
        %8011 = vadd.xlane.f32.xlu0 %v8010
        %v8012 = vpop.xlane.xlu0 %8011
        %v8013 = vsel %vm407, %v7941, 0.0
        %8014 = vadd.xlane.f32.xlu0 %v8013
        %v8015 = vpop.xlane.xlu0 %8014
        %v8016 = vsel %vm407, %v7942, 0.0
        %8017 = vadd.xlane.f32.xlu0 %v8016
        %v8018 = vpop.xlane.xlu0 %8017
        %v8019 = vsel %vm407, %v7943, 0.0
        %8020 = vadd.xlane.f32.xlu0 %v8019
        %v8021 = vpop.xlane.xlu0 %8020
        %v8022 = vsel %vm407, %v7944, 0.0
        %8023 = vadd.xlane.f32.xlu0 %v8022
        %v8024 = vpop.xlane.xlu0 %8023
        %v8025 = vsel %vm407, %v7945, 0.0
        %8026 = vadd.xlane.f32.xlu0 %v8025
        %v8027 = vpop.xlane.xlu0 %8026
        %v8028 = vsel %vm407, %v7946, 0.0
        %8029 = vadd.xlane.f32.xlu0 %v8028
        %v8030 = vpop.xlane.xlu0 %8029
        %v8031 = vsel %vm407, %v7947, 0.0
        %8032 = vadd.xlane.f32.xlu0 %v8031
        %v8033 = vpop.xlane.xlu0 %8032
        %v8034 = vsel %vm407, %v7948, 0.0
        %8035 = vadd.xlane.f32.xlu0 %v8034
        %v8036 = vpop.xlane.xlu0 %8035
        %v8037 = vsel %vm407, %v7949, 0.0
        %8038 = vadd.xlane.f32.xlu0 %v8037
        %v8039 = vpop.xlane.xlu0 %8038
        %v8040 = vsel %vm407, %v7950, 0.0
        %8041 = vadd.xlane.f32.xlu0 %v8040
        %v8042 = vpop.xlane.xlu0 %8041
        %v8043 = vsel %vm407, %v7951, 0.0
        %8044 = vadd.xlane.f32.xlu0 %v8043
        %v8045 = vpop.xlane.xlu0 %8044
        %v8046 = vsel %vm407, %v7952, 0.0
        %8047 = vadd.xlane.f32.xlu0 %v8046
        %v8048 = vpop.xlane.xlu0 %8047
        %v8049 = vrcp.pop 32.0
        %v8050 = vmul.f32 %v7955, %v8049
        %v8051 = vmul.f32 %v7958, %v8049
        %v8052 = vmul.f32 %v7961, %v8049
        %v8053 = vmul.f32 %v7964, %v8049
        %v8054 = vmul.f32 %v7967, %v8049
        %v8055 = vmul.f32 %v7970, %v8049
        %v8056 = vmul.f32 %v7973, %v8049
        %v8057 = vmul.f32 %v7976, %v8049
        %v8058 = vmul.f32 %v7979, %v8049
        %v8059 = vmul.f32 %v7982, %v8049
        %v8060 = vmul.f32 %v7985, %v8049
        %v8061 = vmul.f32 %v7988, %v8049
        %v8062 = vmul.f32 %v7991, %v8049
        %v8063 = vmul.f32 %v7994, %v8049
        %v8064 = vmul.f32 %v7997, %v8049
        %v8065 = vmul.f32 %v8000, %v8049
        %v8066 = vmul.f32 %v8003, %v8049
        %v8067 = vmul.f32 %v8006, %v8049
        %v8068 = vmul.f32 %v8009, %v8049
        %v8069 = vmul.f32 %v8012, %v8049
        %v8070 = vmul.f32 %v8015, %v8049
        %v8071 = vmul.f32 %v8018, %v8049
        %v8072 = vmul.f32 %v8021, %v8049
        %v8073 = vmul.f32 %v8024, %v8049
        %v8074 = vmul.f32 %v8027, %v8049
        %v8075 = vmul.f32 %v8030, %v8049
        %v8076 = vmul.f32 %v8033, %v8049
        %v8077 = vmul.f32 %v8036, %v8049
        %v8078 = vmul.f32 %v8039, %v8049
        %v8079 = vmul.f32 %v8042, %v8049
        %v8080 = vmul.f32 %v8045, %v8049
        %v8081 = vmul.f32 %v8048, %v8049
        %v8082 = vsub.f32 %v7921, %v8050
        %v8083 = vsub.f32 %v7922, %v8051
        %v8084 = vsub.f32 %v7923, %v8052
        %v8085 = vsub.f32 %v7924, %v8053
        %v8086 = vsub.f32 %v7925, %v8054
        %v8087 = vsub.f32 %v7926, %v8055
        %v8088 = vsub.f32 %v7927, %v8056
        %v8089 = vsub.f32 %v7928, %v8057
        %v8090 = vsub.f32 %v7929, %v8058
        %v8091 = vsub.f32 %v7930, %v8059
        %v8092 = vsub.f32 %v7931, %v8060
        %v8093 = vsub.f32 %v7932, %v8061
        %v8094 = vsub.f32 %v7933, %v8062
        %v8095 = vsub.f32 %v7934, %v8063
        %v8096 = vsub.f32 %v7935, %v8064
        %v8097 = vsub.f32 %v7936, %v8065
        %v8098 = vsub.f32 %v7937, %v8066
        %v8099 = vsub.f32 %v7938, %v8067
        %v8100 = vsub.f32 %v7939, %v8068
        %v8101 = vsub.f32 %v7940, %v8069
        %v8102 = vsub.f32 %v7941, %v8070
        %v8103 = vsub.f32 %v7942, %v8071
        %v8104 = vsub.f32 %v7943, %v8072
        %v8105 = vsub.f32 %v7944, %v8073
        %v8106 = vsub.f32 %v7945, %v8074
        %v8107 = vsub.f32 %v7946, %v8075
        %v8108 = vsub.f32 %v7947, %v8076
        %v8109 = vsub.f32 %v7948, %v8077
        %v8110 = vsub.f32 %v7949, %v8078
        %v8111 = vsub.f32 %v7950, %v8079
        %v8112 = vsub.f32 %v7951, %v8080
        %v8113 = vsub.f32 %v7952, %v8081
        %v8114 = vmul.f32 %v8082, %v8082
        %v8115 = vmul.f32 %v8083, %v8083
        %v8116 = vmul.f32 %v8084, %v8084
        %v8117 = vmul.f32 %v8085, %v8085
        %v8118 = vmul.f32 %v8086, %v8086
        %v8119 = vmul.f32 %v8087, %v8087
        %v8120 = vmul.f32 %v8088, %v8088
        %v8121 = vmul.f32 %v8089, %v8089
        %v8122 = vmul.f32 %v8090, %v8090
        %v8123 = vmul.f32 %v8091, %v8091
        %v8124 = vmul.f32 %v8092, %v8092
        %v8125 = vmul.f32 %v8093, %v8093
        %v8126 = vmul.f32 %v8094, %v8094
        %v8127 = vmul.f32 %v8095, %v8095
        %v8128 = vmul.f32 %v8096, %v8096
        %v8129 = vmul.f32 %v8097, %v8097
        %v8130 = vmul.f32 %v8098, %v8098
        %v8131 = vmul.f32 %v8099, %v8099
        %v8132 = vmul.f32 %v8100, %v8100
        %v8133 = vmul.f32 %v8101, %v8101
        %v8134 = vmul.f32 %v8102, %v8102
        %v8135 = vmul.f32 %v8103, %v8103
        %v8136 = vmul.f32 %v8104, %v8104
        %v8137 = vmul.f32 %v8105, %v8105
        %v8138 = vmul.f32 %v8106, %v8106
        %v8139 = vmul.f32 %v8107, %v8107
        %v8140 = vmul.f32 %v8108, %v8108
        %v8141 = vmul.f32 %v8109, %v8109
        %v8142 = vmul.f32 %v8110, %v8110
        %v8143 = vmul.f32 %v8111, %v8111
        %v8144 = vmul.f32 %v8112, %v8112
        %v8145 = vmul.f32 %v8113, %v8113
        %v8146 = vsel %vm407, %v8114, 0.0
        %8147 = vadd.xlane.f32.xlu0 %v8146
        %v8148 = vpop.xlane.xlu0 %8147
        %v8149 = vsel %vm407, %v8115, 0.0
        %8150 = vadd.xlane.f32.xlu0 %v8149
        %v8151 = vpop.xlane.xlu0 %8150
        %v8152 = vsel %vm407, %v8116, 0.0
        %8153 = vadd.xlane.f32.xlu0 %v8152
        %v8154 = vpop.xlane.xlu0 %8153
        %v8155 = vsel %vm407, %v8117, 0.0
        %8156 = vadd.xlane.f32.xlu0 %v8155
        %v8157 = vpop.xlane.xlu0 %8156
        %v8158 = vsel %vm407, %v8118, 0.0
        %8159 = vadd.xlane.f32.xlu0 %v8158
        %v8160 = vpop.xlane.xlu0 %8159
        %v8161 = vsel %vm407, %v8119, 0.0
        %8162 = vadd.xlane.f32.xlu0 %v8161
        %v8163 = vpop.xlane.xlu0 %8162
        %v8164 = vsel %vm407, %v8120, 0.0
        %8165 = vadd.xlane.f32.xlu0 %v8164
        %v8166 = vpop.xlane.xlu0 %8165
        %v8167 = vsel %vm407, %v8121, 0.0
        %8168 = vadd.xlane.f32.xlu0 %v8167
        %v8169 = vpop.xlane.xlu0 %8168
        %v8170 = vsel %vm407, %v8122, 0.0
        %8171 = vadd.xlane.f32.xlu0 %v8170
        %v8172 = vpop.xlane.xlu0 %8171
        %v8173 = vsel %vm407, %v8123, 0.0
        %8174 = vadd.xlane.f32.xlu0 %v8173
        %v8175 = vpop.xlane.xlu0 %8174
        %v8176 = vsel %vm407, %v8124, 0.0
        %8177 = vadd.xlane.f32.xlu0 %v8176
        %v8178 = vpop.xlane.xlu0 %8177
        %v8179 = vsel %vm407, %v8125, 0.0
        %8180 = vadd.xlane.f32.xlu0 %v8179
        %v8181 = vpop.xlane.xlu0 %8180
        %v8182 = vsel %vm407, %v8126, 0.0
        %8183 = vadd.xlane.f32.xlu0 %v8182
        %v8184 = vpop.xlane.xlu0 %8183
        %v8185 = vsel %vm407, %v8127, 0.0
        %8186 = vadd.xlane.f32.xlu0 %v8185
        %v8187 = vpop.xlane.xlu0 %8186
        %v8188 = vsel %vm407, %v8128, 0.0
        %8189 = vadd.xlane.f32.xlu0 %v8188
        %v8190 = vpop.xlane.xlu0 %8189
        %v8191 = vsel %vm407, %v8129, 0.0
        %8192 = vadd.xlane.f32.xlu0 %v8191
        %v8193 = vpop.xlane.xlu0 %8192
        %v8194 = vsel %vm407, %v8130, 0.0
        %8195 = vadd.xlane.f32.xlu0 %v8194
        %v8196 = vpop.xlane.xlu0 %8195
        %v8197 = vsel %vm407, %v8131, 0.0
        %8198 = vadd.xlane.f32.xlu0 %v8197
        %v8199 = vpop.xlane.xlu0 %8198
        %v8200 = vsel %vm407, %v8132, 0.0
        %8201 = vadd.xlane.f32.xlu0 %v8200
        %v8202 = vpop.xlane.xlu0 %8201
        %v8203 = vsel %vm407, %v8133, 0.0
        %8204 = vadd.xlane.f32.xlu0 %v8203
        %v8205 = vpop.xlane.xlu0 %8204
        %v8206 = vsel %vm407, %v8134, 0.0
        %8207 = vadd.xlane.f32.xlu0 %v8206
        %v8208 = vpop.xlane.xlu0 %8207
        %v8209 = vsel %vm407, %v8135, 0.0
        %8210 = vadd.xlane.f32.xlu0 %v8209
        %v8211 = vpop.xlane.xlu0 %8210
        %v8212 = vsel %vm407, %v8136, 0.0
        %8213 = vadd.xlane.f32.xlu0 %v8212
        %v8214 = vpop.xlane.xlu0 %8213
        %v8215 = vsel %vm407, %v8137, 0.0
        %8216 = vadd.xlane.f32.xlu0 %v8215
        %v8217 = vpop.xlane.xlu0 %8216
        %v8218 = vsel %vm407, %v8138, 0.0
        %8219 = vadd.xlane.f32.xlu0 %v8218
        %v8220 = vpop.xlane.xlu0 %8219
        %v8221 = vsel %vm407, %v8139, 0.0
        %8222 = vadd.xlane.f32.xlu0 %v8221
        %v8223 = vpop.xlane.xlu0 %8222
        %v8224 = vsel %vm407, %v8140, 0.0
        %8225 = vadd.xlane.f32.xlu0 %v8224
        %v8226 = vpop.xlane.xlu0 %8225
        %v8227 = vsel %vm407, %v8141, 0.0
        %8228 = vadd.xlane.f32.xlu0 %v8227
        %v8229 = vpop.xlane.xlu0 %8228
        %v8230 = vsel %vm407, %v8142, 0.0
        %8231 = vadd.xlane.f32.xlu0 %v8230
        %v8232 = vpop.xlane.xlu0 %8231
        %v8233 = vsel %vm407, %v8143, 0.0
        %8234 = vadd.xlane.f32.xlu0 %v8233
        %v8235 = vpop.xlane.xlu0 %8234
        %v8236 = vsel %vm407, %v8144, 0.0
        %8237 = vadd.xlane.f32.xlu0 %v8236
        %v8238 = vpop.xlane.xlu0 %8237
        %v8239 = vsel %vm407, %v8145, 0.0
        %8240 = vadd.xlane.f32.xlu0 %v8239
        %v8241 = vpop.xlane.xlu0 %8240
        %v8242 = vmul.f32 %v8148, %v8049
        %v8243 = vmul.f32 %v8151, %v8049
        %v8244 = vmul.f32 %v8154, %v8049
        %v8245 = vmul.f32 %v8157, %v8049
        %v8246 = vmul.f32 %v8160, %v8049
        %v8247 = vmul.f32 %v8163, %v8049
        %v8248 = vmul.f32 %v8166, %v8049
        %v8249 = vmul.f32 %v8169, %v8049
        %v8250 = vmul.f32 %v8172, %v8049
        %v8251 = vmul.f32 %v8175, %v8049
        %v8252 = vmul.f32 %v8178, %v8049
        %v8253 = vmul.f32 %v8181, %v8049
        %v8254 = vmul.f32 %v8184, %v8049
        %v8255 = vmul.f32 %v8187, %v8049
        %v8256 = vmul.f32 %v8190, %v8049
        %v8257 = vmul.f32 %v8193, %v8049
        %v8258 = vmul.f32 %v8196, %v8049
        %v8259 = vmul.f32 %v8199, %v8049
        %v8260 = vmul.f32 %v8202, %v8049
        %v8261 = vmul.f32 %v8205, %v8049
        %v8262 = vmul.f32 %v8208, %v8049
        %v8263 = vmul.f32 %v8211, %v8049
        %v8264 = vmul.f32 %v8214, %v8049
        %v8265 = vmul.f32 %v8217, %v8049
        %v8266 = vmul.f32 %v8220, %v8049
        %v8267 = vmul.f32 %v8223, %v8049
        %v8268 = vmul.f32 %v8226, %v8049
        %v8269 = vmul.f32 %v8229, %v8049
        %v8270 = vmul.f32 %v8232, %v8049
        %v8271 = vmul.f32 %v8235, %v8049
        %v8272 = vmul.f32 %v8238, %v8049
        %v8273 = vmul.f32 %v8241, %v8049
        %v8274 = vadd.f32 %v8242, 1e-05
        %v8275 = vadd.f32 %v8243, 1e-05
        %v8276 = vadd.f32 %v8244, 1e-05
        %v8277 = vadd.f32 %v8245, 1e-05
        %v8278 = vadd.f32 %v8246, 1e-05
        %v8279 = vadd.f32 %v8247, 1e-05
        %v8280 = vadd.f32 %v8248, 1e-05
        %v8281 = vadd.f32 %v8249, 1e-05
        %v8282 = vadd.f32 %v8250, 1e-05
        %v8283 = vadd.f32 %v8251, 1e-05
        %v8284 = vadd.f32 %v8252, 1e-05
        %v8285 = vadd.f32 %v8253, 1e-05
        %v8286 = vadd.f32 %v8254, 1e-05
        %v8287 = vadd.f32 %v8255, 1e-05
        %v8288 = vadd.f32 %v8256, 1e-05
        %v8289 = vadd.f32 %v8257, 1e-05
        %v8290 = vadd.f32 %v8258, 1e-05
        %v8291 = vadd.f32 %v8259, 1e-05
        %v8292 = vadd.f32 %v8260, 1e-05
        %v8293 = vadd.f32 %v8261, 1e-05
        %v8294 = vadd.f32 %v8262, 1e-05
        %v8295 = vadd.f32 %v8263, 1e-05
        %v8296 = vadd.f32 %v8264, 1e-05
        %v8297 = vadd.f32 %v8265, 1e-05
        %v8298 = vadd.f32 %v8266, 1e-05
        %v8299 = vadd.f32 %v8267, 1e-05
        %v8300 = vadd.f32 %v8268, 1e-05
        %v8301 = vadd.f32 %v8269, 1e-05
        %v8302 = vadd.f32 %v8270, 1e-05
        %v8303 = vadd.f32 %v8271, 1e-05
        %v8304 = vadd.f32 %v8272, 1e-05
        %v8305 = vadd.f32 %v8273, 1e-05
        %v8306 = vrsqrt.pop %v8274
        %v8307 = vrsqrt.pop %v8275
        %v8308 = vrsqrt.pop %v8276
        %v8309 = vrsqrt.pop %v8277
        %v8310 = vrsqrt.pop %v8278
        %v8311 = vrsqrt.pop %v8279
        %v8312 = vrsqrt.pop %v8280
        %v8313 = vrsqrt.pop %v8281
        %v8314 = vrsqrt.pop %v8282
        %v8315 = vrsqrt.pop %v8283
        %v8316 = vrsqrt.pop %v8284
        %v8317 = vrsqrt.pop %v8285
        %v8318 = vrsqrt.pop %v8286
        %v8319 = vrsqrt.pop %v8287
        %v8320 = vrsqrt.pop %v8288
        %v8321 = vrsqrt.pop %v8289
        %v8322 = vrsqrt.pop %v8290
        %v8323 = vrsqrt.pop %v8291
        %v8324 = vrsqrt.pop %v8292
        %v8325 = vrsqrt.pop %v8293
        %v8326 = vrsqrt.pop %v8294
        %v8327 = vrsqrt.pop %v8295
        %v8328 = vrsqrt.pop %v8296
        %v8329 = vrsqrt.pop %v8297
        %v8330 = vrsqrt.pop %v8298
        %v8331 = vrsqrt.pop %v8299
        %v8332 = vrsqrt.pop %v8300
        %v8333 = vrsqrt.pop %v8301
        %v8334 = vrsqrt.pop %v8302
        %v8335 = vrsqrt.pop %v8303
        %v8336 = vrsqrt.pop %v8304
        %v8337 = vrsqrt.pop %v8305
        %v8338 = vmul.f32 %v8082, %v8306
        %v8339 = vmul.f32 %v8083, %v8307
        %v8340 = vmul.f32 %v8084, %v8308
        %v8341 = vmul.f32 %v8085, %v8309
        %v8342 = vmul.f32 %v8086, %v8310
        %v8343 = vmul.f32 %v8087, %v8311
        %v8344 = vmul.f32 %v8088, %v8312
        %v8345 = vmul.f32 %v8089, %v8313
        %v8346 = vmul.f32 %v8090, %v8314
        %v8347 = vmul.f32 %v8091, %v8315
        %v8348 = vmul.f32 %v8092, %v8316
        %v8349 = vmul.f32 %v8093, %v8317
        %v8350 = vmul.f32 %v8094, %v8318
        %v8351 = vmul.f32 %v8095, %v8319
        %v8352 = vmul.f32 %v8096, %v8320
        %v8353 = vmul.f32 %v8097, %v8321
        %v8354 = vmul.f32 %v8098, %v8322
        %v8355 = vmul.f32 %v8099, %v8323
        %v8356 = vmul.f32 %v8100, %v8324
        %v8357 = vmul.f32 %v8101, %v8325
        %v8358 = vmul.f32 %v8102, %v8326
        %v8359 = vmul.f32 %v8103, %v8327
        %v8360 = vmul.f32 %v8104, %v8328
        %v8361 = vmul.f32 %v8105, %v8329
        %v8362 = vmul.f32 %v8106, %v8330
        %v8363 = vmul.f32 %v8107, %v8331
        %v8364 = vmul.f32 %v8108, %v8332
        %v8365 = vmul.f32 %v8109, %v8333
        %v8366 = vmul.f32 %v8110, %v8334
        %v8367 = vmul.f32 %v8111, %v8335
        %v8368 = vmul.f32 %v8112, %v8336
        %v8369 = vmul.f32 %v8113, %v8337
        %v8370 = vld [vmem:[%s5] sm:$0x1]
        %v8372 = vlaneseq
        %v8373 = vshrl.u32 %v8372, 7
        %v8374 = vsub.s32 0, %v8373
        %v8375 = vrot.slane %v8370, %v8374
        %v8377 = vmul.f32 %v8338, %v8375
        %v8378 = vmul.f32 %v8339, %v8375
        %v8379 = vmul.f32 %v8340, %v8375
        %v8380 = vmul.f32 %v8341, %v8375
        %v8381 = vmul.f32 %v8342, %v8375
        %v8382 = vmul.f32 %v8343, %v8375
        %v8383 = vmul.f32 %v8344, %v8375
        %v8384 = vmul.f32 %v8345, %v8375
        %v8385 = vmul.f32 %v8346, %v8375
        %v8386 = vmul.f32 %v8347, %v8375
        %v8387 = vmul.f32 %v8348, %v8375
        %v8388 = vmul.f32 %v8349, %v8375
        %v8389 = vmul.f32 %v8350, %v8375
        %v8390 = vmul.f32 %v8351, %v8375
        %v8391 = vmul.f32 %v8352, %v8375
        %v8392 = vmul.f32 %v8353, %v8375
        %v8393 = vmul.f32 %v8354, %v8375
        %v8394 = vmul.f32 %v8355, %v8375
        %v8395 = vmul.f32 %v8356, %v8375
        %v8396 = vmul.f32 %v8357, %v8375
        %v8397 = vmul.f32 %v8358, %v8375
        %v8398 = vmul.f32 %v8359, %v8375
        %v8399 = vmul.f32 %v8360, %v8375
        %v8400 = vmul.f32 %v8361, %v8375
        %v8401 = vmul.f32 %v8362, %v8375
        %v8402 = vmul.f32 %v8363, %v8375
        %v8403 = vmul.f32 %v8364, %v8375
        %v8404 = vmul.f32 %v8365, %v8375
        %v8405 = vmul.f32 %v8366, %v8375
        %v8406 = vmul.f32 %v8367, %v8375
        %v8407 = vmul.f32 %v8368, %v8375
        %v8408 = vmul.f32 %v8369, %v8375
        %v8409 = vld [vmem:[%s6] sm:$0x1]
        %v8411 = vlaneseq
        %v8412 = vshrl.u32 %v8411, 7
        %v8413 = vsub.s32 0, %v8412
        %v8414 = vrot.slane %v8409, %v8413
        %v8416 = vadd.f32 %v8377, %v8414
        %v8417 = vadd.f32 %v8378, %v8414
        %v8418 = vadd.f32 %v8379, %v8414
        %v8419 = vadd.f32 %v8380, %v8414
        %v8420 = vadd.f32 %v8381, %v8414
        %v8421 = vadd.f32 %v8382, %v8414
        %v8422 = vadd.f32 %v8383, %v8414
        %v8423 = vadd.f32 %v8384, %v8414
        %v8424 = vadd.f32 %v8385, %v8414
        %v8425 = vadd.f32 %v8386, %v8414
        %v8426 = vadd.f32 %v8387, %v8414
        %v8427 = vadd.f32 %v8388, %v8414
        %v8428 = vadd.f32 %v8389, %v8414
        %v8429 = vadd.f32 %v8390, %v8414
        %v8430 = vadd.f32 %v8391, %v8414
        %v8431 = vadd.f32 %v8392, %v8414
        %v8432 = vadd.f32 %v8393, %v8414
        %v8433 = vadd.f32 %v8394, %v8414
        %v8434 = vadd.f32 %v8395, %v8414
        %v8435 = vadd.f32 %v8396, %v8414
        %v8436 = vadd.f32 %v8397, %v8414
        %v8437 = vadd.f32 %v8398, %v8414
        %v8438 = vadd.f32 %v8399, %v8414
        %v8439 = vadd.f32 %v8400, %v8414
        %v8440 = vadd.f32 %v8401, %v8414
        %v8441 = vadd.f32 %v8402, %v8414
        %v8442 = vadd.f32 %v8403, %v8414
        %v8443 = vadd.f32 %v8404, %v8414
        %v8444 = vadd.f32 %v8405, %v8414
        %v8445 = vadd.f32 %v8406, %v8414
        %v8446 = vadd.f32 %v8407, %v8414
        %v8447 = vadd.f32 %v8408, %v8414
        %v8448 = vld [vmem:[%s8] sm:$0xff]
        %v8449 = vld [vmem:[%s8 + $0x8] sm:$0xff]
        %v8450 = vld [vmem:[%s8 + $0x10] sm:$0xff]
        %v8451 = vld [vmem:[%s8 + $0x18] sm:$0xff]
        %8452 = vmatprep.subr.mxu0 0.0
        %8453 = vmatpush1.msra.mxu0 %v8416
        %8454 = vmatprep.subr.mxu0 0.0
        %8455 = vmatpush1.msra.mxu0 %v8417
        %8456 = vmatprep.subr.mxu0 0.0
        %8457 = vmatpush1.msra.mxu0 %v8418
        %8458 = vmatprep.subr.mxu0 0.0
        %8459 = vmatpush1.msra.mxu0 %v8419
        %8460 = vmatprep.subr.mxu0 0.0
        %8461 = vmatpush1.msra.mxu0 %v8420
        %8462 = vmatprep.subr.mxu0 0.0
        %8463 = vmatpush1.msra.mxu0 %v8421
        %8464 = vmatprep.subr.mxu0 0.0
        %8465 = vmatpush1.msra.mxu0 %v8422
        %8466 = vmatprep.subr.mxu0 0.0
        %8467 = vmatpush1.msra.mxu0 %v8423
        %8468 = vmatprep.subr.mxu0 0.0
        %8469 = vmatpush1.msra.mxu0 %v8424
        %8470 = vmatprep.subr.mxu0 0.0
        %8471 = vmatpush1.msra.mxu0 %v8425
        %8472 = vmatprep.subr.mxu0 0.0
        %8473 = vmatpush1.msra.mxu0 %v8426
        %8474 = vmatprep.subr.mxu0 0.0
        %8475 = vmatpush1.msra.mxu0 %v8427
        %8476 = vmatprep.subr.mxu0 0.0
        %8477 = vmatpush1.msra.mxu0 %v8428
        %8478 = vmatprep.subr.mxu0 0.0
        %8479 = vmatpush1.msra.mxu0 %v8429
        %8480 = vmatprep.subr.mxu0 0.0
        %8481 = vmatpush1.msra.mxu0 %v8430
        %8482 = vmatprep.subr.mxu0 0.0
        %8483 = vmatpush1.msra.mxu0 %v8431
        %8484 = vmatprep.subr.mxu0 0.0
        %8485 = vmatpush1.msra.mxu0 %v8432
        %8486 = vmatprep.subr.mxu0 0.0
        %8487 = vmatpush1.msra.mxu0 %v8433
        %8488 = vmatprep.subr.mxu0 0.0
        %8489 = vmatpush1.msra.mxu0 %v8434
        %8490 = vmatprep.subr.mxu0 0.0
        %8491 = vmatpush1.msra.mxu0 %v8435
        %8492 = vmatprep.subr.mxu0 0.0
        %8493 = vmatpush1.msra.mxu0 %v8436
        %8494 = vmatprep.subr.mxu0 0.0
        %8495 = vmatpush1.msra.mxu0 %v8437
        %8496 = vmatprep.subr.mxu0 0.0
        %8497 = vmatpush1.msra.mxu0 %v8438
        %8498 = vmatprep.subr.mxu0 0.0
        %8499 = vmatpush1.msra.mxu0 %v8439
        %8500 = vmatprep.subr.mxu0 0.0
        %8501 = vmatpush1.msra.mxu0 %v8440
        %8502 = vmatprep.subr.mxu0 0.0
        %8503 = vmatpush1.msra.mxu0 %v8441
        %8504 = vmatprep.subr.mxu0 0.0
        %8505 = vmatpush1.msra.mxu0 %v8442
        %8506 = vmatprep.subr.mxu0 0.0
        %8507 = vmatpush1.msra.mxu0 %v8443
        %8508 = vmatprep.subr.mxu0 0.0
        %8509 = vmatpush1.msra.mxu0 %v8444
        %8510 = vmatprep.subr.mxu0 0.0
        %8511 = vmatpush1.msra.mxu0 %v8445
        %8512 = vmatprep.subr.mxu0 0.0
        %8513 = vmatpush1.msra.mxu0 %v8446
        %8514 = vmatprep.subr.mxu0 0.0
        %8515 = vmatpush1.msra.mxu0 %v8447
        %8516 = vmatprep.mubr.f32.mxu0 %v8449
        %8517 = vmatmul.mubr.f32.gmra.mrb[0].mxu0 %v8448
        %v8518 = vpop.f32.mrb[0].mxu0
        %v8519 = vadd.f32 0.0, %v8518
        %v8520 = vpop.f32.mrb[0].mxu0
        %8521 = vmatprep.mubr.f32.mxu0 %v8451
        %8522 = vmatmul.mubr.f32.gmra.mrb[0].mxu0 %v8450
        %v8523 = vpop.f32.mrb[0].mxu0
        %v8524 = vadd.f32 0.0, %v8523
        %v8525 = vpop.f32.mrb[0].mxu0
        %8526 = vdwg.mxu0
        %s8527 = scalar_lea.vmem %s8, 32
        %v8528 = vld [vmem:[%s8527] sm:$0xff]
        %v8529 = vld [vmem:[%s8527 + $0x8] sm:$0xff]
        %v8530 = vld [vmem:[%s8527 + $0x10] sm:$0xff]
        %v8531 = vld [vmem:[%s8527 + $0x18] sm:$0xff]
        %8532 = vmatprep.subr.mxu0 0.0
        %8533 = vmatpush1.msra.mxu0 %v8416
        %8534 = vmatprep.subr.mxu0 0.0
        %8535 = vmatpush1.msra.mxu0 %v8417
        %8536 = vmatprep.subr.mxu0 0.0
        %8537 = vmatpush1.msra.mxu0 %v8418
        %8538 = vmatprep.subr.mxu0 0.0
        %8539 = vmatpush1.msra.mxu0 %v8419
        %8540 = vmatprep.subr.mxu0 0.0
        %8541 = vmatpush1.msra.mxu0 %v8420
        %8542 = vmatprep.subr.mxu0 0.0
        %8543 = vmatpush1.msra.mxu0 %v8421
        %8544 = vmatprep.subr.mxu0 0.0
        %8545 = vmatpush1.msra.mxu0 %v8422
        %8546 = vmatprep.subr.mxu0 0.0
        %8547 = vmatpush1.msra.mxu0 %v8423
        %8548 = vmatprep.subr.mxu0 0.0
        %8549 = vmatpush1.msra.mxu0 %v8424
        %8550 = vmatprep.subr.mxu0 0.0
        %8551 = vmatpush1.msra.mxu0 %v8425
        %8552 = vmatprep.subr.mxu0 0.0
        %8553 = vmatpush1.msra.mxu0 %v8426
        %8554 = vmatprep.subr.mxu0 0.0
        %8555 = vmatpush1.msra.mxu0 %v8427
        %8556 = vmatprep.subr.mxu0 0.0
        %8557 = vmatpush1.msra.mxu0 %v8428
        %8558 = vmatprep.subr.mxu0 0.0
        %8559 = vmatpush1.msra.mxu0 %v8429
        %8560 = vmatprep.subr.mxu0 0.0
        %8561 = vmatpush1.msra.mxu0 %v8430
        %8562 = vmatprep.subr.mxu0 0.0
        %8563 = vmatpush1.msra.mxu0 %v8431
        %8564 = vmatprep.subr.mxu0 0.0
        %8565 = vmatpush1.msra.mxu0 %v8432
        %8566 = vmatprep.subr.mxu0 0.0
        %8567 = vmatpush1.msra.mxu0 %v8433
        %8568 = vmatprep.subr.mxu0 0.0
        %8569 = vmatpush1.msra.mxu0 %v8434
        %8570 = vmatprep.subr.mxu0 0.0
        %8571 = vmatpush1.msra.mxu0 %v8435
        %8572 = vmatprep.subr.mxu0 0.0
        %8573 = vmatpush1.msra.mxu0 %v8436
        %8574 = vmatprep.subr.mxu0 0.0
        %8575 = vmatpush1.msra.mxu0 %v8437
        %8576 = vmatprep.subr.mxu0 0.0
        %8577 = vmatpush1.msra.mxu0 %v8438
        %8578 = vmatprep.subr.mxu0 0.0
        %8579 = vmatpush1.msra.mxu0 %v8439
        %8580 = vmatprep.subr.mxu0 0.0
        %8581 = vmatpush1.msra.mxu0 %v8440
        %8582 = vmatprep.subr.mxu0 0.0
        %8583 = vmatpush1.msra.mxu0 %v8441
        %8584 = vmatprep.subr.mxu0 0.0
        %8585 = vmatpush1.msra.mxu0 %v8442
        %8586 = vmatprep.subr.mxu0 0.0
        %8587 = vmatpush1.msra.mxu0 %v8443
        %8588 = vmatprep.subr.mxu0 0.0
        %8589 = vmatpush1.msra.mxu0 %v8444
        %8590 = vmatprep.subr.mxu0 0.0
        %8591 = vmatpush1.msra.mxu0 %v8445
        %8592 = vmatprep.subr.mxu0 0.0
        %8593 = vmatpush1.msra.mxu0 %v8446
        %8594 = vmatprep.subr.mxu0 0.0
        %8595 = vmatpush1.msra.mxu0 %v8447
        %8596 = vmatprep.mubr.f32.mxu0 %v8529
        %8597 = vmatmul.mubr.f32.gmra.mrb[0].mxu0 %v8528
        %v8598 = vpop.f32.mrb[0].mxu0
        %v8599 = vadd.f32 0.0, %v8598
        %v8600 = vpop.f32.mrb[0].mxu0
        %8601 = vmatprep.mubr.f32.mxu0 %v8531
        %8602 = vmatmul.mubr.f32.gmra.mrb[0].mxu0 %v8530
        %v8603 = vpop.f32.mrb[0].mxu0
        %v8604 = vadd.f32 0.0, %v8603
        %v8605 = vpop.f32.mrb[0].mxu0
        %8606 = vdwg.mxu0
        %s8607 = scalar_lea.vmem %s8, 64
        %v8608 = vld [vmem:[%s8607] sm:$0xff]
        %v8609 = vld [vmem:[%s8607 + $0x8] sm:$0xff]
        %v8610 = vld [vmem:[%s8607 + $0x10] sm:$0xff]
        %v8611 = vld [vmem:[%s8607 + $0x18] sm:$0xff]
        %8612 = vmatprep.subr.mxu0 0.0
        %8613 = vmatpush1.msra.mxu0 %v8416
        %8614 = vmatprep.subr.mxu0 0.0
        %8615 = vmatpush1.msra.mxu0 %v8417
        %8616 = vmatprep.subr.mxu0 0.0
        %8617 = vmatpush1.msra.mxu0 %v8418
        %8618 = vmatprep.subr.mxu0 0.0
        %8619 = vmatpush1.msra.mxu0 %v8419
        %8620 = vmatprep.subr.mxu0 0.0
        %8621 = vmatpush1.msra.mxu0 %v8420
        %8622 = vmatprep.subr.mxu0 0.0
        %8623 = vmatpush1.msra.mxu0 %v8421
        %8624 = vmatprep.subr.mxu0 0.0
        %8625 = vmatpush1.msra.mxu0 %v8422
        %8626 = vmatprep.subr.mxu0 0.0
        %8627 = vmatpush1.msra.mxu0 %v8423
        %8628 = vmatprep.subr.mxu0 0.0
        %8629 = vmatpush1.msra.mxu0 %v8424
        %8630 = vmatprep.subr.mxu0 0.0
        %8631 = vmatpush1.msra.mxu0 %v8425
        %8632 = vmatprep.subr.mxu0 0.0
        %8633 = vmatpush1.msra.mxu0 %v8426
        %8634 = vmatprep.subr.mxu0 0.0
        %8635 = vmatpush1.msra.mxu0 %v8427
        %8636 = vmatprep.subr.mxu0 0.0
        %8637 = vmatpush1.msra.mxu0 %v8428
        %8638 = vmatprep.subr.mxu0 0.0
        %8639 = vmatpush1.msra.mxu0 %v8429
        %8640 = vmatprep.subr.mxu0 0.0
        %8641 = vmatpush1.msra.mxu0 %v8430
        %8642 = vmatprep.subr.mxu0 0.0
        %8643 = vmatpush1.msra.mxu0 %v8431
        %8644 = vmatprep.subr.mxu0 0.0
        %8645 = vmatpush1.msra.mxu0 %v8432
        %8646 = vmatprep.subr.mxu0 0.0
        %8647 = vmatpush1.msra.mxu0 %v8433
        %8648 = vmatprep.subr.mxu0 0.0
        %8649 = vmatpush1.msra.mxu0 %v8434
        %8650 = vmatprep.subr.mxu0 0.0
        %8651 = vmatpush1.msra.mxu0 %v8435
        %8652 = vmatprep.subr.mxu0 0.0
        %8653 = vmatpush1.msra.mxu0 %v8436
        %8654 = vmatprep.subr.mxu0 0.0
        %8655 = vmatpush1.msra.mxu0 %v8437
        %8656 = vmatprep.subr.mxu0 0.0
        %8657 = vmatpush1.msra.mxu0 %v8438
        %8658 = vmatprep.subr.mxu0 0.0
        %8659 = vmatpush1.msra.mxu0 %v8439
        %8660 = vmatprep.subr.mxu0 0.0
        %8661 = vmatpush1.msra.mxu0 %v8440
        %8662 = vmatprep.subr.mxu0 0.0
        %8663 = vmatpush1.msra.mxu0 %v8441
        %8664 = vmatprep.subr.mxu0 0.0
        %8665 = vmatpush1.msra.mxu0 %v8442
        %8666 = vmatprep.subr.mxu0 0.0
        %8667 = vmatpush1.msra.mxu0 %v8443
        %8668 = vmatprep.subr.mxu0 0.0
        %8669 = vmatpush1.msra.mxu0 %v8444
        %8670 = vmatprep.subr.mxu0 0.0
        %8671 = vmatpush1.msra.mxu0 %v8445
        %8672 = vmatprep.subr.mxu0 0.0
        %8673 = vmatpush1.msra.mxu0 %v8446
        %8674 = vmatprep.subr.mxu0 0.0
        %8675 = vmatpush1.msra.mxu0 %v8447
        %8676 = vmatprep.mubr.f32.mxu0 %v8609
        %8677 = vmatmul.mubr.f32.gmra.mrb[0].mxu0 %v8608
        %v8678 = vpop.f32.mrb[0].mxu0
        %v8679 = vadd.f32 0.0, %v8678
        %v8680 = vpop.f32.mrb[0].mxu0
        %8681 = vmatprep.mubr.f32.mxu0 %v8611
        %8682 = vmatmul.mubr.f32.gmra.mrb[0].mxu0 %v8610
        %v8683 = vpop.f32.mrb[0].mxu0
        %v8684 = vadd.f32 0.0, %v8683
        %v8685 = vpop.f32.mrb[0].mxu0
        %8686 = vdwg.mxu0
        %s8687 = scalar_lea.vmem %s8, 96
        %v8688 = vld [vmem:[%s8687] sm:$0xff]
        %v8689 = vld [vmem:[%s8687 + $0x8] sm:$0xff]
        %v8690 = vld [vmem:[%s8687 + $0x10] sm:$0xff]
        %v8691 = vld [vmem:[%s8687 + $0x18] sm:$0xff]
        %8692 = vmatprep.subr.mxu0 0.0
        %8693 = vmatpush1.msra.mxu0 %v8416
        %8694 = vmatprep.subr.mxu0 0.0
        %8695 = vmatpush1.msra.mxu0 %v8417
        %8696 = vmatprep.subr.mxu0 0.0
        %8697 = vmatpush1.msra.mxu0 %v8418
        %8698 = vmatprep.subr.mxu0 0.0
        %8699 = vmatpush1.msra.mxu0 %v8419
        %8700 = vmatprep.subr.mxu0 0.0
        %8701 = vmatpush1.msra.mxu0 %v8420
        %8702 = vmatprep.subr.mxu0 0.0
        %8703 = vmatpush1.msra.mxu0 %v8421
        %8704 = vmatprep.subr.mxu0 0.0
        %8705 = vmatpush1.msra.mxu0 %v8422
        %8706 = vmatprep.subr.mxu0 0.0
        %8707 = vmatpush1.msra.mxu0 %v8423
        %8708 = vmatprep.subr.mxu0 0.0
        %8709 = vmatpush1.msra.mxu0 %v8424
        %8710 = vmatprep.subr.mxu0 0.0
        %8711 = vmatpush1.msra.mxu0 %v8425
        %8712 = vmatprep.subr.mxu0 0.0
        %8713 = vmatpush1.msra.mxu0 %v8426
        %8714 = vmatprep.subr.mxu0 0.0
        %8715 = vmatpush1.msra.mxu0 %v8427
        %8716 = vmatprep.subr.mxu0 0.0
        %8717 = vmatpush1.msra.mxu0 %v8428
        %8718 = vmatprep.subr.mxu0 0.0
        %8719 = vmatpush1.msra.mxu0 %v8429
        %8720 = vmatprep.subr.mxu0 0.0
        %8721 = vmatpush1.msra.mxu0 %v8430
        %8722 = vmatprep.subr.mxu0 0.0
        %8723 = vmatpush1.msra.mxu0 %v8431
        %8724 = vmatprep.subr.mxu0 0.0
        %8725 = vmatpush1.msra.mxu0 %v8432
        %8726 = vmatprep.subr.mxu0 0.0
        %8727 = vmatpush1.msra.mxu0 %v8433
        %8728 = vmatprep.subr.mxu0 0.0
        %8729 = vmatpush1.msra.mxu0 %v8434
        %8730 = vmatprep.subr.mxu0 0.0
        %8731 = vmatpush1.msra.mxu0 %v8435
        %8732 = vmatprep.subr.mxu0 0.0
        %8733 = vmatpush1.msra.mxu0 %v8436
        %8734 = vmatprep.subr.mxu0 0.0
        %8735 = vmatpush1.msra.mxu0 %v8437
        %8736 = vmatprep.subr.mxu0 0.0
        %8737 = vmatpush1.msra.mxu0 %v8438
        %8738 = vmatprep.subr.mxu0 0.0
        %8739 = vmatpush1.msra.mxu0 %v8439
        %8740 = vmatprep.subr.mxu0 0.0
        %8741 = vmatpush1.msra.mxu0 %v8440
        %8742 = vmatprep.subr.mxu0 0.0
        %8743 = vmatpush1.msra.mxu0 %v8441
        %8744 = vmatprep.subr.mxu0 0.0
        %8745 = vmatpush1.msra.mxu0 %v8442
        %8746 = vmatprep.subr.mxu0 0.0
        %8747 = vmatpush1.msra.mxu0 %v8443
        %8748 = vmatprep.subr.mxu0 0.0
        %8749 = vmatpush1.msra.mxu0 %v8444
        %8750 = vmatprep.subr.mxu0 0.0
        %8751 = vmatpush1.msra.mxu0 %v8445
        %8752 = vmatprep.subr.mxu0 0.0
        %8753 = vmatpush1.msra.mxu0 %v8446
        %8754 = vmatprep.subr.mxu0 0.0
        %8755 = vmatpush1.msra.mxu0 %v8447
        %8756 = vmatprep.mubr.f32.mxu0 %v8689
        %8757 = vmatmul.mubr.f32.gmra.mrb[0].mxu0 %v8688
        %v8758 = vpop.f32.mrb[0].mxu0
        %v8759 = vadd.f32 0.0, %v8758
        %v8760 = vpop.f32.mrb[0].mxu0
        %8761 = vmatprep.mubr.f32.mxu0 %v8691
        %8762 = vmatmul.mubr.f32.gmra.mrb[0].mxu0 %v8690
        %v8763 = vpop.f32.mrb[0].mxu0
        %v8764 = vadd.f32 0.0, %v8763
        %v8765 = vpop.f32.mrb[0].mxu0
        %8766 = vdwg.mxu0
        %8769 = vrot.lane.b32.xlu0 %v8599, 32
        %v8770 = vpop.permute.xlu0 %8769
        %8771 = vrot.lane.b32.xlu0 %v8604, 32
        %v8772 = vpop.permute.xlu0 %8771
        %8777 = vrot.lane.b32.xlu0 %v8679, 64
        %v8778 = vpop.permute.xlu0 %8777
        %8779 = vrot.lane.b32.xlu0 %v8684, 64
        %v8780 = vpop.permute.xlu0 %8779
        %8785 = vrot.lane.b32.xlu0 %v8759, 96
        %v8786 = vpop.permute.xlu0 %8785
        %8787 = vrot.lane.b32.xlu0 %v8764, 96
        %v8788 = vpop.permute.xlu0 %8787
        %v8791 = vsel %vm407, %v8519, %v8770
        %v8792 = vsel %vm407, %v8524, %v8772
        %vm8793 = vcmask 523264
        %v8794 = vsel %vm8793, %v8791, %v8778
        %v8795 = vsel %vm8793, %v8792, %v8780
        %vm8796 = vcmask 785408
        %v8797 = vsel %vm8796, %v8794, %v8786
        %v8798 = vsel %vm8796, %v8795, %v8788
        %8799 = vst [vmem:[%s356] sm:$0xff] %v8797
        %8800 = vst [vmem:[%s356 + $0x8] sm:$0xff] %v8798
        %s8801 = sand.u32 %s227, 1
        %s8802 = scalar_lea.sflag [#allocation4], %s8801
        %s8803 = sand.u32 %s227, 1
        %s8804 = smul.addr %s8803, 16
        %s8805 = scalar_lea.vmem [#allocation7], %s8804
        // Predicated region
        $region65: #{tpu_custom_call.1} parent=55 // pred_check
          %p8806 = pneg %p237
        $region66: #{tpu_custom_call.1} parent=55 // pred_check_branch
          %8808 = sbr.rel (%p8806) target = $region68
        $region67: #{tpu_custom_call.1} parent=55 // pred_region
          %s8809 = smul.u32 2, %s25
          %s8811 = ssub.s32 256, 256
          %8812 = vsyncadd %s8802, %s8811
          %s8813 = smul.addr %s8809, 128
          %s8814 = scalar_lea.hbm %s9, %s8813
          %s8815 = sshll.u32 %s8805, 4
          %s8816 = int_to_ptr.vmem [resolvable:$true] %s8815
          %8821 = dma.vmem_to_hbm [thread:$0]  %s8816, 256, %s8814, %s8802, 128, 128, 8
        $region68: #{tpu_custom_call.1} parent=55 // pred_fallthru
          _
      $region56: #{tpu_custom_call.1} parent=5 // pred_fallthru
        _
      %p8822 = scmp.le.s32.totalorder 2, %s20
      // Predicated region
      $region69: #{tpu_custom_call.1} parent=5 // pred_check
        %p8823 = pneg %p8822
      $region70: #{tpu_custom_call.1} parent=5 // pred_check_branch
        %8825 = sbr.rel (%p8823) target = $region72
      $region71: #{tpu_custom_call.1} parent=5 // pred_region
        %s8826 = ssub.s32 %s20, 2
        // Predicated region
        $region73: #{tpu_custom_call.1} parent=71 // pred_check
          %p8827 = pneg %p243
        $region74: #{tpu_custom_call.1} parent=71 // pred_check_branch
          %8829 = sbr.rel (%p8827) target = $region76
        $region75: #{tpu_custom_call.1} parent=71 // pred_region
          %s8830 = sand.u32 %s228, 1
          %s8831 = scalar_lea.sflag [#allocation4], %s8830
          %s8832 = sand.u32 %s228, 1
          %s8833 = smul.addr %s8832, 16
          %s8834 = scalar_lea.vmem [#allocation7], %s8833
          %8835 = dma.done %s8831, 256
        $region76: #{tpu_custom_call.1} parent=71 // pred_fallthru
          _
      $region72: #{tpu_custom_call.1} parent=5 // pred_fallthru
        _
    $region6: #{tpu_custom_call.1} parent=1 // loop_footer
      %s24 = sadd.s32 1, %s20
    $region7: #{tpu_custom_call.1} parent=1 // loop_footer_branch
      %19 = sbr.rel target = $region3
    $region8: #{tpu_custom_call.1} parent=1 // loop_exit
      _
    %8836 = vsyncpa [#allocation3], 1
    %s8837 = scalar_lea.sflag [#allocation3], 1
    %8838 = vsyncpa %s8837, 1
    %8839 = vsyncpa [#allocation6], 1
    %8840 = vsyncpa [#allocation4], 1
    %s8841 = scalar_lea.sflag [#allocation4], 1
    %8842 = vsyncpa %s8841, 1

</llo_original>
